<compile_context>
chip_gen: v5e
topology: v5e:2x2
jax: 0.10.0
libtpu: 0.0.40
codegen_flags: <defaults>
</compile_context>

<pallas_src>
import functools

import jax
import jax.numpy as jnp
from jax import lax
from jax.experimental import pallas as pl
from jax.experimental.pallas import tpu as pltpu

NUM_CHANNELS_GRID = 1
TOPOLOGY_TOROIDAL = "toroidal"
TOPOLOGY_FLAT = "flat"


# ----------------------------- Fused Pallas kernel ---------------------------

def _fused_generator_kernel(x_ref, w1_ref, b1_ref, w2_ref, b2_ref, w3_ref,
                            b3_ref, w4t_ref, b4t_ref, o_ref, pad2_ref, col_ref,
                            *, H, W, C_in, C_hid, C_out, toroidal,
                            compute_dtype):
    """Whole 4-layer forward for one batch element; activations stay in VMEM.

    x_ref    : (1, H, W, C_in)       input block (NHWC)
    w{1,2,3} : (9*Cin_l, C_hid)      im2col-reshaped 3x3 weights (compute_dtype)
    b{1,2,3} : (1, C_hid)            biases (float32)
    w4t_ref  : (C_out, C_hid)        transposed 1x1 weights (compute_dtype)
    b4t_ref  : (C_out, 1)            1x1 bias (float32)
    o_ref    : (1, C_out, H*W)       logits (lane-dense last dim)
    pad2_ref : VMEM (H+2, 2*W, Cmax) f32, row-padded activation duplicated
                                     along W (wrapped windows are contiguous)
    col_ref  : VMEM (H*W, 9*Cmax)    im2col buffer (compute_dtype)
    """

    def conv3x3_relu(a, w_ref, b_ref, cin):
        # a: (H, W, cin) f32  ->  (H*W, C_hid) f32 after bias + ReLU.
        zero_row = (None if toroidal
                    else jnp.zeros((1, W, cin), pad2_ref.dtype))
        for c0 in (0, W):                        # two side-by-side copies
            pad2_ref[1:H + 1, c0:c0 + W, 0:cin] = a
            if toroidal:
                pad2_ref[0:1, c0:c0 + W, 0:cin] = a[H - 1:H, :, :]
                pad2_ref[H + 1:H + 2, c0:c0 + W, 0:cin] = a[0:1, :, :]
            else:
                pad2_ref[0:1, c0:c0 + W, 0:cin] = zero_row
                pad2_ref[H + 1:H + 2, c0:c0 + W, 0:cin] = zero_row

        # Column index mask (only needed for zero padding of left/right taps).
        col_idx = (None if toroidal
                   else lax.broadcasted_iota(jnp.int32, (H, W, cin), 1))

        # im2col: each of the 9 taps is one contiguous (H, W, cin) window of
        # the duplicated buffer (copied once into the im2col scratch).
        for ky in range(3):
            for kx in range(3):
                t = ky * 3 + kx
                s = (kx - 1) % W                 # wrapped column offset
                win = pad2_ref[ky:ky + H, s:s + W, 0:cin]
                if not toroidal:
                    if kx == 0:
                        win = jnp.where(col_idx == 0, 0.0, win)
                    elif kx == 2:
                        win = jnp.where(col_idx == W - 1, 0.0, win)
                col_ref[:, t * cin:(t + 1) * cin] = (
                    win.reshape(H * W, cin).astype(compute_dtype))

        # Single MXU matmul over the whole 9*cin contraction.
        y = jnp.dot(col_ref[:, 0:9 * cin], w_ref[...],
                    preferred_element_type=jnp.float32)
        return jnp.maximum(y + b_ref[...], 0.0)   # (H*W, C_hid) f32

    x = x_ref[0].astype(jnp.float32)                               # (H, W, C_in)
    h = conv3x3_relu(x, w1_ref, b1_ref, C_in).reshape(H, W, C_hid)
    h = conv3x3_relu(h, w2_ref, b2_ref, C_hid).reshape(H, W, C_hid)
    h = conv3x3_relu(h, w3_ref, b3_ref, C_hid)                     # (H*W, C_hid)

    # 1x1 conv as A @ B^T so the result is (C_out, H*W): lane-dense store
    # instead of a 1-lane masked (H*W, 1) store.
    logits_t = lax.dot_general(
        w4t_ref[...], h.astype(compute_dtype),
        dimension_numbers=(((1,), (1,)), ((), ())),
        preferred_element_type=jnp.float32) + b4t_ref[...]
    o_ref[...] = logits_t.reshape(1, C_out, H * W)


# ----------------------------- Wrapper ---------------------------------------

def sparse_binary_generator_forward(x_nchw, params,
                                    topology=TOPOLOGY_TOROIDAL,
                                    compute_dtype=jnp.bfloat16):
    """x_nchw: (B, NUM_CHANNELS_GRID, H, W) -> logits (B, NUM_CHANNELS_GRID, H, W).

    NOTE: `temperature` of the PyTorch module is unused in forward(), so it is
    not a parameter here.
    """
    B, C_in, H, W = x_nchw.shape
    C_hid = params["w1"].shape[-1]
    C_out = params["w4"].shape[-1]
    c_max = max(C_in, C_hid)

    x = jnp.transpose(x_nchw, (0, 2, 3, 1)).astype(jnp.float32)    # NHWC

    # im2col-reshaped / transposed weights (cheap one-time XLA glue).
    w1r = params["w1"].reshape(9 * C_in, C_hid).astype(compute_dtype)
    w2r = params["w2"].reshape(9 * C_hid, C_hid).astype(compute_dtype)
    w3r = params["w3"].reshape(9 * C_hid, C_hid).astype(compute_dtype)
    w4t = params["w4"].T.astype(compute_dtype)                     # (C_out, C_hid)
    b1 = params["b1"].astype(jnp.float32)
    b2 = params["b2"].astype(jnp.float32)
    b3 = params["b3"].astype(jnp.float32)
    b4t = params["b4"].reshape(C_out, 1).astype(jnp.float32)

    kernel = functools.partial(
        _fused_generator_kernel, H=H, W=W, C_in=C_in, C_hid=C_hid, C_out=C_out,
        toroidal=(topology == TOPOLOGY_TOROIDAL), compute_dtype=compute_dtype)

    logits_flat = pl.pallas_call(
        kernel,
        out_shape=jax.ShapeDtypeStruct((B, C_out, H * W), jnp.float32),
        grid=(B,),
        in_specs=[
            pl.BlockSpec((1, H, W, C_in), lambda b: (b, 0, 0, 0)),
            pl.BlockSpec((9 * C_in, C_hid), lambda b: (0, 0)),
            pl.BlockSpec((1, C_hid), lambda b: (0, 0)),
            pl.BlockSpec((9 * C_hid, C_hid), lambda b: (0, 0)),
            pl.BlockSpec((1, C_hid), lambda b: (0, 0)),
            pl.BlockSpec((9 * C_hid, C_hid), lambda b: (0, 0)),
            pl.BlockSpec((1, C_hid), lambda b: (0, 0)),
            pl.BlockSpec((C_out, C_hid), lambda b: (0, 0)),
            pl.BlockSpec((C_out, 1), lambda b: (0, 0)),
        ],
        out_specs=pl.BlockSpec((1, C_out, H * W), lambda b: (b, 0, 0)),
        scratch_shapes=[
            pltpu.VMEM((H + 2, 2 * W, c_max), jnp.float32),
            pltpu.VMEM((H * W, 9 * c_max), compute_dtype),
        ],
        compiler_params=pltpu.CompilerParams(
            dimension_semantics=("parallel",)),
    )(x, w1r, b1, w2r, b2, w3r, b3, w4t, b4t)

    return logits_flat.reshape(B, C_out, H, W)                     # NCHW


# ----------------------------- Parameters -------------------------------------

def init_params(key, num_hidden):
    """Deterministic synthetic parameters (HWIO weight layout)."""
    ks = jax.random.split(key, 8)

    def w3(k, cin, cout):
        fan_in = cin * 9
        return (jax.random.normal(k, (3, 3, cin, cout), jnp.float32)
                / jnp.sqrt(fan_in))

    return {
        "w1": w3(ks[0], NUM_CHANNELS_GRID, num_hidden),
        "b1": 0.01 * jax.random.normal(ks[1], (1, num_hidden), jnp.float32),
        "w2": w3(ks[2], num_hidden, num_hidden),
        "b2": 0.01 * jax.random.normal(ks[3], (1, num_hidden), jnp.float32),
        "w3": w3(ks[4], num_hidden, num_hidden),
        "b3": 0.01 * jax.random.normal(ks[5], (1, num_hidden), jnp.float32),
        "w4": (jax.random.normal(ks[6], (num_hidden, NUM_CHANNELS_GRID),
                                 jnp.float32) / jnp.sqrt(num_hidden)),
        "b4": 0.01 * jax.random.normal(ks[7], (1, NUM_CHANNELS_GRID),
                                       jnp.float32),
    }


# ----------------------------- Reference (pure JAX) ----------------------------

def _reference_forward(x_nchw, params, topology=TOPOLOGY_TOROIDAL):
    x = jnp.transpose(x_nchw, (0, 2, 3, 1)).astype(jnp.float32)
    pad_mode = "wrap" if topology == TOPOLOGY_TOROIDAL else "constant"
    dn = ("NHWC", "HWIO", "NHWC")

    def c3(a, w, b):
        a = jnp.pad(a, ((0, 0), (1, 1), (1, 1), (0, 0)), mode=pad_mode)
        y = jax.lax.conv_general_dilated(a, w, (1, 1), "VALID",
                                         dimension_numbers=dn)
        return y + b[0]

    x = jax.nn.relu(c3(x, params["w1"], params["b1"]))
    x = jax.nn.relu(c3(x, params["w2"], params["b2"]))
    x = jax.nn.relu(c3(x, params["w3"], params["b3"]))
    y = jnp.einsum("bhwc,co->bhwo", x, params["w4"]) + params["b4"][0]
    return jnp.transpose(y, (0, 3, 1, 2))


# ----------------------------- Main --------------------------------------------

if __name__ == "__main__":
    B, C, H, W = 2, NUM_CHANNELS_GRID, 16, 16
    num_hidden = 32

    key = jax.random.PRNGKey(0)
    k_x, k_p = jax.random.split(key)
    # binary-ish grid input, as the module name suggests
    x = (jax.random.uniform(k_x, (B, C, H, W)) > 0.5).astype(jnp.float32)
    params = init_params(k_p, num_hidden)

    fwd = jax.jit(sparse_binary_generator_forward,
                  static_argnames=("topology", "compute_dtype"))

    # ---- toroidal topology ----
    ref_t = _reference_forward(x, params, topology=TOPOLOGY_TOROIDAL)

    # f32 compute path: tight numerical check of the fused kernel.
    out_f32 = jax.block_until_ready(
        fwd(x, params, topology=TOPOLOGY_TOROIDAL, compute_dtype=jnp.float32))
    assert out_f32.shape == (B, NUM_CHANNELS_GRID, H, W)
    assert jnp.allclose(out_f32, ref_t, atol=1e-3, rtol=1e-3)

    # bf16 MXU path (default, fast): loose check against the f32 reference.
    out_bf16 = jax.block_until_ready(fwd(x, params, topology=TOPOLOGY_TOROIDAL))
    assert out_bf16.shape == (B, NUM_CHANNELS_GRID, H, W)
    assert jnp.allclose(out_bf16, ref_t, atol=1e-1, rtol=1e-1)

    # ---- flat (zero-padded) topology: exercise the other padding branch ----
    ref_f = _reference_forward(x, params, topology=TOPOLOGY_FLAT)
    out_flat = jax.block_until_ready(
        fwd(x, params, topology=TOPOLOGY_FLAT, compute_dtype=jnp.float32))
    assert jnp.allclose(out_flat, ref_f, atol=1e-3, rtol=1e-3)

    print("KERNEL_OK")
</pallas_src>

<mosaic_0001>
module attributes {stable_mosaic.version = 11 : i64} {
  func.func @_fused_generator_kernel(%arg0: i32, %arg1: memref<1x16x16x1xf32, #tpu.memory_space<vmem>>, %arg2: memref<9x32xf32, #tpu.memory_space<vmem>>, %arg3: memref<1x32xf32, #tpu.memory_space<vmem>>, %arg4: memref<288x32xf32, #tpu.memory_space<vmem>>, %arg5: memref<1x32xf32, #tpu.memory_space<vmem>>, %arg6: memref<288x32xf32, #tpu.memory_space<vmem>>, %arg7: memref<1x32xf32, #tpu.memory_space<vmem>>, %arg8: memref<1x32xf32, #tpu.memory_space<vmem>>, %arg9: memref<1x1xf32, #tpu.memory_space<vmem>>, %arg10: memref<1x1x256xf32, #tpu.memory_space<vmem>>, %arg11: memref<18x32x32xf32, #tpu.memory_space<vmem>>, %arg12: memref<256x288xf32, #tpu.memory_space<vmem>>) attributes {dimension_semantics = [#tpu.dimension_semantics<parallel>], iteration_bounds = array<i64: 2>, scalar_prefetch = 0 : i64, scratch_operands = 2 : i64, tpu.core_type = #tpu.core_type<tc>, window_params = [{transform_indices = @transform_0, window_bounds = array<i64: 1, 16, 16, 1>}, {pipeline_mode = #tpu.pipeline_mode<synchronous>, transform_indices = @transform_1, window_bounds = array<i64: 9, 32>}, {pipeline_mode = #tpu.pipeline_mode<synchronous>, transform_indices = @transform_2, window_bounds = array<i64: 1, 32>}, {pipeline_mode = #tpu.pipeline_mode<synchronous>, transform_indices = @transform_3, window_bounds = array<i64: 288, 32>}, {pipeline_mode = #tpu.pipeline_mode<synchronous>, transform_indices = @transform_4, window_bounds = array<i64: 1, 32>}, {pipeline_mode = #tpu.pipeline_mode<synchronous>, transform_indices = @transform_5, window_bounds = array<i64: 288, 32>}, {pipeline_mode = #tpu.pipeline_mode<synchronous>, transform_indices = @transform_6, window_bounds = array<i64: 1, 32>}, {pipeline_mode = #tpu.pipeline_mode<synchronous>, transform_indices = @transform_7, window_bounds = array<i64: 1, 32>}, {pipeline_mode = #tpu.pipeline_mode<synchronous>, transform_indices = @transform_8, window_bounds = array<i64: 1, 1>}, {transform_indices = @transform_9, window_bounds = array<i64: 1, 1, 256>}]} {
    %c0 = arith.constant 0 : index
    %c0_0 = arith.constant 0 : index
    %c0_1 = arith.constant 0 : index
    %c0_2 = arith.constant 0 : index
    %0 = vector.load %arg1[%c0, %c0_0, %c0_1, %c0_2] : memref<1x16x16x1xf32, #tpu.memory_space<vmem>>, vector<1x16x16x1xf32>
    %1 = vector.shape_cast %0 : vector<1x16x16x1xf32> to vector<16x16x1xf32>
    %c1 = arith.constant 1 : index
    %c0_3 = arith.constant 0 : index
    %c0_4 = arith.constant 0 : index
    %2 = vector.load %arg11[%c1, %c0_3, %c0_4] : memref<18x32x32xf32, #tpu.memory_space<vmem>>, vector<16x16x1xf32>
    tpu.vector_store %arg11[%c1, %c0_3, %c0_4], %1 {strides = array<i32>} : memref<18x32x32xf32, #tpu.memory_space<vmem>>, vector<16x16x1xf32>,
    %3 = vector.extract_strided_slice %1 {offsets = [15, 0, 0], sizes = [1, 16, 1], strides = [1, 1, 1]} : vector<16x16x1xf32> to vector<1x16x1xf32>
    %c0_5 = arith.constant 0 : index
    %c0_6 = arith.constant 0 : index
    %c0_7 = arith.constant 0 : index
    %4 = vector.load %arg11[%c0_5, %c0_6, %c0_7] : memref<18x32x32xf32, #tpu.memory_space<vmem>>, vector<1x16x1xf32>
    tpu.vector_store %arg11[%c0_5, %c0_6, %c0_7], %3 {strides = array<i32>} : memref<18x32x32xf32, #tpu.memory_space<vmem>>, vector<1x16x1xf32>,
    %5 = vector.extract_strided_slice %1 {offsets = [0, 0, 0], sizes = [1, 16, 1], strides = [1, 1, 1]} : vector<16x16x1xf32> to vector<1x16x1xf32>
    %c17 = arith.constant 17 : index
    %c0_8 = arith.constant 0 : index
    %c0_9 = arith.constant 0 : index
    %6 = vector.load %arg11[%c17, %c0_8, %c0_9] : memref<18x32x32xf32, #tpu.memory_space<vmem>>, vector<1x16x1xf32>
    tpu.vector_store %arg11[%c17, %c0_8, %c0_9], %5 {strides = array<i32>} : memref<18x32x32xf32, #tpu.memory_space<vmem>>, vector<1x16x1xf32>,
    %c1_10 = arith.constant 1 : index
    %c16 = arith.constant 16 : index
    %c0_11 = arith.constant 0 : index
    %7 = vector.load %arg11[%c1_10, %c16, %c0_11] : memref<18x32x32xf32, #tpu.memory_space<vmem>>, vector<16x16x1xf32>
    tpu.vector_store %arg11[%c1_10, %c16, %c0_11], %1 {strides = array<i32>} : memref<18x32x32xf32, #tpu.memory_space<vmem>>, vector<16x16x1xf32>,
    %8 = vector.extract_strided_slice %1 {offsets = [15, 0, 0], sizes = [1, 16, 1], strides = [1, 1, 1]} : vector<16x16x1xf32> to vector<1x16x1xf32>
    %c0_12 = arith.constant 0 : index
    %c16_13 = arith.constant 16 : index
    %c0_14 = arith.constant 0 : index
    %9 = vector.load %arg11[%c0_12, %c16_13, %c0_14] : memref<18x32x32xf32, #tpu.memory_space<vmem>>, vector<1x16x1xf32>
    tpu.vector_store %arg11[%c0_12, %c16_13, %c0_14], %8 {strides = array<i32>} : memref<18x32x32xf32, #tpu.memory_space<vmem>>, vector<1x16x1xf32>,
    %10 = vector.extract_strided_slice %1 {offsets = [0, 0, 0], sizes = [1, 16, 1], strides = [1, 1, 1]} : vector<16x16x1xf32> to vector<1x16x1xf32>
    %c17_15 = arith.constant 17 : index
    %c16_16 = arith.constant 16 : index
    %c0_17 = arith.constant 0 : index
    %11 = vector.load %arg11[%c17_15, %c16_16, %c0_17] : memref<18x32x32xf32, #tpu.memory_space<vmem>>, vector<1x16x1xf32>
    tpu.vector_store %arg11[%c17_15, %c16_16, %c0_17], %10 {strides = array<i32>} : memref<18x32x32xf32, #tpu.memory_space<vmem>>, vector<1x16x1xf32>,
    %c0_18 = arith.constant 0 : index
    %c15 = arith.constant 15 : index
    %c0_19 = arith.constant 0 : index
    %12 = vector.load %arg11[%c0_18, %c15, %c0_19] : memref<18x32x32xf32, #tpu.memory_space<vmem>>, vector<16x16x1xf32>
    %13 = vector.shape_cast %12 : vector<16x16x1xf32> to vector<256x1xf32>
    %c0_20 = arith.constant 0 : index
    %c0_21 = arith.constant 0 : index
    %14 = vector.load %arg12[%c0_20, %c0_21] : memref<256x288xf32, #tpu.memory_space<vmem>>, vector<256x1xf32>
    tpu.vector_store %arg12[%c0_20, %c0_21], %13 {strides = array<i32>} : memref<256x288xf32, #tpu.memory_space<vmem>>, vector<256x1xf32>,
    %c0_22 = arith.constant 0 : index
    %c0_23 = arith.constant 0 : index
    %c0_24 = arith.constant 0 : index
    %15 = vector.load %arg11[%c0_22, %c0_23, %c0_24] : memref<18x32x32xf32, #tpu.memory_space<vmem>>, vector<16x16x1xf32>
    %16 = vector.shape_cast %15 : vector<16x16x1xf32> to vector<256x1xf32>
    %c0_25 = arith.constant 0 : index
    %c1_26 = arith.constant 1 : index
    %17 = vector.load %arg12[%c0_25, %c1_26] : memref<256x288xf32, #tpu.memory_space<vmem>>, vector<256x1xf32>
    tpu.vector_store %arg12[%c0_25, %c1_26], %16 {strides = array<i32>} : memref<256x288xf32, #tpu.memory_space<vmem>>, vector<256x1xf32>,
    %c0_27 = arith.constant 0 : index
    %c1_28 = arith.constant 1 : index
    %c0_29 = arith.constant 0 : index
    %18 = vector.load %arg11[%c0_27, %c1_28, %c0_29] : memref<18x32x32xf32, #tpu.memory_space<vmem>>, vector<16x16x1xf32>
    %19 = vector.shape_cast %18 : vector<16x16x1xf32> to vector<256x1xf32>
    %c0_30 = arith.constant 0 : index
    %c2 = arith.constant 2 : index
    %20 = vector.load %arg12[%c0_30, %c2] : memref<256x288xf32, #tpu.memory_space<vmem>>, vector<256x1xf32>
    tpu.vector_store %arg12[%c0_30, %c2], %19 {strides = array<i32>} : memref<256x288xf32, #tpu.memory_space<vmem>>, vector<256x1xf32>,
    %c1_31 = arith.constant 1 : index
    %c15_32 = arith.constant 15 : index
    %c0_33 = arith.constant 0 : index
    %21 = vector.load %arg11[%c1_31, %c15_32, %c0_33] : memref<18x32x32xf32, #tpu.memory_space<vmem>>, vector<16x16x1xf32>
    %22 = vector.shape_cast %21 : vector<16x16x1xf32> to vector<256x1xf32>
    %c0_34 = arith.constant 0 : index
    %c3 = arith.constant 3 : index
    %23 = vector.load %arg12[%c0_34, %c3] : memref<256x288xf32, #tpu.memory_space<vmem>>, vector<256x1xf32>
    tpu.vector_store %arg12[%c0_34, %c3], %22 {strides = array<i32>} : memref<256x288xf32, #tpu.memory_space<vmem>>, vector<256x1xf32>,
    %c1_35 = arith.constant 1 : index
    %c0_36 = arith.constant 0 : index
    %c0_37 = arith.constant 0 : index
    %24 = vector.load %arg11[%c1_35, %c0_36, %c0_37] : memref<18x32x32xf32, #tpu.memory_space<vmem>>, vector<16x16x1xf32>
    %25 = vector.shape_cast %24 : vector<16x16x1xf32> to vector<256x1xf32>
    %c0_38 = arith.constant 0 : index
    %c4 = arith.constant 4 : index
    %26 = vector.load %arg12[%c0_38, %c4] : memref<256x288xf32, #tpu.memory_space<vmem>>, vector<256x1xf32>
    tpu.vector_store %arg12[%c0_38, %c4], %25 {strides = array<i32>} : memref<256x288xf32, #tpu.memory_space<vmem>>, vector<256x1xf32>,
    %c1_39 = arith.constant 1 : index
    %c1_40 = arith.constant 1 : index
    %c0_41 = arith.constant 0 : index
    %27 = vector.load %arg11[%c1_39, %c1_40, %c0_41] : memref<18x32x32xf32, #tpu.memory_space<vmem>>, vector<16x16x1xf32>
    %28 = vector.shape_cast %27 : vector<16x16x1xf32> to vector<256x1xf32>
    %c0_42 = arith.constant 0 : index
    %c5 = arith.constant 5 : index
    %29 = vector.load %arg12[%c0_42, %c5] : memref<256x288xf32, #tpu.memory_space<vmem>>, vector<256x1xf32>
    tpu.vector_store %arg12[%c0_42, %c5], %28 {strides = array<i32>} : memref<256x288xf32, #tpu.memory_space<vmem>>, vector<256x1xf32>,
    %c2_43 = arith.constant 2 : index
    %c15_44 = arith.constant 15 : index
    %c0_45 = arith.constant 0 : index
    %30 = vector.load %arg11[%c2_43, %c15_44, %c0_45] : memref<18x32x32xf32, #tpu.memory_space<vmem>>, vector<16x16x1xf32>
    %31 = vector.shape_cast %30 : vector<16x16x1xf32> to vector<256x1xf32>
    %c0_46 = arith.constant 0 : index
    %c6 = arith.constant 6 : index
    %32 = vector.load %arg12[%c0_46, %c6] : memref<256x288xf32, #tpu.memory_space<vmem>>, vector<256x1xf32>
    tpu.vector_store %arg12[%c0_46, %c6], %31 {strides = array<i32>} : memref<256x288xf32, #tpu.memory_space<vmem>>, vector<256x1xf32>,
    %c2_47 = arith.constant 2 : index
    %c0_48 = arith.constant 0 : index
    %c0_49 = arith.constant 0 : index
    %33 = vector.load %arg11[%c2_47, %c0_48, %c0_49] : memref<18x32x32xf32, #tpu.memory_space<vmem>>, vector<16x16x1xf32>
    %34 = vector.shape_cast %33 : vector<16x16x1xf32> to vector<256x1xf32>
    %c0_50 = arith.constant 0 : index
    %c7 = arith.constant 7 : index
    %35 = vector.load %arg12[%c0_50, %c7] : memref<256x288xf32, #tpu.memory_space<vmem>>, vector<256x1xf32>
    tpu.vector_store %arg12[%c0_50, %c7], %34 {strides = array<i32>} : memref<256x288xf32, #tpu.memory_space<vmem>>, vector<256x1xf32>,
    %c2_51 = arith.constant 2 : index
    %c1_52 = arith.constant 1 : index
    %c0_53 = arith.constant 0 : index
    %36 = vector.load %arg11[%c2_51, %c1_52, %c0_53] : memref<18x32x32xf32, #tpu.memory_space<vmem>>, vector<16x16x1xf32>
    %37 = vector.shape_cast %36 : vector<16x16x1xf32> to vector<256x1xf32>
    %c0_54 = arith.constant 0 : index
    %c8 = arith.constant 8 : index
    %38 = vector.load %arg12[%c0_54, %c8] : memref<256x288xf32, #tpu.memory_space<vmem>>, vector<256x1xf32>
    tpu.vector_store %arg12[%c0_54, %c8], %37 {strides = array<i32>} : memref<256x288xf32, #tpu.memory_space<vmem>>, vector<256x1xf32>,
    %c0_55 = arith.constant 0 : index
    %c0_56 = arith.constant 0 : index
    %39 = vector.load %arg12[%c0_55, %c0_56] : memref<256x288xf32, #tpu.memory_space<vmem>>, vector<256x9xf32>
    %c0_57 = arith.constant 0 : index
    %c0_58 = arith.constant 0 : index
    %40 = vector.load %arg2[%c0_57, %c0_58] : memref<9x32xf32, #tpu.memory_space<vmem>>, vector<9x32xf32>
    %cst = arith.constant dense<0.000000e+00> : vector<256x32xf32>
    %41 = tpu.matmul %39, %40, %cst {dimension_numbers = #tpu.dot_dimension_numbers<[1], [0], [0], [1], [0, 0, 1, 1], [], []>} : vector<256x9xf32>, vector<9x32xf32>, vector<256x32xf32> -> vector<256x32xf32>
    %c0_59 = arith.constant 0 : index
    %c0_60 = arith.constant 0 : index
    %42 = vector.load %arg3[%c0_59, %c0_60] : memref<1x32xf32, #tpu.memory_space<vmem>>, vector<1x32xf32>
    %43 = vector.broadcast %42 : vector<1x32xf32> to vector<256x32xf32>
    %44 = arith.addf %41, %43 : vector<256x32xf32>
    %cst_61 = arith.constant 0.000000e+00 : f32
    %45 = vector.broadcast %cst_61 : f32 to vector<256x32xf32>
    %46 = arith.maximumf %44, %45 : vector<256x32xf32>
    %47 = vector.shape_cast %46 : vector<256x32xf32> to vector<16x16x32xf32>
    %c1_62 = arith.constant 1 : index
    %c0_63 = arith.constant 0 : index
    %c0_64 = arith.constant 0 : index
    %48 = vector.load %arg11[%c1_62, %c0_63, %c0_64] : memref<18x32x32xf32, #tpu.memory_space<vmem>>, vector<16x16x32xf32>
    tpu.vector_store %arg11[%c1_62, %c0_63, %c0_64], %47 {strides = array<i32>} : memref<18x32x32xf32, #tpu.memory_space<vmem>>, vector<16x16x32xf32>,
    %49 = vector.extract_strided_slice %47 {offsets = [15, 0, 0], sizes = [1, 16, 32], strides = [1, 1, 1]} : vector<16x16x32xf32> to vector<1x16x32xf32>
    %c0_65 = arith.constant 0 : index
    %c0_66 = arith.constant 0 : index
    %c0_67 = arith.constant 0 : index
    %50 = vector.load %arg11[%c0_65, %c0_66, %c0_67] : memref<18x32x32xf32, #tpu.memory_space<vmem>>, vector<1x16x32xf32>
    tpu.vector_store %arg11[%c0_65, %c0_66, %c0_67], %49 {strides = array<i32>} : memref<18x32x32xf32, #tpu.memory_space<vmem>>, vector<1x16x32xf32>,
    %51 = vector.extract_strided_slice %47 {offsets = [0, 0, 0], sizes = [1, 16, 32], strides = [1, 1, 1]} : vector<16x16x32xf32> to vector<1x16x32xf32>
    %c17_68 = arith.constant 17 : index
    %c0_69 = arith.constant 0 : index
    %c0_70 = arith.constant 0 : index
    %52 = vector.load %arg11[%c17_68, %c0_69, %c0_70] : memref<18x32x32xf32, #tpu.memory_space<vmem>>, vector<1x16x32xf32>
    tpu.vector_store %arg11[%c17_68, %c0_69, %c0_70], %51 {strides = array<i32>} : memref<18x32x32xf32, #tpu.memory_space<vmem>>, vector<1x16x32xf32>,
    %c1_71 = arith.constant 1 : index
    %c16_72 = arith.constant 16 : index
    %c0_73 = arith.constant 0 : index
    %53 = vector.load %arg11[%c1_71, %c16_72, %c0_73] : memref<18x32x32xf32, #tpu.memory_space<vmem>>, vector<16x16x32xf32>
    tpu.vector_store %arg11[%c1_71, %c16_72, %c0_73], %47 {strides = array<i32>} : memref<18x32x32xf32, #tpu.memory_space<vmem>>, vector<16x16x32xf32>,
    %54 = vector.extract_strided_slice %47 {offsets = [15, 0, 0], sizes = [1, 16, 32], strides = [1, 1, 1]} : vector<16x16x32xf32> to vector<1x16x32xf32>
    %c0_74 = arith.constant 0 : index
    %c16_75 = arith.constant 16 : index
    %c0_76 = arith.constant 0 : index
    %55 = vector.load %arg11[%c0_74, %c16_75, %c0_76] : memref<18x32x32xf32, #tpu.memory_space<vmem>>, vector<1x16x32xf32>
    tpu.vector_store %arg11[%c0_74, %c16_75, %c0_76], %54 {strides = array<i32>} : memref<18x32x32xf32, #tpu.memory_space<vmem>>, vector<1x16x32xf32>,
    %56 = vector.extract_strided_slice %47 {offsets = [0, 0, 0], sizes = [1, 16, 32], strides = [1, 1, 1]} : vector<16x16x32xf32> to vector<1x16x32xf32>
    %c17_77 = arith.constant 17 : index
    %c16_78 = arith.constant 16 : index
    %c0_79 = arith.constant 0 : index
    %57 = vector.load %arg11[%c17_77, %c16_78, %c0_79] : memref<18x32x32xf32, #tpu.memory_space<vmem>>, vector<1x16x32xf32>
    tpu.vector_store %arg11[%c17_77, %c16_78, %c0_79], %56 {strides = array<i32>} : memref<18x32x32xf32, #tpu.memory_space<vmem>>, vector<1x16x32xf32>,
    %c0_80 = arith.constant 0 : index
    %c15_81 = arith.constant 15 : index
    %c0_82 = arith.constant 0 : index
    %58 = vector.load %arg11[%c0_80, %c15_81, %c0_82] : memref<18x32x32xf32, #tpu.memory_space<vmem>>, vector<16x16x32xf32>
    %59 = vector.shape_cast %58 : vector<16x16x32xf32> to vector<256x32xf32>
    %c0_83 = arith.constant 0 : index
    %c0_84 = arith.constant 0 : index
    %60 = vector.load %arg12[%c0_83, %c0_84] : memref<256x288xf32, #tpu.memory_space<vmem>>, vector<256x32xf32>
    tpu.vector_store %arg12[%c0_83, %c0_84], %59 {strides = array<i32>} : memref<256x288xf32, #tpu.memory_space<vmem>>, vector<256x32xf32>,
    %c0_85 = arith.constant 0 : index
    %c0_86 = arith.constant 0 : index
    %c0_87 = arith.constant 0 : index
    %61 = vector.load %arg11[%c0_85, %c0_86, %c0_87] : memref<18x32x32xf32, #tpu.memory_space<vmem>>, vector<16x16x32xf32>
    %62 = vector.shape_cast %61 : vector<16x16x32xf32> to vector<256x32xf32>
    %c0_88 = arith.constant 0 : index
    %c32 = arith.constant 32 : index
    %63 = vector.load %arg12[%c0_88, %c32] : memref<256x288xf32, #tpu.memory_space<vmem>>, vector<256x32xf32>
    tpu.vector_store %arg12[%c0_88, %c32], %62 {strides = array<i32>} : memref<256x288xf32, #tpu.memory_space<vmem>>, vector<256x32xf32>,
    %c0_89 = arith.constant 0 : index
    %c1_90 = arith.constant 1 : index
    %c0_91 = arith.constant 0 : index
    %64 = vector.load %arg11[%c0_89, %c1_90, %c0_91] : memref<18x32x32xf32, #tpu.memory_space<vmem>>, vector<16x16x32xf32>
    %65 = vector.shape_cast %64 : vector<16x16x32xf32> to vector<256x32xf32>
    %c0_92 = arith.constant 0 : index
    %c64 = arith.constant 64 : index
    %66 = vector.load %arg12[%c0_92, %c64] : memref<256x288xf32, #tpu.memory_space<vmem>>, vector<256x32xf32>
    tpu.vector_store %arg12[%c0_92, %c64], %65 {strides = array<i32>} : memref<256x288xf32, #tpu.memory_space<vmem>>, vector<256x32xf32>,
    %c1_93 = arith.constant 1 : index
    %c15_94 = arith.constant 15 : index
    %c0_95 = arith.constant 0 : index
    %67 = vector.load %arg11[%c1_93, %c15_94, %c0_95] : memref<18x32x32xf32, #tpu.memory_space<vmem>>, vector<16x16x32xf32>
    %68 = vector.shape_cast %67 : vector<16x16x32xf32> to vector<256x32xf32>
    %c0_96 = arith.constant 0 : index
    %c96 = arith.constant 96 : index
    %69 = vector.load %arg12[%c0_96, %c96] : memref<256x288xf32, #tpu.memory_space<vmem>>, vector<256x32xf32>
    tpu.vector_store %arg12[%c0_96, %c96], %68 {strides = array<i32>} : memref<256x288xf32, #tpu.memory_space<vmem>>, vector<256x32xf32>,
    %c1_97 = arith.constant 1 : index
    %c0_98 = arith.constant 0 : index
    %c0_99 = arith.constant 0 : index
    %70 = vector.load %arg11[%c1_97, %c0_98, %c0_99] : memref<18x32x32xf32, #tpu.memory_space<vmem>>, vector<16x16x32xf32>
    %71 = vector.shape_cast %70 : vector<16x16x32xf32> to vector<256x32xf32>
    %c0_100 = arith.constant 0 : index
    %c128 = arith.constant 128 : index
    %72 = vector.load %arg12[%c0_100, %c128] : memref<256x288xf32, #tpu.memory_space<vmem>>, vector<256x32xf32>
    tpu.vector_store %arg12[%c0_100, %c128], %71 {strides = array<i32>} : memref<256x288xf32, #tpu.memory_space<vmem>>, vector<256x32xf32>,
    %c1_101 = arith.constant 1 : index
    %c1_102 = arith.constant 1 : index
    %c0_103 = arith.constant 0 : index
    %73 = vector.load %arg11[%c1_101, %c1_102, %c0_103] : memref<18x32x32xf32, #tpu.memory_space<vmem>>, vector<16x16x32xf32>
    %74 = vector.shape_cast %73 : vector<16x16x32xf32> to vector<256x32xf32>
    %c0_104 = arith.constant 0 : index
    %c160 = arith.constant 160 : index
    %75 = vector.load %arg12[%c0_104, %c160] : memref<256x288xf32, #tpu.memory_space<vmem>>, vector<256x32xf32>
    tpu.vector_store %arg12[%c0_104, %c160], %74 {strides = array<i32>} : memref<256x288xf32, #tpu.memory_space<vmem>>, vector<256x32xf32>,
    %c2_105 = arith.constant 2 : index
    %c15_106 = arith.constant 15 : index
    %c0_107 = arith.constant 0 : index
    %76 = vector.load %arg11[%c2_105, %c15_106, %c0_107] : memref<18x32x32xf32, #tpu.memory_space<vmem>>, vector<16x16x32xf32>
    %77 = vector.shape_cast %76 : vector<16x16x32xf32> to vector<256x32xf32>
    %c0_108 = arith.constant 0 : index
    %c192 = arith.constant 192 : index
    %78 = vector.load %arg12[%c0_108, %c192] : memref<256x288xf32, #tpu.memory_space<vmem>>, vector<256x32xf32>
    tpu.vector_store %arg12[%c0_108, %c192], %77 {strides = array<i32>} : memref<256x288xf32, #tpu.memory_space<vmem>>, vector<256x32xf32>,
    %c2_109 = arith.constant 2 : index
    %c0_110 = arith.constant 0 : index
    %c0_111 = arith.constant 0 : index
    %79 = vector.load %arg11[%c2_109, %c0_110, %c0_111] : memref<18x32x32xf32, #tpu.memory_space<vmem>>, vector<16x16x32xf32>
    %80 = vector.shape_cast %79 : vector<16x16x32xf32> to vector<256x32xf32>
    %c0_112 = arith.constant 0 : index
    %c224 = arith.constant 224 : index
    %81 = vector.load %arg12[%c0_112, %c224] : memref<256x288xf32, #tpu.memory_space<vmem>>, vector<256x32xf32>
    tpu.vector_store %arg12[%c0_112, %c224], %80 {strides = array<i32>} : memref<256x288xf32, #tpu.memory_space<vmem>>, vector<256x32xf32>,
    %c2_113 = arith.constant 2 : index
    %c1_114 = arith.constant 1 : index
    %c0_115 = arith.constant 0 : index
    %82 = vector.load %arg11[%c2_113, %c1_114, %c0_115] : memref<18x32x32xf32, #tpu.memory_space<vmem>>, vector<16x16x32xf32>
    %83 = vector.shape_cast %82 : vector<16x16x32xf32> to vector<256x32xf32>
    %c0_116 = arith.constant 0 : index
    %c256 = arith.constant 256 : index
    %84 = vector.load %arg12[%c0_116, %c256] : memref<256x288xf32, #tpu.memory_space<vmem>>, vector<256x32xf32>
    tpu.vector_store %arg12[%c0_116, %c256], %83 {strides = array<i32>} : memref<256x288xf32, #tpu.memory_space<vmem>>, vector<256x32xf32>,
    %c0_117 = arith.constant 0 : index
    %c0_118 = arith.constant 0 : index
    %85 = vector.load %arg12[%c0_117, %c0_118] : memref<256x288xf32, #tpu.memory_space<vmem>>, vector<256x288xf32>
    %c0_119 = arith.constant 0 : index
    %c0_120 = arith.constant 0 : index
    %86 = vector.load %arg4[%c0_119, %c0_120] : memref<288x32xf32, #tpu.memory_space<vmem>>, vector<288x32xf32>
    %cst_121 = arith.constant dense<0.000000e+00> : vector<256x32xf32>
    %87 = tpu.matmul %85, %86, %cst_121 {dimension_numbers = #tpu.dot_dimension_numbers<[1], [0], [0], [1], [0, 0, 1, 1], [], []>} : vector<256x288xf32>, vector<288x32xf32>, vector<256x32xf32> -> vector<256x32xf32>
    %c0_122 = arith.constant 0 : index
    %c0_123 = arith.constant 0 : index
    %88 = vector.load %arg5[%c0_122, %c0_123] : memref<1x32xf32, #tpu.memory_space<vmem>>, vector<1x32xf32>
    %89 = vector.broadcast %88 : vector<1x32xf32> to vector<256x32xf32>
    %90 = arith.addf %87, %89 : vector<256x32xf32>
    %cst_124 = arith.constant 0.000000e+00 : f32
    %91 = vector.broadcast %cst_124 : f32 to vector<256x32xf32>
    %92 = arith.maximumf %90, %91 : vector<256x32xf32>
    %93 = vector.shape_cast %92 : vector<256x32xf32> to vector<16x16x32xf32>
    %c1_125 = arith.constant 1 : index
    %c0_126 = arith.constant 0 : index
    %c0_127 = arith.constant 0 : index
    %94 = vector.load %arg11[%c1_125, %c0_126, %c0_127] : memref<18x32x32xf32, #tpu.memory_space<vmem>>, vector<16x16x32xf32>
    tpu.vector_store %arg11[%c1_125, %c0_126, %c0_127], %93 {strides = array<i32>} : memref<18x32x32xf32, #tpu.memory_space<vmem>>, vector<16x16x32xf32>,
    %95 = vector.extract_strided_slice %93 {offsets = [15, 0, 0], sizes = [1, 16, 32], strides = [1, 1, 1]} : vector<16x16x32xf32> to vector<1x16x32xf32>
    %c0_128 = arith.constant 0 : index
    %c0_129 = arith.constant 0 : index
    %c0_130 = arith.constant 0 : index
    %96 = vector.load %arg11[%c0_128, %c0_129, %c0_130] : memref<18x32x32xf32, #tpu.memory_space<vmem>>, vector<1x16x32xf32>
    tpu.vector_store %arg11[%c0_128, %c0_129, %c0_130], %95 {strides = array<i32>} : memref<18x32x32xf32, #tpu.memory_space<vmem>>, vector<1x16x32xf32>,
    %97 = vector.extract_strided_slice %93 {offsets = [0, 0, 0], sizes = [1, 16, 32], strides = [1, 1, 1]} : vector<16x16x32xf32> to vector<1x16x32xf32>
    %c17_131 = arith.constant 17 : index
    %c0_132 = arith.constant 0 : index
    %c0_133 = arith.constant 0 : index
    %98 = vector.load %arg11[%c17_131, %c0_132, %c0_133] : memref<18x32x32xf32, #tpu.memory_space<vmem>>, vector<1x16x32xf32>
    tpu.vector_store %arg11[%c17_131, %c0_132, %c0_133], %97 {strides = array<i32>} : memref<18x32x32xf32, #tpu.memory_space<vmem>>, vector<1x16x32xf32>,
    %c1_134 = arith.constant 1 : index
    %c16_135 = arith.constant 16 : index
    %c0_136 = arith.constant 0 : index
    %99 = vector.load %arg11[%c1_134, %c16_135, %c0_136] : memref<18x32x32xf32, #tpu.memory_space<vmem>>, vector<16x16x32xf32>
    tpu.vector_store %arg11[%c1_134, %c16_135, %c0_136], %93 {strides = array<i32>} : memref<18x32x32xf32, #tpu.memory_space<vmem>>, vector<16x16x32xf32>,
    %100 = vector.extract_strided_slice %93 {offsets = [15, 0, 0], sizes = [1, 16, 32], strides = [1, 1, 1]} : vector<16x16x32xf32> to vector<1x16x32xf32>
    %c0_137 = arith.constant 0 : index
    %c16_138 = arith.constant 16 : index
    %c0_139 = arith.constant 0 : index
    %101 = vector.load %arg11[%c0_137, %c16_138, %c0_139] : memref<18x32x32xf32, #tpu.memory_space<vmem>>, vector<1x16x32xf32>
    tpu.vector_store %arg11[%c0_137, %c16_138, %c0_139], %100 {strides = array<i32>} : memref<18x32x32xf32, #tpu.memory_space<vmem>>, vector<1x16x32xf32>,
    %102 = vector.extract_strided_slice %93 {offsets = [0, 0, 0], sizes = [1, 16, 32], strides = [1, 1, 1]} : vector<16x16x32xf32> to vector<1x16x32xf32>
    %c17_140 = arith.constant 17 : index
    %c16_141 = arith.constant 16 : index
    %c0_142 = arith.constant 0 : index
    %103 = vector.load %arg11[%c17_140, %c16_141, %c0_142] : memref<18x32x32xf32, #tpu.memory_space<vmem>>, vector<1x16x32xf32>
    tpu.vector_store %arg11[%c17_140, %c16_141, %c0_142], %102 {strides = array<i32>} : memref<18x32x32xf32, #tpu.memory_space<vmem>>, vector<1x16x32xf32>,
    %c0_143 = arith.constant 0 : index
    %c15_144 = arith.constant 15 : index
    %c0_145 = arith.constant 0 : index
    %104 = vector.load %arg11[%c0_143, %c15_144, %c0_145] : memref<18x32x32xf32, #tpu.memory_space<vmem>>, vector<16x16x32xf32>
    %105 = vector.shape_cast %104 : vector<16x16x32xf32> to vector<256x32xf32>
    %c0_146 = arith.constant 0 : index
    %c0_147 = arith.constant 0 : index
    %106 = vector.load %arg12[%c0_146, %c0_147] : memref<256x288xf32, #tpu.memory_space<vmem>>, vector<256x32xf32>
    tpu.vector_store %arg12[%c0_146, %c0_147], %105 {strides = array<i32>} : memref<256x288xf32, #tpu.memory_space<vmem>>, vector<256x32xf32>,
    %c0_148 = arith.constant 0 : index
    %c0_149 = arith.constant 0 : index
    %c0_150 = arith.constant 0 : index
    %107 = vector.load %arg11[%c0_148, %c0_149, %c0_150] : memref<18x32x32xf32, #tpu.memory_space<vmem>>, vector<16x16x32xf32>
    %108 = vector.shape_cast %107 : vector<16x16x32xf32> to vector<256x32xf32>
    %c0_151 = arith.constant 0 : index
    %c32_152 = arith.constant 32 : index
    %109 = vector.load %arg12[%c0_151, %c32_152] : memref<256x288xf32, #tpu.memory_space<vmem>>, vector<256x32xf32>
    tpu.vector_store %arg12[%c0_151, %c32_152], %108 {strides = array<i32>} : memref<256x288xf32, #tpu.memory_space<vmem>>, vector<256x32xf32>,
    %c0_153 = arith.constant 0 : index
    %c1_154 = arith.constant 1 : index
    %c0_155 = arith.constant 0 : index
    %110 = vector.load %arg11[%c0_153, %c1_154, %c0_155] : memref<18x32x32xf32, #tpu.memory_space<vmem>>, vector<16x16x32xf32>
    %111 = vector.shape_cast %110 : vector<16x16x32xf32> to vector<256x32xf32>
    %c0_156 = arith.constant 0 : index
    %c64_157 = arith.constant 64 : index
    %112 = vector.load %arg12[%c0_156, %c64_157] : memref<256x288xf32, #tpu.memory_space<vmem>>, vector<256x32xf32>
    tpu.vector_store %arg12[%c0_156, %c64_157], %111 {strides = array<i32>} : memref<256x288xf32, #tpu.memory_space<vmem>>, vector<256x32xf32>,
    %c1_158 = arith.constant 1 : index
    %c15_159 = arith.constant 15 : index
    %c0_160 = arith.constant 0 : index
    %113 = vector.load %arg11[%c1_158, %c15_159, %c0_160] : memref<18x32x32xf32, #tpu.memory_space<vmem>>, vector<16x16x32xf32>
    %114 = vector.shape_cast %113 : vector<16x16x32xf32> to vector<256x32xf32>
    %c0_161 = arith.constant 0 : index
    %c96_162 = arith.constant 96 : index
    %115 = vector.load %arg12[%c0_161, %c96_162] : memref<256x288xf32, #tpu.memory_space<vmem>>, vector<256x32xf32>
    tpu.vector_store %arg12[%c0_161, %c96_162], %114 {strides = array<i32>} : memref<256x288xf32, #tpu.memory_space<vmem>>, vector<256x32xf32>,
    %c1_163 = arith.constant 1 : index
    %c0_164 = arith.constant 0 : index
    %c0_165 = arith.constant 0 : index
    %116 = vector.load %arg11[%c1_163, %c0_164, %c0_165] : memref<18x32x32xf32, #tpu.memory_space<vmem>>, vector<16x16x32xf32>
    %117 = vector.shape_cast %116 : vector<16x16x32xf32> to vector<256x32xf32>
    %c0_166 = arith.constant 0 : index
    %c128_167 = arith.constant 128 : index
    %118 = vector.load %arg12[%c0_166, %c128_167] : memref<256x288xf32, #tpu.memory_space<vmem>>, vector<256x32xf32>
    tpu.vector_store %arg12[%c0_166, %c128_167], %117 {strides = array<i32>} : memref<256x288xf32, #tpu.memory_space<vmem>>, vector<256x32xf32>,
    %c1_168 = arith.constant 1 : index
    %c1_169 = arith.constant 1 : index
    %c0_170 = arith.constant 0 : index
    %119 = vector.load %arg11[%c1_168, %c1_169, %c0_170] : memref<18x32x32xf32, #tpu.memory_space<vmem>>, vector<16x16x32xf32>
    %120 = vector.shape_cast %119 : vector<16x16x32xf32> to vector<256x32xf32>
    %c0_171 = arith.constant 0 : index
    %c160_172 = arith.constant 160 : index
    %121 = vector.load %arg12[%c0_171, %c160_172] : memref<256x288xf32, #tpu.memory_space<vmem>>, vector<256x32xf32>
    tpu.vector_store %arg12[%c0_171, %c160_172], %120 {strides = array<i32>} : memref<256x288xf32, #tpu.memory_space<vmem>>, vector<256x32xf32>,
    %c2_173 = arith.constant 2 : index
    %c15_174 = arith.constant 15 : index
    %c0_175 = arith.constant 0 : index
    %122 = vector.load %arg11[%c2_173, %c15_174, %c0_175] : memref<18x32x32xf32, #tpu.memory_space<vmem>>, vector<16x16x32xf32>
    %123 = vector.shape_cast %122 : vector<16x16x32xf32> to vector<256x32xf32>
    %c0_176 = arith.constant 0 : index
    %c192_177 = arith.constant 192 : index
    %124 = vector.load %arg12[%c0_176, %c192_177] : memref<256x288xf32, #tpu.memory_space<vmem>>, vector<256x32xf32>
    tpu.vector_store %arg12[%c0_176, %c192_177], %123 {strides = array<i32>} : memref<256x288xf32, #tpu.memory_space<vmem>>, vector<256x32xf32>,
    %c2_178 = arith.constant 2 : index
    %c0_179 = arith.constant 0 : index
    %c0_180 = arith.constant 0 : index
    %125 = vector.load %arg11[%c2_178, %c0_179, %c0_180] : memref<18x32x32xf32, #tpu.memory_space<vmem>>, vector<16x16x32xf32>
    %126 = vector.shape_cast %125 : vector<16x16x32xf32> to vector<256x32xf32>
    %c0_181 = arith.constant 0 : index
    %c224_182 = arith.constant 224 : index
    %127 = vector.load %arg12[%c0_181, %c224_182] : memref<256x288xf32, #tpu.memory_space<vmem>>, vector<256x32xf32>
    tpu.vector_store %arg12[%c0_181, %c224_182], %126 {strides = array<i32>} : memref<256x288xf32, #tpu.memory_space<vmem>>, vector<256x32xf32>,
    %c2_183 = arith.constant 2 : index
    %c1_184 = arith.constant 1 : index
    %c0_185 = arith.constant 0 : index
    %128 = vector.load %arg11[%c2_183, %c1_184, %c0_185] : memref<18x32x32xf32, #tpu.memory_space<vmem>>, vector<16x16x32xf32>
    %129 = vector.shape_cast %128 : vector<16x16x32xf32> to vector<256x32xf32>
    %c0_186 = arith.constant 0 : index
    %c256_187 = arith.constant 256 : index
    %130 = vector.load %arg12[%c0_186, %c256_187] : memref<256x288xf32, #tpu.memory_space<vmem>>, vector<256x32xf32>
    tpu.vector_store %arg12[%c0_186, %c256_187], %129 {strides = array<i32>} : memref<256x288xf32, #tpu.memory_space<vmem>>, vector<256x32xf32>,
    %c0_188 = arith.constant 0 : index
    %c0_189 = arith.constant 0 : index
    %131 = vector.load %arg12[%c0_188, %c0_189] : memref<256x288xf32, #tpu.memory_space<vmem>>, vector<256x288xf32>
    %c0_190 = arith.constant 0 : index
    %c0_191 = arith.constant 0 : index
    %132 = vector.load %arg6[%c0_190, %c0_191] : memref<288x32xf32, #tpu.memory_space<vmem>>, vector<288x32xf32>
    %cst_192 = arith.constant dense<0.000000e+00> : vector<256x32xf32>
    %133 = tpu.matmul %131, %132, %cst_192 {dimension_numbers = #tpu.dot_dimension_numbers<[1], [0], [0], [1], [0, 0, 1, 1], [], []>} : vector<256x288xf32>, vector<288x32xf32>, vector<256x32xf32> -> vector<256x32xf32>
    %c0_193 = arith.constant 0 : index
    %c0_194 = arith.constant 0 : index
    %134 = vector.load %arg7[%c0_193, %c0_194] : memref<1x32xf32, #tpu.memory_space<vmem>>, vector<1x32xf32>
    %135 = vector.broadcast %134 : vector<1x32xf32> to vector<256x32xf32>
    %136 = arith.addf %133, %135 : vector<256x32xf32>
    %cst_195 = arith.constant 0.000000e+00 : f32
    %137 = vector.broadcast %cst_195 : f32 to vector<256x32xf32>
    %138 = arith.maximumf %136, %137 : vector<256x32xf32>
    %c0_196 = arith.constant 0 : index
    %c0_197 = arith.constant 0 : index
    %139 = vector.load %arg8[%c0_196, %c0_197] : memref<1x32xf32, #tpu.memory_space<vmem>>, vector<1x32xf32>
    %cst_198 = arith.constant dense<0.000000e+00> : vector<1x256xf32>
    %140 = tpu.matmul %139, %138, %cst_198 {dimension_numbers = #tpu.dot_dimension_numbers<[1], [1], [0], [0], [0, 0, 1, 0], [], []>} : vector<1x32xf32>, vector<256x32xf32>, vector<1x256xf32> -> vector<1x256xf32>
    %c0_199 = arith.constant 0 : index
    %c0_200 = arith.constant 0 : index
    %141 = vector.load %arg9[%c0_199, %c0_200] : memref<1x1xf32, #tpu.memory_space<vmem>>, vector<1x1xf32>
    %142 = vector.broadcast %141 : vector<1x1xf32> to vector<1x256xf32>
    %143 = arith.addf %140, %142 : vector<1x256xf32>
    %144 = vector.shape_cast %143 : vector<1x256xf32> to vector<1x1x256xf32>
    %c0_201 = arith.constant 0 : index
    %c0_202 = arith.constant 0 : index
    %c0_203 = arith.constant 0 : index
    %145 = vector.load %arg10[%c0_201, %c0_202, %c0_203] : memref<1x1x256xf32, #tpu.memory_space<vmem>>, vector<1x1x256xf32>
    tpu.vector_store %arg10[%c0_201, %c0_202, %c0_203], %144 {strides = array<i32>} : memref<1x1x256xf32, #tpu.memory_space<vmem>>, vector<1x1x256xf32>,
    return
  }
  func.func @transform_0(%arg0: i32) -> (i32, i32, i32, i32) {
    %c0_i32 = arith.constant 0 : i32
    %c0_i32_0 = arith.constant 0 : i32
    %c0_i32_1 = arith.constant 0 : i32
    %c0_i32_2 = arith.constant 0 : i32
    return %arg0, %c0_i32, %c0_i32_0, %c0_i32_1 : i32, i32, i32, i32
  }
  func.func @transform_1(%arg0: i32) -> (i32, i32) {
    %c0_i32 = arith.constant 0 : i32
    %c0_i32_0 = arith.constant 0 : i32
    %c0_i32_1 = arith.constant 0 : i32
    return %c0_i32, %c0_i32_0 : i32, i32
  }
  func.func @transform_2(%arg0: i32) -> (i32, i32) {
    %c0_i32 = arith.constant 0 : i32
    %c0_i32_0 = arith.constant 0 : i32
    %c0_i32_1 = arith.constant 0 : i32
    return %c0_i32, %c0_i32_0 : i32, i32
  }
  func.func @transform_3(%arg0: i32) -> (i32, i32) {
    %c0_i32 = arith.constant 0 : i32
    %c0_i32_0 = arith.constant 0 : i32
    %c0_i32_1 = arith.constant 0 : i32
    return %c0_i32, %c0_i32_0 : i32, i32
  }
  func.func @transform_4(%arg0: i32) -> (i32, i32) {
    %c0_i32 = arith.constant 0 : i32
    %c0_i32_0 = arith.constant 0 : i32
    %c0_i32_1 = arith.constant 0 : i32
    return %c0_i32, %c0_i32_0 : i32, i32
  }
  func.func @transform_5(%arg0: i32) -> (i32, i32) {
    %c0_i32 = arith.constant 0 : i32
    %c0_i32_0 = arith.constant 0 : i32
    %c0_i32_1 = arith.constant 0 : i32
    return %c0_i32, %c0_i32_0 : i32, i32
  }
  func.func @transform_6(%arg0: i32) -> (i32, i32) {
    %c0_i32 = arith.constant 0 : i32
    %c0_i32_0 = arith.constant 0 : i32
    %c0_i32_1 = arith.constant 0 : i32
    return %c0_i32, %c0_i32_0 : i32, i32
  }
  func.func @transform_7(%arg0: i32) -> (i32, i32) {
    %c0_i32 = arith.constant 0 : i32
    %c0_i32_0 = arith.constant 0 : i32
    %c0_i32_1 = arith.constant 0 : i32
    return %c0_i32, %c0_i32_0 : i32, i32
  }
  func.func @transform_8(%arg0: i32) -> (i32, i32) {
    %c0_i32 = arith.constant 0 : i32
    %c0_i32_0 = arith.constant 0 : i32
    %c0_i32_1 = arith.constant 0 : i32
    return %c0_i32, %c0_i32_0 : i32, i32
  }
  func.func @transform_9(%arg0: i32) -> (i32, i32, i32) {
    %c0_i32 = arith.constant 0 : i32
    %c0_i32_0 = arith.constant 0 : i32
    %c0_i32_1 = arith.constant 0 : i32
    return %arg0, %c0_i32, %c0_i32_0 : i32, i32, i32
  }
}

</mosaic_0001>

<llo_original>
// kernel: sparse_binary_generator_forward.1
$region0: #{sparse_binary_generator_forward.1}
  #allocation0 [shape = 'u32[]', space=smem, size = 0x4, offset = 0x4, fixed_abs, tag = 'smem constant byte address 0x4 - core index']
  #allocation1 [shape = 'u32[72,128]{1,0:T(1,128)}', space=vmem, size = 0x9000, scoped, tag = 'internal scratch']
  #allocation2 [shape = 'f32[18,32,32]{2,1,0:T(8,128)}', space=vmem, size = 0x48000, scoped, tag = 'scratch operand']
  #allocation3 [shape = 'f32[256,288]{1,0:T(8,128)}', space=vmem, size = 0x60000, scoped, tag = 'scratch operand']
  #allocation4 [shape = 'f32[1,1]{1,0:T(1,128)S(1)}', space=vmem, size = 0x200, scoped, tag = 'scoped memory for sparse_binary_generator_forward.1']
  %s0 = inlined_call_operand.vmem [shape: f32[2,16,16,1], index: 0, kind: input, shape index: {}]
  %s1 = inlined_call_operand.vmem [shape: f32[9,32], index: 1, kind: input, shape index: {}]
  %s2 = inlined_call_operand.vmem [shape: f32[1,32], index: 2, kind: input, shape index: {}]
  %s3 = inlined_call_operand.vmem [shape: f32[288,32], index: 3, kind: input, shape index: {}]
  %s4 = inlined_call_operand.vmem [shape: f32[1,32], index: 4, kind: input, shape index: {}]
  %s5 = inlined_call_operand.hbm [shape: f32[288,32], index: 5, kind: input, shape index: {}]
  %s6 = inlined_call_operand.vmem [shape: f32[1,32], index: 6, kind: input, shape index: {}]
  %s7 = inlined_call_operand.vmem [shape: f32[1,32], index: 7, kind: input, shape index: {}]
  %s8 = inlined_call_operand.<no memory space> [shape: f32[1,1], index: 8, kind: input, shape index: {}]
  %s9 = inlined_call_operand.vmem [shape: f32[2,1,256], index: 9, kind: output, shape index: {}]
  %s10 = sld [smem:[#allocation0]]
  $region73: #{sparse_binary_generator_forward.1} parent=0
    _
  %s12 = ssub.s32 1, %s10
  %s13 = scalar_select 0, %s12, %s10
  %v14 = vstv %s8
  %15 = vst [vmem:[#allocation4] sm:$0x1] %v14
  $region1: #{sparse_binary_generator_forward.1} parent=0
    #allocation5 [shape = 'u8[147456]{0}', space=vmem, size = 0x24000, scoped, tag = 'input window, operand 5, single buffered']
    #allocation6 [shape = 's32[2]{0}', space=sflag, size = 0x8, scoped, tag = 'scoped memory for sparse_binary_generator_forward.1']
    %16 = vsyncpa [#allocation6], 0
    loop: start=0, step=1, limit=4
    $region2: #{sparse_binary_generator_forward.1} parent=1 // loop_pre_header
      _
    $region3: #{sparse_binary_generator_forward.1} parent=1 // loop_header
      %s18 = sphi 0, %s22
      %p19 = scmp.ge.s32.totalorder %s18, 4
      %s28 = sphi 0, %s30
      %s31 = sphi 0, %s28
      %s32 = sphi 0, %s31
      %s48 = sphi 0, %s32
      %s52 = sphi 0, %s52
      %s54 = sphi 0, %s52
      %s55 = sphi 0, %s54
      %s69 = sphi 0, %s55
      %s73 = sphi 0, %s73
      %s75 = sphi 0, %s73
      %s76 = sphi 0, %s75
      %s90 = sphi 0, %s76
      %s94 = sphi 0, %s94
      %s96 = sphi 0, %s94
      %s97 = sphi 0, %s96
      %s111 = sphi 0, %s97
      %s115 = sphi 0, %s115
      %s117 = sphi 0, %s115
      %s118 = sphi 0, %s117
      %s132 = sphi 0, %s118
      %s136 = sphi 0, %s136
      %s138 = sphi 0, %s136
      %s139 = sphi 0, %s138
      %s153 = sphi 0, %s139
      %s157 = sphi 0, %s157
      %s159 = sphi 0, %s157
      %s160 = sphi 0, %s159
      %s174 = sphi 0, %s160
      %s178 = sphi 0, %s178
      %s180 = sphi 0, %s178
      %s181 = sphi 0, %s180
      %s195 = sphi 0, %s181
      %s199 = sphi 0, %s199
      %s201 = sphi 0, %s199
      %s202 = sphi 0, %s201
      %s216 = sphi 0, %s202
      %s222 = sphi 0, %s224
      %s225 = sphi 0, %s222
      %s226 = sphi 0, %s225
      %s242 = sphi 0, %s226
    $region4: #{sparse_binary_generator_forward.1} parent=1 // loop_header_branch
      %21 = sbr.rel (%p19) target = $region8
    $region5: #{sparse_binary_generator_forward.1} parent=1 // loop_body
      %s23 = ssub.s32 %s18, 1
      %s24 = ssub.s32 %s18, 2
      %s25 = sadd.s32 %s18, 1
      %s26 = ssub.s32 %s18, %s25
      %p27 = scmp.eq.s32.totalorder %s26, 0
      %s29 = sadd.s32 %s28, 1
      %s30 = scalar_select %p27, %s28, %s29
      %p33 = pneg %p27
      %p34 = scmp.eq.s32.totalorder %s18, 1
      %p35 = por %p33, %p34
      %p36 = scmp.ne.s32.totalorder %s28, %s31
      %p37 = scmp.eq.s32.totalorder %s18, 0
      %p38 = por %p36, %p37
      %p39 = scmp.ne.s32.totalorder %s28, %s31
      %p40 = scmp.eq.s32.totalorder %s23, 1
      %p41 = por %p39, %p40
      %p42 = scmp.ne.s32.totalorder %s31, %s32
      %p43 = scmp.eq.s32.totalorder %s23, 0
      %p44 = por %p42, %p43
      %p45 = scmp.ne.s32.totalorder %s31, %s32
      %p46 = scmp.eq.s32.totalorder %s24, 1
      %p47 = por %p45, %p46
      %p49 = scmp.ne.s32.totalorder %s32, %s48
      %p50 = scmp.eq.s32.totalorder %s24, 0
      %p51 = por %p49, %p50
      %s53 = sadd.s32 %s52, 1
      %p56 = scmp.eq.s32.totalorder %s18, 1
      %p57 = scmp.ne.s32.totalorder %s52, %s54
      %p58 = scmp.eq.s32.totalorder %s18, 0
      %p59 = por %p57, %p58
      %p60 = scmp.ne.s32.totalorder %s52, %s54
      %p61 = scmp.eq.s32.totalorder %s23, 1
      %p62 = por %p60, %p61
      %p63 = scmp.ne.s32.totalorder %s54, %s55
      %p64 = scmp.eq.s32.totalorder %s23, 0
      %p65 = por %p63, %p64
      %p66 = scmp.ne.s32.totalorder %s54, %s55
      %p67 = scmp.eq.s32.totalorder %s24, 1
      %p68 = por %p66, %p67
      %p70 = scmp.ne.s32.totalorder %s55, %s69
      %p71 = scmp.eq.s32.totalorder %s24, 0
      %p72 = por %p70, %p71
      %s74 = sadd.s32 %s73, 1
      %p77 = scmp.eq.s32.totalorder %s18, 1
      %p78 = scmp.ne.s32.totalorder %s73, %s75
      %p79 = scmp.eq.s32.totalorder %s18, 0
      %p80 = por %p78, %p79
      %p81 = scmp.ne.s32.totalorder %s73, %s75
      %p82 = scmp.eq.s32.totalorder %s23, 1
      %p83 = por %p81, %p82
      %p84 = scmp.ne.s32.totalorder %s75, %s76
      %p85 = scmp.eq.s32.totalorder %s23, 0
      %p86 = por %p84, %p85
      %p87 = scmp.ne.s32.totalorder %s75, %s76
      %p88 = scmp.eq.s32.totalorder %s24, 1
      %p89 = por %p87, %p88
      %p91 = scmp.ne.s32.totalorder %s76, %s90
      %p92 = scmp.eq.s32.totalorder %s24, 0
      %p93 = por %p91, %p92
      %s95 = sadd.s32 %s94, 1
      %p98 = scmp.eq.s32.totalorder %s18, 1
      %p99 = scmp.ne.s32.totalorder %s94, %s96
      %p100 = scmp.eq.s32.totalorder %s18, 0
      %p101 = por %p99, %p100
      %p102 = scmp.ne.s32.totalorder %s94, %s96
      %p103 = scmp.eq.s32.totalorder %s23, 1
      %p104 = por %p102, %p103
      %p105 = scmp.ne.s32.totalorder %s96, %s97
      %p106 = scmp.eq.s32.totalorder %s23, 0
      %p107 = por %p105, %p106
      %p108 = scmp.ne.s32.totalorder %s96, %s97
      %p109 = scmp.eq.s32.totalorder %s24, 1
      %p110 = por %p108, %p109
      %p112 = scmp.ne.s32.totalorder %s97, %s111
      %p113 = scmp.eq.s32.totalorder %s24, 0
      %p114 = por %p112, %p113
      %s116 = sadd.s32 %s115, 1
      %p119 = scmp.eq.s32.totalorder %s18, 1
      %p120 = scmp.ne.s32.totalorder %s115, %s117
      %p121 = scmp.eq.s32.totalorder %s18, 0
      %p122 = por %p120, %p121
      %p123 = scmp.ne.s32.totalorder %s115, %s117
      %p124 = scmp.eq.s32.totalorder %s23, 1
      %p125 = por %p123, %p124
      %p126 = scmp.ne.s32.totalorder %s117, %s118
      %p127 = scmp.eq.s32.totalorder %s23, 0
      %p128 = por %p126, %p127
      %p129 = scmp.ne.s32.totalorder %s117, %s118
      %p130 = scmp.eq.s32.totalorder %s24, 1
      %p131 = por %p129, %p130
      %p133 = scmp.ne.s32.totalorder %s118, %s132
      %p134 = scmp.eq.s32.totalorder %s24, 0
      %p135 = por %p133, %p134
      %s137 = sadd.s32 %s136, 1
      %p140 = scmp.eq.s32.totalorder %s18, 1
      %p141 = scmp.ne.s32.totalorder %s136, %s138
      %p142 = scmp.eq.s32.totalorder %s18, 0
      %p143 = por %p141, %p142
      %p144 = scmp.ne.s32.totalorder %s136, %s138
      %p145 = scmp.eq.s32.totalorder %s23, 1
      %p146 = por %p144, %p145
      %p147 = scmp.ne.s32.totalorder %s138, %s139
      %p148 = scmp.eq.s32.totalorder %s23, 0
      %p149 = por %p147, %p148
      %p150 = scmp.ne.s32.totalorder %s138, %s139
      %p151 = scmp.eq.s32.totalorder %s24, 1
      %p152 = por %p150, %p151
      %p154 = scmp.ne.s32.totalorder %s139, %s153
      %p155 = scmp.eq.s32.totalorder %s24, 0
      %p156 = por %p154, %p155
      %s158 = sadd.s32 %s157, 1
      %p161 = scmp.eq.s32.totalorder %s18, 1
      %p162 = scmp.ne.s32.totalorder %s157, %s159
      %p163 = scmp.eq.s32.totalorder %s18, 0
      %p164 = por %p162, %p163
      %p165 = scmp.ne.s32.totalorder %s157, %s159
      %p166 = scmp.eq.s32.totalorder %s23, 1
      %p167 = por %p165, %p166
      %p168 = scmp.ne.s32.totalorder %s159, %s160
      %p169 = scmp.eq.s32.totalorder %s23, 0
      %p170 = por %p168, %p169
      %p171 = scmp.ne.s32.totalorder %s159, %s160
      %p172 = scmp.eq.s32.totalorder %s24, 1
      %p173 = por %p171, %p172
      %p175 = scmp.ne.s32.totalorder %s160, %s174
      %p176 = scmp.eq.s32.totalorder %s24, 0
      %p177 = por %p175, %p176
      %s179 = sadd.s32 %s178, 1
      %p182 = scmp.eq.s32.totalorder %s18, 1
      %p183 = scmp.ne.s32.totalorder %s178, %s180
      %p184 = scmp.eq.s32.totalorder %s18, 0
      %p185 = por %p183, %p184
      %p186 = scmp.ne.s32.totalorder %s178, %s180
      %p187 = scmp.eq.s32.totalorder %s23, 1
      %p188 = por %p186, %p187
      %p189 = scmp.ne.s32.totalorder %s180, %s181
      %p190 = scmp.eq.s32.totalorder %s23, 0
      %p191 = por %p189, %p190
      %p192 = scmp.ne.s32.totalorder %s180, %s181
      %p193 = scmp.eq.s32.totalorder %s24, 1
      %p194 = por %p192, %p193
      %p196 = scmp.ne.s32.totalorder %s181, %s195
      %p197 = scmp.eq.s32.totalorder %s24, 0
      %p198 = por %p196, %p197
      %s200 = sadd.s32 %s199, 1
      %p203 = scmp.eq.s32.totalorder %s18, 1
      %p204 = scmp.ne.s32.totalorder %s199, %s201
      %p205 = scmp.eq.s32.totalorder %s18, 0
      %p206 = por %p204, %p205
      %p207 = scmp.ne.s32.totalorder %s199, %s201
      %p208 = scmp.eq.s32.totalorder %s23, 1
      %p209 = por %p207, %p208
      %p210 = scmp.ne.s32.totalorder %s201, %s202
      %p211 = scmp.eq.s32.totalorder %s23, 0
      %p212 = por %p210, %p211
      %p213 = scmp.ne.s32.totalorder %s201, %s202
      %p214 = scmp.eq.s32.totalorder %s24, 1
      %p215 = por %p213, %p214
      %p217 = scmp.ne.s32.totalorder %s202, %s216
      %p218 = scmp.eq.s32.totalorder %s24, 0
      %p219 = por %p217, %p218
      %s220 = ssub.s32 %s18, %s25
      %p221 = scmp.eq.s32.totalorder %s220, 0
      %s223 = sadd.s32 %s222, 1
      %s224 = scalar_select %p221, %s222, %s223
      %p227 = pneg %p221
      %p228 = scmp.eq.s32.totalorder %s18, 1
      %p229 = por %p227, %p228
      %p230 = scmp.ne.s32.totalorder %s222, %s225
      %p231 = scmp.eq.s32.totalorder %s18, 0
      %p232 = por %p230, %p231
      %p233 = scmp.ne.s32.totalorder %s222, %s225
      %p234 = scmp.eq.s32.totalorder %s23, 1
      %p235 = por %p233, %p234
      %p236 = scmp.ne.s32.totalorder %s225, %s226
      %p237 = scmp.eq.s32.totalorder %s23, 0
      %p238 = por %p236, %p237
      %p239 = scmp.ne.s32.totalorder %s225, %s226
      %p240 = scmp.eq.s32.totalorder %s24, 1
      %p241 = por %p239, %p240
      %p243 = scmp.ne.s32.totalorder %s226, %s242
      %p244 = scmp.eq.s32.totalorder %s24, 0
      %p245 = por %p243, %p244
      %p246 = scmp.le.s32.totalorder 1, %s18
      %p247 = scmp.lt.s32.totalorder %s18, 3
      %p248 = pnand %p246, %p247
      %p249 = pneg %p248
      // Predicated region
      $region9: #{sparse_binary_generator_forward.1} parent=5 // pred_check
        _
      $region10: #{sparse_binary_generator_forward.1} parent=5 // pred_check_branch
        %251 = sbr.rel (%p248) target = $region12
      $region11: #{sparse_binary_generator_forward.1} parent=5 // pred_region
        %s252 = ssub.s32 %s18, 1
        // Predicated region
        $region13: #{sparse_binary_generator_forward.1} parent=11 // pred_check
          %p253 = pneg %p65
        $region14: #{sparse_binary_generator_forward.1} parent=11 // pred_check_branch
          %255 = sbr.rel (%p253) target = $region16
        $region15: #{sparse_binary_generator_forward.1} parent=11 // pred_region
          _
        $region16: #{sparse_binary_generator_forward.1} parent=11 // pred_fallthru
          _
        // Predicated region
        $region17: #{sparse_binary_generator_forward.1} parent=11 // pred_check
          %p256 = pneg %p86
        $region18: #{sparse_binary_generator_forward.1} parent=11 // pred_check_branch
          %258 = sbr.rel (%p256) target = $region20
        $region19: #{sparse_binary_generator_forward.1} parent=11 // pred_region
          _
        $region20: #{sparse_binary_generator_forward.1} parent=11 // pred_fallthru
          _
        // Predicated region
        $region21: #{sparse_binary_generator_forward.1} parent=11 // pred_check
          %p259 = pneg %p107
        $region22: #{sparse_binary_generator_forward.1} parent=11 // pred_check_branch
          %261 = sbr.rel (%p259) target = $region24
        $region23: #{sparse_binary_generator_forward.1} parent=11 // pred_region
          _
        $region24: #{sparse_binary_generator_forward.1} parent=11 // pred_fallthru
          _
        // Predicated region
        $region25: #{sparse_binary_generator_forward.1} parent=11 // pred_check
          %p262 = pneg %p128
        $region26: #{sparse_binary_generator_forward.1} parent=11 // pred_check_branch
          %264 = sbr.rel (%p262) target = $region28
        $region27: #{sparse_binary_generator_forward.1} parent=11 // pred_region
          _
        $region28: #{sparse_binary_generator_forward.1} parent=11 // pred_fallthru
          _
        // Predicated region
        $region29: #{sparse_binary_generator_forward.1} parent=11 // pred_check
          %p265 = pneg %p149
        $region30: #{sparse_binary_generator_forward.1} parent=11 // pred_check_branch
          %267 = sbr.rel (%p265) target = $region32
        $region31: #{sparse_binary_generator_forward.1} parent=11 // pred_region
          %269 = vsyncadd [#allocation6], 0
          %s270 = sshll.u32 %s5, 4
          %s271 = int_to_ptr.hbm [resolvable:$true] %s270
          %s272 = sshll.u32 [#allocation5], 4
          %s273 = int_to_ptr.vmem [resolvable:$true] %s272
          %278 = dma.hbm_to_vmem [thread:$0]  %s271, 4608, %s273, [#allocation6], 128, 128, 8
        $region32: #{sparse_binary_generator_forward.1} parent=11 // pred_fallthru
          _
        // Predicated region
        $region33: #{sparse_binary_generator_forward.1} parent=11 // pred_check
          %p279 = pneg %p170
        $region34: #{sparse_binary_generator_forward.1} parent=11 // pred_check_branch
          %281 = sbr.rel (%p279) target = $region36
        $region35: #{sparse_binary_generator_forward.1} parent=11 // pred_region
          _
        $region36: #{sparse_binary_generator_forward.1} parent=11 // pred_fallthru
          _
        // Predicated region
        $region37: #{sparse_binary_generator_forward.1} parent=11 // pred_check
          %p282 = pneg %p191
        $region38: #{sparse_binary_generator_forward.1} parent=11 // pred_check_branch
          %284 = sbr.rel (%p282) target = $region40
        $region39: #{sparse_binary_generator_forward.1} parent=11 // pred_region
          _
        $region40: #{sparse_binary_generator_forward.1} parent=11 // pred_fallthru
          _
        // Predicated region
        $region41: #{sparse_binary_generator_forward.1} parent=11 // pred_check
          %p285 = pneg %p212
        $region42: #{sparse_binary_generator_forward.1} parent=11 // pred_check_branch
          %287 = sbr.rel (%p285) target = $region44
        $region43: #{sparse_binary_generator_forward.1} parent=11 // pred_region
          _
        $region44: #{sparse_binary_generator_forward.1} parent=11 // pred_fallthru
          _
      $region12: #{sparse_binary_generator_forward.1} parent=5 // pred_fallthru
        _
      %p288 = scmp.lt.s32.totalorder %s18, 2
      // Predicated region
      $region45: #{sparse_binary_generator_forward.1} parent=5 // pred_check
        %p289 = pneg %p288
      $region46: #{sparse_binary_generator_forward.1} parent=5 // pred_check_branch
        %291 = sbr.rel (%p289) target = $region48
      $region47: #{sparse_binary_generator_forward.1} parent=5 // pred_region
        // Predicated region
        $region49: #{sparse_binary_generator_forward.1} parent=47 // pred_check
          %p292 = pneg %p38
        $region50: #{sparse_binary_generator_forward.1} parent=47 // pred_check_branch
          %294 = sbr.rel (%p292) target = $region52
        $region51: #{sparse_binary_generator_forward.1} parent=47 // pred_region
          %p295 = scmp.lt.s32.totalorder %s18, 1
          %s296 = scalar_select %p295, %s18, 1
          %s297 = smul.addr %s296, 32
          %s298 = smul.addr %s297, 8
          %s299 = scalar_lea.vmem %s0, %s298
        $region52: #{sparse_binary_generator_forward.1} parent=47 // pred_fallthru
          _
      $region48: #{sparse_binary_generator_forward.1} parent=5 // pred_fallthru
        _
      %p300 = scmp.le.s32.totalorder 1, %s18
      %p301 = scmp.lt.s32.totalorder %s18, 3
      %p302 = pnand %p300, %p301
      %p303 = pneg %p302
      // Predicated region
      $region53: #{sparse_binary_generator_forward.1} parent=5 // pred_check
        _
      $region54: #{sparse_binary_generator_forward.1} parent=5 // pred_check_branch
        %305 = sbr.rel (%p302) target = $region56
      $region55: #{sparse_binary_generator_forward.1} parent=5 // pred_region
        %s306 = ssub.s32 %s18, 1
        // Predicated region
        $region57: #{sparse_binary_generator_forward.1} parent=55 // pred_check
          %p307 = pneg %p149
        $region58: #{sparse_binary_generator_forward.1} parent=55 // pred_check_branch
          %309 = sbr.rel (%p307) target = $region60
        $region59: #{sparse_binary_generator_forward.1} parent=55 // pred_region
          %311 = dma.done [#allocation6], 4608
        $region60: #{sparse_binary_generator_forward.1} parent=55 // pred_fallthru
          _
        %p312 = scmp.lt.s32.totalorder %s23, 1
        %s313 = scalar_select %p312, %s23, 1
        %s314 = smul.addr %s313, 32
        %s315 = smul.addr %s314, 8
        %s316 = scalar_lea.vmem %s0, %s315
        %p317 = pneg %p44
        %p318 = pneg %p41
        %p319 = pneg %p65
        %p320 = pneg %p62
        %p321 = pneg %p86
        %p322 = pneg %p83
        %p323 = pneg %p107
        %p324 = pneg %p104
        %p325 = pneg %p128
        %p326 = pneg %p125
        %p327 = pneg %p149
        %p328 = pneg %p146
        %p329 = pneg %p170
        %p330 = pneg %p167
        %p331 = pneg %p191
        %p332 = pneg %p188
        %p333 = pneg %p212
        %p334 = pneg %p209
        %p335 = pneg %p238
        %p336 = pneg %p235
        %p337 = scmp.lt.s32.totalorder %s23, 1
        %s338 = scalar_select %p337, %s23, 1
        %s339 = smul.addr %s338, 2
        %s340 = scalar_lea.vmem %s9, %s339
        %p341 = scmp.lt.s32.totalorder %s23, 1
        %s342 = scalar_select %p341, %s23, 1
        %s343 = smul.addr %s342, 32
        %s344 = smul.addr %s343, 8
        %s345 = scalar_lea.vmem %s0, %s344
        %p346 = scmp.lt.s32.totalorder %s23, 1
        %s347 = scalar_select %p346, %s23, 1
        %s348 = smul.addr %s347, 2
        %s349 = scalar_lea.vmem %s9, %s348
        %v350 = vld [vmem:[%s345] sm:$0xff]
        %v351 = vld [vmem:[%s345 + $0x8] sm:$0xff]
        %v352 = vld [vmem:[%s345 + $0x10] sm:$0xff]
        %v353 = vld [vmem:[%s345 + $0x18] sm:$0xff]
        %v354 = vld [vmem:[%s345 + $0x20] sm:$0xff]
        %v355 = vld [vmem:[%s345 + $0x28] sm:$0xff]
        %v356 = vld [vmem:[%s345 + $0x30] sm:$0xff]
        %v357 = vld [vmem:[%s345 + $0x38] sm:$0xff]
        %v358 = vld [vmem:[%s345 + $0x40] sm:$0xff]
        %v359 = vld [vmem:[%s345 + $0x48] sm:$0xff]
        %v360 = vld [vmem:[%s345 + $0x50] sm:$0xff]
        %v361 = vld [vmem:[%s345 + $0x58] sm:$0xff]
        %v362 = vld [vmem:[%s345 + $0x60] sm:$0xff]
        %v363 = vld [vmem:[%s345 + $0x68] sm:$0xff]
        %v364 = vld [vmem:[%s345 + $0x70] sm:$0xff]
        %v365 = vld [vmem:[%s345 + $0x78] sm:$0xff]
        %v366 = vld [vmem:[%s345 + $0x80] sm:$0xff]
        %v367 = vld [vmem:[%s345 + $0x88] sm:$0xff]
        %v368 = vld [vmem:[%s345 + $0x90] sm:$0xff]
        %v369 = vld [vmem:[%s345 + $0x98] sm:$0xff]
        %v370 = vld [vmem:[%s345 + $0xa0] sm:$0xff]
        %v371 = vld [vmem:[%s345 + $0xa8] sm:$0xff]
        %v372 = vld [vmem:[%s345 + $0xb0] sm:$0xff]
        %v373 = vld [vmem:[%s345 + $0xb8] sm:$0xff]
        %v374 = vld [vmem:[%s345 + $0xc0] sm:$0xff]
        %v375 = vld [vmem:[%s345 + $0xc8] sm:$0xff]
        %v376 = vld [vmem:[%s345 + $0xd0] sm:$0xff]
        %v377 = vld [vmem:[%s345 + $0xd8] sm:$0xff]
        %v378 = vld [vmem:[%s345 + $0xe0] sm:$0xff]
        %v379 = vld [vmem:[%s345 + $0xe8] sm:$0xff]
        %v380 = vld [vmem:[%s345 + $0xf0] sm:$0xff]
        %v381 = vld [vmem:[%s345 + $0xf8] sm:$0xff]
        %s382 = scalar_lea.vmem [#allocation2], 32
        %vm383 = vcmask 7168
        %384 = vst.msk [vmem:[%s382] sm:$0xff] %vm383, %v350
        %385 = vst.msk [vmem:[%s382 + $0x8] sm:$0xff] %vm383, %v351
        %386 = vst.msk [vmem:[%s382 + $0x20] sm:$0xff] %vm383, %v352
        %387 = vst.msk [vmem:[%s382 + $0x28] sm:$0xff] %vm383, %v353
        %388 = vst.msk [vmem:[%s382 + $0x40] sm:$0xff] %vm383, %v354
        %389 = vst.msk [vmem:[%s382 + $0x48] sm:$0xff] %vm383, %v355
        %390 = vst.msk [vmem:[%s382 + $0x60] sm:$0xff] %vm383, %v356
        %391 = vst.msk [vmem:[%s382 + $0x68] sm:$0xff] %vm383, %v357
        %392 = vst.msk [vmem:[%s382 + $0x80] sm:$0xff] %vm383, %v358
        %393 = vst.msk [vmem:[%s382 + $0x88] sm:$0xff] %vm383, %v359
        %394 = vst.msk [vmem:[%s382 + $0xa0] sm:$0xff] %vm383, %v360
        %395 = vst.msk [vmem:[%s382 + $0xa8] sm:$0xff] %vm383, %v361
        %396 = vst.msk [vmem:[%s382 + $0xc0] sm:$0xff] %vm383, %v362
        %397 = vst.msk [vmem:[%s382 + $0xc8] sm:$0xff] %vm383, %v363
        %398 = vst.msk [vmem:[%s382 + $0xe0] sm:$0xff] %vm383, %v364
        %399 = vst.msk [vmem:[%s382 + $0xe8] sm:$0xff] %vm383, %v365
        %400 = vst.msk [vmem:[%s382 + $0x100] sm:$0xff] %vm383, %v366
        %401 = vst.msk [vmem:[%s382 + $0x108] sm:$0xff] %vm383, %v367
        %402 = vst.msk [vmem:[%s382 + $0x120] sm:$0xff] %vm383, %v368
        %403 = vst.msk [vmem:[%s382 + $0x128] sm:$0xff] %vm383, %v369
        %404 = vst.msk [vmem:[%s382 + $0x140] sm:$0xff] %vm383, %v370
        %405 = vst.msk [vmem:[%s382 + $0x148] sm:$0xff] %vm383, %v371
        %406 = vst.msk [vmem:[%s382 + $0x160] sm:$0xff] %vm383, %v372
        %407 = vst.msk [vmem:[%s382 + $0x168] sm:$0xff] %vm383, %v373
        %408 = vst.msk [vmem:[%s382 + $0x180] sm:$0xff] %vm383, %v374
        %409 = vst.msk [vmem:[%s382 + $0x188] sm:$0xff] %vm383, %v375
        %410 = vst.msk [vmem:[%s382 + $0x1a0] sm:$0xff] %vm383, %v376
        %411 = vst.msk [vmem:[%s382 + $0x1a8] sm:$0xff] %vm383, %v377
        %412 = vst.msk [vmem:[%s382 + $0x1c0] sm:$0xff] %vm383, %v378
        %413 = vst.msk [vmem:[%s382 + $0x1c8] sm:$0xff] %vm383, %v379
        %414 = vst.msk [vmem:[%s382 + $0x1e0] sm:$0xff] %vm383, %v380
        %415 = vst.msk [vmem:[%s382 + $0x1e8] sm:$0xff] %vm383, %v381
        %416 = vst.msk [vmem:[#allocation2] sm:$0xff] %vm383, %v380
        %417 = vst.msk [vmem:[#allocation2 + $0x8] sm:$0xff] %vm383, %v381
        %s418 = scalar_lea.vmem [#allocation2], 544
        %419 = vst.msk [vmem:[%s418] sm:$0xff] %vm383, %v350
        %420 = vst.msk [vmem:[%s418 + $0x8] sm:$0xff] %vm383, %v351
        %421 = vst.msk [vmem:[%s382 + $0x10] sm:$0xff] %vm383, %v350
        %422 = vst.msk [vmem:[%s382 + $0x18] sm:$0xff] %vm383, %v351
        %423 = vst.msk [vmem:[%s382 + $0x30] sm:$0xff] %vm383, %v352
        %424 = vst.msk [vmem:[%s382 + $0x38] sm:$0xff] %vm383, %v353
        %425 = vst.msk [vmem:[%s382 + $0x50] sm:$0xff] %vm383, %v354
        %426 = vst.msk [vmem:[%s382 + $0x58] sm:$0xff] %vm383, %v355
        %427 = vst.msk [vmem:[%s382 + $0x70] sm:$0xff] %vm383, %v356
        %428 = vst.msk [vmem:[%s382 + $0x78] sm:$0xff] %vm383, %v357
        %429 = vst.msk [vmem:[%s382 + $0x90] sm:$0xff] %vm383, %v358
        %430 = vst.msk [vmem:[%s382 + $0x98] sm:$0xff] %vm383, %v359
        %431 = vst.msk [vmem:[%s382 + $0xb0] sm:$0xff] %vm383, %v360
        %432 = vst.msk [vmem:[%s382 + $0xb8] sm:$0xff] %vm383, %v361
        %433 = vst.msk [vmem:[%s382 + $0xd0] sm:$0xff] %vm383, %v362
        %434 = vst.msk [vmem:[%s382 + $0xd8] sm:$0xff] %vm383, %v363
        %435 = vst.msk [vmem:[%s382 + $0xf0] sm:$0xff] %vm383, %v364
        %436 = vst.msk [vmem:[%s382 + $0xf8] sm:$0xff] %vm383, %v365
        %437 = vst.msk [vmem:[%s382 + $0x110] sm:$0xff] %vm383, %v366
        %438 = vst.msk [vmem:[%s382 + $0x118] sm:$0xff] %vm383, %v367
        %439 = vst.msk [vmem:[%s382 + $0x130] sm:$0xff] %vm383, %v368
        %440 = vst.msk [vmem:[%s382 + $0x138] sm:$0xff] %vm383, %v369
        %441 = vst.msk [vmem:[%s382 + $0x150] sm:$0xff] %vm383, %v370
        %442 = vst.msk [vmem:[%s382 + $0x158] sm:$0xff] %vm383, %v371
        %443 = vst.msk [vmem:[%s382 + $0x170] sm:$0xff] %vm383, %v372
        %444 = vst.msk [vmem:[%s382 + $0x178] sm:$0xff] %vm383, %v373
        %445 = vst.msk [vmem:[%s382 + $0x190] sm:$0xff] %vm383, %v374
        %446 = vst.msk [vmem:[%s382 + $0x198] sm:$0xff] %vm383, %v375
        %447 = vst.msk [vmem:[%s382 + $0x1b0] sm:$0xff] %vm383, %v376
        %448 = vst.msk [vmem:[%s382 + $0x1b8] sm:$0xff] %vm383, %v377
        %449 = vst.msk [vmem:[%s382 + $0x1d0] sm:$0xff] %vm383, %v378
        %450 = vst.msk [vmem:[%s382 + $0x1d8] sm:$0xff] %vm383, %v379
        %451 = vst.msk [vmem:[%s382 + $0x1f0] sm:$0xff] %vm383, %v380
        %452 = vst.msk [vmem:[%s382 + $0x1f8] sm:$0xff] %vm383, %v381
        %453 = vst.msk [vmem:[#allocation2 + $0x10] sm:$0xff] %vm383, %v380
        %454 = vst.msk [vmem:[#allocation2 + $0x18] sm:$0xff] %vm383, %v381
        %455 = vst.msk [vmem:[%s418 + $0x10] sm:$0xff] %vm383, %v350
        %456 = vst.msk [vmem:[%s418 + $0x18] sm:$0xff] %vm383, %v351
        %v457 = vld [vmem:[#allocation2 + $0xf] sm:$0xff]
        %v458 = vld [vmem:[#allocation2 + $0x17] sm:$0xff]
        %v459 = vld [vmem:[#allocation2 + $0x2f] sm:$0xff]
        %v460 = vld [vmem:[#allocation2 + $0x37] sm:$0xff]
        %v461 = vld [vmem:[#allocation2 + $0x4f] sm:$0xff]
        %v462 = vld [vmem:[#allocation2 + $0x57] sm:$0xff]
        %v463 = vld [vmem:[#allocation2 + $0x6f] sm:$0xff]
        %v464 = vld [vmem:[#allocation2 + $0x77] sm:$0xff]
        %v465 = vld [vmem:[#allocation2 + $0x8f] sm:$0xff]
        %v466 = vld [vmem:[#allocation2 + $0x97] sm:$0xff]
        %v467 = vld [vmem:[#allocation2 + $0xaf] sm:$0xff]
        %v468 = vld [vmem:[#allocation2 + $0xb7] sm:$0xff]
        %v469 = vld [vmem:[#allocation2 + $0xcf] sm:$0xff]
        %v470 = vld [vmem:[#allocation2 + $0xd7] sm:$0xff]
        %v471 = vld [vmem:[#allocation2 + $0xef] sm:$0xff]
        %v472 = vld [vmem:[#allocation2 + $0xf7] sm:$0xff]
        %v473 = vld [vmem:[#allocation2 + $0x10f] sm:$0xff]
        %v474 = vld [vmem:[#allocation2 + $0x117] sm:$0xff]
        %v475 = vld [vmem:[#allocation2 + $0x12f] sm:$0xff]
        %v476 = vld [vmem:[#allocation2 + $0x137] sm:$0xff]
        %v477 = vld [vmem:[#allocation2 + $0x14f] sm:$0xff]
        %v478 = vld [vmem:[#allocation2 + $0x157] sm:$0xff]
        %v479 = vld [vmem:[#allocation2 + $0x16f] sm:$0xff]
        %v480 = vld [vmem:[#allocation2 + $0x177] sm:$0xff]
        %v481 = vld [vmem:[#allocation2 + $0x18f] sm:$0xff]
        %v482 = vld [vmem:[#allocation2 + $0x197] sm:$0xff]
        %v483 = vld [vmem:[#allocation2 + $0x1af] sm:$0xff]
        %v484 = vld [vmem:[#allocation2 + $0x1b7] sm:$0xff]
        %v485 = vld [vmem:[#allocation2 + $0x1cf] sm:$0xff]
        %v486 = vld [vmem:[#allocation2 + $0x1d7] sm:$0xff]
        %v487 = vld [vmem:[#allocation2 + $0x1ef] sm:$0xff]
        %v488 = vld [vmem:[#allocation2 + $0x1f7] sm:$0xff]
        %489 = vst.msk [vmem:[#allocation3] sm:$0xff] %vm383, %v457
        %490 = vst.msk [vmem:[#allocation3 + $0x18] sm:$0xff] %vm383, %v458
        %491 = vst.msk [vmem:[#allocation3 + $0x30] sm:$0xff] %vm383, %v459
        %492 = vst.msk [vmem:[#allocation3 + $0x48] sm:$0xff] %vm383, %v460
        %493 = vst.msk [vmem:[#allocation3 + $0x60] sm:$0xff] %vm383, %v461
        %494 = vst.msk [vmem:[#allocation3 + $0x78] sm:$0xff] %vm383, %v462
        %495 = vst.msk [vmem:[#allocation3 + $0x90] sm:$0xff] %vm383, %v463
        %496 = vst.msk [vmem:[#allocation3 + $0xa8] sm:$0xff] %vm383, %v464
        %497 = vst.msk [vmem:[#allocation3 + $0xc0] sm:$0xff] %vm383, %v465
        %498 = vst.msk [vmem:[#allocation3 + $0xd8] sm:$0xff] %vm383, %v466
        %499 = vst.msk [vmem:[#allocation3 + $0xf0] sm:$0xff] %vm383, %v467
        %500 = vst.msk [vmem:[#allocation3 + $0x108] sm:$0xff] %vm383, %v468
        %501 = vst.msk [vmem:[#allocation3 + $0x120] sm:$0xff] %vm383, %v469
        %502 = vst.msk [vmem:[#allocation3 + $0x138] sm:$0xff] %vm383, %v470
        %503 = vst.msk [vmem:[#allocation3 + $0x150] sm:$0xff] %vm383, %v471
        %504 = vst.msk [vmem:[#allocation3 + $0x168] sm:$0xff] %vm383, %v472
        %505 = vst.msk [vmem:[#allocation3 + $0x180] sm:$0xff] %vm383, %v473
        %506 = vst.msk [vmem:[#allocation3 + $0x198] sm:$0xff] %vm383, %v474
        %507 = vst.msk [vmem:[#allocation3 + $0x1b0] sm:$0xff] %vm383, %v475
        %508 = vst.msk [vmem:[#allocation3 + $0x1c8] sm:$0xff] %vm383, %v476
        %509 = vst.msk [vmem:[#allocation3 + $0x1e0] sm:$0xff] %vm383, %v477
        %510 = vst.msk [vmem:[#allocation3 + $0x1f8] sm:$0xff] %vm383, %v478
        %511 = vst.msk [vmem:[#allocation3 + $0x210] sm:$0xff] %vm383, %v479
        %512 = vst.msk [vmem:[#allocation3 + $0x228] sm:$0xff] %vm383, %v480
        %513 = vst.msk [vmem:[#allocation3 + $0x240] sm:$0xff] %vm383, %v481
        %514 = vst.msk [vmem:[#allocation3 + $0x258] sm:$0xff] %vm383, %v482
        %515 = vst.msk [vmem:[#allocation3 + $0x270] sm:$0xff] %vm383, %v483
        %516 = vst.msk [vmem:[#allocation3 + $0x288] sm:$0xff] %vm383, %v484
        %517 = vst.msk [vmem:[#allocation3 + $0x2a0] sm:$0xff] %vm383, %v485
        %518 = vst.msk [vmem:[#allocation3 + $0x2b8] sm:$0xff] %vm383, %v486
        %519 = vst.msk [vmem:[#allocation3 + $0x2d0] sm:$0xff] %vm383, %v487
        %520 = vst.msk [vmem:[#allocation3 + $0x2e8] sm:$0xff] %vm383, %v488
        %v521 = vld [vmem:[#allocation2] sm:$0xff]
        %v522 = vld [vmem:[#allocation2 + $0x8] sm:$0xff]
        %v523 = vld [vmem:[#allocation2 + $0x20] sm:$0xff]
        %v524 = vld [vmem:[#allocation2 + $0x28] sm:$0xff]
        %v525 = vld [vmem:[#allocation2 + $0x40] sm:$0xff]
        %v526 = vld [vmem:[#allocation2 + $0x48] sm:$0xff]
        %v527 = vld [vmem:[#allocation2 + $0x60] sm:$0xff]
        %v528 = vld [vmem:[#allocation2 + $0x68] sm:$0xff]
        %v529 = vld [vmem:[#allocation2 + $0x80] sm:$0xff]
        %v530 = vld [vmem:[#allocation2 + $0x88] sm:$0xff]
        %v531 = vld [vmem:[#allocation2 + $0xa0] sm:$0xff]
        %v532 = vld [vmem:[#allocation2 + $0xa8] sm:$0xff]
        %v533 = vld [vmem:[#allocation2 + $0xc0] sm:$0xff]
        %v534 = vld [vmem:[#allocation2 + $0xc8] sm:$0xff]
        %v535 = vld [vmem:[#allocation2 + $0xe0] sm:$0xff]
        %v536 = vld [vmem:[#allocation2 + $0xe8] sm:$0xff]
        %v537 = vld [vmem:[#allocation2 + $0x100] sm:$0xff]
        %v538 = vld [vmem:[#allocation2 + $0x108] sm:$0xff]
        %v539 = vld [vmem:[#allocation2 + $0x120] sm:$0xff]
        %v540 = vld [vmem:[#allocation2 + $0x128] sm:$0xff]
        %v541 = vld [vmem:[#allocation2 + $0x140] sm:$0xff]
        %v542 = vld [vmem:[#allocation2 + $0x148] sm:$0xff]
        %v543 = vld [vmem:[#allocation2 + $0x160] sm:$0xff]
        %v544 = vld [vmem:[#allocation2 + $0x168] sm:$0xff]
        %v545 = vld [vmem:[#allocation2 + $0x180] sm:$0xff]
        %v546 = vld [vmem:[#allocation2 + $0x188] sm:$0xff]
        %v547 = vld [vmem:[#allocation2 + $0x1a0] sm:$0xff]
        %v548 = vld [vmem:[#allocation2 + $0x1a8] sm:$0xff]
        %v549 = vld [vmem:[#allocation2 + $0x1c0] sm:$0xff]
        %v550 = vld [vmem:[#allocation2 + $0x1c8] sm:$0xff]
        %v551 = vld [vmem:[#allocation2 + $0x1e0] sm:$0xff]
        %v552 = vld [vmem:[#allocation2 + $0x1e8] sm:$0xff]
        %585 = vrot.lane.b32.xlu0 %v521, 1
        %v586 = vpop.permute.xlu0 %585
        %587 = vrot.lane.b32.xlu0 %v522, 1
        %v588 = vpop.permute.xlu0 %587
        %589 = vrot.lane.b32.xlu0 %v523, 1
        %v590 = vpop.permute.xlu0 %589
        %591 = vrot.lane.b32.xlu0 %v524, 1
        %v592 = vpop.permute.xlu0 %591
        %593 = vrot.lane.b32.xlu0 %v525, 1
        %v594 = vpop.permute.xlu0 %593
        %595 = vrot.lane.b32.xlu0 %v526, 1
        %v596 = vpop.permute.xlu0 %595
        %597 = vrot.lane.b32.xlu0 %v527, 1
        %v598 = vpop.permute.xlu0 %597
        %599 = vrot.lane.b32.xlu0 %v528, 1
        %v600 = vpop.permute.xlu0 %599
        %601 = vrot.lane.b32.xlu0 %v529, 1
        %v602 = vpop.permute.xlu0 %601
        %603 = vrot.lane.b32.xlu0 %v530, 1
        %v604 = vpop.permute.xlu0 %603
        %605 = vrot.lane.b32.xlu0 %v531, 1
        %v606 = vpop.permute.xlu0 %605
        %607 = vrot.lane.b32.xlu0 %v532, 1
        %v608 = vpop.permute.xlu0 %607
        %609 = vrot.lane.b32.xlu0 %v533, 1
        %v610 = vpop.permute.xlu0 %609
        %611 = vrot.lane.b32.xlu0 %v534, 1
        %v612 = vpop.permute.xlu0 %611
        %613 = vrot.lane.b32.xlu0 %v535, 1
        %v614 = vpop.permute.xlu0 %613
        %615 = vrot.lane.b32.xlu0 %v536, 1
        %v616 = vpop.permute.xlu0 %615
        %617 = vrot.lane.b32.xlu0 %v537, 1
        %v618 = vpop.permute.xlu0 %617
        %619 = vrot.lane.b32.xlu0 %v538, 1
        %v620 = vpop.permute.xlu0 %619
        %621 = vrot.lane.b32.xlu0 %v539, 1
        %v622 = vpop.permute.xlu0 %621
        %623 = vrot.lane.b32.xlu0 %v540, 1
        %v624 = vpop.permute.xlu0 %623
        %625 = vrot.lane.b32.xlu0 %v541, 1
        %v626 = vpop.permute.xlu0 %625
        %627 = vrot.lane.b32.xlu0 %v542, 1
        %v628 = vpop.permute.xlu0 %627
        %629 = vrot.lane.b32.xlu0 %v543, 1
        %v630 = vpop.permute.xlu0 %629
        %631 = vrot.lane.b32.xlu0 %v544, 1
        %v632 = vpop.permute.xlu0 %631
        %633 = vrot.lane.b32.xlu0 %v545, 1
        %v634 = vpop.permute.xlu0 %633
        %635 = vrot.lane.b32.xlu0 %v546, 1
        %v636 = vpop.permute.xlu0 %635
        %637 = vrot.lane.b32.xlu0 %v547, 1
        %v638 = vpop.permute.xlu0 %637
        %639 = vrot.lane.b32.xlu0 %v548, 1
        %v640 = vpop.permute.xlu0 %639
        %641 = vrot.lane.b32.xlu0 %v549, 1
        %v642 = vpop.permute.xlu0 %641
        %643 = vrot.lane.b32.xlu0 %v550, 1
        %v644 = vpop.permute.xlu0 %643
        %645 = vrot.lane.b32.xlu0 %v551, 1
        %v646 = vpop.permute.xlu0 %645
        %647 = vrot.lane.b32.xlu0 %v552, 1
        %v648 = vpop.permute.xlu0 %647
        %vm681 = vcmask 15368
        %682 = vst.msk [vmem:[#allocation3] sm:$0xff] %vm681, %v586
        %683 = vst.msk [vmem:[#allocation3 + $0x18] sm:$0xff] %vm681, %v588
        %684 = vst.msk [vmem:[#allocation3 + $0x30] sm:$0xff] %vm681, %v590
        %685 = vst.msk [vmem:[#allocation3 + $0x48] sm:$0xff] %vm681, %v592
        %686 = vst.msk [vmem:[#allocation3 + $0x60] sm:$0xff] %vm681, %v594
        %687 = vst.msk [vmem:[#allocation3 + $0x78] sm:$0xff] %vm681, %v596
        %688 = vst.msk [vmem:[#allocation3 + $0x90] sm:$0xff] %vm681, %v598
        %689 = vst.msk [vmem:[#allocation3 + $0xa8] sm:$0xff] %vm681, %v600
        %690 = vst.msk [vmem:[#allocation3 + $0xc0] sm:$0xff] %vm681, %v602
        %691 = vst.msk [vmem:[#allocation3 + $0xd8] sm:$0xff] %vm681, %v604
        %692 = vst.msk [vmem:[#allocation3 + $0xf0] sm:$0xff] %vm681, %v606
        %693 = vst.msk [vmem:[#allocation3 + $0x108] sm:$0xff] %vm681, %v608
        %694 = vst.msk [vmem:[#allocation3 + $0x120] sm:$0xff] %vm681, %v610
        %695 = vst.msk [vmem:[#allocation3 + $0x138] sm:$0xff] %vm681, %v612
        %696 = vst.msk [vmem:[#allocation3 + $0x150] sm:$0xff] %vm681, %v614
        %697 = vst.msk [vmem:[#allocation3 + $0x168] sm:$0xff] %vm681, %v616
        %698 = vst.msk [vmem:[#allocation3 + $0x180] sm:$0xff] %vm681, %v618
        %699 = vst.msk [vmem:[#allocation3 + $0x198] sm:$0xff] %vm681, %v620
        %700 = vst.msk [vmem:[#allocation3 + $0x1b0] sm:$0xff] %vm681, %v622
        %701 = vst.msk [vmem:[#allocation3 + $0x1c8] sm:$0xff] %vm681, %v624
        %702 = vst.msk [vmem:[#allocation3 + $0x1e0] sm:$0xff] %vm681, %v626
        %703 = vst.msk [vmem:[#allocation3 + $0x1f8] sm:$0xff] %vm681, %v628
        %704 = vst.msk [vmem:[#allocation3 + $0x210] sm:$0xff] %vm681, %v630
        %705 = vst.msk [vmem:[#allocation3 + $0x228] sm:$0xff] %vm681, %v632
        %706 = vst.msk [vmem:[#allocation3 + $0x240] sm:$0xff] %vm681, %v634
        %707 = vst.msk [vmem:[#allocation3 + $0x258] sm:$0xff] %vm681, %v636
        %708 = vst.msk [vmem:[#allocation3 + $0x270] sm:$0xff] %vm681, %v638
        %709 = vst.msk [vmem:[#allocation3 + $0x288] sm:$0xff] %vm681, %v640
        %710 = vst.msk [vmem:[#allocation3 + $0x2a0] sm:$0xff] %vm681, %v642
        %711 = vst.msk [vmem:[#allocation3 + $0x2b8] sm:$0xff] %vm681, %v644
        %712 = vst.msk [vmem:[#allocation3 + $0x2d0] sm:$0xff] %vm681, %v646
        %713 = vst.msk [vmem:[#allocation3 + $0x2e8] sm:$0xff] %vm681, %v648
        %v714 = vld [vmem:[#allocation2 + $0x1] sm:$0xff]
        %v715 = vld [vmem:[#allocation2 + $0x9] sm:$0xff]
        %v716 = vld [vmem:[#allocation2 + $0x21] sm:$0xff]
        %v717 = vld [vmem:[#allocation2 + $0x29] sm:$0xff]
        %v718 = vld [vmem:[#allocation2 + $0x41] sm:$0xff]
        %v719 = vld [vmem:[#allocation2 + $0x49] sm:$0xff]
        %v720 = vld [vmem:[#allocation2 + $0x61] sm:$0xff]
        %v721 = vld [vmem:[#allocation2 + $0x69] sm:$0xff]
        %v722 = vld [vmem:[#allocation2 + $0x81] sm:$0xff]
        %v723 = vld [vmem:[#allocation2 + $0x89] sm:$0xff]
        %v724 = vld [vmem:[#allocation2 + $0xa1] sm:$0xff]
        %v725 = vld [vmem:[#allocation2 + $0xa9] sm:$0xff]
        %v726 = vld [vmem:[#allocation2 + $0xc1] sm:$0xff]
        %v727 = vld [vmem:[#allocation2 + $0xc9] sm:$0xff]
        %v728 = vld [vmem:[#allocation2 + $0xe1] sm:$0xff]
        %v729 = vld [vmem:[#allocation2 + $0xe9] sm:$0xff]
        %v730 = vld [vmem:[#allocation2 + $0x101] sm:$0xff]
        %v731 = vld [vmem:[#allocation2 + $0x109] sm:$0xff]
        %v732 = vld [vmem:[#allocation2 + $0x121] sm:$0xff]
        %v733 = vld [vmem:[#allocation2 + $0x129] sm:$0xff]
        %v734 = vld [vmem:[#allocation2 + $0x141] sm:$0xff]
        %v735 = vld [vmem:[#allocation2 + $0x149] sm:$0xff]
        %v736 = vld [vmem:[#allocation2 + $0x161] sm:$0xff]
        %v737 = vld [vmem:[#allocation2 + $0x169] sm:$0xff]
        %v738 = vld [vmem:[#allocation2 + $0x181] sm:$0xff]
        %v739 = vld [vmem:[#allocation2 + $0x189] sm:$0xff]
        %v740 = vld [vmem:[#allocation2 + $0x1a1] sm:$0xff]
        %v741 = vld [vmem:[#allocation2 + $0x1a9] sm:$0xff]
        %v742 = vld [vmem:[#allocation2 + $0x1c1] sm:$0xff]
        %v743 = vld [vmem:[#allocation2 + $0x1c9] sm:$0xff]
        %v744 = vld [vmem:[#allocation2 + $0x1e1] sm:$0xff]
        %v745 = vld [vmem:[#allocation2 + $0x1e9] sm:$0xff]
        %778 = vrot.lane.b32.xlu0 %v714, 2
        %v779 = vpop.permute.xlu0 %778
        %780 = vrot.lane.b32.xlu0 %v715, 2
        %v781 = vpop.permute.xlu0 %780
        %782 = vrot.lane.b32.xlu0 %v716, 2
        %v783 = vpop.permute.xlu0 %782
        %784 = vrot.lane.b32.xlu0 %v717, 2
        %v785 = vpop.permute.xlu0 %784
        %786 = vrot.lane.b32.xlu0 %v718, 2
        %v787 = vpop.permute.xlu0 %786
        %788 = vrot.lane.b32.xlu0 %v719, 2
        %v789 = vpop.permute.xlu0 %788
        %790 = vrot.lane.b32.xlu0 %v720, 2
        %v791 = vpop.permute.xlu0 %790
        %792 = vrot.lane.b32.xlu0 %v721, 2
        %v793 = vpop.permute.xlu0 %792
        %794 = vrot.lane.b32.xlu0 %v722, 2
        %v795 = vpop.permute.xlu0 %794
        %796 = vrot.lane.b32.xlu0 %v723, 2
        %v797 = vpop.permute.xlu0 %796
        %798 = vrot.lane.b32.xlu0 %v724, 2
        %v799 = vpop.permute.xlu0 %798
        %800 = vrot.lane.b32.xlu0 %v725, 2
        %v801 = vpop.permute.xlu0 %800
        %802 = vrot.lane.b32.xlu0 %v726, 2
        %v803 = vpop.permute.xlu0 %802
        %804 = vrot.lane.b32.xlu0 %v727, 2
        %v805 = vpop.permute.xlu0 %804
        %806 = vrot.lane.b32.xlu0 %v728, 2
        %v807 = vpop.permute.xlu0 %806
        %808 = vrot.lane.b32.xlu0 %v729, 2
        %v809 = vpop.permute.xlu0 %808
        %810 = vrot.lane.b32.xlu0 %v730, 2
        %v811 = vpop.permute.xlu0 %810
        %812 = vrot.lane.b32.xlu0 %v731, 2
        %v813 = vpop.permute.xlu0 %812
        %814 = vrot.lane.b32.xlu0 %v732, 2
        %v815 = vpop.permute.xlu0 %814
        %816 = vrot.lane.b32.xlu0 %v733, 2
        %v817 = vpop.permute.xlu0 %816
        %818 = vrot.lane.b32.xlu0 %v734, 2
        %v819 = vpop.permute.xlu0 %818
        %820 = vrot.lane.b32.xlu0 %v735, 2
        %v821 = vpop.permute.xlu0 %820
        %822 = vrot.lane.b32.xlu0 %v736, 2
        %v823 = vpop.permute.xlu0 %822
        %824 = vrot.lane.b32.xlu0 %v737, 2
        %v825 = vpop.permute.xlu0 %824
        %826 = vrot.lane.b32.xlu0 %v738, 2
        %v827 = vpop.permute.xlu0 %826
        %828 = vrot.lane.b32.xlu0 %v739, 2
        %v829 = vpop.permute.xlu0 %828
        %830 = vrot.lane.b32.xlu0 %v740, 2
        %v831 = vpop.permute.xlu0 %830
        %832 = vrot.lane.b32.xlu0 %v741, 2
        %v833 = vpop.permute.xlu0 %832
        %834 = vrot.lane.b32.xlu0 %v742, 2
        %v835 = vpop.permute.xlu0 %834
        %836 = vrot.lane.b32.xlu0 %v743, 2
        %v837 = vpop.permute.xlu0 %836
        %838 = vrot.lane.b32.xlu0 %v744, 2
        %v839 = vpop.permute.xlu0 %838
        %840 = vrot.lane.b32.xlu0 %v745, 2
        %v841 = vpop.permute.xlu0 %840
        %vm874 = vcmask 23568
        %875 = vst.msk [vmem:[#allocation3] sm:$0xff] %vm874, %v779
        %876 = vst.msk [vmem:[#allocation3 + $0x18] sm:$0xff] %vm874, %v781
        %877 = vst.msk [vmem:[#allocation3 + $0x30] sm:$0xff] %vm874, %v783
        %878 = vst.msk [vmem:[#allocation3 + $0x48] sm:$0xff] %vm874, %v785
        %879 = vst.msk [vmem:[#allocation3 + $0x60] sm:$0xff] %vm874, %v787
        %880 = vst.msk [vmem:[#allocation3 + $0x78] sm:$0xff] %vm874, %v789
        %881 = vst.msk [vmem:[#allocation3 + $0x90] sm:$0xff] %vm874, %v791
        %882 = vst.msk [vmem:[#allocation3 + $0xa8] sm:$0xff] %vm874, %v793
        %883 = vst.msk [vmem:[#allocation3 + $0xc0] sm:$0xff] %vm874, %v795
        %884 = vst.msk [vmem:[#allocation3 + $0xd8] sm:$0xff] %vm874, %v797
        %885 = vst.msk [vmem:[#allocation3 + $0xf0] sm:$0xff] %vm874, %v799
        %886 = vst.msk [vmem:[#allocation3 + $0x108] sm:$0xff] %vm874, %v801
        %887 = vst.msk [vmem:[#allocation3 + $0x120] sm:$0xff] %vm874, %v803
        %888 = vst.msk [vmem:[#allocation3 + $0x138] sm:$0xff] %vm874, %v805
        %889 = vst.msk [vmem:[#allocation3 + $0x150] sm:$0xff] %vm874, %v807
        %890 = vst.msk [vmem:[#allocation3 + $0x168] sm:$0xff] %vm874, %v809
        %891 = vst.msk [vmem:[#allocation3 + $0x180] sm:$0xff] %vm874, %v811
        %892 = vst.msk [vmem:[#allocation3 + $0x198] sm:$0xff] %vm874, %v813
        %893 = vst.msk [vmem:[#allocation3 + $0x1b0] sm:$0xff] %vm874, %v815
        %894 = vst.msk [vmem:[#allocation3 + $0x1c8] sm:$0xff] %vm874, %v817
        %895 = vst.msk [vmem:[#allocation3 + $0x1e0] sm:$0xff] %vm874, %v819
        %896 = vst.msk [vmem:[#allocation3 + $0x1f8] sm:$0xff] %vm874, %v821
        %897 = vst.msk [vmem:[#allocation3 + $0x210] sm:$0xff] %vm874, %v823
        %898 = vst.msk [vmem:[#allocation3 + $0x228] sm:$0xff] %vm874, %v825
        %899 = vst.msk [vmem:[#allocation3 + $0x240] sm:$0xff] %vm874, %v827
        %900 = vst.msk [vmem:[#allocation3 + $0x258] sm:$0xff] %vm874, %v829
        %901 = vst.msk [vmem:[#allocation3 + $0x270] sm:$0xff] %vm874, %v831
        %902 = vst.msk [vmem:[#allocation3 + $0x288] sm:$0xff] %vm874, %v833
        %903 = vst.msk [vmem:[#allocation3 + $0x2a0] sm:$0xff] %vm874, %v835
        %904 = vst.msk [vmem:[#allocation3 + $0x2b8] sm:$0xff] %vm874, %v837
        %905 = vst.msk [vmem:[#allocation3 + $0x2d0] sm:$0xff] %vm874, %v839
        %906 = vst.msk [vmem:[#allocation3 + $0x2e8] sm:$0xff] %vm874, %v841
        %v907 = vld [vmem:[%s382 + $0xf] sm:$0xff]
        %v908 = vld [vmem:[%s382 + $0x17] sm:$0xff]
        %v909 = vld [vmem:[%s382 + $0x2f] sm:$0xff]
        %v910 = vld [vmem:[%s382 + $0x37] sm:$0xff]
        %v911 = vld [vmem:[%s382 + $0x4f] sm:$0xff]
        %v912 = vld [vmem:[%s382 + $0x57] sm:$0xff]
        %v913 = vld [vmem:[%s382 + $0x6f] sm:$0xff]
        %v914 = vld [vmem:[%s382 + $0x77] sm:$0xff]
        %v915 = vld [vmem:[%s382 + $0x8f] sm:$0xff]
        %v916 = vld [vmem:[%s382 + $0x97] sm:$0xff]
        %v917 = vld [vmem:[%s382 + $0xaf] sm:$0xff]
        %v918 = vld [vmem:[%s382 + $0xb7] sm:$0xff]
        %v919 = vld [vmem:[%s382 + $0xcf] sm:$0xff]
        %v920 = vld [vmem:[%s382 + $0xd7] sm:$0xff]
        %v921 = vld [vmem:[%s382 + $0xef] sm:$0xff]
        %v922 = vld [vmem:[%s382 + $0xf7] sm:$0xff]
        %v923 = vld [vmem:[%s382 + $0x10f] sm:$0xff]
        %v924 = vld [vmem:[%s382 + $0x117] sm:$0xff]
        %v925 = vld [vmem:[%s382 + $0x12f] sm:$0xff]
        %v926 = vld [vmem:[%s382 + $0x137] sm:$0xff]
        %v927 = vld [vmem:[%s382 + $0x14f] sm:$0xff]
        %v928 = vld [vmem:[%s382 + $0x157] sm:$0xff]
        %v929 = vld [vmem:[%s382 + $0x16f] sm:$0xff]
        %v930 = vld [vmem:[%s382 + $0x177] sm:$0xff]
        %v931 = vld [vmem:[%s382 + $0x18f] sm:$0xff]
        %v932 = vld [vmem:[%s382 + $0x197] sm:$0xff]
        %v933 = vld [vmem:[%s382 + $0x1af] sm:$0xff]
        %v934 = vld [vmem:[%s382 + $0x1b7] sm:$0xff]
        %v935 = vld [vmem:[%s382 + $0x1cf] sm:$0xff]
        %v936 = vld [vmem:[%s382 + $0x1d7] sm:$0xff]
        %v937 = vld [vmem:[%s382 + $0x1ef] sm:$0xff]
        %v938 = vld [vmem:[%s382 + $0x1f7] sm:$0xff]
        %971 = vrot.lane.b32.xlu0 %v907, 3
        %v972 = vpop.permute.xlu0 %971
        %973 = vrot.lane.b32.xlu0 %v908, 3
        %v974 = vpop.permute.xlu0 %973
        %975 = vrot.lane.b32.xlu0 %v909, 3
        %v976 = vpop.permute.xlu0 %975
        %977 = vrot.lane.b32.xlu0 %v910, 3
        %v978 = vpop.permute.xlu0 %977
        %979 = vrot.lane.b32.xlu0 %v911, 3
        %v980 = vpop.permute.xlu0 %979
        %981 = vrot.lane.b32.xlu0 %v912, 3
        %v982 = vpop.permute.xlu0 %981
        %983 = vrot.lane.b32.xlu0 %v913, 3
        %v984 = vpop.permute.xlu0 %983
        %985 = vrot.lane.b32.xlu0 %v914, 3
        %v986 = vpop.permute.xlu0 %985
        %987 = vrot.lane.b32.xlu0 %v915, 3
        %v988 = vpop.permute.xlu0 %987
        %989 = vrot.lane.b32.xlu0 %v916, 3
        %v990 = vpop.permute.xlu0 %989
        %991 = vrot.lane.b32.xlu0 %v917, 3
        %v992 = vpop.permute.xlu0 %991
        %993 = vrot.lane.b32.xlu0 %v918, 3
        %v994 = vpop.permute.xlu0 %993
        %995 = vrot.lane.b32.xlu0 %v919, 3
        %v996 = vpop.permute.xlu0 %995
        %997 = vrot.lane.b32.xlu0 %v920, 3
        %v998 = vpop.permute.xlu0 %997
        %999 = vrot.lane.b32.xlu0 %v921, 3
        %v1000 = vpop.permute.xlu0 %999
        %1001 = vrot.lane.b32.xlu0 %v922, 3
        %v1002 = vpop.permute.xlu0 %1001
        %1003 = vrot.lane.b32.xlu0 %v923, 3
        %v1004 = vpop.permute.xlu0 %1003
        %1005 = vrot.lane.b32.xlu0 %v924, 3
        %v1006 = vpop.permute.xlu0 %1005
        %1007 = vrot.lane.b32.xlu0 %v925, 3
        %v1008 = vpop.permute.xlu0 %1007
        %1009 = vrot.lane.b32.xlu0 %v926, 3
        %v1010 = vpop.permute.xlu0 %1009
        %1011 = vrot.lane.b32.xlu0 %v927, 3
        %v1012 = vpop.permute.xlu0 %1011
        %1013 = vrot.lane.b32.xlu0 %v928, 3
        %v1014 = vpop.permute.xlu0 %1013
        %1015 = vrot.lane.b32.xlu0 %v929, 3
        %v1016 = vpop.permute.xlu0 %1015
        %1017 = vrot.lane.b32.xlu0 %v930, 3
        %v1018 = vpop.permute.xlu0 %1017
        %1019 = vrot.lane.b32.xlu0 %v931, 3
        %v1020 = vpop.permute.xlu0 %1019
        %1021 = vrot.lane.b32.xlu0 %v932, 3
        %v1022 = vpop.permute.xlu0 %1021
        %1023 = vrot.lane.b32.xlu0 %v933, 3
        %v1024 = vpop.permute.xlu0 %1023
        %1025 = vrot.lane.b32.xlu0 %v934, 3
        %v1026 = vpop.permute.xlu0 %1025
        %1027 = vrot.lane.b32.xlu0 %v935, 3
        %v1028 = vpop.permute.xlu0 %1027
        %1029 = vrot.lane.b32.xlu0 %v936, 3
        %v1030 = vpop.permute.xlu0 %1029
        %1031 = vrot.lane.b32.xlu0 %v937, 3
        %v1032 = vpop.permute.xlu0 %1031
        %1033 = vrot.lane.b32.xlu0 %v938, 3
        %v1034 = vpop.permute.xlu0 %1033
        %vm1067 = vcmask 31768
        %1068 = vst.msk [vmem:[#allocation3] sm:$0xff] %vm1067, %v972
        %1069 = vst.msk [vmem:[#allocation3 + $0x18] sm:$0xff] %vm1067, %v974
        %1070 = vst.msk [vmem:[#allocation3 + $0x30] sm:$0xff] %vm1067, %v976
        %1071 = vst.msk [vmem:[#allocation3 + $0x48] sm:$0xff] %vm1067, %v978
        %1072 = vst.msk [vmem:[#allocation3 + $0x60] sm:$0xff] %vm1067, %v980
        %1073 = vst.msk [vmem:[#allocation3 + $0x78] sm:$0xff] %vm1067, %v982
        %1074 = vst.msk [vmem:[#allocation3 + $0x90] sm:$0xff] %vm1067, %v984
        %1075 = vst.msk [vmem:[#allocation3 + $0xa8] sm:$0xff] %vm1067, %v986
        %1076 = vst.msk [vmem:[#allocation3 + $0xc0] sm:$0xff] %vm1067, %v988
        %1077 = vst.msk [vmem:[#allocation3 + $0xd8] sm:$0xff] %vm1067, %v990
        %1078 = vst.msk [vmem:[#allocation3 + $0xf0] sm:$0xff] %vm1067, %v992
        %1079 = vst.msk [vmem:[#allocation3 + $0x108] sm:$0xff] %vm1067, %v994
        %1080 = vst.msk [vmem:[#allocation3 + $0x120] sm:$0xff] %vm1067, %v996
        %1081 = vst.msk [vmem:[#allocation3 + $0x138] sm:$0xff] %vm1067, %v998
        %1082 = vst.msk [vmem:[#allocation3 + $0x150] sm:$0xff] %vm1067, %v1000
        %1083 = vst.msk [vmem:[#allocation3 + $0x168] sm:$0xff] %vm1067, %v1002
        %1084 = vst.msk [vmem:[#allocation3 + $0x180] sm:$0xff] %vm1067, %v1004
        %1085 = vst.msk [vmem:[#allocation3 + $0x198] sm:$0xff] %vm1067, %v1006
        %1086 = vst.msk [vmem:[#allocation3 + $0x1b0] sm:$0xff] %vm1067, %v1008
        %1087 = vst.msk [vmem:[#allocation3 + $0x1c8] sm:$0xff] %vm1067, %v1010
        %1088 = vst.msk [vmem:[#allocation3 + $0x1e0] sm:$0xff] %vm1067, %v1012
        %1089 = vst.msk [vmem:[#allocation3 + $0x1f8] sm:$0xff] %vm1067, %v1014
        %1090 = vst.msk [vmem:[#allocation3 + $0x210] sm:$0xff] %vm1067, %v1016
        %1091 = vst.msk [vmem:[#allocation3 + $0x228] sm:$0xff] %vm1067, %v1018
        %1092 = vst.msk [vmem:[#allocation3 + $0x240] sm:$0xff] %vm1067, %v1020
        %1093 = vst.msk [vmem:[#allocation3 + $0x258] sm:$0xff] %vm1067, %v1022
        %1094 = vst.msk [vmem:[#allocation3 + $0x270] sm:$0xff] %vm1067, %v1024
        %1095 = vst.msk [vmem:[#allocation3 + $0x288] sm:$0xff] %vm1067, %v1026
        %1096 = vst.msk [vmem:[#allocation3 + $0x2a0] sm:$0xff] %vm1067, %v1028
        %1097 = vst.msk [vmem:[#allocation3 + $0x2b8] sm:$0xff] %vm1067, %v1030
        %1098 = vst.msk [vmem:[#allocation3 + $0x2d0] sm:$0xff] %vm1067, %v1032
        %1099 = vst.msk [vmem:[#allocation3 + $0x2e8] sm:$0xff] %vm1067, %v1034
        %v1100 = vld [vmem:[%s382] sm:$0xff]
        %v1101 = vld [vmem:[%s382 + $0x8] sm:$0xff]
        %v1102 = vld [vmem:[%s382 + $0x20] sm:$0xff]
        %v1103 = vld [vmem:[%s382 + $0x28] sm:$0xff]
        %v1104 = vld [vmem:[%s382 + $0x40] sm:$0xff]
        %v1105 = vld [vmem:[%s382 + $0x48] sm:$0xff]
        %v1106 = vld [vmem:[%s382 + $0x60] sm:$0xff]
        %v1107 = vld [vmem:[%s382 + $0x68] sm:$0xff]
        %v1108 = vld [vmem:[%s382 + $0x80] sm:$0xff]
        %v1109 = vld [vmem:[%s382 + $0x88] sm:$0xff]
        %v1110 = vld [vmem:[%s382 + $0xa0] sm:$0xff]
        %v1111 = vld [vmem:[%s382 + $0xa8] sm:$0xff]
        %v1112 = vld [vmem:[%s382 + $0xc0] sm:$0xff]
        %v1113 = vld [vmem:[%s382 + $0xc8] sm:$0xff]
        %v1114 = vld [vmem:[%s382 + $0xe0] sm:$0xff]
        %v1115 = vld [vmem:[%s382 + $0xe8] sm:$0xff]
        %v1116 = vld [vmem:[%s382 + $0x100] sm:$0xff]
        %v1117 = vld [vmem:[%s382 + $0x108] sm:$0xff]
        %v1118 = vld [vmem:[%s382 + $0x120] sm:$0xff]
        %v1119 = vld [vmem:[%s382 + $0x128] sm:$0xff]
        %v1120 = vld [vmem:[%s382 + $0x140] sm:$0xff]
        %v1121 = vld [vmem:[%s382 + $0x148] sm:$0xff]
        %v1122 = vld [vmem:[%s382 + $0x160] sm:$0xff]
        %v1123 = vld [vmem:[%s382 + $0x168] sm:$0xff]
        %v1124 = vld [vmem:[%s382 + $0x180] sm:$0xff]
        %v1125 = vld [vmem:[%s382 + $0x188] sm:$0xff]
        %v1126 = vld [vmem:[%s382 + $0x1a0] sm:$0xff]
        %v1127 = vld [vmem:[%s382 + $0x1a8] sm:$0xff]
        %v1128 = vld [vmem:[%s382 + $0x1c0] sm:$0xff]
        %v1129 = vld [vmem:[%s382 + $0x1c8] sm:$0xff]
        %v1130 = vld [vmem:[%s382 + $0x1e0] sm:$0xff]
        %v1131 = vld [vmem:[%s382 + $0x1e8] sm:$0xff]
        %1164 = vrot.lane.b32.xlu0 %v1100, 4
        %v1165 = vpop.permute.xlu0 %1164
        %1166 = vrot.lane.b32.xlu0 %v1101, 4
        %v1167 = vpop.permute.xlu0 %1166
        %1168 = vrot.lane.b32.xlu0 %v1102, 4
        %v1169 = vpop.permute.xlu0 %1168
        %1170 = vrot.lane.b32.xlu0 %v1103, 4
        %v1171 = vpop.permute.xlu0 %1170
        %1172 = vrot.lane.b32.xlu0 %v1104, 4
        %v1173 = vpop.permute.xlu0 %1172
        %1174 = vrot.lane.b32.xlu0 %v1105, 4
        %v1175 = vpop.permute.xlu0 %1174
        %1176 = vrot.lane.b32.xlu0 %v1106, 4
        %v1177 = vpop.permute.xlu0 %1176
        %1178 = vrot.lane.b32.xlu0 %v1107, 4
        %v1179 = vpop.permute.xlu0 %1178
        %1180 = vrot.lane.b32.xlu0 %v1108, 4
        %v1181 = vpop.permute.xlu0 %1180
        %1182 = vrot.lane.b32.xlu0 %v1109, 4
        %v1183 = vpop.permute.xlu0 %1182
        %1184 = vrot.lane.b32.xlu0 %v1110, 4
        %v1185 = vpop.permute.xlu0 %1184
        %1186 = vrot.lane.b32.xlu0 %v1111, 4
        %v1187 = vpop.permute.xlu0 %1186
        %1188 = vrot.lane.b32.xlu0 %v1112, 4
        %v1189 = vpop.permute.xlu0 %1188
        %1190 = vrot.lane.b32.xlu0 %v1113, 4
        %v1191 = vpop.permute.xlu0 %1190
        %1192 = vrot.lane.b32.xlu0 %v1114, 4
        %v1193 = vpop.permute.xlu0 %1192
        %1194 = vrot.lane.b32.xlu0 %v1115, 4
        %v1195 = vpop.permute.xlu0 %1194
        %1196 = vrot.lane.b32.xlu0 %v1116, 4
        %v1197 = vpop.permute.xlu0 %1196
        %1198 = vrot.lane.b32.xlu0 %v1117, 4
        %v1199 = vpop.permute.xlu0 %1198
        %1200 = vrot.lane.b32.xlu0 %v1118, 4
        %v1201 = vpop.permute.xlu0 %1200
        %1202 = vrot.lane.b32.xlu0 %v1119, 4
        %v1203 = vpop.permute.xlu0 %1202
        %1204 = vrot.lane.b32.xlu0 %v1120, 4
        %v1205 = vpop.permute.xlu0 %1204
        %1206 = vrot.lane.b32.xlu0 %v1121, 4
        %v1207 = vpop.permute.xlu0 %1206
        %1208 = vrot.lane.b32.xlu0 %v1122, 4
        %v1209 = vpop.permute.xlu0 %1208
        %1210 = vrot.lane.b32.xlu0 %v1123, 4
        %v1211 = vpop.permute.xlu0 %1210
        %1212 = vrot.lane.b32.xlu0 %v1124, 4
        %v1213 = vpop.permute.xlu0 %1212
        %1214 = vrot.lane.b32.xlu0 %v1125, 4
        %v1215 = vpop.permute.xlu0 %1214
        %1216 = vrot.lane.b32.xlu0 %v1126, 4
        %v1217 = vpop.permute.xlu0 %1216
        %1218 = vrot.lane.b32.xlu0 %v1127, 4
        %v1219 = vpop.permute.xlu0 %1218
        %1220 = vrot.lane.b32.xlu0 %v1128, 4
        %v1221 = vpop.permute.xlu0 %1220
        %1222 = vrot.lane.b32.xlu0 %v1129, 4
        %v1223 = vpop.permute.xlu0 %1222
        %1224 = vrot.lane.b32.xlu0 %v1130, 4
        %v1225 = vpop.permute.xlu0 %1224
        %1226 = vrot.lane.b32.xlu0 %v1131, 4
        %v1227 = vpop.permute.xlu0 %1226
        %vm1260 = vcmask 39968
        %1261 = vst.msk [vmem:[#allocation3] sm:$0xff] %vm1260, %v1165
        %1262 = vst.msk [vmem:[#allocation3 + $0x18] sm:$0xff] %vm1260, %v1167
        %1263 = vst.msk [vmem:[#allocation3 + $0x30] sm:$0xff] %vm1260, %v1169
        %1264 = vst.msk [vmem:[#allocation3 + $0x48] sm:$0xff] %vm1260, %v1171
        %1265 = vst.msk [vmem:[#allocation3 + $0x60] sm:$0xff] %vm1260, %v1173
        %1266 = vst.msk [vmem:[#allocation3 + $0x78] sm:$0xff] %vm1260, %v1175
        %1267 = vst.msk [vmem:[#allocation3 + $0x90] sm:$0xff] %vm1260, %v1177
        %1268 = vst.msk [vmem:[#allocation3 + $0xa8] sm:$0xff] %vm1260, %v1179
        %1269 = vst.msk [vmem:[#allocation3 + $0xc0] sm:$0xff] %vm1260, %v1181
        %1270 = vst.msk [vmem:[#allocation3 + $0xd8] sm:$0xff] %vm1260, %v1183
        %1271 = vst.msk [vmem:[#allocation3 + $0xf0] sm:$0xff] %vm1260, %v1185
        %1272 = vst.msk [vmem:[#allocation3 + $0x108] sm:$0xff] %vm1260, %v1187
        %1273 = vst.msk [vmem:[#allocation3 + $0x120] sm:$0xff] %vm1260, %v1189
        %1274 = vst.msk [vmem:[#allocation3 + $0x138] sm:$0xff] %vm1260, %v1191
        %1275 = vst.msk [vmem:[#allocation3 + $0x150] sm:$0xff] %vm1260, %v1193
        %1276 = vst.msk [vmem:[#allocation3 + $0x168] sm:$0xff] %vm1260, %v1195
        %1277 = vst.msk [vmem:[#allocation3 + $0x180] sm:$0xff] %vm1260, %v1197
        %1278 = vst.msk [vmem:[#allocation3 + $0x198] sm:$0xff] %vm1260, %v1199
        %1279 = vst.msk [vmem:[#allocation3 + $0x1b0] sm:$0xff] %vm1260, %v1201
        %1280 = vst.msk [vmem:[#allocation3 + $0x1c8] sm:$0xff] %vm1260, %v1203
        %1281 = vst.msk [vmem:[#allocation3 + $0x1e0] sm:$0xff] %vm1260, %v1205
        %1282 = vst.msk [vmem:[#allocation3 + $0x1f8] sm:$0xff] %vm1260, %v1207
        %1283 = vst.msk [vmem:[#allocation3 + $0x210] sm:$0xff] %vm1260, %v1209
        %1284 = vst.msk [vmem:[#allocation3 + $0x228] sm:$0xff] %vm1260, %v1211
        %1285 = vst.msk [vmem:[#allocation3 + $0x240] sm:$0xff] %vm1260, %v1213
        %1286 = vst.msk [vmem:[#allocation3 + $0x258] sm:$0xff] %vm1260, %v1215
        %1287 = vst.msk [vmem:[#allocation3 + $0x270] sm:$0xff] %vm1260, %v1217
        %1288 = vst.msk [vmem:[#allocation3 + $0x288] sm:$0xff] %vm1260, %v1219
        %1289 = vst.msk [vmem:[#allocation3 + $0x2a0] sm:$0xff] %vm1260, %v1221
        %1290 = vst.msk [vmem:[#allocation3 + $0x2b8] sm:$0xff] %vm1260, %v1223
        %1291 = vst.msk [vmem:[#allocation3 + $0x2d0] sm:$0xff] %vm1260, %v1225
        %1292 = vst.msk [vmem:[#allocation3 + $0x2e8] sm:$0xff] %vm1260, %v1227
        %v1293 = vld [vmem:[%s382 + $0x1] sm:$0xff]
        %v1294 = vld [vmem:[%s382 + $0x9] sm:$0xff]
        %v1295 = vld [vmem:[%s382 + $0x21] sm:$0xff]
        %v1296 = vld [vmem:[%s382 + $0x29] sm:$0xff]
        %v1297 = vld [vmem:[%s382 + $0x41] sm:$0xff]
        %v1298 = vld [vmem:[%s382 + $0x49] sm:$0xff]
        %v1299 = vld [vmem:[%s382 + $0x61] sm:$0xff]
        %v1300 = vld [vmem:[%s382 + $0x69] sm:$0xff]
        %v1301 = vld [vmem:[%s382 + $0x81] sm:$0xff]
        %v1302 = vld [vmem:[%s382 + $0x89] sm:$0xff]
        %v1303 = vld [vmem:[%s382 + $0xa1] sm:$0xff]
        %v1304 = vld [vmem:[%s382 + $0xa9] sm:$0xff]
        %v1305 = vld [vmem:[%s382 + $0xc1] sm:$0xff]
        %v1306 = vld [vmem:[%s382 + $0xc9] sm:$0xff]
        %v1307 = vld [vmem:[%s382 + $0xe1] sm:$0xff]
        %v1308 = vld [vmem:[%s382 + $0xe9] sm:$0xff]
        %v1309 = vld [vmem:[%s382 + $0x101] sm:$0xff]
        %v1310 = vld [vmem:[%s382 + $0x109] sm:$0xff]
        %v1311 = vld [vmem:[%s382 + $0x121] sm:$0xff]
        %v1312 = vld [vmem:[%s382 + $0x129] sm:$0xff]
        %v1313 = vld [vmem:[%s382 + $0x141] sm:$0xff]
        %v1314 = vld [vmem:[%s382 + $0x149] sm:$0xff]
        %v1315 = vld [vmem:[%s382 + $0x161] sm:$0xff]
        %v1316 = vld [vmem:[%s382 + $0x169] sm:$0xff]
        %v1317 = vld [vmem:[%s382 + $0x181] sm:$0xff]
        %v1318 = vld [vmem:[%s382 + $0x189] sm:$0xff]
        %v1319 = vld [vmem:[%s382 + $0x1a1] sm:$0xff]
        %v1320 = vld [vmem:[%s382 + $0x1a9] sm:$0xff]
        %v1321 = vld [vmem:[%s382 + $0x1c1] sm:$0xff]
        %v1322 = vld [vmem:[%s382 + $0x1c9] sm:$0xff]
        %v1323 = vld [vmem:[%s382 + $0x1e1] sm:$0xff]
        %v1324 = vld [vmem:[%s382 + $0x1e9] sm:$0xff]
        %1357 = vrot.lane.b32.xlu0 %v1293, 5
        %v1358 = vpop.permute.xlu0 %1357
        %1359 = vrot.lane.b32.xlu0 %v1294, 5
        %v1360 = vpop.permute.xlu0 %1359
        %1361 = vrot.lane.b32.xlu0 %v1295, 5
        %v1362 = vpop.permute.xlu0 %1361
        %1363 = vrot.lane.b32.xlu0 %v1296, 5
        %v1364 = vpop.permute.xlu0 %1363
        %1365 = vrot.lane.b32.xlu0 %v1297, 5
        %v1366 = vpop.permute.xlu0 %1365
        %1367 = vrot.lane.b32.xlu0 %v1298, 5
        %v1368 = vpop.permute.xlu0 %1367
        %1369 = vrot.lane.b32.xlu0 %v1299, 5
        %v1370 = vpop.permute.xlu0 %1369
        %1371 = vrot.lane.b32.xlu0 %v1300, 5
        %v1372 = vpop.permute.xlu0 %1371
        %1373 = vrot.lane.b32.xlu0 %v1301, 5
        %v1374 = vpop.permute.xlu0 %1373
        %1375 = vrot.lane.b32.xlu0 %v1302, 5
        %v1376 = vpop.permute.xlu0 %1375
        %1377 = vrot.lane.b32.xlu0 %v1303, 5
        %v1378 = vpop.permute.xlu0 %1377
        %1379 = vrot.lane.b32.xlu0 %v1304, 5
        %v1380 = vpop.permute.xlu0 %1379
        %1381 = vrot.lane.b32.xlu0 %v1305, 5
        %v1382 = vpop.permute.xlu0 %1381
        %1383 = vrot.lane.b32.xlu0 %v1306, 5
        %v1384 = vpop.permute.xlu0 %1383
        %1385 = vrot.lane.b32.xlu0 %v1307, 5
        %v1386 = vpop.permute.xlu0 %1385
        %1387 = vrot.lane.b32.xlu0 %v1308, 5
        %v1388 = vpop.permute.xlu0 %1387
        %1389 = vrot.lane.b32.xlu0 %v1309, 5
        %v1390 = vpop.permute.xlu0 %1389
        %1391 = vrot.lane.b32.xlu0 %v1310, 5
        %v1392 = vpop.permute.xlu0 %1391
        %1393 = vrot.lane.b32.xlu0 %v1311, 5
        %v1394 = vpop.permute.xlu0 %1393
        %1395 = vrot.lane.b32.xlu0 %v1312, 5
        %v1396 = vpop.permute.xlu0 %1395
        %1397 = vrot.lane.b32.xlu0 %v1313, 5
        %v1398 = vpop.permute.xlu0 %1397
        %1399 = vrot.lane.b32.xlu0 %v1314, 5
        %v1400 = vpop.permute.xlu0 %1399
        %1401 = vrot.lane.b32.xlu0 %v1315, 5
        %v1402 = vpop.permute.xlu0 %1401
        %1403 = vrot.lane.b32.xlu0 %v1316, 5
        %v1404 = vpop.permute.xlu0 %1403
        %1405 = vrot.lane.b32.xlu0 %v1317, 5
        %v1406 = vpop.permute.xlu0 %1405
        %1407 = vrot.lane.b32.xlu0 %v1318, 5
        %v1408 = vpop.permute.xlu0 %1407
        %1409 = vrot.lane.b32.xlu0 %v1319, 5
        %v1410 = vpop.permute.xlu0 %1409
        %1411 = vrot.lane.b32.xlu0 %v1320, 5
        %v1412 = vpop.permute.xlu0 %1411
        %1413 = vrot.lane.b32.xlu0 %v1321, 5
        %v1414 = vpop.permute.xlu0 %1413
        %1415 = vrot.lane.b32.xlu0 %v1322, 5
        %v1416 = vpop.permute.xlu0 %1415
        %1417 = vrot.lane.b32.xlu0 %v1323, 5
        %v1418 = vpop.permute.xlu0 %1417
        %1419 = vrot.lane.b32.xlu0 %v1324, 5
        %v1420 = vpop.permute.xlu0 %1419
        %vm1453 = vcmask 48168
        %1454 = vst.msk [vmem:[#allocation3] sm:$0xff] %vm1453, %v1358
        %1455 = vst.msk [vmem:[#allocation3 + $0x18] sm:$0xff] %vm1453, %v1360
        %1456 = vst.msk [vmem:[#allocation3 + $0x30] sm:$0xff] %vm1453, %v1362
        %1457 = vst.msk [vmem:[#allocation3 + $0x48] sm:$0xff] %vm1453, %v1364
        %1458 = vst.msk [vmem:[#allocation3 + $0x60] sm:$0xff] %vm1453, %v1366
        %1459 = vst.msk [vmem:[#allocation3 + $0x78] sm:$0xff] %vm1453, %v1368
        %1460 = vst.msk [vmem:[#allocation3 + $0x90] sm:$0xff] %vm1453, %v1370
        %1461 = vst.msk [vmem:[#allocation3 + $0xa8] sm:$0xff] %vm1453, %v1372
        %1462 = vst.msk [vmem:[#allocation3 + $0xc0] sm:$0xff] %vm1453, %v1374
        %1463 = vst.msk [vmem:[#allocation3 + $0xd8] sm:$0xff] %vm1453, %v1376
        %1464 = vst.msk [vmem:[#allocation3 + $0xf0] sm:$0xff] %vm1453, %v1378
        %1465 = vst.msk [vmem:[#allocation3 + $0x108] sm:$0xff] %vm1453, %v1380
        %1466 = vst.msk [vmem:[#allocation3 + $0x120] sm:$0xff] %vm1453, %v1382
        %1467 = vst.msk [vmem:[#allocation3 + $0x138] sm:$0xff] %vm1453, %v1384
        %1468 = vst.msk [vmem:[#allocation3 + $0x150] sm:$0xff] %vm1453, %v1386
        %1469 = vst.msk [vmem:[#allocation3 + $0x168] sm:$0xff] %vm1453, %v1388
        %1470 = vst.msk [vmem:[#allocation3 + $0x180] sm:$0xff] %vm1453, %v1390
        %1471 = vst.msk [vmem:[#allocation3 + $0x198] sm:$0xff] %vm1453, %v1392
        %1472 = vst.msk [vmem:[#allocation3 + $0x1b0] sm:$0xff] %vm1453, %v1394
        %1473 = vst.msk [vmem:[#allocation3 + $0x1c8] sm:$0xff] %vm1453, %v1396
        %1474 = vst.msk [vmem:[#allocation3 + $0x1e0] sm:$0xff] %vm1453, %v1398
        %1475 = vst.msk [vmem:[#allocation3 + $0x1f8] sm:$0xff] %vm1453, %v1400
        %1476 = vst.msk [vmem:[#allocation3 + $0x210] sm:$0xff] %vm1453, %v1402
        %1477 = vst.msk [vmem:[#allocation3 + $0x228] sm:$0xff] %vm1453, %v1404
        %1478 = vst.msk [vmem:[#allocation3 + $0x240] sm:$0xff] %vm1453, %v1406
        %1479 = vst.msk [vmem:[#allocation3 + $0x258] sm:$0xff] %vm1453, %v1408
        %1480 = vst.msk [vmem:[#allocation3 + $0x270] sm:$0xff] %vm1453, %v1410
        %1481 = vst.msk [vmem:[#allocation3 + $0x288] sm:$0xff] %vm1453, %v1412
        %1482 = vst.msk [vmem:[#allocation3 + $0x2a0] sm:$0xff] %vm1453, %v1414
        %1483 = vst.msk [vmem:[#allocation3 + $0x2b8] sm:$0xff] %vm1453, %v1416
        %1484 = vst.msk [vmem:[#allocation3 + $0x2d0] sm:$0xff] %vm1453, %v1418
        %1485 = vst.msk [vmem:[#allocation3 + $0x2e8] sm:$0xff] %vm1453, %v1420
        %s1486 = scalar_lea.vmem [#allocation2], 64
        %v1487 = vld [vmem:[%s1486 + $0xf] sm:$0xff]
        %v1488 = vld [vmem:[%s1486 + $0x17] sm:$0xff]
        %v1489 = vld [vmem:[%s1486 + $0x2f] sm:$0xff]
        %v1490 = vld [vmem:[%s1486 + $0x37] sm:$0xff]
        %v1491 = vld [vmem:[%s1486 + $0x4f] sm:$0xff]
        %v1492 = vld [vmem:[%s1486 + $0x57] sm:$0xff]
        %v1493 = vld [vmem:[%s1486 + $0x6f] sm:$0xff]
        %v1494 = vld [vmem:[%s1486 + $0x77] sm:$0xff]
        %v1495 = vld [vmem:[%s1486 + $0x8f] sm:$0xff]
        %v1496 = vld [vmem:[%s1486 + $0x97] sm:$0xff]
        %v1497 = vld [vmem:[%s1486 + $0xaf] sm:$0xff]
        %v1498 = vld [vmem:[%s1486 + $0xb7] sm:$0xff]
        %v1499 = vld [vmem:[%s1486 + $0xcf] sm:$0xff]
        %v1500 = vld [vmem:[%s1486 + $0xd7] sm:$0xff]
        %v1501 = vld [vmem:[%s1486 + $0xef] sm:$0xff]
        %v1502 = vld [vmem:[%s1486 + $0xf7] sm:$0xff]
        %v1503 = vld [vmem:[%s1486 + $0x10f] sm:$0xff]
        %v1504 = vld [vmem:[%s1486 + $0x117] sm:$0xff]
        %v1505 = vld [vmem:[%s1486 + $0x12f] sm:$0xff]
        %v1506 = vld [vmem:[%s1486 + $0x137] sm:$0xff]
        %v1507 = vld [vmem:[%s1486 + $0x14f] sm:$0xff]
        %v1508 = vld [vmem:[%s1486 + $0x157] sm:$0xff]
        %v1509 = vld [vmem:[%s1486 + $0x16f] sm:$0xff]
        %v1510 = vld [vmem:[%s1486 + $0x177] sm:$0xff]
        %v1511 = vld [vmem:[%s1486 + $0x18f] sm:$0xff]
        %v1512 = vld [vmem:[%s1486 + $0x197] sm:$0xff]
        %v1513 = vld [vmem:[%s1486 + $0x1af] sm:$0xff]
        %v1514 = vld [vmem:[%s1486 + $0x1b7] sm:$0xff]
        %v1515 = vld [vmem:[%s1486 + $0x1cf] sm:$0xff]
        %v1516 = vld [vmem:[%s1486 + $0x1d7] sm:$0xff]
        %v1517 = vld [vmem:[%s1486 + $0x1ef] sm:$0xff]
        %v1518 = vld [vmem:[%s1486 + $0x1f7] sm:$0xff]
        %1551 = vrot.lane.b32.xlu0 %v1487, 6
        %v1552 = vpop.permute.xlu0 %1551
        %1553 = vrot.lane.b32.xlu0 %v1488, 6
        %v1554 = vpop.permute.xlu0 %1553
        %1555 = vrot.lane.b32.xlu0 %v1489, 6
        %v1556 = vpop.permute.xlu0 %1555
        %1557 = vrot.lane.b32.xlu0 %v1490, 6
        %v1558 = vpop.permute.xlu0 %1557
        %1559 = vrot.lane.b32.xlu0 %v1491, 6
        %v1560 = vpop.permute.xlu0 %1559
        %1561 = vrot.lane.b32.xlu0 %v1492, 6
        %v1562 = vpop.permute.xlu0 %1561
        %1563 = vrot.lane.b32.xlu0 %v1493, 6
        %v1564 = vpop.permute.xlu0 %1563
        %1565 = vrot.lane.b32.xlu0 %v1494, 6
        %v1566 = vpop.permute.xlu0 %1565
        %1567 = vrot.lane.b32.xlu0 %v1495, 6
        %v1568 = vpop.permute.xlu0 %1567
        %1569 = vrot.lane.b32.xlu0 %v1496, 6
        %v1570 = vpop.permute.xlu0 %1569
        %1571 = vrot.lane.b32.xlu0 %v1497, 6
        %v1572 = vpop.permute.xlu0 %1571
        %1573 = vrot.lane.b32.xlu0 %v1498, 6
        %v1574 = vpop.permute.xlu0 %1573
        %1575 = vrot.lane.b32.xlu0 %v1499, 6
        %v1576 = vpop.permute.xlu0 %1575
        %1577 = vrot.lane.b32.xlu0 %v1500, 6
        %v1578 = vpop.permute.xlu0 %1577
        %1579 = vrot.lane.b32.xlu0 %v1501, 6
        %v1580 = vpop.permute.xlu0 %1579
        %1581 = vrot.lane.b32.xlu0 %v1502, 6
        %v1582 = vpop.permute.xlu0 %1581
        %1583 = vrot.lane.b32.xlu0 %v1503, 6
        %v1584 = vpop.permute.xlu0 %1583
        %1585 = vrot.lane.b32.xlu0 %v1504, 6
        %v1586 = vpop.permute.xlu0 %1585
        %1587 = vrot.lane.b32.xlu0 %v1505, 6
        %v1588 = vpop.permute.xlu0 %1587
        %1589 = vrot.lane.b32.xlu0 %v1506, 6
        %v1590 = vpop.permute.xlu0 %1589
        %1591 = vrot.lane.b32.xlu0 %v1507, 6
        %v1592 = vpop.permute.xlu0 %1591
        %1593 = vrot.lane.b32.xlu0 %v1508, 6
        %v1594 = vpop.permute.xlu0 %1593
        %1595 = vrot.lane.b32.xlu0 %v1509, 6
        %v1596 = vpop.permute.xlu0 %1595
        %1597 = vrot.lane.b32.xlu0 %v1510, 6
        %v1598 = vpop.permute.xlu0 %1597
        %1599 = vrot.lane.b32.xlu0 %v1511, 6
        %v1600 = vpop.permute.xlu0 %1599
        %1601 = vrot.lane.b32.xlu0 %v1512, 6
        %v1602 = vpop.permute.xlu0 %1601
        %1603 = vrot.lane.b32.xlu0 %v1513, 6
        %v1604 = vpop.permute.xlu0 %1603
        %1605 = vrot.lane.b32.xlu0 %v1514, 6
        %v1606 = vpop.permute.xlu0 %1605
        %1607 = vrot.lane.b32.xlu0 %v1515, 6
        %v1608 = vpop.permute.xlu0 %1607
        %1609 = vrot.lane.b32.xlu0 %v1516, 6
        %v1610 = vpop.permute.xlu0 %1609
        %1611 = vrot.lane.b32.xlu0 %v1517, 6
        %v1612 = vpop.permute.xlu0 %1611
        %1613 = vrot.lane.b32.xlu0 %v1518, 6
        %v1614 = vpop.permute.xlu0 %1613
        %vm1647 = vcmask 56368
        %1648 = vst.msk [vmem:[#allocation3] sm:$0xff] %vm1647, %v1552
        %1649 = vst.msk [vmem:[#allocation3 + $0x18] sm:$0xff] %vm1647, %v1554
        %1650 = vst.msk [vmem:[#allocation3 + $0x30] sm:$0xff] %vm1647, %v1556
        %1651 = vst.msk [vmem:[#allocation3 + $0x48] sm:$0xff] %vm1647, %v1558
        %1652 = vst.msk [vmem:[#allocation3 + $0x60] sm:$0xff] %vm1647, %v1560
        %1653 = vst.msk [vmem:[#allocation3 + $0x78] sm:$0xff] %vm1647, %v1562
        %1654 = vst.msk [vmem:[#allocation3 + $0x90] sm:$0xff] %vm1647, %v1564
        %1655 = vst.msk [vmem:[#allocation3 + $0xa8] sm:$0xff] %vm1647, %v1566
        %1656 = vst.msk [vmem:[#allocation3 + $0xc0] sm:$0xff] %vm1647, %v1568
        %1657 = vst.msk [vmem:[#allocation3 + $0xd8] sm:$0xff] %vm1647, %v1570
        %1658 = vst.msk [vmem:[#allocation3 + $0xf0] sm:$0xff] %vm1647, %v1572
        %1659 = vst.msk [vmem:[#allocation3 + $0x108] sm:$0xff] %vm1647, %v1574
        %1660 = vst.msk [vmem:[#allocation3 + $0x120] sm:$0xff] %vm1647, %v1576
        %1661 = vst.msk [vmem:[#allocation3 + $0x138] sm:$0xff] %vm1647, %v1578
        %1662 = vst.msk [vmem:[#allocation3 + $0x150] sm:$0xff] %vm1647, %v1580
        %1663 = vst.msk [vmem:[#allocation3 + $0x168] sm:$0xff] %vm1647, %v1582
        %1664 = vst.msk [vmem:[#allocation3 + $0x180] sm:$0xff] %vm1647, %v1584
        %1665 = vst.msk [vmem:[#allocation3 + $0x198] sm:$0xff] %vm1647, %v1586
        %1666 = vst.msk [vmem:[#allocation3 + $0x1b0] sm:$0xff] %vm1647, %v1588
        %1667 = vst.msk [vmem:[#allocation3 + $0x1c8] sm:$0xff] %vm1647, %v1590
        %1668 = vst.msk [vmem:[#allocation3 + $0x1e0] sm:$0xff] %vm1647, %v1592
        %1669 = vst.msk [vmem:[#allocation3 + $0x1f8] sm:$0xff] %vm1647, %v1594
        %1670 = vst.msk [vmem:[#allocation3 + $0x210] sm:$0xff] %vm1647, %v1596
        %1671 = vst.msk [vmem:[#allocation3 + $0x228] sm:$0xff] %vm1647, %v1598
        %1672 = vst.msk [vmem:[#allocation3 + $0x240] sm:$0xff] %vm1647, %v1600
        %1673 = vst.msk [vmem:[#allocation3 + $0x258] sm:$0xff] %vm1647, %v1602
        %1674 = vst.msk [vmem:[#allocation3 + $0x270] sm:$0xff] %vm1647, %v1604
        %1675 = vst.msk [vmem:[#allocation3 + $0x288] sm:$0xff] %vm1647, %v1606
        %1676 = vst.msk [vmem:[#allocation3 + $0x2a0] sm:$0xff] %vm1647, %v1608
        %1677 = vst.msk [vmem:[#allocation3 + $0x2b8] sm:$0xff] %vm1647, %v1610
        %1678 = vst.msk [vmem:[#allocation3 + $0x2d0] sm:$0xff] %vm1647, %v1612
        %1679 = vst.msk [vmem:[#allocation3 + $0x2e8] sm:$0xff] %vm1647, %v1614
        %v1680 = vld [vmem:[%s1486] sm:$0xff]
        %v1681 = vld [vmem:[%s1486 + $0x8] sm:$0xff]
        %v1682 = vld [vmem:[%s1486 + $0x20] sm:$0xff]
        %v1683 = vld [vmem:[%s1486 + $0x28] sm:$0xff]
        %v1684 = vld [vmem:[%s1486 + $0x40] sm:$0xff]
        %v1685 = vld [vmem:[%s1486 + $0x48] sm:$0xff]
        %v1686 = vld [vmem:[%s1486 + $0x60] sm:$0xff]
        %v1687 = vld [vmem:[%s1486 + $0x68] sm:$0xff]
        %v1688 = vld [vmem:[%s1486 + $0x80] sm:$0xff]
        %v1689 = vld [vmem:[%s1486 + $0x88] sm:$0xff]
        %v1690 = vld [vmem:[%s1486 + $0xa0] sm:$0xff]
        %v1691 = vld [vmem:[%s1486 + $0xa8] sm:$0xff]
        %v1692 = vld [vmem:[%s1486 + $0xc0] sm:$0xff]
        %v1693 = vld [vmem:[%s1486 + $0xc8] sm:$0xff]
        %v1694 = vld [vmem:[%s1486 + $0xe0] sm:$0xff]
        %v1695 = vld [vmem:[%s1486 + $0xe8] sm:$0xff]
        %v1696 = vld [vmem:[%s1486 + $0x100] sm:$0xff]
        %v1697 = vld [vmem:[%s1486 + $0x108] sm:$0xff]
        %v1698 = vld [vmem:[%s1486 + $0x120] sm:$0xff]
        %v1699 = vld [vmem:[%s1486 + $0x128] sm:$0xff]
        %v1700 = vld [vmem:[%s1486 + $0x140] sm:$0xff]
        %v1701 = vld [vmem:[%s1486 + $0x148] sm:$0xff]
        %v1702 = vld [vmem:[%s1486 + $0x160] sm:$0xff]
        %v1703 = vld [vmem:[%s1486 + $0x168] sm:$0xff]
        %v1704 = vld [vmem:[%s1486 + $0x180] sm:$0xff]
        %v1705 = vld [vmem:[%s1486 + $0x188] sm:$0xff]
        %v1706 = vld [vmem:[%s1486 + $0x1a0] sm:$0xff]
        %v1707 = vld [vmem:[%s1486 + $0x1a8] sm:$0xff]
        %v1708 = vld [vmem:[%s1486 + $0x1c0] sm:$0xff]
        %v1709 = vld [vmem:[%s1486 + $0x1c8] sm:$0xff]
        %v1710 = vld [vmem:[%s1486 + $0x1e0] sm:$0xff]
        %v1711 = vld [vmem:[%s1486 + $0x1e8] sm:$0xff]
        %1744 = vrot.lane.b32.xlu0 %v1680, 7
        %v1745 = vpop.permute.xlu0 %1744
        %1746 = vrot.lane.b32.xlu0 %v1681, 7
        %v1747 = vpop.permute.xlu0 %1746
        %1748 = vrot.lane.b32.xlu0 %v1682, 7
        %v1749 = vpop.permute.xlu0 %1748
        %1750 = vrot.lane.b32.xlu0 %v1683, 7
        %v1751 = vpop.permute.xlu0 %1750
        %1752 = vrot.lane.b32.xlu0 %v1684, 7
        %v1753 = vpop.permute.xlu0 %1752
        %1754 = vrot.lane.b32.xlu0 %v1685, 7
        %v1755 = vpop.permute.xlu0 %1754
        %1756 = vrot.lane.b32.xlu0 %v1686, 7
        %v1757 = vpop.permute.xlu0 %1756
        %1758 = vrot.lane.b32.xlu0 %v1687, 7
        %v1759 = vpop.permute.xlu0 %1758
        %1760 = vrot.lane.b32.xlu0 %v1688, 7
        %v1761 = vpop.permute.xlu0 %1760
        %1762 = vrot.lane.b32.xlu0 %v1689, 7
        %v1763 = vpop.permute.xlu0 %1762
        %1764 = vrot.lane.b32.xlu0 %v1690, 7
        %v1765 = vpop.permute.xlu0 %1764
        %1766 = vrot.lane.b32.xlu0 %v1691, 7
        %v1767 = vpop.permute.xlu0 %1766
        %1768 = vrot.lane.b32.xlu0 %v1692, 7
        %v1769 = vpop.permute.xlu0 %1768
        %1770 = vrot.lane.b32.xlu0 %v1693, 7
        %v1771 = vpop.permute.xlu0 %1770
        %1772 = vrot.lane.b32.xlu0 %v1694, 7
        %v1773 = vpop.permute.xlu0 %1772
        %1774 = vrot.lane.b32.xlu0 %v1695, 7
        %v1775 = vpop.permute.xlu0 %1774
        %1776 = vrot.lane.b32.xlu0 %v1696, 7
        %v1777 = vpop.permute.xlu0 %1776
        %1778 = vrot.lane.b32.xlu0 %v1697, 7
        %v1779 = vpop.permute.xlu0 %1778
        %1780 = vrot.lane.b32.xlu0 %v1698, 7
        %v1781 = vpop.permute.xlu0 %1780
        %1782 = vrot.lane.b32.xlu0 %v1699, 7
        %v1783 = vpop.permute.xlu0 %1782
        %1784 = vrot.lane.b32.xlu0 %v1700, 7
        %v1785 = vpop.permute.xlu0 %1784
        %1786 = vrot.lane.b32.xlu0 %v1701, 7
        %v1787 = vpop.permute.xlu0 %1786
        %1788 = vrot.lane.b32.xlu0 %v1702, 7
        %v1789 = vpop.permute.xlu0 %1788
        %1790 = vrot.lane.b32.xlu0 %v1703, 7
        %v1791 = vpop.permute.xlu0 %1790
        %1792 = vrot.lane.b32.xlu0 %v1704, 7
        %v1793 = vpop.permute.xlu0 %1792
        %1794 = vrot.lane.b32.xlu0 %v1705, 7
        %v1795 = vpop.permute.xlu0 %1794
        %1796 = vrot.lane.b32.xlu0 %v1706, 7
        %v1797 = vpop.permute.xlu0 %1796
        %1798 = vrot.lane.b32.xlu0 %v1707, 7
        %v1799 = vpop.permute.xlu0 %1798
        %1800 = vrot.lane.b32.xlu0 %v1708, 7
        %v1801 = vpop.permute.xlu0 %1800
        %1802 = vrot.lane.b32.xlu0 %v1709, 7
        %v1803 = vpop.permute.xlu0 %1802
        %1804 = vrot.lane.b32.xlu0 %v1710, 7
        %v1805 = vpop.permute.xlu0 %1804
        %1806 = vrot.lane.b32.xlu0 %v1711, 7
        %v1807 = vpop.permute.xlu0 %1806
        %vm1840 = vcmask 64568
        %1841 = vst.msk [vmem:[#allocation3] sm:$0xff] %vm1840, %v1745
        %1842 = vst.msk [vmem:[#allocation3 + $0x18] sm:$0xff] %vm1840, %v1747
        %1843 = vst.msk [vmem:[#allocation3 + $0x30] sm:$0xff] %vm1840, %v1749
        %1844 = vst.msk [vmem:[#allocation3 + $0x48] sm:$0xff] %vm1840, %v1751
        %1845 = vst.msk [vmem:[#allocation3 + $0x60] sm:$0xff] %vm1840, %v1753
        %1846 = vst.msk [vmem:[#allocation3 + $0x78] sm:$0xff] %vm1840, %v1755
        %1847 = vst.msk [vmem:[#allocation3 + $0x90] sm:$0xff] %vm1840, %v1757
        %1848 = vst.msk [vmem:[#allocation3 + $0xa8] sm:$0xff] %vm1840, %v1759
        %1849 = vst.msk [vmem:[#allocation3 + $0xc0] sm:$0xff] %vm1840, %v1761
        %1850 = vst.msk [vmem:[#allocation3 + $0xd8] sm:$0xff] %vm1840, %v1763
        %1851 = vst.msk [vmem:[#allocation3 + $0xf0] sm:$0xff] %vm1840, %v1765
        %1852 = vst.msk [vmem:[#allocation3 + $0x108] sm:$0xff] %vm1840, %v1767
        %1853 = vst.msk [vmem:[#allocation3 + $0x120] sm:$0xff] %vm1840, %v1769
        %1854 = vst.msk [vmem:[#allocation3 + $0x138] sm:$0xff] %vm1840, %v1771
        %1855 = vst.msk [vmem:[#allocation3 + $0x150] sm:$0xff] %vm1840, %v1773
        %1856 = vst.msk [vmem:[#allocation3 + $0x168] sm:$0xff] %vm1840, %v1775
        %1857 = vst.msk [vmem:[#allocation3 + $0x180] sm:$0xff] %vm1840, %v1777
        %1858 = vst.msk [vmem:[#allocation3 + $0x198] sm:$0xff] %vm1840, %v1779
        %1859 = vst.msk [vmem:[#allocation3 + $0x1b0] sm:$0xff] %vm1840, %v1781
        %1860 = vst.msk [vmem:[#allocation3 + $0x1c8] sm:$0xff] %vm1840, %v1783
        %1861 = vst.msk [vmem:[#allocation3 + $0x1e0] sm:$0xff] %vm1840, %v1785
        %1862 = vst.msk [vmem:[#allocation3 + $0x1f8] sm:$0xff] %vm1840, %v1787
        %1863 = vst.msk [vmem:[#allocation3 + $0x210] sm:$0xff] %vm1840, %v1789
        %1864 = vst.msk [vmem:[#allocation3 + $0x228] sm:$0xff] %vm1840, %v1791
        %1865 = vst.msk [vmem:[#allocation3 + $0x240] sm:$0xff] %vm1840, %v1793
        %1866 = vst.msk [vmem:[#allocation3 + $0x258] sm:$0xff] %vm1840, %v1795
        %1867 = vst.msk [vmem:[#allocation3 + $0x270] sm:$0xff] %vm1840, %v1797
        %1868 = vst.msk [vmem:[#allocation3 + $0x288] sm:$0xff] %vm1840, %v1799
        %1869 = vst.msk [vmem:[#allocation3 + $0x2a0] sm:$0xff] %vm1840, %v1801
        %1870 = vst.msk [vmem:[#allocation3 + $0x2b8] sm:$0xff] %vm1840, %v1803
        %1871 = vst.msk [vmem:[#allocation3 + $0x2d0] sm:$0xff] %vm1840, %v1805
        %1872 = vst.msk [vmem:[#allocation3 + $0x2e8] sm:$0xff] %vm1840, %v1807
        %v1873 = vld [vmem:[%s1486 + $0x1] sm:$0xff]
        %v1874 = vld [vmem:[%s1486 + $0x9] sm:$0xff]
        %v1875 = vld [vmem:[%s1486 + $0x21] sm:$0xff]
        %v1876 = vld [vmem:[%s1486 + $0x29] sm:$0xff]
        %v1877 = vld [vmem:[%s1486 + $0x41] sm:$0xff]
        %v1878 = vld [vmem:[%s1486 + $0x49] sm:$0xff]
        %v1879 = vld [vmem:[%s1486 + $0x61] sm:$0xff]
        %v1880 = vld [vmem:[%s1486 + $0x69] sm:$0xff]
        %v1881 = vld [vmem:[%s1486 + $0x81] sm:$0xff]
        %v1882 = vld [vmem:[%s1486 + $0x89] sm:$0xff]
        %v1883 = vld [vmem:[%s1486 + $0xa1] sm:$0xff]
        %v1884 = vld [vmem:[%s1486 + $0xa9] sm:$0xff]
        %v1885 = vld [vmem:[%s1486 + $0xc1] sm:$0xff]
        %v1886 = vld [vmem:[%s1486 + $0xc9] sm:$0xff]
        %v1887 = vld [vmem:[%s1486 + $0xe1] sm:$0xff]
        %v1888 = vld [vmem:[%s1486 + $0xe9] sm:$0xff]
        %v1889 = vld [vmem:[%s1486 + $0x101] sm:$0xff]
        %v1890 = vld [vmem:[%s1486 + $0x109] sm:$0xff]
        %v1891 = vld [vmem:[%s1486 + $0x121] sm:$0xff]
        %v1892 = vld [vmem:[%s1486 + $0x129] sm:$0xff]
        %v1893 = vld [vmem:[%s1486 + $0x141] sm:$0xff]
        %v1894 = vld [vmem:[%s1486 + $0x149] sm:$0xff]
        %v1895 = vld [vmem:[%s1486 + $0x161] sm:$0xff]
        %v1896 = vld [vmem:[%s1486 + $0x169] sm:$0xff]
        %v1897 = vld [vmem:[%s1486 + $0x181] sm:$0xff]
        %v1898 = vld [vmem:[%s1486 + $0x189] sm:$0xff]
        %v1899 = vld [vmem:[%s1486 + $0x1a1] sm:$0xff]
        %v1900 = vld [vmem:[%s1486 + $0x1a9] sm:$0xff]
        %v1901 = vld [vmem:[%s1486 + $0x1c1] sm:$0xff]
        %v1902 = vld [vmem:[%s1486 + $0x1c9] sm:$0xff]
        %v1903 = vld [vmem:[%s1486 + $0x1e1] sm:$0xff]
        %v1904 = vld [vmem:[%s1486 + $0x1e9] sm:$0xff]
        %1937 = vrot.lane.b32.xlu0 %v1873, 8
        %v1938 = vpop.permute.xlu0 %1937
        %1939 = vrot.lane.b32.xlu0 %v1874, 8
        %v1940 = vpop.permute.xlu0 %1939
        %1941 = vrot.lane.b32.xlu0 %v1875, 8
        %v1942 = vpop.permute.xlu0 %1941
        %1943 = vrot.lane.b32.xlu0 %v1876, 8
        %v1944 = vpop.permute.xlu0 %1943
        %1945 = vrot.lane.b32.xlu0 %v1877, 8
        %v1946 = vpop.permute.xlu0 %1945
        %1947 = vrot.lane.b32.xlu0 %v1878, 8
        %v1948 = vpop.permute.xlu0 %1947
        %1949 = vrot.lane.b32.xlu0 %v1879, 8
        %v1950 = vpop.permute.xlu0 %1949
        %1951 = vrot.lane.b32.xlu0 %v1880, 8
        %v1952 = vpop.permute.xlu0 %1951
        %1953 = vrot.lane.b32.xlu0 %v1881, 8
        %v1954 = vpop.permute.xlu0 %1953
        %1955 = vrot.lane.b32.xlu0 %v1882, 8
        %v1956 = vpop.permute.xlu0 %1955
        %1957 = vrot.lane.b32.xlu0 %v1883, 8
        %v1958 = vpop.permute.xlu0 %1957
        %1959 = vrot.lane.b32.xlu0 %v1884, 8
        %v1960 = vpop.permute.xlu0 %1959
        %1961 = vrot.lane.b32.xlu0 %v1885, 8
        %v1962 = vpop.permute.xlu0 %1961
        %1963 = vrot.lane.b32.xlu0 %v1886, 8
        %v1964 = vpop.permute.xlu0 %1963
        %1965 = vrot.lane.b32.xlu0 %v1887, 8
        %v1966 = vpop.permute.xlu0 %1965
        %1967 = vrot.lane.b32.xlu0 %v1888, 8
        %v1968 = vpop.permute.xlu0 %1967
        %1969 = vrot.lane.b32.xlu0 %v1889, 8
        %v1970 = vpop.permute.xlu0 %1969
        %1971 = vrot.lane.b32.xlu0 %v1890, 8
        %v1972 = vpop.permute.xlu0 %1971
        %1973 = vrot.lane.b32.xlu0 %v1891, 8
        %v1974 = vpop.permute.xlu0 %1973
        %1975 = vrot.lane.b32.xlu0 %v1892, 8
        %v1976 = vpop.permute.xlu0 %1975
        %1977 = vrot.lane.b32.xlu0 %v1893, 8
        %v1978 = vpop.permute.xlu0 %1977
        %1979 = vrot.lane.b32.xlu0 %v1894, 8
        %v1980 = vpop.permute.xlu0 %1979
        %1981 = vrot.lane.b32.xlu0 %v1895, 8
        %v1982 = vpop.permute.xlu0 %1981
        %1983 = vrot.lane.b32.xlu0 %v1896, 8
        %v1984 = vpop.permute.xlu0 %1983
        %1985 = vrot.lane.b32.xlu0 %v1897, 8
        %v1986 = vpop.permute.xlu0 %1985
        %1987 = vrot.lane.b32.xlu0 %v1898, 8
        %v1988 = vpop.permute.xlu0 %1987
        %1989 = vrot.lane.b32.xlu0 %v1899, 8
        %v1990 = vpop.permute.xlu0 %1989
        %1991 = vrot.lane.b32.xlu0 %v1900, 8
        %v1992 = vpop.permute.xlu0 %1991
        %1993 = vrot.lane.b32.xlu0 %v1901, 8
        %v1994 = vpop.permute.xlu0 %1993
        %1995 = vrot.lane.b32.xlu0 %v1902, 8
        %v1996 = vpop.permute.xlu0 %1995
        %1997 = vrot.lane.b32.xlu0 %v1903, 8
        %v1998 = vpop.permute.xlu0 %1997
        %1999 = vrot.lane.b32.xlu0 %v1904, 8
        %v2000 = vpop.permute.xlu0 %1999
        %vm2033 = vcmask 72768
        %2034 = vst.msk [vmem:[#allocation3] sm:$0xff] %vm2033, %v1938
        %2035 = vst.msk [vmem:[#allocation3 + $0x18] sm:$0xff] %vm2033, %v1940
        %2036 = vst.msk [vmem:[#allocation3 + $0x30] sm:$0xff] %vm2033, %v1942
        %2037 = vst.msk [vmem:[#allocation3 + $0x48] sm:$0xff] %vm2033, %v1944
        %2038 = vst.msk [vmem:[#allocation3 + $0x60] sm:$0xff] %vm2033, %v1946
        %2039 = vst.msk [vmem:[#allocation3 + $0x78] sm:$0xff] %vm2033, %v1948
        %2040 = vst.msk [vmem:[#allocation3 + $0x90] sm:$0xff] %vm2033, %v1950
        %2041 = vst.msk [vmem:[#allocation3 + $0xa8] sm:$0xff] %vm2033, %v1952
        %2042 = vst.msk [vmem:[#allocation3 + $0xc0] sm:$0xff] %vm2033, %v1954
        %2043 = vst.msk [vmem:[#allocation3 + $0xd8] sm:$0xff] %vm2033, %v1956
        %2044 = vst.msk [vmem:[#allocation3 + $0xf0] sm:$0xff] %vm2033, %v1958
        %2045 = vst.msk [vmem:[#allocation3 + $0x108] sm:$0xff] %vm2033, %v1960
        %2046 = vst.msk [vmem:[#allocation3 + $0x120] sm:$0xff] %vm2033, %v1962
        %2047 = vst.msk [vmem:[#allocation3 + $0x138] sm:$0xff] %vm2033, %v1964
        %2048 = vst.msk [vmem:[#allocation3 + $0x150] sm:$0xff] %vm2033, %v1966
        %2049 = vst.msk [vmem:[#allocation3 + $0x168] sm:$0xff] %vm2033, %v1968
        %2050 = vst.msk [vmem:[#allocation3 + $0x180] sm:$0xff] %vm2033, %v1970
        %2051 = vst.msk [vmem:[#allocation3 + $0x198] sm:$0xff] %vm2033, %v1972
        %2052 = vst.msk [vmem:[#allocation3 + $0x1b0] sm:$0xff] %vm2033, %v1974
        %2053 = vst.msk [vmem:[#allocation3 + $0x1c8] sm:$0xff] %vm2033, %v1976
        %2054 = vst.msk [vmem:[#allocation3 + $0x1e0] sm:$0xff] %vm2033, %v1978
        %2055 = vst.msk [vmem:[#allocation3 + $0x1f8] sm:$0xff] %vm2033, %v1980
        %2056 = vst.msk [vmem:[#allocation3 + $0x210] sm:$0xff] %vm2033, %v1982
        %2057 = vst.msk [vmem:[#allocation3 + $0x228] sm:$0xff] %vm2033, %v1984
        %2058 = vst.msk [vmem:[#allocation3 + $0x240] sm:$0xff] %vm2033, %v1986
        %2059 = vst.msk [vmem:[#allocation3 + $0x258] sm:$0xff] %vm2033, %v1988
        %2060 = vst.msk [vmem:[#allocation3 + $0x270] sm:$0xff] %vm2033, %v1990
        %2061 = vst.msk [vmem:[#allocation3 + $0x288] sm:$0xff] %vm2033, %v1992
        %2062 = vst.msk [vmem:[#allocation3 + $0x2a0] sm:$0xff] %vm2033, %v1994
        %2063 = vst.msk [vmem:[#allocation3 + $0x2b8] sm:$0xff] %vm2033, %v1996
        %2064 = vst.msk [vmem:[#allocation3 + $0x2d0] sm:$0xff] %vm2033, %v1998
        %2065 = vst.msk [vmem:[#allocation3 + $0x2e8] sm:$0xff] %vm2033, %v2000
        %v2066 = vld [vmem:[#allocation3] sm:$0xff]
        %v2067 = vld [vmem:[#allocation3 + $0x18] sm:$0xff]
        %v2068 = vld [vmem:[#allocation3 + $0x30] sm:$0xff]
        %v2069 = vld [vmem:[#allocation3 + $0x48] sm:$0xff]
        %v2070 = vld [vmem:[#allocation3 + $0x60] sm:$0xff]
        %v2071 = vld [vmem:[#allocation3 + $0x78] sm:$0xff]
        %v2072 = vld [vmem:[#allocation3 + $0x90] sm:$0xff]
        %v2073 = vld [vmem:[#allocation3 + $0xa8] sm:$0xff]
        %v2074 = vld [vmem:[#allocation3 + $0xc0] sm:$0xff]
        %v2075 = vld [vmem:[#allocation3 + $0xd8] sm:$0xff]
        %v2076 = vld [vmem:[#allocation3 + $0xf0] sm:$0xff]
        %v2077 = vld [vmem:[#allocation3 + $0x108] sm:$0xff]
        %v2078 = vld [vmem:[#allocation3 + $0x120] sm:$0xff]
        %v2079 = vld [vmem:[#allocation3 + $0x138] sm:$0xff]
        %v2080 = vld [vmem:[#allocation3 + $0x150] sm:$0xff]
        %v2081 = vld [vmem:[#allocation3 + $0x168] sm:$0xff]
        %v2082 = vld [vmem:[#allocation3 + $0x180] sm:$0xff]
        %v2083 = vld [vmem:[#allocation3 + $0x198] sm:$0xff]
        %v2084 = vld [vmem:[#allocation3 + $0x1b0] sm:$0xff]
        %v2085 = vld [vmem:[#allocation3 + $0x1c8] sm:$0xff]
        %v2086 = vld [vmem:[#allocation3 + $0x1e0] sm:$0xff]
        %v2087 = vld [vmem:[#allocation3 + $0x1f8] sm:$0xff]
        %v2088 = vld [vmem:[#allocation3 + $0x210] sm:$0xff]
        %v2089 = vld [vmem:[#allocation3 + $0x228] sm:$0xff]
        %v2090 = vld [vmem:[#allocation3 + $0x240] sm:$0xff]
        %v2091 = vld [vmem:[#allocation3 + $0x258] sm:$0xff]
        %v2092 = vld [vmem:[#allocation3 + $0x270] sm:$0xff]
        %v2093 = vld [vmem:[#allocation3 + $0x288] sm:$0xff]
        %v2094 = vld [vmem:[#allocation3 + $0x2a0] sm:$0xff]
        %v2095 = vld [vmem:[#allocation3 + $0x2b8] sm:$0xff]
        %v2096 = vld [vmem:[#allocation3 + $0x2d0] sm:$0xff]
        %v2097 = vld [vmem:[#allocation3 + $0x2e8] sm:$0xff]
        %v2098 = vld [vmem:[%s1] sm:$0xff]
        %v2099 = vld [vmem:[%s1 + $0x8] sm:$0x1]
        %v2100 = vld [vmem:[%s2] sm:$0x1]
        %v2102 = vperm.slane %v2100, 0
        %vm2104 = vcmask 72704
        %v2106 = vsel %vm2104, %v2066, 0
        %v2109 = vsel %vm2104, %v2067, 0
        %v2112 = vsel %vm2104, %v2068, 0
        %v2115 = vsel %vm2104, %v2069, 0
        %v2118 = vsel %vm2104, %v2070, 0
        %v2121 = vsel %vm2104, %v2071, 0
        %v2124 = vsel %vm2104, %v2072, 0
        %v2127 = vsel %vm2104, %v2073, 0
        %v2130 = vsel %vm2104, %v2074, 0
        %v2133 = vsel %vm2104, %v2075, 0
        %v2136 = vsel %vm2104, %v2076, 0
        %v2139 = vsel %vm2104, %v2077, 0
        %v2142 = vsel %vm2104, %v2078, 0
        %v2145 = vsel %vm2104, %v2079, 0
        %v2148 = vsel %vm2104, %v2080, 0
        %v2151 = vsel %vm2104, %v2081, 0
        %v2154 = vsel %vm2104, %v2082, 0
        %v2157 = vsel %vm2104, %v2083, 0
        %v2160 = vsel %vm2104, %v2084, 0
        %v2163 = vsel %vm2104, %v2085, 0
        %v2166 = vsel %vm2104, %v2086, 0
        %v2169 = vsel %vm2104, %v2087, 0
        %v2172 = vsel %vm2104, %v2088, 0
        %v2175 = vsel %vm2104, %v2089, 0
        %v2178 = vsel %vm2104, %v2090, 0
        %v2181 = vsel %vm2104, %v2091, 0
        %v2184 = vsel %vm2104, %v2092, 0
        %v2187 = vsel %vm2104, %v2093, 0
        %v2190 = vsel %vm2104, %v2094, 0
        %v2193 = vsel %vm2104, %v2095, 0
        %v2196 = vsel %vm2104, %v2096, 0
        %v2199 = vsel %vm2104, %v2097, 0
        %vm2201 = vcmask 1040384
        %v2203 = vsel %vm2201, %v2099, 0
        %2205 = vmatpush.msra.mxu0 0.0
        %2206 = vmatpush.msra.mxu0 0.0
        %2207 = vmatpush.msra.mxu0 0.0
        %2208 = vmatpush.msra.mxu0 0.0
        %2209 = vmatpush.msra.mxu0 0.0
        %2210 = vmatpush.msra.mxu0 0.0
        %2211 = vmatpush.msra.mxu0 0.0
        %2212 = vmatpush.msra.mxu0 0.0
        %2213 = vmatpush.msra.mxu0 0.0
        %2214 = vmatpush.msra.mxu0 0.0
        %2215 = vmatpush.msra.mxu0 0.0
        %2216 = vmatpush.msra.mxu0 0.0
        %2217 = vmatpush.msra.mxu0 0.0
        %2218 = vmatpush.msra.mxu0 0.0
        %2219 = vmatpush.msra.mxu0 %v2203
        %2220 = vmatpush.msra.mxu0 %v2098
        %2221 = vmatmul.f32.gmra.mxu0 %v2106
        %v2222 = vpop.f32.mrf.mxu0
        %v2223 = vadd.f32 %v2102, %v2222
        %2224 = vmatmul.f32.gmra.mxu0 %v2109
        %v2225 = vpop.f32.mrf.mxu0
        %v2226 = vadd.f32 %v2102, %v2225
        %2227 = vmatmul.f32.gmra.mxu0 %v2112
        %v2228 = vpop.f32.mrf.mxu0
        %v2229 = vadd.f32 %v2102, %v2228
        %2230 = vmatmul.f32.gmra.mxu0 %v2115
        %v2231 = vpop.f32.mrf.mxu0
        %v2232 = vadd.f32 %v2102, %v2231
        %2233 = vmatmul.f32.gmra.mxu0 %v2118
        %v2234 = vpop.f32.mrf.mxu0
        %v2235 = vadd.f32 %v2102, %v2234
        %2236 = vmatmul.f32.gmra.mxu0 %v2121
        %v2237 = vpop.f32.mrf.mxu0
        %v2238 = vadd.f32 %v2102, %v2237
        %2239 = vmatmul.f32.gmra.mxu0 %v2124
        %v2240 = vpop.f32.mrf.mxu0
        %v2241 = vadd.f32 %v2102, %v2240
        %2242 = vmatmul.f32.gmra.mxu0 %v2127
        %v2243 = vpop.f32.mrf.mxu0
        %v2244 = vadd.f32 %v2102, %v2243
        %2245 = vmatmul.f32.gmra.mxu0 %v2130
        %v2246 = vpop.f32.mrf.mxu0
        %v2247 = vadd.f32 %v2102, %v2246
        %2248 = vmatmul.f32.gmra.mxu0 %v2133
        %v2249 = vpop.f32.mrf.mxu0
        %v2250 = vadd.f32 %v2102, %v2249
        %2251 = vmatmul.f32.gmra.mxu0 %v2136
        %v2252 = vpop.f32.mrf.mxu0
        %v2253 = vadd.f32 %v2102, %v2252
        %2254 = vmatmul.f32.gmra.mxu0 %v2139
        %v2255 = vpop.f32.mrf.mxu0
        %v2256 = vadd.f32 %v2102, %v2255
        %2257 = vmatmul.f32.gmra.mxu0 %v2142
        %v2258 = vpop.f32.mrf.mxu0
        %v2259 = vadd.f32 %v2102, %v2258
        %2260 = vmatmul.f32.gmra.mxu0 %v2145
        %v2261 = vpop.f32.mrf.mxu0
        %v2262 = vadd.f32 %v2102, %v2261
        %2263 = vmatmul.f32.gmra.mxu0 %v2148
        %v2264 = vpop.f32.mrf.mxu0
        %v2265 = vadd.f32 %v2102, %v2264
        %2266 = vmatmul.f32.gmra.mxu0 %v2151
        %v2267 = vpop.f32.mrf.mxu0
        %v2268 = vadd.f32 %v2102, %v2267
        %2269 = vmatmul.f32.gmra.mxu0 %v2154
        %v2270 = vpop.f32.mrf.mxu0
        %v2271 = vadd.f32 %v2102, %v2270
        %2272 = vmatmul.f32.gmra.mxu0 %v2157
        %v2273 = vpop.f32.mrf.mxu0
        %v2274 = vadd.f32 %v2102, %v2273
        %2275 = vmatmul.f32.gmra.mxu0 %v2160
        %v2276 = vpop.f32.mrf.mxu0
        %v2277 = vadd.f32 %v2102, %v2276
        %2278 = vmatmul.f32.gmra.mxu0 %v2163
        %v2279 = vpop.f32.mrf.mxu0
        %v2280 = vadd.f32 %v2102, %v2279
        %2281 = vmatmul.f32.gmra.mxu0 %v2166
        %v2282 = vpop.f32.mrf.mxu0
        %v2283 = vadd.f32 %v2102, %v2282
        %2284 = vmatmul.f32.gmra.mxu0 %v2169
        %v2285 = vpop.f32.mrf.mxu0
        %v2286 = vadd.f32 %v2102, %v2285
        %2287 = vmatmul.f32.gmra.mxu0 %v2172
        %v2288 = vpop.f32.mrf.mxu0
        %v2289 = vadd.f32 %v2102, %v2288
        %2290 = vmatmul.f32.gmra.mxu0 %v2175
        %v2291 = vpop.f32.mrf.mxu0
        %v2292 = vadd.f32 %v2102, %v2291
        %2293 = vmatmul.f32.gmra.mxu0 %v2178
        %v2294 = vpop.f32.mrf.mxu0
        %v2295 = vadd.f32 %v2102, %v2294
        %2296 = vmatmul.f32.gmra.mxu0 %v2181
        %v2297 = vpop.f32.mrf.mxu0
        %v2298 = vadd.f32 %v2102, %v2297
        %2299 = vmatmul.f32.gmra.mxu0 %v2184
        %v2300 = vpop.f32.mrf.mxu0
        %v2301 = vadd.f32 %v2102, %v2300
        %2302 = vmatmul.f32.gmra.mxu0 %v2187
        %v2303 = vpop.f32.mrf.mxu0
        %v2304 = vadd.f32 %v2102, %v2303
        %2305 = vmatmul.f32.gmra.mxu0 %v2190
        %v2306 = vpop.f32.mrf.mxu0
        %v2307 = vadd.f32 %v2102, %v2306
        %2308 = vmatmul.f32.gmra.mxu0 %v2193
        %v2309 = vpop.f32.mrf.mxu0
        %v2310 = vadd.f32 %v2102, %v2309
        %2311 = vmatmul.f32.gmra.mxu0 %v2196
        %v2312 = vpop.f32.mrf.mxu0
        %v2313 = vadd.f32 %v2102, %v2312
        %2314 = vmatmul.f32.gmra.mxu0 %v2199
        %v2315 = vpop.f32.mrf.mxu0
        %v2316 = vadd.f32 %v2102, %v2315
        %2317 = vdwg.mxu0
        %v2318 = vmax.f32 %v2223, 0.0
        %v2319 = vmax.f32 %v2226, 0.0
        %v2320 = vmax.f32 %v2229, 0.0
        %v2321 = vmax.f32 %v2232, 0.0
        %v2322 = vmax.f32 %v2235, 0.0
        %v2323 = vmax.f32 %v2238, 0.0
        %v2324 = vmax.f32 %v2241, 0.0
        %v2325 = vmax.f32 %v2244, 0.0
        %v2326 = vmax.f32 %v2247, 0.0
        %v2327 = vmax.f32 %v2250, 0.0
        %v2328 = vmax.f32 %v2253, 0.0
        %v2329 = vmax.f32 %v2256, 0.0
        %v2330 = vmax.f32 %v2259, 0.0
        %v2331 = vmax.f32 %v2262, 0.0
        %v2332 = vmax.f32 %v2265, 0.0
        %v2333 = vmax.f32 %v2268, 0.0
        %v2334 = vmax.f32 %v2271, 0.0
        %v2335 = vmax.f32 %v2274, 0.0
        %v2336 = vmax.f32 %v2277, 0.0
        %v2337 = vmax.f32 %v2280, 0.0
        %v2338 = vmax.f32 %v2283, 0.0
        %v2339 = vmax.f32 %v2286, 0.0
        %v2340 = vmax.f32 %v2289, 0.0
        %v2341 = vmax.f32 %v2292, 0.0
        %v2342 = vmax.f32 %v2295, 0.0
        %v2343 = vmax.f32 %v2298, 0.0
        %v2344 = vmax.f32 %v2301, 0.0
        %v2345 = vmax.f32 %v2304, 0.0
        %v2346 = vmax.f32 %v2307, 0.0
        %v2347 = vmax.f32 %v2310, 0.0
        %v2348 = vmax.f32 %v2313, 0.0
        %v2349 = vmax.f32 %v2316, 0.0
        %vm2350 = vcmask 261120
        %2351 = vst.msk [vmem:[%s382] sm:$0xff] %vm2350, %v2318
        %2352 = vst.msk [vmem:[%s382 + $0x8] sm:$0xff] %vm2350, %v2319
        %2353 = vst.msk [vmem:[%s382 + $0x20] sm:$0xff] %vm2350, %v2320
        %2354 = vst.msk [vmem:[%s382 + $0x28] sm:$0xff] %vm2350, %v2321
        %2355 = vst.msk [vmem:[%s382 + $0x40] sm:$0xff] %vm2350, %v2322
        %2356 = vst.msk [vmem:[%s382 + $0x48] sm:$0xff] %vm2350, %v2323
        %2357 = vst.msk [vmem:[%s382 + $0x60] sm:$0xff] %vm2350, %v2324
        %2358 = vst.msk [vmem:[%s382 + $0x68] sm:$0xff] %vm2350, %v2325
        %2359 = vst.msk [vmem:[%s382 + $0x80] sm:$0xff] %vm2350, %v2326
        %2360 = vst.msk [vmem:[%s382 + $0x88] sm:$0xff] %vm2350, %v2327
        %2361 = vst.msk [vmem:[%s382 + $0xa0] sm:$0xff] %vm2350, %v2328
        %2362 = vst.msk [vmem:[%s382 + $0xa8] sm:$0xff] %vm2350, %v2329
        %2363 = vst.msk [vmem:[%s382 + $0xc0] sm:$0xff] %vm2350, %v2330
        %2364 = vst.msk [vmem:[%s382 + $0xc8] sm:$0xff] %vm2350, %v2331
        %2365 = vst.msk [vmem:[%s382 + $0xe0] sm:$0xff] %vm2350, %v2332
        %2366 = vst.msk [vmem:[%s382 + $0xe8] sm:$0xff] %vm2350, %v2333
        %2367 = vst.msk [vmem:[%s382 + $0x100] sm:$0xff] %vm2350, %v2334
        %2368 = vst.msk [vmem:[%s382 + $0x108] sm:$0xff] %vm2350, %v2335
        %2369 = vst.msk [vmem:[%s382 + $0x120] sm:$0xff] %vm2350, %v2336
        %2370 = vst.msk [vmem:[%s382 + $0x128] sm:$0xff] %vm2350, %v2337
        %2371 = vst.msk [vmem:[%s382 + $0x140] sm:$0xff] %vm2350, %v2338
        %2372 = vst.msk [vmem:[%s382 + $0x148] sm:$0xff] %vm2350, %v2339
        %2373 = vst.msk [vmem:[%s382 + $0x160] sm:$0xff] %vm2350, %v2340
        %2374 = vst.msk [vmem:[%s382 + $0x168] sm:$0xff] %vm2350, %v2341
        %2375 = vst.msk [vmem:[%s382 + $0x180] sm:$0xff] %vm2350, %v2342
        %2376 = vst.msk [vmem:[%s382 + $0x188] sm:$0xff] %vm2350, %v2343
        %2377 = vst.msk [vmem:[%s382 + $0x1a0] sm:$0xff] %vm2350, %v2344
        %2378 = vst.msk [vmem:[%s382 + $0x1a8] sm:$0xff] %vm2350, %v2345
        %2379 = vst.msk [vmem:[%s382 + $0x1c0] sm:$0xff] %vm2350, %v2346
        %2380 = vst.msk [vmem:[%s382 + $0x1c8] sm:$0xff] %vm2350, %v2347
        %2381 = vst.msk [vmem:[%s382 + $0x1e0] sm:$0xff] %vm2350, %v2348
        %2382 = vst.msk [vmem:[%s382 + $0x1e8] sm:$0xff] %vm2350, %v2349
        %2383 = vst.msk [vmem:[#allocation2] sm:$0xff] %vm2350, %v2348
        %2384 = vst.msk [vmem:[#allocation2 + $0x8] sm:$0xff] %vm2350, %v2349
        %2385 = vst.msk [vmem:[%s418] sm:$0xff] %vm2350, %v2318
        %2386 = vst.msk [vmem:[%s418 + $0x8] sm:$0xff] %vm2350, %v2319
        %2387 = vst.msk [vmem:[%s382 + $0x10] sm:$0xff] %vm2350, %v2318
        %2388 = vst.msk [vmem:[%s382 + $0x18] sm:$0xff] %vm2350, %v2319
        %2389 = vst.msk [vmem:[%s382 + $0x30] sm:$0xff] %vm2350, %v2320
        %2390 = vst.msk [vmem:[%s382 + $0x38] sm:$0xff] %vm2350, %v2321
        %2391 = vst.msk [vmem:[%s382 + $0x50] sm:$0xff] %vm2350, %v2322
        %2392 = vst.msk [vmem:[%s382 + $0x58] sm:$0xff] %vm2350, %v2323
        %2393 = vst.msk [vmem:[%s382 + $0x70] sm:$0xff] %vm2350, %v2324
        %2394 = vst.msk [vmem:[%s382 + $0x78] sm:$0xff] %vm2350, %v2325
        %2395 = vst.msk [vmem:[%s382 + $0x90] sm:$0xff] %vm2350, %v2326
        %2396 = vst.msk [vmem:[%s382 + $0x98] sm:$0xff] %vm2350, %v2327
        %2397 = vst.msk [vmem:[%s382 + $0xb0] sm:$0xff] %vm2350, %v2328
        %2398 = vst.msk [vmem:[%s382 + $0xb8] sm:$0xff] %vm2350, %v2329
        %2399 = vst.msk [vmem:[%s382 + $0xd0] sm:$0xff] %vm2350, %v2330
        %2400 = vst.msk [vmem:[%s382 + $0xd8] sm:$0xff] %vm2350, %v2331
        %2401 = vst.msk [vmem:[%s382 + $0xf0] sm:$0xff] %vm2350, %v2332
        %2402 = vst.msk [vmem:[%s382 + $0xf8] sm:$0xff] %vm2350, %v2333
        %2403 = vst.msk [vmem:[%s382 + $0x110] sm:$0xff] %vm2350, %v2334
        %2404 = vst.msk [vmem:[%s382 + $0x118] sm:$0xff] %vm2350, %v2335
        %2405 = vst.msk [vmem:[%s382 + $0x130] sm:$0xff] %vm2350, %v2336
        %2406 = vst.msk [vmem:[%s382 + $0x138] sm:$0xff] %vm2350, %v2337
        %2407 = vst.msk [vmem:[%s382 + $0x150] sm:$0xff] %vm2350, %v2338
        %2408 = vst.msk [vmem:[%s382 + $0x158] sm:$0xff] %vm2350, %v2339
        %2409 = vst.msk [vmem:[%s382 + $0x170] sm:$0xff] %vm2350, %v2340
        %2410 = vst.msk [vmem:[%s382 + $0x178] sm:$0xff] %vm2350, %v2341
        %2411 = vst.msk [vmem:[%s382 + $0x190] sm:$0xff] %vm2350, %v2342
        %2412 = vst.msk [vmem:[%s382 + $0x198] sm:$0xff] %vm2350, %v2343
        %2413 = vst.msk [vmem:[%s382 + $0x1b0] sm:$0xff] %vm2350, %v2344
        %2414 = vst.msk [vmem:[%s382 + $0x1b8] sm:$0xff] %vm2350, %v2345
        %2415 = vst.msk [vmem:[%s382 + $0x1d0] sm:$0xff] %vm2350, %v2346
        %2416 = vst.msk [vmem:[%s382 + $0x1d8] sm:$0xff] %vm2350, %v2347
        %2417 = vst.msk [vmem:[%s382 + $0x1f0] sm:$0xff] %vm2350, %v2348
        %2418 = vst.msk [vmem:[%s382 + $0x1f8] sm:$0xff] %vm2350, %v2349
        %2419 = vst.msk [vmem:[#allocation2 + $0x10] sm:$0xff] %vm2350, %v2348
        %2420 = vst.msk [vmem:[#allocation2 + $0x18] sm:$0xff] %vm2350, %v2349
        %2421 = vst.msk [vmem:[%s418 + $0x10] sm:$0xff] %vm2350, %v2318
        %2422 = vst.msk [vmem:[%s418 + $0x18] sm:$0xff] %vm2350, %v2319
        %v2423 = vld [vmem:[#allocation2 + $0xf] sm:$0xff]
        %v2424 = vld [vmem:[#allocation2 + $0x17] sm:$0xff]
        %v2425 = vld [vmem:[#allocation2 + $0x2f] sm:$0xff]
        %v2426 = vld [vmem:[#allocation2 + $0x37] sm:$0xff]
        %v2427 = vld [vmem:[#allocation2 + $0x4f] sm:$0xff]
        %v2428 = vld [vmem:[#allocation2 + $0x57] sm:$0xff]
        %v2429 = vld [vmem:[#allocation2 + $0x6f] sm:$0xff]
        %v2430 = vld [vmem:[#allocation2 + $0x77] sm:$0xff]
        %v2431 = vld [vmem:[#allocation2 + $0x8f] sm:$0xff]
        %v2432 = vld [vmem:[#allocation2 + $0x97] sm:$0xff]
        %v2433 = vld [vmem:[#allocation2 + $0xaf] sm:$0xff]
        %v2434 = vld [vmem:[#allocation2 + $0xb7] sm:$0xff]
        %v2435 = vld [vmem:[#allocation2 + $0xcf] sm:$0xff]
        %v2436 = vld [vmem:[#allocation2 + $0xd7] sm:$0xff]
        %v2437 = vld [vmem:[#allocation2 + $0xef] sm:$0xff]
        %v2438 = vld [vmem:[#allocation2 + $0xf7] sm:$0xff]
        %v2439 = vld [vmem:[#allocation2 + $0x10f] sm:$0xff]
        %v2440 = vld [vmem:[#allocation2 + $0x117] sm:$0xff]
        %v2441 = vld [vmem:[#allocation2 + $0x12f] sm:$0xff]
        %v2442 = vld [vmem:[#allocation2 + $0x137] sm:$0xff]
        %v2443 = vld [vmem:[#allocation2 + $0x14f] sm:$0xff]
        %v2444 = vld [vmem:[#allocation2 + $0x157] sm:$0xff]
        %v2445 = vld [vmem:[#allocation2 + $0x16f] sm:$0xff]
        %v2446 = vld [vmem:[#allocation2 + $0x177] sm:$0xff]
        %v2447 = vld [vmem:[#allocation2 + $0x18f] sm:$0xff]
        %v2448 = vld [vmem:[#allocation2 + $0x197] sm:$0xff]
        %v2449 = vld [vmem:[#allocation2 + $0x1af] sm:$0xff]
        %v2450 = vld [vmem:[#allocation2 + $0x1b7] sm:$0xff]
        %v2451 = vld [vmem:[#allocation2 + $0x1cf] sm:$0xff]
        %v2452 = vld [vmem:[#allocation2 + $0x1d7] sm:$0xff]
        %v2453 = vld [vmem:[#allocation2 + $0x1ef] sm:$0xff]
        %v2454 = vld [vmem:[#allocation2 + $0x1f7] sm:$0xff]
        %2455 = vst.msk [vmem:[#allocation3] sm:$0xff] %vm2350, %v2423
        %2456 = vst.msk [vmem:[#allocation3 + $0x18] sm:$0xff] %vm2350, %v2424
        %2457 = vst.msk [vmem:[#allocation3 + $0x30] sm:$0xff] %vm2350, %v2425
        %2458 = vst.msk [vmem:[#allocation3 + $0x48] sm:$0xff] %vm2350, %v2426
        %2459 = vst.msk [vmem:[#allocation3 + $0x60] sm:$0xff] %vm2350, %v2427
        %2460 = vst.msk [vmem:[#allocation3 + $0x78] sm:$0xff] %vm2350, %v2428
        %2461 = vst.msk [vmem:[#allocation3 + $0x90] sm:$0xff] %vm2350, %v2429
        %2462 = vst.msk [vmem:[#allocation3 + $0xa8] sm:$0xff] %vm2350, %v2430
        %2463 = vst.msk [vmem:[#allocation3 + $0xc0] sm:$0xff] %vm2350, %v2431
        %2464 = vst.msk [vmem:[#allocation3 + $0xd8] sm:$0xff] %vm2350, %v2432
        %2465 = vst.msk [vmem:[#allocation3 + $0xf0] sm:$0xff] %vm2350, %v2433
        %2466 = vst.msk [vmem:[#allocation3 + $0x108] sm:$0xff] %vm2350, %v2434
        %2467 = vst.msk [vmem:[#allocation3 + $0x120] sm:$0xff] %vm2350, %v2435
        %2468 = vst.msk [vmem:[#allocation3 + $0x138] sm:$0xff] %vm2350, %v2436
        %2469 = vst.msk [vmem:[#allocation3 + $0x150] sm:$0xff] %vm2350, %v2437
        %2470 = vst.msk [vmem:[#allocation3 + $0x168] sm:$0xff] %vm2350, %v2438
        %2471 = vst.msk [vmem:[#allocation3 + $0x180] sm:$0xff] %vm2350, %v2439
        %2472 = vst.msk [vmem:[#allocation3 + $0x198] sm:$0xff] %vm2350, %v2440
        %2473 = vst.msk [vmem:[#allocation3 + $0x1b0] sm:$0xff] %vm2350, %v2441
        %2474 = vst.msk [vmem:[#allocation3 + $0x1c8] sm:$0xff] %vm2350, %v2442
        %2475 = vst.msk [vmem:[#allocation3 + $0x1e0] sm:$0xff] %vm2350, %v2443
        %2476 = vst.msk [vmem:[#allocation3 + $0x1f8] sm:$0xff] %vm2350, %v2444
        %2477 = vst.msk [vmem:[#allocation3 + $0x210] sm:$0xff] %vm2350, %v2445
        %2478 = vst.msk [vmem:[#allocation3 + $0x228] sm:$0xff] %vm2350, %v2446
        %2479 = vst.msk [vmem:[#allocation3 + $0x240] sm:$0xff] %vm2350, %v2447
        %2480 = vst.msk [vmem:[#allocation3 + $0x258] sm:$0xff] %vm2350, %v2448
        %2481 = vst.msk [vmem:[#allocation3 + $0x270] sm:$0xff] %vm2350, %v2449
        %2482 = vst.msk [vmem:[#allocation3 + $0x288] sm:$0xff] %vm2350, %v2450
        %2483 = vst.msk [vmem:[#allocation3 + $0x2a0] sm:$0xff] %vm2350, %v2451
        %2484 = vst.msk [vmem:[#allocation3 + $0x2b8] sm:$0xff] %vm2350, %v2452
        %2485 = vst.msk [vmem:[#allocation3 + $0x2d0] sm:$0xff] %vm2350, %v2453
        %2486 = vst.msk [vmem:[#allocation3 + $0x2e8] sm:$0xff] %vm2350, %v2454
        %v2487 = vld [vmem:[#allocation2] sm:$0xff]
        %v2488 = vld [vmem:[#allocation2 + $0x8] sm:$0xff]
        %v2489 = vld [vmem:[#allocation2 + $0x20] sm:$0xff]
        %v2490 = vld [vmem:[#allocation2 + $0x28] sm:$0xff]
        %v2491 = vld [vmem:[#allocation2 + $0x40] sm:$0xff]
        %v2492 = vld [vmem:[#allocation2 + $0x48] sm:$0xff]
        %v2493 = vld [vmem:[#allocation2 + $0x60] sm:$0xff]
        %v2494 = vld [vmem:[#allocation2 + $0x68] sm:$0xff]
        %v2495 = vld [vmem:[#allocation2 + $0x80] sm:$0xff]
        %v2496 = vld [vmem:[#allocation2 + $0x88] sm:$0xff]
        %v2497 = vld [vmem:[#allocation2 + $0xa0] sm:$0xff]
        %v2498 = vld [vmem:[#allocation2 + $0xa8] sm:$0xff]
        %v2499 = vld [vmem:[#allocation2 + $0xc0] sm:$0xff]
        %v2500 = vld [vmem:[#allocation2 + $0xc8] sm:$0xff]
        %v2501 = vld [vmem:[#allocation2 + $0xe0] sm:$0xff]
        %v2502 = vld [vmem:[#allocation2 + $0xe8] sm:$0xff]
        %v2503 = vld [vmem:[#allocation2 + $0x100] sm:$0xff]
        %v2504 = vld [vmem:[#allocation2 + $0x108] sm:$0xff]
        %v2505 = vld [vmem:[#allocation2 + $0x120] sm:$0xff]
        %v2506 = vld [vmem:[#allocation2 + $0x128] sm:$0xff]
        %v2507 = vld [vmem:[#allocation2 + $0x140] sm:$0xff]
        %v2508 = vld [vmem:[#allocation2 + $0x148] sm:$0xff]
        %v2509 = vld [vmem:[#allocation2 + $0x160] sm:$0xff]
        %v2510 = vld [vmem:[#allocation2 + $0x168] sm:$0xff]
        %v2511 = vld [vmem:[#allocation2 + $0x180] sm:$0xff]
        %v2512 = vld [vmem:[#allocation2 + $0x188] sm:$0xff]
        %v2513 = vld [vmem:[#allocation2 + $0x1a0] sm:$0xff]
        %v2514 = vld [vmem:[#allocation2 + $0x1a8] sm:$0xff]
        %v2515 = vld [vmem:[#allocation2 + $0x1c0] sm:$0xff]
        %v2516 = vld [vmem:[#allocation2 + $0x1c8] sm:$0xff]
        %v2517 = vld [vmem:[#allocation2 + $0x1e0] sm:$0xff]
        %v2518 = vld [vmem:[#allocation2 + $0x1e8] sm:$0xff]
        %2551 = vrot.lane.b32.xlu0 %v2487, 32
        %v2552 = vpop.permute.xlu0 %2551
        %2553 = vrot.lane.b32.xlu0 %v2488, 32
        %v2554 = vpop.permute.xlu0 %2553
        %2555 = vrot.lane.b32.xlu0 %v2489, 32
        %v2556 = vpop.permute.xlu0 %2555
        %2557 = vrot.lane.b32.xlu0 %v2490, 32
        %v2558 = vpop.permute.xlu0 %2557
        %2559 = vrot.lane.b32.xlu0 %v2491, 32
        %v2560 = vpop.permute.xlu0 %2559
        %2561 = vrot.lane.b32.xlu0 %v2492, 32
        %v2562 = vpop.permute.xlu0 %2561
        %2563 = vrot.lane.b32.xlu0 %v2493, 32
        %v2564 = vpop.permute.xlu0 %2563
        %2565 = vrot.lane.b32.xlu0 %v2494, 32
        %v2566 = vpop.permute.xlu0 %2565
        %2567 = vrot.lane.b32.xlu0 %v2495, 32
        %v2568 = vpop.permute.xlu0 %2567
        %2569 = vrot.lane.b32.xlu0 %v2496, 32
        %v2570 = vpop.permute.xlu0 %2569
        %2571 = vrot.lane.b32.xlu0 %v2497, 32
        %v2572 = vpop.permute.xlu0 %2571
        %2573 = vrot.lane.b32.xlu0 %v2498, 32
        %v2574 = vpop.permute.xlu0 %2573
        %2575 = vrot.lane.b32.xlu0 %v2499, 32
        %v2576 = vpop.permute.xlu0 %2575
        %2577 = vrot.lane.b32.xlu0 %v2500, 32
        %v2578 = vpop.permute.xlu0 %2577
        %2579 = vrot.lane.b32.xlu0 %v2501, 32
        %v2580 = vpop.permute.xlu0 %2579
        %2581 = vrot.lane.b32.xlu0 %v2502, 32
        %v2582 = vpop.permute.xlu0 %2581
        %2583 = vrot.lane.b32.xlu0 %v2503, 32
        %v2584 = vpop.permute.xlu0 %2583
        %2585 = vrot.lane.b32.xlu0 %v2504, 32
        %v2586 = vpop.permute.xlu0 %2585
        %2587 = vrot.lane.b32.xlu0 %v2505, 32
        %v2588 = vpop.permute.xlu0 %2587
        %2589 = vrot.lane.b32.xlu0 %v2506, 32
        %v2590 = vpop.permute.xlu0 %2589
        %2591 = vrot.lane.b32.xlu0 %v2507, 32
        %v2592 = vpop.permute.xlu0 %2591
        %2593 = vrot.lane.b32.xlu0 %v2508, 32
        %v2594 = vpop.permute.xlu0 %2593
        %2595 = vrot.lane.b32.xlu0 %v2509, 32
        %v2596 = vpop.permute.xlu0 %2595
        %2597 = vrot.lane.b32.xlu0 %v2510, 32
        %v2598 = vpop.permute.xlu0 %2597
        %2599 = vrot.lane.b32.xlu0 %v2511, 32
        %v2600 = vpop.permute.xlu0 %2599
        %2601 = vrot.lane.b32.xlu0 %v2512, 32
        %v2602 = vpop.permute.xlu0 %2601
        %2603 = vrot.lane.b32.xlu0 %v2513, 32
        %v2604 = vpop.permute.xlu0 %2603
        %2605 = vrot.lane.b32.xlu0 %v2514, 32
        %v2606 = vpop.permute.xlu0 %2605
        %2607 = vrot.lane.b32.xlu0 %v2515, 32
        %v2608 = vpop.permute.xlu0 %2607
        %2609 = vrot.lane.b32.xlu0 %v2516, 32
        %v2610 = vpop.permute.xlu0 %2609
        %2611 = vrot.lane.b32.xlu0 %v2517, 32
        %v2612 = vpop.permute.xlu0 %2611
        %2613 = vrot.lane.b32.xlu0 %v2518, 32
        %v2614 = vpop.permute.xlu0 %2613
        %vm2647 = vcmask 523520
        %2648 = vst.msk [vmem:[#allocation3] sm:$0xff] %vm2647, %v2552
        %2649 = vst.msk [vmem:[#allocation3 + $0x18] sm:$0xff] %vm2647, %v2554
        %2650 = vst.msk [vmem:[#allocation3 + $0x30] sm:$0xff] %vm2647, %v2556
        %2651 = vst.msk [vmem:[#allocation3 + $0x48] sm:$0xff] %vm2647, %v2558
        %2652 = vst.msk [vmem:[#allocation3 + $0x60] sm:$0xff] %vm2647, %v2560
        %2653 = vst.msk [vmem:[#allocation3 + $0x78] sm:$0xff] %vm2647, %v2562
        %2654 = vst.msk [vmem:[#allocation3 + $0x90] sm:$0xff] %vm2647, %v2564
        %2655 = vst.msk [vmem:[#allocation3 + $0xa8] sm:$0xff] %vm2647, %v2566
        %2656 = vst.msk [vmem:[#allocation3 + $0xc0] sm:$0xff] %vm2647, %v2568
        %2657 = vst.msk [vmem:[#allocation3 + $0xd8] sm:$0xff] %vm2647, %v2570
        %2658 = vst.msk [vmem:[#allocation3 + $0xf0] sm:$0xff] %vm2647, %v2572
        %2659 = vst.msk [vmem:[#allocation3 + $0x108] sm:$0xff] %vm2647, %v2574
        %2660 = vst.msk [vmem:[#allocation3 + $0x120] sm:$0xff] %vm2647, %v2576
        %2661 = vst.msk [vmem:[#allocation3 + $0x138] sm:$0xff] %vm2647, %v2578
        %2662 = vst.msk [vmem:[#allocation3 + $0x150] sm:$0xff] %vm2647, %v2580
        %2663 = vst.msk [vmem:[#allocation3 + $0x168] sm:$0xff] %vm2647, %v2582
        %2664 = vst.msk [vmem:[#allocation3 + $0x180] sm:$0xff] %vm2647, %v2584
        %2665 = vst.msk [vmem:[#allocation3 + $0x198] sm:$0xff] %vm2647, %v2586
        %2666 = vst.msk [vmem:[#allocation3 + $0x1b0] sm:$0xff] %vm2647, %v2588
        %2667 = vst.msk [vmem:[#allocation3 + $0x1c8] sm:$0xff] %vm2647, %v2590
        %2668 = vst.msk [vmem:[#allocation3 + $0x1e0] sm:$0xff] %vm2647, %v2592
        %2669 = vst.msk [vmem:[#allocation3 + $0x1f8] sm:$0xff] %vm2647, %v2594
        %2670 = vst.msk [vmem:[#allocation3 + $0x210] sm:$0xff] %vm2647, %v2596
        %2671 = vst.msk [vmem:[#allocation3 + $0x228] sm:$0xff] %vm2647, %v2598
        %2672 = vst.msk [vmem:[#allocation3 + $0x240] sm:$0xff] %vm2647, %v2600
        %2673 = vst.msk [vmem:[#allocation3 + $0x258] sm:$0xff] %vm2647, %v2602
        %2674 = vst.msk [vmem:[#allocation3 + $0x270] sm:$0xff] %vm2647, %v2604
        %2675 = vst.msk [vmem:[#allocation3 + $0x288] sm:$0xff] %vm2647, %v2606
        %2676 = vst.msk [vmem:[#allocation3 + $0x2a0] sm:$0xff] %vm2647, %v2608
        %2677 = vst.msk [vmem:[#allocation3 + $0x2b8] sm:$0xff] %vm2647, %v2610
        %2678 = vst.msk [vmem:[#allocation3 + $0x2d0] sm:$0xff] %vm2647, %v2612
        %2679 = vst.msk [vmem:[#allocation3 + $0x2e8] sm:$0xff] %vm2647, %v2614
        %v2680 = vld [vmem:[#allocation2 + $0x1] sm:$0xff]
        %v2681 = vld [vmem:[#allocation2 + $0x9] sm:$0xff]
        %v2682 = vld [vmem:[#allocation2 + $0x21] sm:$0xff]
        %v2683 = vld [vmem:[#allocation2 + $0x29] sm:$0xff]
        %v2684 = vld [vmem:[#allocation2 + $0x41] sm:$0xff]
        %v2685 = vld [vmem:[#allocation2 + $0x49] sm:$0xff]
        %v2686 = vld [vmem:[#allocation2 + $0x61] sm:$0xff]
        %v2687 = vld [vmem:[#allocation2 + $0x69] sm:$0xff]
        %v2688 = vld [vmem:[#allocation2 + $0x81] sm:$0xff]
        %v2689 = vld [vmem:[#allocation2 + $0x89] sm:$0xff]
        %v2690 = vld [vmem:[#allocation2 + $0xa1] sm:$0xff]
        %v2691 = vld [vmem:[#allocation2 + $0xa9] sm:$0xff]
        %v2692 = vld [vmem:[#allocation2 + $0xc1] sm:$0xff]
        %v2693 = vld [vmem:[#allocation2 + $0xc9] sm:$0xff]
        %v2694 = vld [vmem:[#allocation2 + $0xe1] sm:$0xff]
        %v2695 = vld [vmem:[#allocation2 + $0xe9] sm:$0xff]
        %v2696 = vld [vmem:[#allocation2 + $0x101] sm:$0xff]
        %v2697 = vld [vmem:[#allocation2 + $0x109] sm:$0xff]
        %v2698 = vld [vmem:[#allocation2 + $0x121] sm:$0xff]
        %v2699 = vld [vmem:[#allocation2 + $0x129] sm:$0xff]
        %v2700 = vld [vmem:[#allocation2 + $0x141] sm:$0xff]
        %v2701 = vld [vmem:[#allocation2 + $0x149] sm:$0xff]
        %v2702 = vld [vmem:[#allocation2 + $0x161] sm:$0xff]
        %v2703 = vld [vmem:[#allocation2 + $0x169] sm:$0xff]
        %v2704 = vld [vmem:[#allocation2 + $0x181] sm:$0xff]
        %v2705 = vld [vmem:[#allocation2 + $0x189] sm:$0xff]
        %v2706 = vld [vmem:[#allocation2 + $0x1a1] sm:$0xff]
        %v2707 = vld [vmem:[#allocation2 + $0x1a9] sm:$0xff]
        %v2708 = vld [vmem:[#allocation2 + $0x1c1] sm:$0xff]
        %v2709 = vld [vmem:[#allocation2 + $0x1c9] sm:$0xff]
        %v2710 = vld [vmem:[#allocation2 + $0x1e1] sm:$0xff]
        %v2711 = vld [vmem:[#allocation2 + $0x1e9] sm:$0xff]
        %2744 = vrot.lane.b32.xlu0 %v2680, 64
        %v2745 = vpop.permute.xlu0 %2744
        %2746 = vrot.lane.b32.xlu0 %v2681, 64
        %v2747 = vpop.permute.xlu0 %2746
        %2748 = vrot.lane.b32.xlu0 %v2682, 64
        %v2749 = vpop.permute.xlu0 %2748
        %2750 = vrot.lane.b32.xlu0 %v2683, 64
        %v2751 = vpop.permute.xlu0 %2750
        %2752 = vrot.lane.b32.xlu0 %v2684, 64
        %v2753 = vpop.permute.xlu0 %2752
        %2754 = vrot.lane.b32.xlu0 %v2685, 64
        %v2755 = vpop.permute.xlu0 %2754
        %2756 = vrot.lane.b32.xlu0 %v2686, 64
        %v2757 = vpop.permute.xlu0 %2756
        %2758 = vrot.lane.b32.xlu0 %v2687, 64
        %v2759 = vpop.permute.xlu0 %2758
        %2760 = vrot.lane.b32.xlu0 %v2688, 64
        %v2761 = vpop.permute.xlu0 %2760
        %2762 = vrot.lane.b32.xlu0 %v2689, 64
        %v2763 = vpop.permute.xlu0 %2762
        %2764 = vrot.lane.b32.xlu0 %v2690, 64
        %v2765 = vpop.permute.xlu0 %2764
        %2766 = vrot.lane.b32.xlu0 %v2691, 64
        %v2767 = vpop.permute.xlu0 %2766
        %2768 = vrot.lane.b32.xlu0 %v2692, 64
        %v2769 = vpop.permute.xlu0 %2768
        %2770 = vrot.lane.b32.xlu0 %v2693, 64
        %v2771 = vpop.permute.xlu0 %2770
        %2772 = vrot.lane.b32.xlu0 %v2694, 64
        %v2773 = vpop.permute.xlu0 %2772
        %2774 = vrot.lane.b32.xlu0 %v2695, 64
        %v2775 = vpop.permute.xlu0 %2774
        %2776 = vrot.lane.b32.xlu0 %v2696, 64
        %v2777 = vpop.permute.xlu0 %2776
        %2778 = vrot.lane.b32.xlu0 %v2697, 64
        %v2779 = vpop.permute.xlu0 %2778
        %2780 = vrot.lane.b32.xlu0 %v2698, 64
        %v2781 = vpop.permute.xlu0 %2780
        %2782 = vrot.lane.b32.xlu0 %v2699, 64
        %v2783 = vpop.permute.xlu0 %2782
        %2784 = vrot.lane.b32.xlu0 %v2700, 64
        %v2785 = vpop.permute.xlu0 %2784
        %2786 = vrot.lane.b32.xlu0 %v2701, 64
        %v2787 = vpop.permute.xlu0 %2786
        %2788 = vrot.lane.b32.xlu0 %v2702, 64
        %v2789 = vpop.permute.xlu0 %2788
        %2790 = vrot.lane.b32.xlu0 %v2703, 64
        %v2791 = vpop.permute.xlu0 %2790
        %2792 = vrot.lane.b32.xlu0 %v2704, 64
        %v2793 = vpop.permute.xlu0 %2792
        %2794 = vrot.lane.b32.xlu0 %v2705, 64
        %v2795 = vpop.permute.xlu0 %2794
        %2796 = vrot.lane.b32.xlu0 %v2706, 64
        %v2797 = vpop.permute.xlu0 %2796
        %2798 = vrot.lane.b32.xlu0 %v2707, 64
        %v2799 = vpop.permute.xlu0 %2798
        %2800 = vrot.lane.b32.xlu0 %v2708, 64
        %v2801 = vpop.permute.xlu0 %2800
        %2802 = vrot.lane.b32.xlu0 %v2709, 64
        %v2803 = vpop.permute.xlu0 %2802
        %2804 = vrot.lane.b32.xlu0 %v2710, 64
        %v2805 = vpop.permute.xlu0 %2804
        %2806 = vrot.lane.b32.xlu0 %v2711, 64
        %v2807 = vpop.permute.xlu0 %2806
        %vm2840 = vcmask 785920
        %2841 = vst.msk [vmem:[#allocation3] sm:$0xff] %vm2840, %v2745
        %2842 = vst.msk [vmem:[#allocation3 + $0x18] sm:$0xff] %vm2840, %v2747
        %2843 = vst.msk [vmem:[#allocation3 + $0x30] sm:$0xff] %vm2840, %v2749
        %2844 = vst.msk [vmem:[#allocation3 + $0x48] sm:$0xff] %vm2840, %v2751
        %2845 = vst.msk [vmem:[#allocation3 + $0x60] sm:$0xff] %vm2840, %v2753
        %2846 = vst.msk [vmem:[#allocation3 + $0x78] sm:$0xff] %vm2840, %v2755
        %2847 = vst.msk [vmem:[#allocation3 + $0x90] sm:$0xff] %vm2840, %v2757
        %2848 = vst.msk [vmem:[#allocation3 + $0xa8] sm:$0xff] %vm2840, %v2759
        %2849 = vst.msk [vmem:[#allocation3 + $0xc0] sm:$0xff] %vm2840, %v2761
        %2850 = vst.msk [vmem:[#allocation3 + $0xd8] sm:$0xff] %vm2840, %v2763
        %2851 = vst.msk [vmem:[#allocation3 + $0xf0] sm:$0xff] %vm2840, %v2765
        %2852 = vst.msk [vmem:[#allocation3 + $0x108] sm:$0xff] %vm2840, %v2767
        %2853 = vst.msk [vmem:[#allocation3 + $0x120] sm:$0xff] %vm2840, %v2769
        %2854 = vst.msk [vmem:[#allocation3 + $0x138] sm:$0xff] %vm2840, %v2771
        %2855 = vst.msk [vmem:[#allocation3 + $0x150] sm:$0xff] %vm2840, %v2773
        %2856 = vst.msk [vmem:[#allocation3 + $0x168] sm:$0xff] %vm2840, %v2775
        %2857 = vst.msk [vmem:[#allocation3 + $0x180] sm:$0xff] %vm2840, %v2777
        %2858 = vst.msk [vmem:[#allocation3 + $0x198] sm:$0xff] %vm2840, %v2779
        %2859 = vst.msk [vmem:[#allocation3 + $0x1b0] sm:$0xff] %vm2840, %v2781
        %2860 = vst.msk [vmem:[#allocation3 + $0x1c8] sm:$0xff] %vm2840, %v2783
        %2861 = vst.msk [vmem:[#allocation3 + $0x1e0] sm:$0xff] %vm2840, %v2785
        %2862 = vst.msk [vmem:[#allocation3 + $0x1f8] sm:$0xff] %vm2840, %v2787
        %2863 = vst.msk [vmem:[#allocation3 + $0x210] sm:$0xff] %vm2840, %v2789
        %2864 = vst.msk [vmem:[#allocation3 + $0x228] sm:$0xff] %vm2840, %v2791
        %2865 = vst.msk [vmem:[#allocation3 + $0x240] sm:$0xff] %vm2840, %v2793
        %2866 = vst.msk [vmem:[#allocation3 + $0x258] sm:$0xff] %vm2840, %v2795
        %2867 = vst.msk [vmem:[#allocation3 + $0x270] sm:$0xff] %vm2840, %v2797
        %2868 = vst.msk [vmem:[#allocation3 + $0x288] sm:$0xff] %vm2840, %v2799
        %2869 = vst.msk [vmem:[#allocation3 + $0x2a0] sm:$0xff] %vm2840, %v2801
        %2870 = vst.msk [vmem:[#allocation3 + $0x2b8] sm:$0xff] %vm2840, %v2803
        %2871 = vst.msk [vmem:[#allocation3 + $0x2d0] sm:$0xff] %vm2840, %v2805
        %2872 = vst.msk [vmem:[#allocation3 + $0x2e8] sm:$0xff] %vm2840, %v2807
        %v2873 = vld [vmem:[%s382 + $0xf] sm:$0xff]
        %v2874 = vld [vmem:[%s382 + $0x17] sm:$0xff]
        %v2875 = vld [vmem:[%s382 + $0x2f] sm:$0xff]
        %v2876 = vld [vmem:[%s382 + $0x37] sm:$0xff]
        %v2877 = vld [vmem:[%s382 + $0x4f] sm:$0xff]
        %v2878 = vld [vmem:[%s382 + $0x57] sm:$0xff]
        %v2879 = vld [vmem:[%s382 + $0x6f] sm:$0xff]
        %v2880 = vld [vmem:[%s382 + $0x77] sm:$0xff]
        %v2881 = vld [vmem:[%s382 + $0x8f] sm:$0xff]
        %v2882 = vld [vmem:[%s382 + $0x97] sm:$0xff]
        %v2883 = vld [vmem:[%s382 + $0xaf] sm:$0xff]
        %v2884 = vld [vmem:[%s382 + $0xb7] sm:$0xff]
        %v2885 = vld [vmem:[%s382 + $0xcf] sm:$0xff]
        %v2886 = vld [vmem:[%s382 + $0xd7] sm:$0xff]
        %v2887 = vld [vmem:[%s382 + $0xef] sm:$0xff]
        %v2888 = vld [vmem:[%s382 + $0xf7] sm:$0xff]
        %v2889 = vld [vmem:[%s382 + $0x10f] sm:$0xff]
        %v2890 = vld [vmem:[%s382 + $0x117] sm:$0xff]
        %v2891 = vld [vmem:[%s382 + $0x12f] sm:$0xff]
        %v2892 = vld [vmem:[%s382 + $0x137] sm:$0xff]
        %v2893 = vld [vmem:[%s382 + $0x14f] sm:$0xff]
        %v2894 = vld [vmem:[%s382 + $0x157] sm:$0xff]
        %v2895 = vld [vmem:[%s382 + $0x16f] sm:$0xff]
        %v2896 = vld [vmem:[%s382 + $0x177] sm:$0xff]
        %v2897 = vld [vmem:[%s382 + $0x18f] sm:$0xff]
        %v2898 = vld [vmem:[%s382 + $0x197] sm:$0xff]
        %v2899 = vld [vmem:[%s382 + $0x1af] sm:$0xff]
        %v2900 = vld [vmem:[%s382 + $0x1b7] sm:$0xff]
        %v2901 = vld [vmem:[%s382 + $0x1cf] sm:$0xff]
        %v2902 = vld [vmem:[%s382 + $0x1d7] sm:$0xff]
        %v2903 = vld [vmem:[%s382 + $0x1ef] sm:$0xff]
        %v2904 = vld [vmem:[%s382 + $0x1f7] sm:$0xff]
        %2937 = vrot.lane.b32.xlu0 %v2873, 96
        %v2938 = vpop.permute.xlu0 %2937
        %2939 = vrot.lane.b32.xlu0 %v2874, 96
        %v2940 = vpop.permute.xlu0 %2939
        %2941 = vrot.lane.b32.xlu0 %v2875, 96
        %v2942 = vpop.permute.xlu0 %2941
        %2943 = vrot.lane.b32.xlu0 %v2876, 96
        %v2944 = vpop.permute.xlu0 %2943
        %2945 = vrot.lane.b32.xlu0 %v2877, 96
        %v2946 = vpop.permute.xlu0 %2945
        %2947 = vrot.lane.b32.xlu0 %v2878, 96
        %v2948 = vpop.permute.xlu0 %2947
        %2949 = vrot.lane.b32.xlu0 %v2879, 96
        %v2950 = vpop.permute.xlu0 %2949
        %2951 = vrot.lane.b32.xlu0 %v2880, 96
        %v2952 = vpop.permute.xlu0 %2951
        %2953 = vrot.lane.b32.xlu0 %v2881, 96
        %v2954 = vpop.permute.xlu0 %2953
        %2955 = vrot.lane.b32.xlu0 %v2882, 96
        %v2956 = vpop.permute.xlu0 %2955
        %2957 = vrot.lane.b32.xlu0 %v2883, 96
        %v2958 = vpop.permute.xlu0 %2957
        %2959 = vrot.lane.b32.xlu0 %v2884, 96
        %v2960 = vpop.permute.xlu0 %2959
        %2961 = vrot.lane.b32.xlu0 %v2885, 96
        %v2962 = vpop.permute.xlu0 %2961
        %2963 = vrot.lane.b32.xlu0 %v2886, 96
        %v2964 = vpop.permute.xlu0 %2963
        %2965 = vrot.lane.b32.xlu0 %v2887, 96
        %v2966 = vpop.permute.xlu0 %2965
        %2967 = vrot.lane.b32.xlu0 %v2888, 96
        %v2968 = vpop.permute.xlu0 %2967
        %2969 = vrot.lane.b32.xlu0 %v2889, 96
        %v2970 = vpop.permute.xlu0 %2969
        %2971 = vrot.lane.b32.xlu0 %v2890, 96
        %v2972 = vpop.permute.xlu0 %2971
        %2973 = vrot.lane.b32.xlu0 %v2891, 96
        %v2974 = vpop.permute.xlu0 %2973
        %2975 = vrot.lane.b32.xlu0 %v2892, 96
        %v2976 = vpop.permute.xlu0 %2975
        %2977 = vrot.lane.b32.xlu0 %v2893, 96
        %v2978 = vpop.permute.xlu0 %2977
        %2979 = vrot.lane.b32.xlu0 %v2894, 96
        %v2980 = vpop.permute.xlu0 %2979
        %2981 = vrot.lane.b32.xlu0 %v2895, 96
        %v2982 = vpop.permute.xlu0 %2981
        %2983 = vrot.lane.b32.xlu0 %v2896, 96
        %v2984 = vpop.permute.xlu0 %2983
        %2985 = vrot.lane.b32.xlu0 %v2897, 96
        %v2986 = vpop.permute.xlu0 %2985
        %2987 = vrot.lane.b32.xlu0 %v2898, 96
        %v2988 = vpop.permute.xlu0 %2987
        %2989 = vrot.lane.b32.xlu0 %v2899, 96
        %v2990 = vpop.permute.xlu0 %2989
        %2991 = vrot.lane.b32.xlu0 %v2900, 96
        %v2992 = vpop.permute.xlu0 %2991
        %2993 = vrot.lane.b32.xlu0 %v2901, 96
        %v2994 = vpop.permute.xlu0 %2993
        %2995 = vrot.lane.b32.xlu0 %v2902, 96
        %v2996 = vpop.permute.xlu0 %2995
        %2997 = vrot.lane.b32.xlu0 %v2903, 96
        %v2998 = vpop.permute.xlu0 %2997
        %2999 = vrot.lane.b32.xlu0 %v2904, 96
        %v3000 = vpop.permute.xlu0 %2999
        %vm3033 = vcmask 1048320
        %3034 = vst.msk [vmem:[#allocation3] sm:$0xff] %vm3033, %v2938
        %3035 = vst.msk [vmem:[#allocation3 + $0x18] sm:$0xff] %vm3033, %v2940
        %3036 = vst.msk [vmem:[#allocation3 + $0x30] sm:$0xff] %vm3033, %v2942
        %3037 = vst.msk [vmem:[#allocation3 + $0x48] sm:$0xff] %vm3033, %v2944
        %3038 = vst.msk [vmem:[#allocation3 + $0x60] sm:$0xff] %vm3033, %v2946
        %3039 = vst.msk [vmem:[#allocation3 + $0x78] sm:$0xff] %vm3033, %v2948
        %3040 = vst.msk [vmem:[#allocation3 + $0x90] sm:$0xff] %vm3033, %v2950
        %3041 = vst.msk [vmem:[#allocation3 + $0xa8] sm:$0xff] %vm3033, %v2952
        %3042 = vst.msk [vmem:[#allocation3 + $0xc0] sm:$0xff] %vm3033, %v2954
        %3043 = vst.msk [vmem:[#allocation3 + $0xd8] sm:$0xff] %vm3033, %v2956
        %3044 = vst.msk [vmem:[#allocation3 + $0xf0] sm:$0xff] %vm3033, %v2958
        %3045 = vst.msk [vmem:[#allocation3 + $0x108] sm:$0xff] %vm3033, %v2960
        %3046 = vst.msk [vmem:[#allocation3 + $0x120] sm:$0xff] %vm3033, %v2962
        %3047 = vst.msk [vmem:[#allocation3 + $0x138] sm:$0xff] %vm3033, %v2964
        %3048 = vst.msk [vmem:[#allocation3 + $0x150] sm:$0xff] %vm3033, %v2966
        %3049 = vst.msk [vmem:[#allocation3 + $0x168] sm:$0xff] %vm3033, %v2968
        %3050 = vst.msk [vmem:[#allocation3 + $0x180] sm:$0xff] %vm3033, %v2970
        %3051 = vst.msk [vmem:[#allocation3 + $0x198] sm:$0xff] %vm3033, %v2972
        %3052 = vst.msk [vmem:[#allocation3 + $0x1b0] sm:$0xff] %vm3033, %v2974
        %3053 = vst.msk [vmem:[#allocation3 + $0x1c8] sm:$0xff] %vm3033, %v2976
        %3054 = vst.msk [vmem:[#allocation3 + $0x1e0] sm:$0xff] %vm3033, %v2978
        %3055 = vst.msk [vmem:[#allocation3 + $0x1f8] sm:$0xff] %vm3033, %v2980
        %3056 = vst.msk [vmem:[#allocation3 + $0x210] sm:$0xff] %vm3033, %v2982
        %3057 = vst.msk [vmem:[#allocation3 + $0x228] sm:$0xff] %vm3033, %v2984
        %3058 = vst.msk [vmem:[#allocation3 + $0x240] sm:$0xff] %vm3033, %v2986
        %3059 = vst.msk [vmem:[#allocation3 + $0x258] sm:$0xff] %vm3033, %v2988
        %3060 = vst.msk [vmem:[#allocation3 + $0x270] sm:$0xff] %vm3033, %v2990
        %3061 = vst.msk [vmem:[#allocation3 + $0x288] sm:$0xff] %vm3033, %v2992
        %3062 = vst.msk [vmem:[#allocation3 + $0x2a0] sm:$0xff] %vm3033, %v2994
        %3063 = vst.msk [vmem:[#allocation3 + $0x2b8] sm:$0xff] %vm3033, %v2996
        %3064 = vst.msk [vmem:[#allocation3 + $0x2d0] sm:$0xff] %vm3033, %v2998
        %3065 = vst.msk [vmem:[#allocation3 + $0x2e8] sm:$0xff] %vm3033, %v3000
        %v3066 = vld [vmem:[%s382] sm:$0xff]
        %v3067 = vld [vmem:[%s382 + $0x8] sm:$0xff]
        %v3068 = vld [vmem:[%s382 + $0x20] sm:$0xff]
        %v3069 = vld [vmem:[%s382 + $0x28] sm:$0xff]
        %v3070 = vld [vmem:[%s382 + $0x40] sm:$0xff]
        %v3071 = vld [vmem:[%s382 + $0x48] sm:$0xff]
        %v3072 = vld [vmem:[%s382 + $0x60] sm:$0xff]
        %v3073 = vld [vmem:[%s382 + $0x68] sm:$0xff]
        %v3074 = vld [vmem:[%s382 + $0x80] sm:$0xff]
        %v3075 = vld [vmem:[%s382 + $0x88] sm:$0xff]
        %v3076 = vld [vmem:[%s382 + $0xa0] sm:$0xff]
        %v3077 = vld [vmem:[%s382 + $0xa8] sm:$0xff]
        %v3078 = vld [vmem:[%s382 + $0xc0] sm:$0xff]
        %v3079 = vld [vmem:[%s382 + $0xc8] sm:$0xff]
        %v3080 = vld [vmem:[%s382 + $0xe0] sm:$0xff]
        %v3081 = vld [vmem:[%s382 + $0xe8] sm:$0xff]
        %v3082 = vld [vmem:[%s382 + $0x100] sm:$0xff]
        %v3083 = vld [vmem:[%s382 + $0x108] sm:$0xff]
        %v3084 = vld [vmem:[%s382 + $0x120] sm:$0xff]
        %v3085 = vld [vmem:[%s382 + $0x128] sm:$0xff]
        %v3086 = vld [vmem:[%s382 + $0x140] sm:$0xff]
        %v3087 = vld [vmem:[%s382 + $0x148] sm:$0xff]
        %v3088 = vld [vmem:[%s382 + $0x160] sm:$0xff]
        %v3089 = vld [vmem:[%s382 + $0x168] sm:$0xff]
        %v3090 = vld [vmem:[%s382 + $0x180] sm:$0xff]
        %v3091 = vld [vmem:[%s382 + $0x188] sm:$0xff]
        %v3092 = vld [vmem:[%s382 + $0x1a0] sm:$0xff]
        %v3093 = vld [vmem:[%s382 + $0x1a8] sm:$0xff]
        %v3094 = vld [vmem:[%s382 + $0x1c0] sm:$0xff]
        %v3095 = vld [vmem:[%s382 + $0x1c8] sm:$0xff]
        %v3096 = vld [vmem:[%s382 + $0x1e0] sm:$0xff]
        %v3097 = vld [vmem:[%s382 + $0x1e8] sm:$0xff]
        %3098 = vst.msk [vmem:[#allocation3 + $0x8] sm:$0xff] %vm2350, %v3066
        %3099 = vst.msk [vmem:[#allocation3 + $0x20] sm:$0xff] %vm2350, %v3067
        %3100 = vst.msk [vmem:[#allocation3 + $0x38] sm:$0xff] %vm2350, %v3068
        %3101 = vst.msk [vmem:[#allocation3 + $0x50] sm:$0xff] %vm2350, %v3069
        %3102 = vst.msk [vmem:[#allocation3 + $0x68] sm:$0xff] %vm2350, %v3070
        %3103 = vst.msk [vmem:[#allocation3 + $0x80] sm:$0xff] %vm2350, %v3071
        %3104 = vst.msk [vmem:[#allocation3 + $0x98] sm:$0xff] %vm2350, %v3072
        %3105 = vst.msk [vmem:[#allocation3 + $0xb0] sm:$0xff] %vm2350, %v3073
        %3106 = vst.msk [vmem:[#allocation3 + $0xc8] sm:$0xff] %vm2350, %v3074
        %3107 = vst.msk [vmem:[#allocation3 + $0xe0] sm:$0xff] %vm2350, %v3075
        %3108 = vst.msk [vmem:[#allocation3 + $0xf8] sm:$0xff] %vm2350, %v3076
        %3109 = vst.msk [vmem:[#allocation3 + $0x110] sm:$0xff] %vm2350, %v3077
        %3110 = vst.msk [vmem:[#allocation3 + $0x128] sm:$0xff] %vm2350, %v3078
        %3111 = vst.msk [vmem:[#allocation3 + $0x140] sm:$0xff] %vm2350, %v3079
        %3112 = vst.msk [vmem:[#allocation3 + $0x158] sm:$0xff] %vm2350, %v3080
        %3113 = vst.msk [vmem:[#allocation3 + $0x170] sm:$0xff] %vm2350, %v3081
        %3114 = vst.msk [vmem:[#allocation3 + $0x188] sm:$0xff] %vm2350, %v3082
        %3115 = vst.msk [vmem:[#allocation3 + $0x1a0] sm:$0xff] %vm2350, %v3083
        %3116 = vst.msk [vmem:[#allocation3 + $0x1b8] sm:$0xff] %vm2350, %v3084
        %3117 = vst.msk [vmem:[#allocation3 + $0x1d0] sm:$0xff] %vm2350, %v3085
        %3118 = vst.msk [vmem:[#allocation3 + $0x1e8] sm:$0xff] %vm2350, %v3086
        %3119 = vst.msk [vmem:[#allocation3 + $0x200] sm:$0xff] %vm2350, %v3087
        %3120 = vst.msk [vmem:[#allocation3 + $0x218] sm:$0xff] %vm2350, %v3088
        %3121 = vst.msk [vmem:[#allocation3 + $0x230] sm:$0xff] %vm2350, %v3089
        %3122 = vst.msk [vmem:[#allocation3 + $0x248] sm:$0xff] %vm2350, %v3090
        %3123 = vst.msk [vmem:[#allocation3 + $0x260] sm:$0xff] %vm2350, %v3091
        %3124 = vst.msk [vmem:[#allocation3 + $0x278] sm:$0xff] %vm2350, %v3092
        %3125 = vst.msk [vmem:[#allocation3 + $0x290] sm:$0xff] %vm2350, %v3093
        %3126 = vst.msk [vmem:[#allocation3 + $0x2a8] sm:$0xff] %vm2350, %v3094
        %3127 = vst.msk [vmem:[#allocation3 + $0x2c0] sm:$0xff] %vm2350, %v3095
        %3128 = vst.msk [vmem:[#allocation3 + $0x2d8] sm:$0xff] %vm2350, %v3096
        %3129 = vst.msk [vmem:[#allocation3 + $0x2f0] sm:$0xff] %vm2350, %v3097
        %v3130 = vld [vmem:[%s382 + $0x1] sm:$0xff]
        %v3131 = vld [vmem:[%s382 + $0x9] sm:$0xff]
        %v3132 = vld [vmem:[%s382 + $0x21] sm:$0xff]
        %v3133 = vld [vmem:[%s382 + $0x29] sm:$0xff]
        %v3134 = vld [vmem:[%s382 + $0x41] sm:$0xff]
        %v3135 = vld [vmem:[%s382 + $0x49] sm:$0xff]
        %v3136 = vld [vmem:[%s382 + $0x61] sm:$0xff]
        %v3137 = vld [vmem:[%s382 + $0x69] sm:$0xff]
        %v3138 = vld [vmem:[%s382 + $0x81] sm:$0xff]
        %v3139 = vld [vmem:[%s382 + $0x89] sm:$0xff]
        %v3140 = vld [vmem:[%s382 + $0xa1] sm:$0xff]
        %v3141 = vld [vmem:[%s382 + $0xa9] sm:$0xff]
        %v3142 = vld [vmem:[%s382 + $0xc1] sm:$0xff]
        %v3143 = vld [vmem:[%s382 + $0xc9] sm:$0xff]
        %v3144 = vld [vmem:[%s382 + $0xe1] sm:$0xff]
        %v3145 = vld [vmem:[%s382 + $0xe9] sm:$0xff]
        %v3146 = vld [vmem:[%s382 + $0x101] sm:$0xff]
        %v3147 = vld [vmem:[%s382 + $0x109] sm:$0xff]
        %v3148 = vld [vmem:[%s382 + $0x121] sm:$0xff]
        %v3149 = vld [vmem:[%s382 + $0x129] sm:$0xff]
        %v3150 = vld [vmem:[%s382 + $0x141] sm:$0xff]
        %v3151 = vld [vmem:[%s382 + $0x149] sm:$0xff]
        %v3152 = vld [vmem:[%s382 + $0x161] sm:$0xff]
        %v3153 = vld [vmem:[%s382 + $0x169] sm:$0xff]
        %v3154 = vld [vmem:[%s382 + $0x181] sm:$0xff]
        %v3155 = vld [vmem:[%s382 + $0x189] sm:$0xff]
        %v3156 = vld [vmem:[%s382 + $0x1a1] sm:$0xff]
        %v3157 = vld [vmem:[%s382 + $0x1a9] sm:$0xff]
        %v3158 = vld [vmem:[%s382 + $0x1c1] sm:$0xff]
        %v3159 = vld [vmem:[%s382 + $0x1c9] sm:$0xff]
        %v3160 = vld [vmem:[%s382 + $0x1e1] sm:$0xff]
        %v3161 = vld [vmem:[%s382 + $0x1e9] sm:$0xff]
        %3194 = vrot.lane.b32.xlu0 %v3130, 32
        %v3195 = vpop.permute.xlu0 %3194
        %3196 = vrot.lane.b32.xlu0 %v3131, 32
        %v3197 = vpop.permute.xlu0 %3196
        %3198 = vrot.lane.b32.xlu0 %v3132, 32
        %v3199 = vpop.permute.xlu0 %3198
        %3200 = vrot.lane.b32.xlu0 %v3133, 32
        %v3201 = vpop.permute.xlu0 %3200
        %3202 = vrot.lane.b32.xlu0 %v3134, 32
        %v3203 = vpop.permute.xlu0 %3202
        %3204 = vrot.lane.b32.xlu0 %v3135, 32
        %v3205 = vpop.permute.xlu0 %3204
        %3206 = vrot.lane.b32.xlu0 %v3136, 32
        %v3207 = vpop.permute.xlu0 %3206
        %3208 = vrot.lane.b32.xlu0 %v3137, 32
        %v3209 = vpop.permute.xlu0 %3208
        %3210 = vrot.lane.b32.xlu0 %v3138, 32
        %v3211 = vpop.permute.xlu0 %3210
        %3212 = vrot.lane.b32.xlu0 %v3139, 32
        %v3213 = vpop.permute.xlu0 %3212
        %3214 = vrot.lane.b32.xlu0 %v3140, 32
        %v3215 = vpop.permute.xlu0 %3214
        %3216 = vrot.lane.b32.xlu0 %v3141, 32
        %v3217 = vpop.permute.xlu0 %3216
        %3218 = vrot.lane.b32.xlu0 %v3142, 32
        %v3219 = vpop.permute.xlu0 %3218
        %3220 = vrot.lane.b32.xlu0 %v3143, 32
        %v3221 = vpop.permute.xlu0 %3220
        %3222 = vrot.lane.b32.xlu0 %v3144, 32
        %v3223 = vpop.permute.xlu0 %3222
        %3224 = vrot.lane.b32.xlu0 %v3145, 32
        %v3225 = vpop.permute.xlu0 %3224
        %3226 = vrot.lane.b32.xlu0 %v3146, 32
        %v3227 = vpop.permute.xlu0 %3226
        %3228 = vrot.lane.b32.xlu0 %v3147, 32
        %v3229 = vpop.permute.xlu0 %3228
        %3230 = vrot.lane.b32.xlu0 %v3148, 32
        %v3231 = vpop.permute.xlu0 %3230
        %3232 = vrot.lane.b32.xlu0 %v3149, 32
        %v3233 = vpop.permute.xlu0 %3232
        %3234 = vrot.lane.b32.xlu0 %v3150, 32
        %v3235 = vpop.permute.xlu0 %3234
        %3236 = vrot.lane.b32.xlu0 %v3151, 32
        %v3237 = vpop.permute.xlu0 %3236
        %3238 = vrot.lane.b32.xlu0 %v3152, 32
        %v3239 = vpop.permute.xlu0 %3238
        %3240 = vrot.lane.b32.xlu0 %v3153, 32
        %v3241 = vpop.permute.xlu0 %3240
        %3242 = vrot.lane.b32.xlu0 %v3154, 32
        %v3243 = vpop.permute.xlu0 %3242
        %3244 = vrot.lane.b32.xlu0 %v3155, 32
        %v3245 = vpop.permute.xlu0 %3244
        %3246 = vrot.lane.b32.xlu0 %v3156, 32
        %v3247 = vpop.permute.xlu0 %3246
        %3248 = vrot.lane.b32.xlu0 %v3157, 32
        %v3249 = vpop.permute.xlu0 %3248
        %3250 = vrot.lane.b32.xlu0 %v3158, 32
        %v3251 = vpop.permute.xlu0 %3250
        %3252 = vrot.lane.b32.xlu0 %v3159, 32
        %v3253 = vpop.permute.xlu0 %3252
        %3254 = vrot.lane.b32.xlu0 %v3160, 32
        %v3255 = vpop.permute.xlu0 %3254
        %3256 = vrot.lane.b32.xlu0 %v3161, 32
        %v3257 = vpop.permute.xlu0 %3256
        %3290 = vst.msk [vmem:[#allocation3 + $0x8] sm:$0xff] %vm2647, %v3195
        %3291 = vst.msk [vmem:[#allocation3 + $0x20] sm:$0xff] %vm2647, %v3197
        %3292 = vst.msk [vmem:[#allocation3 + $0x38] sm:$0xff] %vm2647, %v3199
        %3293 = vst.msk [vmem:[#allocation3 + $0x50] sm:$0xff] %vm2647, %v3201
        %3294 = vst.msk [vmem:[#allocation3 + $0x68] sm:$0xff] %vm2647, %v3203
        %3295 = vst.msk [vmem:[#allocation3 + $0x80] sm:$0xff] %vm2647, %v3205
        %3296 = vst.msk [vmem:[#allocation3 + $0x98] sm:$0xff] %vm2647, %v3207
        %3297 = vst.msk [vmem:[#allocation3 + $0xb0] sm:$0xff] %vm2647, %v3209
        %3298 = vst.msk [vmem:[#allocation3 + $0xc8] sm:$0xff] %vm2647, %v3211
        %3299 = vst.msk [vmem:[#allocation3 + $0xe0] sm:$0xff] %vm2647, %v3213
        %3300 = vst.msk [vmem:[#allocation3 + $0xf8] sm:$0xff] %vm2647, %v3215
        %3301 = vst.msk [vmem:[#allocation3 + $0x110] sm:$0xff] %vm2647, %v3217
        %3302 = vst.msk [vmem:[#allocation3 + $0x128] sm:$0xff] %vm2647, %v3219
        %3303 = vst.msk [vmem:[#allocation3 + $0x140] sm:$0xff] %vm2647, %v3221
        %3304 = vst.msk [vmem:[#allocation3 + $0x158] sm:$0xff] %vm2647, %v3223
        %3305 = vst.msk [vmem:[#allocation3 + $0x170] sm:$0xff] %vm2647, %v3225
        %3306 = vst.msk [vmem:[#allocation3 + $0x188] sm:$0xff] %vm2647, %v3227
        %3307 = vst.msk [vmem:[#allocation3 + $0x1a0] sm:$0xff] %vm2647, %v3229
        %3308 = vst.msk [vmem:[#allocation3 + $0x1b8] sm:$0xff] %vm2647, %v3231
        %3309 = vst.msk [vmem:[#allocation3 + $0x1d0] sm:$0xff] %vm2647, %v3233
        %3310 = vst.msk [vmem:[#allocation3 + $0x1e8] sm:$0xff] %vm2647, %v3235
        %3311 = vst.msk [vmem:[#allocation3 + $0x200] sm:$0xff] %vm2647, %v3237
        %3312 = vst.msk [vmem:[#allocation3 + $0x218] sm:$0xff] %vm2647, %v3239
        %3313 = vst.msk [vmem:[#allocation3 + $0x230] sm:$0xff] %vm2647, %v3241
        %3314 = vst.msk [vmem:[#allocation3 + $0x248] sm:$0xff] %vm2647, %v3243
        %3315 = vst.msk [vmem:[#allocation3 + $0x260] sm:$0xff] %vm2647, %v3245
        %3316 = vst.msk [vmem:[#allocation3 + $0x278] sm:$0xff] %vm2647, %v3247
        %3317 = vst.msk [vmem:[#allocation3 + $0x290] sm:$0xff] %vm2647, %v3249
        %3318 = vst.msk [vmem:[#allocation3 + $0x2a8] sm:$0xff] %vm2647, %v3251
        %3319 = vst.msk [vmem:[#allocation3 + $0x2c0] sm:$0xff] %vm2647, %v3253
        %3320 = vst.msk [vmem:[#allocation3 + $0x2d8] sm:$0xff] %vm2647, %v3255
        %3321 = vst.msk [vmem:[#allocation3 + $0x2f0] sm:$0xff] %vm2647, %v3257
        %v3322 = vld [vmem:[%s1486 + $0xf] sm:$0xff]
        %v3323 = vld [vmem:[%s1486 + $0x17] sm:$0xff]
        %v3324 = vld [vmem:[%s1486 + $0x2f] sm:$0xff]
        %v3325 = vld [vmem:[%s1486 + $0x37] sm:$0xff]
        %v3326 = vld [vmem:[%s1486 + $0x4f] sm:$0xff]
        %v3327 = vld [vmem:[%s1486 + $0x57] sm:$0xff]
        %v3328 = vld [vmem:[%s1486 + $0x6f] sm:$0xff]
        %v3329 = vld [vmem:[%s1486 + $0x77] sm:$0xff]
        %v3330 = vld [vmem:[%s1486 + $0x8f] sm:$0xff]
        %v3331 = vld [vmem:[%s1486 + $0x97] sm:$0xff]
        %v3332 = vld [vmem:[%s1486 + $0xaf] sm:$0xff]
        %v3333 = vld [vmem:[%s1486 + $0xb7] sm:$0xff]
        %v3334 = vld [vmem:[%s1486 + $0xcf] sm:$0xff]
        %v3335 = vld [vmem:[%s1486 + $0xd7] sm:$0xff]
        %v3336 = vld [vmem:[%s1486 + $0xef] sm:$0xff]
        %v3337 = vld [vmem:[%s1486 + $0xf7] sm:$0xff]
        %v3338 = vld [vmem:[%s1486 + $0x10f] sm:$0xff]
        %v3339 = vld [vmem:[%s1486 + $0x117] sm:$0xff]
        %v3340 = vld [vmem:[%s1486 + $0x12f] sm:$0xff]
        %v3341 = vld [vmem:[%s1486 + $0x137] sm:$0xff]
        %v3342 = vld [vmem:[%s1486 + $0x14f] sm:$0xff]
        %v3343 = vld [vmem:[%s1486 + $0x157] sm:$0xff]
        %v3344 = vld [vmem:[%s1486 + $0x16f] sm:$0xff]
        %v3345 = vld [vmem:[%s1486 + $0x177] sm:$0xff]
        %v3346 = vld [vmem:[%s1486 + $0x18f] sm:$0xff]
        %v3347 = vld [vmem:[%s1486 + $0x197] sm:$0xff]
        %v3348 = vld [vmem:[%s1486 + $0x1af] sm:$0xff]
        %v3349 = vld [vmem:[%s1486 + $0x1b7] sm:$0xff]
        %v3350 = vld [vmem:[%s1486 + $0x1cf] sm:$0xff]
        %v3351 = vld [vmem:[%s1486 + $0x1d7] sm:$0xff]
        %v3352 = vld [vmem:[%s1486 + $0x1ef] sm:$0xff]
        %v3353 = vld [vmem:[%s1486 + $0x1f7] sm:$0xff]
        %3386 = vrot.lane.b32.xlu0 %v3322, 64
        %v3387 = vpop.permute.xlu0 %3386
        %3388 = vrot.lane.b32.xlu0 %v3323, 64
        %v3389 = vpop.permute.xlu0 %3388
        %3390 = vrot.lane.b32.xlu0 %v3324, 64
        %v3391 = vpop.permute.xlu0 %3390
        %3392 = vrot.lane.b32.xlu0 %v3325, 64
        %v3393 = vpop.permute.xlu0 %3392
        %3394 = vrot.lane.b32.xlu0 %v3326, 64
        %v3395 = vpop.permute.xlu0 %3394
        %3396 = vrot.lane.b32.xlu0 %v3327, 64
        %v3397 = vpop.permute.xlu0 %3396
        %3398 = vrot.lane.b32.xlu0 %v3328, 64
        %v3399 = vpop.permute.xlu0 %3398
        %3400 = vrot.lane.b32.xlu0 %v3329, 64
        %v3401 = vpop.permute.xlu0 %3400
        %3402 = vrot.lane.b32.xlu0 %v3330, 64
        %v3403 = vpop.permute.xlu0 %3402
        %3404 = vrot.lane.b32.xlu0 %v3331, 64
        %v3405 = vpop.permute.xlu0 %3404
        %3406 = vrot.lane.b32.xlu0 %v3332, 64
        %v3407 = vpop.permute.xlu0 %3406
        %3408 = vrot.lane.b32.xlu0 %v3333, 64
        %v3409 = vpop.permute.xlu0 %3408
        %3410 = vrot.lane.b32.xlu0 %v3334, 64
        %v3411 = vpop.permute.xlu0 %3410
        %3412 = vrot.lane.b32.xlu0 %v3335, 64
        %v3413 = vpop.permute.xlu0 %3412
        %3414 = vrot.lane.b32.xlu0 %v3336, 64
        %v3415 = vpop.permute.xlu0 %3414
        %3416 = vrot.lane.b32.xlu0 %v3337, 64
        %v3417 = vpop.permute.xlu0 %3416
        %3418 = vrot.lane.b32.xlu0 %v3338, 64
        %v3419 = vpop.permute.xlu0 %3418
        %3420 = vrot.lane.b32.xlu0 %v3339, 64
        %v3421 = vpop.permute.xlu0 %3420
        %3422 = vrot.lane.b32.xlu0 %v3340, 64
        %v3423 = vpop.permute.xlu0 %3422
        %3424 = vrot.lane.b32.xlu0 %v3341, 64
        %v3425 = vpop.permute.xlu0 %3424
        %3426 = vrot.lane.b32.xlu0 %v3342, 64
        %v3427 = vpop.permute.xlu0 %3426
        %3428 = vrot.lane.b32.xlu0 %v3343, 64
        %v3429 = vpop.permute.xlu0 %3428
        %3430 = vrot.lane.b32.xlu0 %v3344, 64
        %v3431 = vpop.permute.xlu0 %3430
        %3432 = vrot.lane.b32.xlu0 %v3345, 64
        %v3433 = vpop.permute.xlu0 %3432
        %3434 = vrot.lane.b32.xlu0 %v3346, 64
        %v3435 = vpop.permute.xlu0 %3434
        %3436 = vrot.lane.b32.xlu0 %v3347, 64
        %v3437 = vpop.permute.xlu0 %3436
        %3438 = vrot.lane.b32.xlu0 %v3348, 64
        %v3439 = vpop.permute.xlu0 %3438
        %3440 = vrot.lane.b32.xlu0 %v3349, 64
        %v3441 = vpop.permute.xlu0 %3440
        %3442 = vrot.lane.b32.xlu0 %v3350, 64
        %v3443 = vpop.permute.xlu0 %3442
        %3444 = vrot.lane.b32.xlu0 %v3351, 64
        %v3445 = vpop.permute.xlu0 %3444
        %3446 = vrot.lane.b32.xlu0 %v3352, 64
        %v3447 = vpop.permute.xlu0 %3446
        %3448 = vrot.lane.b32.xlu0 %v3353, 64
        %v3449 = vpop.permute.xlu0 %3448
        %3482 = vst.msk [vmem:[#allocation3 + $0x8] sm:$0xff] %vm2840, %v3387
        %3483 = vst.msk [vmem:[#allocation3 + $0x20] sm:$0xff] %vm2840, %v3389
        %3484 = vst.msk [vmem:[#allocation3 + $0x38] sm:$0xff] %vm2840, %v3391
        %3485 = vst.msk [vmem:[#allocation3 + $0x50] sm:$0xff] %vm2840, %v3393
        %3486 = vst.msk [vmem:[#allocation3 + $0x68] sm:$0xff] %vm2840, %v3395
        %3487 = vst.msk [vmem:[#allocation3 + $0x80] sm:$0xff] %vm2840, %v3397
        %3488 = vst.msk [vmem:[#allocation3 + $0x98] sm:$0xff] %vm2840, %v3399
        %3489 = vst.msk [vmem:[#allocation3 + $0xb0] sm:$0xff] %vm2840, %v3401
        %3490 = vst.msk [vmem:[#allocation3 + $0xc8] sm:$0xff] %vm2840, %v3403
        %3491 = vst.msk [vmem:[#allocation3 + $0xe0] sm:$0xff] %vm2840, %v3405
        %3492 = vst.msk [vmem:[#allocation3 + $0xf8] sm:$0xff] %vm2840, %v3407
        %3493 = vst.msk [vmem:[#allocation3 + $0x110] sm:$0xff] %vm2840, %v3409
        %3494 = vst.msk [vmem:[#allocation3 + $0x128] sm:$0xff] %vm2840, %v3411
        %3495 = vst.msk [vmem:[#allocation3 + $0x140] sm:$0xff] %vm2840, %v3413
        %3496 = vst.msk [vmem:[#allocation3 + $0x158] sm:$0xff] %vm2840, %v3415
        %3497 = vst.msk [vmem:[#allocation3 + $0x170] sm:$0xff] %vm2840, %v3417
        %3498 = vst.msk [vmem:[#allocation3 + $0x188] sm:$0xff] %vm2840, %v3419
        %3499 = vst.msk [vmem:[#allocation3 + $0x1a0] sm:$0xff] %vm2840, %v3421
        %3500 = vst.msk [vmem:[#allocation3 + $0x1b8] sm:$0xff] %vm2840, %v3423
        %3501 = vst.msk [vmem:[#allocation3 + $0x1d0] sm:$0xff] %vm2840, %v3425
        %3502 = vst.msk [vmem:[#allocation3 + $0x1e8] sm:$0xff] %vm2840, %v3427
        %3503 = vst.msk [vmem:[#allocation3 + $0x200] sm:$0xff] %vm2840, %v3429
        %3504 = vst.msk [vmem:[#allocation3 + $0x218] sm:$0xff] %vm2840, %v3431
        %3505 = vst.msk [vmem:[#allocation3 + $0x230] sm:$0xff] %vm2840, %v3433
        %3506 = vst.msk [vmem:[#allocation3 + $0x248] sm:$0xff] %vm2840, %v3435
        %3507 = vst.msk [vmem:[#allocation3 + $0x260] sm:$0xff] %vm2840, %v3437
        %3508 = vst.msk [vmem:[#allocation3 + $0x278] sm:$0xff] %vm2840, %v3439
        %3509 = vst.msk [vmem:[#allocation3 + $0x290] sm:$0xff] %vm2840, %v3441
        %3510 = vst.msk [vmem:[#allocation3 + $0x2a8] sm:$0xff] %vm2840, %v3443
        %3511 = vst.msk [vmem:[#allocation3 + $0x2c0] sm:$0xff] %vm2840, %v3445
        %3512 = vst.msk [vmem:[#allocation3 + $0x2d8] sm:$0xff] %vm2840, %v3447
        %3513 = vst.msk [vmem:[#allocation3 + $0x2f0] sm:$0xff] %vm2840, %v3449
        %v3514 = vld [vmem:[%s1486] sm:$0xff]
        %v3515 = vld [vmem:[%s1486 + $0x8] sm:$0xff]
        %v3516 = vld [vmem:[%s1486 + $0x20] sm:$0xff]
        %v3517 = vld [vmem:[%s1486 + $0x28] sm:$0xff]
        %v3518 = vld [vmem:[%s1486 + $0x40] sm:$0xff]
        %v3519 = vld [vmem:[%s1486 + $0x48] sm:$0xff]
        %v3520 = vld [vmem:[%s1486 + $0x60] sm:$0xff]
        %v3521 = vld [vmem:[%s1486 + $0x68] sm:$0xff]
        %v3522 = vld [vmem:[%s1486 + $0x80] sm:$0xff]
        %v3523 = vld [vmem:[%s1486 + $0x88] sm:$0xff]
        %v3524 = vld [vmem:[%s1486 + $0xa0] sm:$0xff]
        %v3525 = vld [vmem:[%s1486 + $0xa8] sm:$0xff]
        %v3526 = vld [vmem:[%s1486 + $0xc0] sm:$0xff]
        %v3527 = vld [vmem:[%s1486 + $0xc8] sm:$0xff]
        %v3528 = vld [vmem:[%s1486 + $0xe0] sm:$0xff]
        %v3529 = vld [vmem:[%s1486 + $0xe8] sm:$0xff]
        %v3530 = vld [vmem:[%s1486 + $0x100] sm:$0xff]
        %v3531 = vld [vmem:[%s1486 + $0x108] sm:$0xff]
        %v3532 = vld [vmem:[%s1486 + $0x120] sm:$0xff]
        %v3533 = vld [vmem:[%s1486 + $0x128] sm:$0xff]
        %v3534 = vld [vmem:[%s1486 + $0x140] sm:$0xff]
        %v3535 = vld [vmem:[%s1486 + $0x148] sm:$0xff]
        %v3536 = vld [vmem:[%s1486 + $0x160] sm:$0xff]
        %v3537 = vld [vmem:[%s1486 + $0x168] sm:$0xff]
        %v3538 = vld [vmem:[%s1486 + $0x180] sm:$0xff]
        %v3539 = vld [vmem:[%s1486 + $0x188] sm:$0xff]
        %v3540 = vld [vmem:[%s1486 + $0x1a0] sm:$0xff]
        %v3541 = vld [vmem:[%s1486 + $0x1a8] sm:$0xff]
        %v3542 = vld [vmem:[%s1486 + $0x1c0] sm:$0xff]
        %v3543 = vld [vmem:[%s1486 + $0x1c8] sm:$0xff]
        %v3544 = vld [vmem:[%s1486 + $0x1e0] sm:$0xff]
        %v3545 = vld [vmem:[%s1486 + $0x1e8] sm:$0xff]
        %3578 = vrot.lane.b32.xlu0 %v3514, 96
        %v3579 = vpop.permute.xlu0 %3578
        %3580 = vrot.lane.b32.xlu0 %v3515, 96
        %v3581 = vpop.permute.xlu0 %3580
        %3582 = vrot.lane.b32.xlu0 %v3516, 96
        %v3583 = vpop.permute.xlu0 %3582
        %3584 = vrot.lane.b32.xlu0 %v3517, 96
        %v3585 = vpop.permute.xlu0 %3584
        %3586 = vrot.lane.b32.xlu0 %v3518, 96
        %v3587 = vpop.permute.xlu0 %3586
        %3588 = vrot.lane.b32.xlu0 %v3519, 96
        %v3589 = vpop.permute.xlu0 %3588
        %3590 = vrot.lane.b32.xlu0 %v3520, 96
        %v3591 = vpop.permute.xlu0 %3590
        %3592 = vrot.lane.b32.xlu0 %v3521, 96
        %v3593 = vpop.permute.xlu0 %3592
        %3594 = vrot.lane.b32.xlu0 %v3522, 96
        %v3595 = vpop.permute.xlu0 %3594
        %3596 = vrot.lane.b32.xlu0 %v3523, 96
        %v3597 = vpop.permute.xlu0 %3596
        %3598 = vrot.lane.b32.xlu0 %v3524, 96
        %v3599 = vpop.permute.xlu0 %3598
        %3600 = vrot.lane.b32.xlu0 %v3525, 96
        %v3601 = vpop.permute.xlu0 %3600
        %3602 = vrot.lane.b32.xlu0 %v3526, 96
        %v3603 = vpop.permute.xlu0 %3602
        %3604 = vrot.lane.b32.xlu0 %v3527, 96
        %v3605 = vpop.permute.xlu0 %3604
        %3606 = vrot.lane.b32.xlu0 %v3528, 96
        %v3607 = vpop.permute.xlu0 %3606
        %3608 = vrot.lane.b32.xlu0 %v3529, 96
        %v3609 = vpop.permute.xlu0 %3608
        %3610 = vrot.lane.b32.xlu0 %v3530, 96
        %v3611 = vpop.permute.xlu0 %3610
        %3612 = vrot.lane.b32.xlu0 %v3531, 96
        %v3613 = vpop.permute.xlu0 %3612
        %3614 = vrot.lane.b32.xlu0 %v3532, 96
        %v3615 = vpop.permute.xlu0 %3614
        %3616 = vrot.lane.b32.xlu0 %v3533, 96
        %v3617 = vpop.permute.xlu0 %3616
        %3618 = vrot.lane.b32.xlu0 %v3534, 96
        %v3619 = vpop.permute.xlu0 %3618
        %3620 = vrot.lane.b32.xlu0 %v3535, 96
        %v3621 = vpop.permute.xlu0 %3620
        %3622 = vrot.lane.b32.xlu0 %v3536, 96
        %v3623 = vpop.permute.xlu0 %3622
        %3624 = vrot.lane.b32.xlu0 %v3537, 96
        %v3625 = vpop.permute.xlu0 %3624
        %3626 = vrot.lane.b32.xlu0 %v3538, 96
        %v3627 = vpop.permute.xlu0 %3626
        %3628 = vrot.lane.b32.xlu0 %v3539, 96
        %v3629 = vpop.permute.xlu0 %3628
        %3630 = vrot.lane.b32.xlu0 %v3540, 96
        %v3631 = vpop.permute.xlu0 %3630
        %3632 = vrot.lane.b32.xlu0 %v3541, 96
        %v3633 = vpop.permute.xlu0 %3632
        %3634 = vrot.lane.b32.xlu0 %v3542, 96
        %v3635 = vpop.permute.xlu0 %3634
        %3636 = vrot.lane.b32.xlu0 %v3543, 96
        %v3637 = vpop.permute.xlu0 %3636
        %3638 = vrot.lane.b32.xlu0 %v3544, 96
        %v3639 = vpop.permute.xlu0 %3638
        %3640 = vrot.lane.b32.xlu0 %v3545, 96
        %v3641 = vpop.permute.xlu0 %3640
        %3674 = vst.msk [vmem:[#allocation3 + $0x8] sm:$0xff] %vm3033, %v3579
        %3675 = vst.msk [vmem:[#allocation3 + $0x20] sm:$0xff] %vm3033, %v3581
        %3676 = vst.msk [vmem:[#allocation3 + $0x38] sm:$0xff] %vm3033, %v3583
        %3677 = vst.msk [vmem:[#allocation3 + $0x50] sm:$0xff] %vm3033, %v3585
        %3678 = vst.msk [vmem:[#allocation3 + $0x68] sm:$0xff] %vm3033, %v3587
        %3679 = vst.msk [vmem:[#allocation3 + $0x80] sm:$0xff] %vm3033, %v3589
        %3680 = vst.msk [vmem:[#allocation3 + $0x98] sm:$0xff] %vm3033, %v3591
        %3681 = vst.msk [vmem:[#allocation3 + $0xb0] sm:$0xff] %vm3033, %v3593
        %3682 = vst.msk [vmem:[#allocation3 + $0xc8] sm:$0xff] %vm3033, %v3595
        %3683 = vst.msk [vmem:[#allocation3 + $0xe0] sm:$0xff] %vm3033, %v3597
        %3684 = vst.msk [vmem:[#allocation3 + $0xf8] sm:$0xff] %vm3033, %v3599
        %3685 = vst.msk [vmem:[#allocation3 + $0x110] sm:$0xff] %vm3033, %v3601
        %3686 = vst.msk [vmem:[#allocation3 + $0x128] sm:$0xff] %vm3033, %v3603
        %3687 = vst.msk [vmem:[#allocation3 + $0x140] sm:$0xff] %vm3033, %v3605
        %3688 = vst.msk [vmem:[#allocation3 + $0x158] sm:$0xff] %vm3033, %v3607
        %3689 = vst.msk [vmem:[#allocation3 + $0x170] sm:$0xff] %vm3033, %v3609
        %3690 = vst.msk [vmem:[#allocation3 + $0x188] sm:$0xff] %vm3033, %v3611
        %3691 = vst.msk [vmem:[#allocation3 + $0x1a0] sm:$0xff] %vm3033, %v3613
        %3692 = vst.msk [vmem:[#allocation3 + $0x1b8] sm:$0xff] %vm3033, %v3615
        %3693 = vst.msk [vmem:[#allocation3 + $0x1d0] sm:$0xff] %vm3033, %v3617
        %3694 = vst.msk [vmem:[#allocation3 + $0x1e8] sm:$0xff] %vm3033, %v3619
        %3695 = vst.msk [vmem:[#allocation3 + $0x200] sm:$0xff] %vm3033, %v3621
        %3696 = vst.msk [vmem:[#allocation3 + $0x218] sm:$0xff] %vm3033, %v3623
        %3697 = vst.msk [vmem:[#allocation3 + $0x230] sm:$0xff] %vm3033, %v3625
        %3698 = vst.msk [vmem:[#allocation3 + $0x248] sm:$0xff] %vm3033, %v3627
        %3699 = vst.msk [vmem:[#allocation3 + $0x260] sm:$0xff] %vm3033, %v3629
        %3700 = vst.msk [vmem:[#allocation3 + $0x278] sm:$0xff] %vm3033, %v3631
        %3701 = vst.msk [vmem:[#allocation3 + $0x290] sm:$0xff] %vm3033, %v3633
        %3702 = vst.msk [vmem:[#allocation3 + $0x2a8] sm:$0xff] %vm3033, %v3635
        %3703 = vst.msk [vmem:[#allocation3 + $0x2c0] sm:$0xff] %vm3033, %v3637
        %3704 = vst.msk [vmem:[#allocation3 + $0x2d8] sm:$0xff] %vm3033, %v3639
        %3705 = vst.msk [vmem:[#allocation3 + $0x2f0] sm:$0xff] %vm3033, %v3641
        %v3706 = vld [vmem:[%s1486 + $0x1] sm:$0xff]
        %v3707 = vld [vmem:[%s1486 + $0x9] sm:$0xff]
        %v3708 = vld [vmem:[%s1486 + $0x21] sm:$0xff]
        %v3709 = vld [vmem:[%s1486 + $0x29] sm:$0xff]
        %v3710 = vld [vmem:[%s1486 + $0x41] sm:$0xff]
        %v3711 = vld [vmem:[%s1486 + $0x49] sm:$0xff]
        %v3712 = vld [vmem:[%s1486 + $0x61] sm:$0xff]
        %v3713 = vld [vmem:[%s1486 + $0x69] sm:$0xff]
        %v3714 = vld [vmem:[%s1486 + $0x81] sm:$0xff]
        %v3715 = vld [vmem:[%s1486 + $0x89] sm:$0xff]
        %v3716 = vld [vmem:[%s1486 + $0xa1] sm:$0xff]
        %v3717 = vld [vmem:[%s1486 + $0xa9] sm:$0xff]
        %v3718 = vld [vmem:[%s1486 + $0xc1] sm:$0xff]
        %v3719 = vld [vmem:[%s1486 + $0xc9] sm:$0xff]
        %v3720 = vld [vmem:[%s1486 + $0xe1] sm:$0xff]
        %v3721 = vld [vmem:[%s1486 + $0xe9] sm:$0xff]
        %v3722 = vld [vmem:[%s1486 + $0x101] sm:$0xff]
        %v3723 = vld [vmem:[%s1486 + $0x109] sm:$0xff]
        %v3724 = vld [vmem:[%s1486 + $0x121] sm:$0xff]
        %v3725 = vld [vmem:[%s1486 + $0x129] sm:$0xff]
        %v3726 = vld [vmem:[%s1486 + $0x141] sm:$0xff]
        %v3727 = vld [vmem:[%s1486 + $0x149] sm:$0xff]
        %v3728 = vld [vmem:[%s1486 + $0x161] sm:$0xff]
        %v3729 = vld [vmem:[%s1486 + $0x169] sm:$0xff]
        %v3730 = vld [vmem:[%s1486 + $0x181] sm:$0xff]
        %v3731 = vld [vmem:[%s1486 + $0x189] sm:$0xff]
        %v3732 = vld [vmem:[%s1486 + $0x1a1] sm:$0xff]
        %v3733 = vld [vmem:[%s1486 + $0x1a9] sm:$0xff]
        %v3734 = vld [vmem:[%s1486 + $0x1c1] sm:$0xff]
        %v3735 = vld [vmem:[%s1486 + $0x1c9] sm:$0xff]
        %v3736 = vld [vmem:[%s1486 + $0x1e1] sm:$0xff]
        %v3737 = vld [vmem:[%s1486 + $0x1e9] sm:$0xff]
        %3738 = vst.msk [vmem:[#allocation3 + $0x10] sm:$0xff] %vm2350, %v3706
        %3739 = vst.msk [vmem:[#allocation3 + $0x28] sm:$0xff] %vm2350, %v3707
        %3740 = vst.msk [vmem:[#allocation3 + $0x40] sm:$0xff] %vm2350, %v3708
        %3741 = vst.msk [vmem:[#allocation3 + $0x58] sm:$0xff] %vm2350, %v3709
        %3742 = vst.msk [vmem:[#allocation3 + $0x70] sm:$0xff] %vm2350, %v3710
        %3743 = vst.msk [vmem:[#allocation3 + $0x88] sm:$0xff] %vm2350, %v3711
        %3744 = vst.msk [vmem:[#allocation3 + $0xa0] sm:$0xff] %vm2350, %v3712
        %3745 = vst.msk [vmem:[#allocation3 + $0xb8] sm:$0xff] %vm2350, %v3713
        %3746 = vst.msk [vmem:[#allocation3 + $0xd0] sm:$0xff] %vm2350, %v3714
        %3747 = vst.msk [vmem:[#allocation3 + $0xe8] sm:$0xff] %vm2350, %v3715
        %3748 = vst.msk [vmem:[#allocation3 + $0x100] sm:$0xff] %vm2350, %v3716
        %3749 = vst.msk [vmem:[#allocation3 + $0x118] sm:$0xff] %vm2350, %v3717
        %3750 = vst.msk [vmem:[#allocation3 + $0x130] sm:$0xff] %vm2350, %v3718
        %3751 = vst.msk [vmem:[#allocation3 + $0x148] sm:$0xff] %vm2350, %v3719
        %3752 = vst.msk [vmem:[#allocation3 + $0x160] sm:$0xff] %vm2350, %v3720
        %3753 = vst.msk [vmem:[#allocation3 + $0x178] sm:$0xff] %vm2350, %v3721
        %3754 = vst.msk [vmem:[#allocation3 + $0x190] sm:$0xff] %vm2350, %v3722
        %3755 = vst.msk [vmem:[#allocation3 + $0x1a8] sm:$0xff] %vm2350, %v3723
        %3756 = vst.msk [vmem:[#allocation3 + $0x1c0] sm:$0xff] %vm2350, %v3724
        %3757 = vst.msk [vmem:[#allocation3 + $0x1d8] sm:$0xff] %vm2350, %v3725
        %3758 = vst.msk [vmem:[#allocation3 + $0x1f0] sm:$0xff] %vm2350, %v3726
        %3759 = vst.msk [vmem:[#allocation3 + $0x208] sm:$0xff] %vm2350, %v3727
        %3760 = vst.msk [vmem:[#allocation3 + $0x220] sm:$0xff] %vm2350, %v3728
        %3761 = vst.msk [vmem:[#allocation3 + $0x238] sm:$0xff] %vm2350, %v3729
        %3762 = vst.msk [vmem:[#allocation3 + $0x250] sm:$0xff] %vm2350, %v3730
        %3763 = vst.msk [vmem:[#allocation3 + $0x268] sm:$0xff] %vm2350, %v3731
        %3764 = vst.msk [vmem:[#allocation3 + $0x280] sm:$0xff] %vm2350, %v3732
        %3765 = vst.msk [vmem:[#allocation3 + $0x298] sm:$0xff] %vm2350, %v3733
        %3766 = vst.msk [vmem:[#allocation3 + $0x2b0] sm:$0xff] %vm2350, %v3734
        %3767 = vst.msk [vmem:[#allocation3 + $0x2c8] sm:$0xff] %vm2350, %v3735
        %3768 = vst.msk [vmem:[#allocation3 + $0x2e0] sm:$0xff] %vm2350, %v3736
        %3769 = vst.msk [vmem:[#allocation3 + $0x2f8] sm:$0xff] %vm2350, %v3737
        %v3770 = vld [vmem:[#allocation3] sm:$0xff]
        %v3771 = vld [vmem:[#allocation3 + $0x8] sm:$0xff]
        %v3772 = vld [vmem:[#allocation3 + $0x10] sm:$0xff]
        %v3773 = vld [vmem:[#allocation3 + $0x18] sm:$0xff]
        %v3774 = vld [vmem:[#allocation3 + $0x20] sm:$0xff]
        %v3775 = vld [vmem:[#allocation3 + $0x28] sm:$0xff]
        %v3776 = vld [vmem:[#allocation3 + $0x30] sm:$0xff]
        %v3777 = vld [vmem:[#allocation3 + $0x38] sm:$0xff]
        %v3778 = vld [vmem:[#allocation3 + $0x40] sm:$0xff]
        %v3779 = vld [vmem:[#allocation3 + $0x48] sm:$0xff]
        %v3780 = vld [vmem:[#allocation3 + $0x50] sm:$0xff]
        %v3781 = vld [vmem:[#allocation3 + $0x58] sm:$0xff]
        %v3782 = vld [vmem:[#allocation3 + $0x60] sm:$0xff]
        %v3783 = vld [vmem:[#allocation3 + $0x68] sm:$0xff]
        %v3784 = vld [vmem:[#allocation3 + $0x70] sm:$0xff]
        %v3785 = vld [vmem:[#allocation3 + $0x78] sm:$0xff]
        %v3786 = vld [vmem:[#allocation3 + $0x80] sm:$0xff]
        %v3787 = vld [vmem:[#allocation3 + $0x88] sm:$0xff]
        %v3788 = vld [vmem:[#allocation3 + $0x90] sm:$0xff]
        %v3789 = vld [vmem:[#allocation3 + $0x98] sm:$0xff]
        %v3790 = vld [vmem:[#allocation3 + $0xa0] sm:$0xff]
        %v3791 = vld [vmem:[#allocation3 + $0xa8] sm:$0xff]
        %v3792 = vld [vmem:[#allocation3 + $0xb0] sm:$0xff]
        %v3793 = vld [vmem:[#allocation3 + $0xb8] sm:$0xff]
        %v3794 = vld [vmem:[#allocation3 + $0xc0] sm:$0xff]
        %v3795 = vld [vmem:[#allocation3 + $0xc8] sm:$0xff]
        %v3796 = vld [vmem:[#allocation3 + $0xd0] sm:$0xff]
        %v3797 = vld [vmem:[#allocation3 + $0xd8] sm:$0xff]
        %v3798 = vld [vmem:[#allocation3 + $0xe0] sm:$0xff]
        %v3799 = vld [vmem:[#allocation3 + $0xe8] sm:$0xff]
        %v3800 = vld [vmem:[#allocation3 + $0xf0] sm:$0xff]
        %v3801 = vld [vmem:[#allocation3 + $0xf8] sm:$0xff]
        %v3802 = vld [vmem:[#allocation3 + $0x100] sm:$0xff]
        %v3803 = vld [vmem:[#allocation3 + $0x108] sm:$0xff]
        %v3804 = vld [vmem:[#allocation3 + $0x110] sm:$0xff]
        %v3805 = vld [vmem:[#allocation3 + $0x118] sm:$0xff]
        %v3806 = vld [vmem:[#allocation3 + $0x120] sm:$0xff]
        %v3807 = vld [vmem:[#allocation3 + $0x128] sm:$0xff]
        %v3808 = vld [vmem:[#allocation3 + $0x130] sm:$0xff]
        %v3809 = vld [vmem:[#allocation3 + $0x138] sm:$0xff]
        %v3810 = vld [vmem:[#allocation3 + $0x140] sm:$0xff]
        %v3811 = vld [vmem:[#allocation3 + $0x148] sm:$0xff]
        %v3812 = vld [vmem:[#allocation3 + $0x150] sm:$0xff]
        %v3813 = vld [vmem:[#allocation3 + $0x158] sm:$0xff]
        %v3814 = vld [vmem:[#allocation3 + $0x160] sm:$0xff]
        %v3815 = vld [vmem:[#allocation3 + $0x168] sm:$0xff]
        %v3816 = vld [vmem:[#allocation3 + $0x170] sm:$0xff]
        %v3817 = vld [vmem:[#allocation3 + $0x178] sm:$0xff]
        %v3818 = vld [vmem:[#allocation3 + $0x180] sm:$0xff]
        %v3819 = vld [vmem:[#allocation3 + $0x188] sm:$0xff]
        %v3820 = vld [vmem:[#allocation3 + $0x190] sm:$0xff]
        %v3821 = vld [vmem:[#allocation3 + $0x198] sm:$0xff]
        %v3822 = vld [vmem:[#allocation3 + $0x1a0] sm:$0xff]
        %v3823 = vld [vmem:[#allocation3 + $0x1a8] sm:$0xff]
        %v3824 = vld [vmem:[#allocation3 + $0x1b0] sm:$0xff]
        %v3825 = vld [vmem:[#allocation3 + $0x1b8] sm:$0xff]
        %v3826 = vld [vmem:[#allocation3 + $0x1c0] sm:$0xff]
        %v3827 = vld [vmem:[#allocation3 + $0x1c8] sm:$0xff]
        %v3828 = vld [vmem:[#allocation3 + $0x1d0] sm:$0xff]
        %v3829 = vld [vmem:[#allocation3 + $0x1d8] sm:$0xff]
        %v3830 = vld [vmem:[#allocation3 + $0x1e0] sm:$0xff]
        %v3831 = vld [vmem:[#allocation3 + $0x1e8] sm:$0xff]
        %v3832 = vld [vmem:[#allocation3 + $0x1f0] sm:$0xff]
        %v3833 = vld [vmem:[#allocation3 + $0x1f8] sm:$0xff]
        %v3834 = vld [vmem:[#allocation3 + $0x200] sm:$0xff]
        %v3835 = vld [vmem:[#allocation3 + $0x208] sm:$0xff]
        %v3836 = vld [vmem:[#allocation3 + $0x210] sm:$0xff]
        %v3837 = vld [vmem:[#allocation3 + $0x218] sm:$0xff]
        %v3838 = vld [vmem:[#allocation3 + $0x220] sm:$0xff]
        %v3839 = vld [vmem:[#allocation3 + $0x228] sm:$0xff]
        %v3840 = vld [vmem:[#allocation3 + $0x230] sm:$0xff]
        %v3841 = vld [vmem:[#allocation3 + $0x238] sm:$0xff]
        %v3842 = vld [vmem:[#allocation3 + $0x240] sm:$0xff]
        %v3843 = vld [vmem:[#allocation3 + $0x248] sm:$0xff]
        %v3844 = vld [vmem:[#allocation3 + $0x250] sm:$0xff]
        %v3845 = vld [vmem:[#allocation3 + $0x258] sm:$0xff]
        %v3846 = vld [vmem:[#allocation3 + $0x260] sm:$0xff]
        %v3847 = vld [vmem:[#allocation3 + $0x268] sm:$0xff]
        %v3848 = vld [vmem:[#allocation3 + $0x270] sm:$0xff]
        %v3849 = vld [vmem:[#allocation3 + $0x278] sm:$0xff]
        %v3850 = vld [vmem:[#allocation3 + $0x280] sm:$0xff]
        %v3851 = vld [vmem:[#allocation3 + $0x288] sm:$0xff]
        %v3852 = vld [vmem:[#allocation3 + $0x290] sm:$0xff]
        %v3853 = vld [vmem:[#allocation3 + $0x298] sm:$0xff]
        %v3854 = vld [vmem:[#allocation3 + $0x2a0] sm:$0xff]
        %v3855 = vld [vmem:[#allocation3 + $0x2a8] sm:$0xff]
        %v3856 = vld [vmem:[#allocation3 + $0x2b0] sm:$0xff]
        %v3857 = vld [vmem:[#allocation3 + $0x2b8] sm:$0xff]
        %v3858 = vld [vmem:[#allocation3 + $0x2c0] sm:$0xff]
        %v3859 = vld [vmem:[#allocation3 + $0x2c8] sm:$0xff]
        %v3860 = vld [vmem:[#allocation3 + $0x2d0] sm:$0xff]
        %v3861 = vld [vmem:[#allocation3 + $0x2d8] sm:$0xff]
        %v3862 = vld [vmem:[#allocation3 + $0x2e0] sm:$0xff]
        %v3863 = vld [vmem:[#allocation3 + $0x2e8] sm:$0xff]
        %v3864 = vld [vmem:[#allocation3 + $0x2f0] sm:$0xff]
        %v3865 = vld [vmem:[#allocation3 + $0x2f8] sm:$0xff]
        %v3866 = vld [vmem:[%s3] sm:$0xff]
        %v3867 = vld [vmem:[%s3 + $0x8] sm:$0xff]
        %v3868 = vld [vmem:[%s3 + $0x10] sm:$0xff]
        %v3869 = vld [vmem:[%s3 + $0x18] sm:$0xff]
        %v3870 = vld [vmem:[%s3 + $0x20] sm:$0xff]
        %v3871 = vld [vmem:[%s3 + $0x28] sm:$0xff]
        %v3872 = vld [vmem:[%s3 + $0x30] sm:$0xff]
        %v3873 = vld [vmem:[%s3 + $0x38] sm:$0xff]
        %v3874 = vld [vmem:[%s3 + $0x40] sm:$0xff]
        %v3875 = vld [vmem:[%s3 + $0x48] sm:$0xff]
        %v3876 = vld [vmem:[%s3 + $0x50] sm:$0xff]
        %v3877 = vld [vmem:[%s3 + $0x58] sm:$0xff]
        %v3878 = vld [vmem:[%s3 + $0x60] sm:$0xff]
        %v3879 = vld [vmem:[%s3 + $0x68] sm:$0xff]
        %v3880 = vld [vmem:[%s3 + $0x70] sm:$0xff]
        %v3881 = vld [vmem:[%s3 + $0x78] sm:$0xff]
        %v3882 = vld [vmem:[%s3 + $0x80] sm:$0xff]
        %v3883 = vld [vmem:[%s3 + $0x88] sm:$0xff]
        %v3884 = vld [vmem:[%s3 + $0x90] sm:$0xff]
        %v3885 = vld [vmem:[%s3 + $0x98] sm:$0xff]
        %v3886 = vld [vmem:[%s3 + $0xa0] sm:$0xff]
        %v3887 = vld [vmem:[%s3 + $0xa8] sm:$0xff]
        %v3888 = vld [vmem:[%s3 + $0xb0] sm:$0xff]
        %v3889 = vld [vmem:[%s3 + $0xb8] sm:$0xff]
        %v3890 = vld [vmem:[%s3 + $0xc0] sm:$0xff]
        %v3891 = vld [vmem:[%s3 + $0xc8] sm:$0xff]
        %v3892 = vld [vmem:[%s3 + $0xd0] sm:$0xff]
        %v3893 = vld [vmem:[%s3 + $0xd8] sm:$0xff]
        %v3894 = vld [vmem:[%s3 + $0xe0] sm:$0xff]
        %v3895 = vld [vmem:[%s3 + $0xe8] sm:$0xff]
        %v3896 = vld [vmem:[%s3 + $0xf0] sm:$0xff]
        %v3897 = vld [vmem:[%s3 + $0xf8] sm:$0xff]
        %v3898 = vld [vmem:[%s3 + $0x100] sm:$0xff]
        %v3899 = vld [vmem:[%s3 + $0x108] sm:$0xff]
        %v3900 = vld [vmem:[%s3 + $0x110] sm:$0xff]
        %v3901 = vld [vmem:[%s3 + $0x118] sm:$0xff]
        %v3902 = vld [vmem:[%s4] sm:$0x1]
        %v3904 = vperm.slane %v3902, 0
        %v3907 = vsel %vm2350, %v3772, 0
        %v3910 = vsel %vm2350, %v3775, 0
        %v3913 = vsel %vm2350, %v3778, 0
        %v3916 = vsel %vm2350, %v3781, 0
        %v3919 = vsel %vm2350, %v3784, 0
        %v3922 = vsel %vm2350, %v3787, 0
        %v3925 = vsel %vm2350, %v3790, 0
        %v3928 = vsel %vm2350, %v3793, 0
        %v3931 = vsel %vm2350, %v3796, 0
        %v3934 = vsel %vm2350, %v3799, 0
        %v3937 = vsel %vm2350, %v3802, 0
        %v3940 = vsel %vm2350, %v3805, 0
        %v3943 = vsel %vm2350, %v3808, 0
        %v3946 = vsel %vm2350, %v3811, 0
        %v3949 = vsel %vm2350, %v3814, 0
        %v3952 = vsel %vm2350, %v3817, 0
        %v3955 = vsel %vm2350, %v3820, 0
        %v3958 = vsel %vm2350, %v3823, 0
        %v3961 = vsel %vm2350, %v3826, 0
        %v3964 = vsel %vm2350, %v3829, 0
        %v3967 = vsel %vm2350, %v3832, 0
        %v3970 = vsel %vm2350, %v3835, 0
        %v3973 = vsel %vm2350, %v3838, 0
        %v3976 = vsel %vm2350, %v3841, 0
        %v3979 = vsel %vm2350, %v3844, 0
        %v3982 = vsel %vm2350, %v3847, 0
        %v3985 = vsel %vm2350, %v3850, 0
        %v3988 = vsel %vm2350, %v3853, 0
        %v3991 = vsel %vm2350, %v3856, 0
        %v3994 = vsel %vm2350, %v3859, 0
        %v3997 = vsel %vm2350, %v3862, 0
        %v4000 = vsel %vm2350, %v3865, 0
        %4002 = vmatpush.msra.mxu0 %v3881
        %4003 = vmatpush.msra.mxu0 %v3880
        %4004 = vmatpush.msra.mxu0 %v3879
        %4005 = vmatpush.msra.mxu0 %v3878
        %4006 = vmatpush.msra.mxu0 %v3877
        %4007 = vmatpush.msra.mxu0 %v3876
        %4008 = vmatpush.msra.mxu0 %v3875
        %4009 = vmatpush.msra.mxu0 %v3874
        %4010 = vmatpush.msra.mxu0 %v3873
        %4011 = vmatpush.msra.mxu0 %v3872
        %4012 = vmatpush.msra.mxu0 %v3871
        %4013 = vmatpush.msra.mxu0 %v3870
        %4014 = vmatpush.msra.mxu0 %v3869
        %4015 = vmatpush.msra.mxu0 %v3868
        %4016 = vmatpush.msra.mxu0 %v3867
        %4017 = vmatpush.msra.mxu0 %v3866
        %4018 = vmatmul.f32.gmra.mxu0 %v3770
        %v4019 = vpop.f32.mrf.mxu0
        %v4020 = vadd.f32 %v3904, %v4019
        %4021 = vmatmul.f32.gmra.mxu0 %v3773
        %v4022 = vpop.f32.mrf.mxu0
        %v4023 = vadd.f32 %v3904, %v4022
        %4024 = vmatmul.f32.gmra.mxu0 %v3776
        %v4025 = vpop.f32.mrf.mxu0
        %v4026 = vadd.f32 %v3904, %v4025
        %4027 = vmatmul.f32.gmra.mxu0 %v3779
        %v4028 = vpop.f32.mrf.mxu0
        %v4029 = vadd.f32 %v3904, %v4028
        %4030 = vmatmul.f32.gmra.mxu0 %v3782
        %v4031 = vpop.f32.mrf.mxu0
        %v4032 = vadd.f32 %v3904, %v4031
        %4033 = vmatmul.f32.gmra.mxu0 %v3785
        %v4034 = vpop.f32.mrf.mxu0
        %v4035 = vadd.f32 %v3904, %v4034
        %4036 = vmatmul.f32.gmra.mxu0 %v3788
        %v4037 = vpop.f32.mrf.mxu0
        %v4038 = vadd.f32 %v3904, %v4037
        %4039 = vmatmul.f32.gmra.mxu0 %v3791
        %v4040 = vpop.f32.mrf.mxu0
        %v4041 = vadd.f32 %v3904, %v4040
        %4042 = vmatmul.f32.gmra.mxu0 %v3794
        %v4043 = vpop.f32.mrf.mxu0
        %v4044 = vadd.f32 %v3904, %v4043
        %4045 = vmatmul.f32.gmra.mxu0 %v3797
        %v4046 = vpop.f32.mrf.mxu0
        %v4047 = vadd.f32 %v3904, %v4046
        %4048 = vmatmul.f32.gmra.mxu0 %v3800
        %v4049 = vpop.f32.mrf.mxu0
        %v4050 = vadd.f32 %v3904, %v4049
        %4051 = vmatmul.f32.gmra.mxu0 %v3803
        %v4052 = vpop.f32.mrf.mxu0
        %v4053 = vadd.f32 %v3904, %v4052
        %4054 = vmatmul.f32.gmra.mxu0 %v3806
        %v4055 = vpop.f32.mrf.mxu0
        %v4056 = vadd.f32 %v3904, %v4055
        %4057 = vmatmul.f32.gmra.mxu0 %v3809
        %v4058 = vpop.f32.mrf.mxu0
        %v4059 = vadd.f32 %v3904, %v4058
        %4060 = vmatmul.f32.gmra.mxu0 %v3812
        %v4061 = vpop.f32.mrf.mxu0
        %v4062 = vadd.f32 %v3904, %v4061
        %4063 = vmatmul.f32.gmra.mxu0 %v3815
        %v4064 = vpop.f32.mrf.mxu0
        %v4065 = vadd.f32 %v3904, %v4064
        %4066 = vmatmul.f32.gmra.mxu0 %v3818
        %v4067 = vpop.f32.mrf.mxu0
        %v4068 = vadd.f32 %v3904, %v4067
        %4069 = vmatmul.f32.gmra.mxu0 %v3821
        %v4070 = vpop.f32.mrf.mxu0
        %v4071 = vadd.f32 %v3904, %v4070
        %4072 = vmatmul.f32.gmra.mxu0 %v3824
        %v4073 = vpop.f32.mrf.mxu0
        %v4074 = vadd.f32 %v3904, %v4073
        %4075 = vmatmul.f32.gmra.mxu0 %v3827
        %v4076 = vpop.f32.mrf.mxu0
        %v4077 = vadd.f32 %v3904, %v4076
        %4078 = vmatmul.f32.gmra.mxu0 %v3830
        %v4079 = vpop.f32.mrf.mxu0
        %v4080 = vadd.f32 %v3904, %v4079
        %4081 = vmatmul.f32.gmra.mxu0 %v3833
        %v4082 = vpop.f32.mrf.mxu0
        %v4083 = vadd.f32 %v3904, %v4082
        %4084 = vmatmul.f32.gmra.mxu0 %v3836
        %v4085 = vpop.f32.mrf.mxu0
        %v4086 = vadd.f32 %v3904, %v4085
        %4087 = vmatmul.f32.gmra.mxu0 %v3839
        %v4088 = vpop.f32.mrf.mxu0
        %v4089 = vadd.f32 %v3904, %v4088
        %4090 = vmatmul.f32.gmra.mxu0 %v3842
        %v4091 = vpop.f32.mrf.mxu0
        %v4092 = vadd.f32 %v3904, %v4091
        %4093 = vmatmul.f32.gmra.mxu0 %v3845
        %v4094 = vpop.f32.mrf.mxu0
        %v4095 = vadd.f32 %v3904, %v4094
        %4096 = vmatmul.f32.gmra.mxu0 %v3848
        %v4097 = vpop.f32.mrf.mxu0
        %v4098 = vadd.f32 %v3904, %v4097
        %4099 = vmatmul.f32.gmra.mxu0 %v3851
        %v4100 = vpop.f32.mrf.mxu0
        %v4101 = vadd.f32 %v3904, %v4100
        %4102 = vmatmul.f32.gmra.mxu0 %v3854
        %v4103 = vpop.f32.mrf.mxu0
        %v4104 = vadd.f32 %v3904, %v4103
        %4105 = vmatmul.f32.gmra.mxu0 %v3857
        %v4106 = vpop.f32.mrf.mxu0
        %v4107 = vadd.f32 %v3904, %v4106
        %4108 = vmatmul.f32.gmra.mxu0 %v3860
        %v4109 = vpop.f32.mrf.mxu0
        %v4110 = vadd.f32 %v3904, %v4109
        %4111 = vmatmul.f32.gmra.mxu0 %v3863
        %v4112 = vpop.f32.mrf.mxu0
        %v4113 = vadd.f32 %v3904, %v4112
        %4114 = vdwg.mxu0
        %4115 = vmatpush.msra.mxu0 %v3897
        %4116 = vmatpush.msra.mxu0 %v3896
        %4117 = vmatpush.msra.mxu0 %v3895
        %4118 = vmatpush.msra.mxu0 %v3894
        %4119 = vmatpush.msra.mxu0 %v3893
        %4120 = vmatpush.msra.mxu0 %v3892
        %4121 = vmatpush.msra.mxu0 %v3891
        %4122 = vmatpush.msra.mxu0 %v3890
        %4123 = vmatpush.msra.mxu0 %v3889
        %4124 = vmatpush.msra.mxu0 %v3888
        %4125 = vmatpush.msra.mxu0 %v3887
        %4126 = vmatpush.msra.mxu0 %v3886
        %4127 = vmatpush.msra.mxu0 %v3885
        %4128 = vmatpush.msra.mxu0 %v3884
        %4129 = vmatpush.msra.mxu0 %v3883
        %4130 = vmatpush.msra.mxu0 %v3882
        %4131 = vmatmul.f32.gmra.mxu0 %v3771
        %v4132 = vpop.f32.mrf.mxu0
        %v4133 = vadd.f32 %v4020, %v4132
        %4134 = vmatmul.f32.gmra.mxu0 %v3774
        %v4135 = vpop.f32.mrf.mxu0
        %v4136 = vadd.f32 %v4023, %v4135
        %4137 = vmatmul.f32.gmra.mxu0 %v3777
        %v4138 = vpop.f32.mrf.mxu0
        %v4139 = vadd.f32 %v4026, %v4138
        %4140 = vmatmul.f32.gmra.mxu0 %v3780
        %v4141 = vpop.f32.mrf.mxu0
        %v4142 = vadd.f32 %v4029, %v4141
        %4143 = vmatmul.f32.gmra.mxu0 %v3783
        %v4144 = vpop.f32.mrf.mxu0
        %v4145 = vadd.f32 %v4032, %v4144
        %4146 = vmatmul.f32.gmra.mxu0 %v3786
        %v4147 = vpop.f32.mrf.mxu0
        %v4148 = vadd.f32 %v4035, %v4147
        %4149 = vmatmul.f32.gmra.mxu0 %v3789
        %v4150 = vpop.f32.mrf.mxu0
        %v4151 = vadd.f32 %v4038, %v4150
        %4152 = vmatmul.f32.gmra.mxu0 %v3792
        %v4153 = vpop.f32.mrf.mxu0
        %v4154 = vadd.f32 %v4041, %v4153
        %4155 = vmatmul.f32.gmra.mxu0 %v3795
        %v4156 = vpop.f32.mrf.mxu0
        %v4157 = vadd.f32 %v4044, %v4156
        %4158 = vmatmul.f32.gmra.mxu0 %v3798
        %v4159 = vpop.f32.mrf.mxu0
        %v4160 = vadd.f32 %v4047, %v4159
        %4161 = vmatmul.f32.gmra.mxu0 %v3801
        %v4162 = vpop.f32.mrf.mxu0
        %v4163 = vadd.f32 %v4050, %v4162
        %4164 = vmatmul.f32.gmra.mxu0 %v3804
        %v4165 = vpop.f32.mrf.mxu0
        %v4166 = vadd.f32 %v4053, %v4165
        %4167 = vmatmul.f32.gmra.mxu0 %v3807
        %v4168 = vpop.f32.mrf.mxu0
        %v4169 = vadd.f32 %v4056, %v4168
        %4170 = vmatmul.f32.gmra.mxu0 %v3810
        %v4171 = vpop.f32.mrf.mxu0
        %v4172 = vadd.f32 %v4059, %v4171
        %4173 = vmatmul.f32.gmra.mxu0 %v3813
        %v4174 = vpop.f32.mrf.mxu0
        %v4175 = vadd.f32 %v4062, %v4174
        %4176 = vmatmul.f32.gmra.mxu0 %v3816
        %v4177 = vpop.f32.mrf.mxu0
        %v4178 = vadd.f32 %v4065, %v4177
        %4179 = vmatmul.f32.gmra.mxu0 %v3819
        %v4180 = vpop.f32.mrf.mxu0
        %v4181 = vadd.f32 %v4068, %v4180
        %4182 = vmatmul.f32.gmra.mxu0 %v3822
        %v4183 = vpop.f32.mrf.mxu0
        %v4184 = vadd.f32 %v4071, %v4183
        %4185 = vmatmul.f32.gmra.mxu0 %v3825
        %v4186 = vpop.f32.mrf.mxu0
        %v4187 = vadd.f32 %v4074, %v4186
        %4188 = vmatmul.f32.gmra.mxu0 %v3828
        %v4189 = vpop.f32.mrf.mxu0
        %v4190 = vadd.f32 %v4077, %v4189
        %4191 = vmatmul.f32.gmra.mxu0 %v3831
        %v4192 = vpop.f32.mrf.mxu0
        %v4193 = vadd.f32 %v4080, %v4192
        %4194 = vmatmul.f32.gmra.mxu0 %v3834
        %v4195 = vpop.f32.mrf.mxu0
        %v4196 = vadd.f32 %v4083, %v4195
        %4197 = vmatmul.f32.gmra.mxu0 %v3837
        %v4198 = vpop.f32.mrf.mxu0
        %v4199 = vadd.f32 %v4086, %v4198
        %4200 = vmatmul.f32.gmra.mxu0 %v3840
        %v4201 = vpop.f32.mrf.mxu0
        %v4202 = vadd.f32 %v4089, %v4201
        %4203 = vmatmul.f32.gmra.mxu0 %v3843
        %v4204 = vpop.f32.mrf.mxu0
        %v4205 = vadd.f32 %v4092, %v4204
        %4206 = vmatmul.f32.gmra.mxu0 %v3846
        %v4207 = vpop.f32.mrf.mxu0
        %v4208 = vadd.f32 %v4095, %v4207
        %4209 = vmatmul.f32.gmra.mxu0 %v3849
        %v4210 = vpop.f32.mrf.mxu0
        %v4211 = vadd.f32 %v4098, %v4210
        %4212 = vmatmul.f32.gmra.mxu0 %v3852
        %v4213 = vpop.f32.mrf.mxu0
        %v4214 = vadd.f32 %v4101, %v4213
        %4215 = vmatmul.f32.gmra.mxu0 %v3855
        %v4216 = vpop.f32.mrf.mxu0
        %v4217 = vadd.f32 %v4104, %v4216
        %4218 = vmatmul.f32.gmra.mxu0 %v3858
        %v4219 = vpop.f32.mrf.mxu0
        %v4220 = vadd.f32 %v4107, %v4219
        %4221 = vmatmul.f32.gmra.mxu0 %v3861
        %v4222 = vpop.f32.mrf.mxu0
        %v4223 = vadd.f32 %v4110, %v4222
        %4224 = vmatmul.f32.gmra.mxu0 %v3864
        %v4225 = vpop.f32.mrf.mxu0
        %v4226 = vadd.f32 %v4113, %v4225
        %4227 = vdwg.mxu0
        %4228 = vmatpush.msra.mxu0 0.0
        %4229 = vmatpush.msra.mxu0 0.0
        %4230 = vmatpush.msra.mxu0 0.0
        %4231 = vmatpush.msra.mxu0 0.0
        %4232 = vmatpush.msra.mxu0 0.0
        %4233 = vmatpush.msra.mxu0 0.0
        %4234 = vmatpush.msra.mxu0 0.0
        %4235 = vmatpush.msra.mxu0 0.0
        %4236 = vmatpush.msra.mxu0 0.0
        %4237 = vmatpush.msra.mxu0 0.0
        %4238 = vmatpush.msra.mxu0 0.0
        %4239 = vmatpush.msra.mxu0 0.0
        %4240 = vmatpush.msra.mxu0 %v3901
        %4241 = vmatpush.msra.mxu0 %v3900
        %4242 = vmatpush.msra.mxu0 %v3899
        %4243 = vmatpush.msra.mxu0 %v3898
        %4244 = vmatmul.f32.gmra.mxu0 %v3907
        %v4245 = vpop.f32.mrf.mxu0
        %v4246 = vadd.f32 %v4133, %v4245
        %4247 = vmatmul.f32.gmra.mxu0 %v3910
        %v4248 = vpop.f32.mrf.mxu0
        %v4249 = vadd.f32 %v4136, %v4248
        %4250 = vmatmul.f32.gmra.mxu0 %v3913
        %v4251 = vpop.f32.mrf.mxu0
        %v4252 = vadd.f32 %v4139, %v4251
        %4253 = vmatmul.f32.gmra.mxu0 %v3916
        %v4254 = vpop.f32.mrf.mxu0
        %v4255 = vadd.f32 %v4142, %v4254
        %4256 = vmatmul.f32.gmra.mxu0 %v3919
        %v4257 = vpop.f32.mrf.mxu0
        %v4258 = vadd.f32 %v4145, %v4257
        %4259 = vmatmul.f32.gmra.mxu0 %v3922
        %v4260 = vpop.f32.mrf.mxu0
        %v4261 = vadd.f32 %v4148, %v4260
        %4262 = vmatmul.f32.gmra.mxu0 %v3925
        %v4263 = vpop.f32.mrf.mxu0
        %v4264 = vadd.f32 %v4151, %v4263
        %4265 = vmatmul.f32.gmra.mxu0 %v3928
        %v4266 = vpop.f32.mrf.mxu0
        %v4267 = vadd.f32 %v4154, %v4266
        %4268 = vmatmul.f32.gmra.mxu0 %v3931
        %v4269 = vpop.f32.mrf.mxu0
        %v4270 = vadd.f32 %v4157, %v4269
        %4271 = vmatmul.f32.gmra.mxu0 %v3934
        %v4272 = vpop.f32.mrf.mxu0
        %v4273 = vadd.f32 %v4160, %v4272
        %4274 = vmatmul.f32.gmra.mxu0 %v3937
        %v4275 = vpop.f32.mrf.mxu0
        %v4276 = vadd.f32 %v4163, %v4275
        %4277 = vmatmul.f32.gmra.mxu0 %v3940
        %v4278 = vpop.f32.mrf.mxu0
        %v4279 = vadd.f32 %v4166, %v4278
        %4280 = vmatmul.f32.gmra.mxu0 %v3943
        %v4281 = vpop.f32.mrf.mxu0
        %v4282 = vadd.f32 %v4169, %v4281
        %4283 = vmatmul.f32.gmra.mxu0 %v3946
        %v4284 = vpop.f32.mrf.mxu0
        %v4285 = vadd.f32 %v4172, %v4284
        %4286 = vmatmul.f32.gmra.mxu0 %v3949
        %v4287 = vpop.f32.mrf.mxu0
        %v4288 = vadd.f32 %v4175, %v4287
        %4289 = vmatmul.f32.gmra.mxu0 %v3952
        %v4290 = vpop.f32.mrf.mxu0
        %v4291 = vadd.f32 %v4178, %v4290
        %4292 = vmatmul.f32.gmra.mxu0 %v3955
        %v4293 = vpop.f32.mrf.mxu0
        %v4294 = vadd.f32 %v4181, %v4293
        %4295 = vmatmul.f32.gmra.mxu0 %v3958
        %v4296 = vpop.f32.mrf.mxu0
        %v4297 = vadd.f32 %v4184, %v4296
        %4298 = vmatmul.f32.gmra.mxu0 %v3961
        %v4299 = vpop.f32.mrf.mxu0
        %v4300 = vadd.f32 %v4187, %v4299
        %4301 = vmatmul.f32.gmra.mxu0 %v3964
        %v4302 = vpop.f32.mrf.mxu0
        %v4303 = vadd.f32 %v4190, %v4302
        %4304 = vmatmul.f32.gmra.mxu0 %v3967
        %v4305 = vpop.f32.mrf.mxu0
        %v4306 = vadd.f32 %v4193, %v4305
        %4307 = vmatmul.f32.gmra.mxu0 %v3970
        %v4308 = vpop.f32.mrf.mxu0
        %v4309 = vadd.f32 %v4196, %v4308
        %4310 = vmatmul.f32.gmra.mxu0 %v3973
        %v4311 = vpop.f32.mrf.mxu0
        %v4312 = vadd.f32 %v4199, %v4311
        %4313 = vmatmul.f32.gmra.mxu0 %v3976
        %v4314 = vpop.f32.mrf.mxu0
        %v4315 = vadd.f32 %v4202, %v4314
        %4316 = vmatmul.f32.gmra.mxu0 %v3979
        %v4317 = vpop.f32.mrf.mxu0
        %v4318 = vadd.f32 %v4205, %v4317
        %4319 = vmatmul.f32.gmra.mxu0 %v3982
        %v4320 = vpop.f32.mrf.mxu0
        %v4321 = vadd.f32 %v4208, %v4320
        %4322 = vmatmul.f32.gmra.mxu0 %v3985
        %v4323 = vpop.f32.mrf.mxu0
        %v4324 = vadd.f32 %v4211, %v4323
        %4325 = vmatmul.f32.gmra.mxu0 %v3988
        %v4326 = vpop.f32.mrf.mxu0
        %v4327 = vadd.f32 %v4214, %v4326
        %4328 = vmatmul.f32.gmra.mxu0 %v3991
        %v4329 = vpop.f32.mrf.mxu0
        %v4330 = vadd.f32 %v4217, %v4329
        %4331 = vmatmul.f32.gmra.mxu0 %v3994
        %v4332 = vpop.f32.mrf.mxu0
        %v4333 = vadd.f32 %v4220, %v4332
        %4334 = vmatmul.f32.gmra.mxu0 %v3997
        %v4335 = vpop.f32.mrf.mxu0
        %v4336 = vadd.f32 %v4223, %v4335
        %4337 = vmatmul.f32.gmra.mxu0 %v4000
        %v4338 = vpop.f32.mrf.mxu0
        %v4339 = vadd.f32 %v4226, %v4338
        %4340 = vdwg.mxu0
        %v4341 = vmax.f32 %v4246, 0.0
        %v4342 = vmax.f32 %v4249, 0.0
        %v4343 = vmax.f32 %v4252, 0.0
        %v4344 = vmax.f32 %v4255, 0.0
        %v4345 = vmax.f32 %v4258, 0.0
        %v4346 = vmax.f32 %v4261, 0.0
        %v4347 = vmax.f32 %v4264, 0.0
        %v4348 = vmax.f32 %v4267, 0.0
        %v4349 = vmax.f32 %v4270, 0.0
        %v4350 = vmax.f32 %v4273, 0.0
        %v4351 = vmax.f32 %v4276, 0.0
        %v4352 = vmax.f32 %v4279, 0.0
        %v4353 = vmax.f32 %v4282, 0.0
        %v4354 = vmax.f32 %v4285, 0.0
        %v4355 = vmax.f32 %v4288, 0.0
        %v4356 = vmax.f32 %v4291, 0.0
        %v4357 = vmax.f32 %v4294, 0.0
        %v4358 = vmax.f32 %v4297, 0.0
        %v4359 = vmax.f32 %v4300, 0.0
        %v4360 = vmax.f32 %v4303, 0.0
        %v4361 = vmax.f32 %v4306, 0.0
        %v4362 = vmax.f32 %v4309, 0.0
        %v4363 = vmax.f32 %v4312, 0.0
        %v4364 = vmax.f32 %v4315, 0.0
        %v4365 = vmax.f32 %v4318, 0.0
        %v4366 = vmax.f32 %v4321, 0.0
        %v4367 = vmax.f32 %v4324, 0.0
        %v4368 = vmax.f32 %v4327, 0.0
        %v4369 = vmax.f32 %v4330, 0.0
        %v4370 = vmax.f32 %v4333, 0.0
        %v4371 = vmax.f32 %v4336, 0.0
        %v4372 = vmax.f32 %v4339, 0.0
        %4373 = vst.msk [vmem:[%s382] sm:$0xff] %vm2350, %v4341
        %4374 = vst.msk [vmem:[%s382 + $0x8] sm:$0xff] %vm2350, %v4342
        %4375 = vst.msk [vmem:[%s382 + $0x20] sm:$0xff] %vm2350, %v4343
        %4376 = vst.msk [vmem:[%s382 + $0x28] sm:$0xff] %vm2350, %v4344
        %4377 = vst.msk [vmem:[%s382 + $0x40] sm:$0xff] %vm2350, %v4345
        %4378 = vst.msk [vmem:[%s382 + $0x48] sm:$0xff] %vm2350, %v4346
        %4379 = vst.msk [vmem:[%s382 + $0x60] sm:$0xff] %vm2350, %v4347
        %4380 = vst.msk [vmem:[%s382 + $0x68] sm:$0xff] %vm2350, %v4348
        %4381 = vst.msk [vmem:[%s382 + $0x80] sm:$0xff] %vm2350, %v4349
        %4382 = vst.msk [vmem:[%s382 + $0x88] sm:$0xff] %vm2350, %v4350
        %4383 = vst.msk [vmem:[%s382 + $0xa0] sm:$0xff] %vm2350, %v4351
        %4384 = vst.msk [vmem:[%s382 + $0xa8] sm:$0xff] %vm2350, %v4352
        %4385 = vst.msk [vmem:[%s382 + $0xc0] sm:$0xff] %vm2350, %v4353
        %4386 = vst.msk [vmem:[%s382 + $0xc8] sm:$0xff] %vm2350, %v4354
        %4387 = vst.msk [vmem:[%s382 + $0xe0] sm:$0xff] %vm2350, %v4355
        %4388 = vst.msk [vmem:[%s382 + $0xe8] sm:$0xff] %vm2350, %v4356
        %4389 = vst.msk [vmem:[%s382 + $0x100] sm:$0xff] %vm2350, %v4357
        %4390 = vst.msk [vmem:[%s382 + $0x108] sm:$0xff] %vm2350, %v4358
        %4391 = vst.msk [vmem:[%s382 + $0x120] sm:$0xff] %vm2350, %v4359
        %4392 = vst.msk [vmem:[%s382 + $0x128] sm:$0xff] %vm2350, %v4360
        %4393 = vst.msk [vmem:[%s382 + $0x140] sm:$0xff] %vm2350, %v4361
        %4394 = vst.msk [vmem:[%s382 + $0x148] sm:$0xff] %vm2350, %v4362
        %4395 = vst.msk [vmem:[%s382 + $0x160] sm:$0xff] %vm2350, %v4363
        %4396 = vst.msk [vmem:[%s382 + $0x168] sm:$0xff] %vm2350, %v4364
        %4397 = vst.msk [vmem:[%s382 + $0x180] sm:$0xff] %vm2350, %v4365
        %4398 = vst.msk [vmem:[%s382 + $0x188] sm:$0xff] %vm2350, %v4366
        %4399 = vst.msk [vmem:[%s382 + $0x1a0] sm:$0xff] %vm2350, %v4367
        %4400 = vst.msk [vmem:[%s382 + $0x1a8] sm:$0xff] %vm2350, %v4368
        %4401 = vst.msk [vmem:[%s382 + $0x1c0] sm:$0xff] %vm2350, %v4369
        %4402 = vst.msk [vmem:[%s382 + $0x1c8] sm:$0xff] %vm2350, %v4370
        %4403 = vst.msk [vmem:[%s382 + $0x1e0] sm:$0xff] %vm2350, %v4371
        %4404 = vst.msk [vmem:[%s382 + $0x1e8] sm:$0xff] %vm2350, %v4372
        %4405 = vst.msk [vmem:[#allocation2] sm:$0xff] %vm2350, %v4371
        %4406 = vst.msk [vmem:[#allocation2 + $0x8] sm:$0xff] %vm2350, %v4372
        %4407 = vst.msk [vmem:[%s418] sm:$0xff] %vm2350, %v4341
        %4408 = vst.msk [vmem:[%s418 + $0x8] sm:$0xff] %vm2350, %v4342
        %4409 = vst.msk [vmem:[%s382 + $0x10] sm:$0xff] %vm2350, %v4341
        %4410 = vst.msk [vmem:[%s382 + $0x18] sm:$0xff] %vm2350, %v4342
        %4411 = vst.msk [vmem:[%s382 + $0x30] sm:$0xff] %vm2350, %v4343
        %4412 = vst.msk [vmem:[%s382 + $0x38] sm:$0xff] %vm2350, %v4344
        %4413 = vst.msk [vmem:[%s382 + $0x50] sm:$0xff] %vm2350, %v4345
        %4414 = vst.msk [vmem:[%s382 + $0x58] sm:$0xff] %vm2350, %v4346
        %4415 = vst.msk [vmem:[%s382 + $0x70] sm:$0xff] %vm2350, %v4347
        %4416 = vst.msk [vmem:[%s382 + $0x78] sm:$0xff] %vm2350, %v4348
        %4417 = vst.msk [vmem:[%s382 + $0x90] sm:$0xff] %vm2350, %v4349
        %4418 = vst.msk [vmem:[%s382 + $0x98] sm:$0xff] %vm2350, %v4350
        %4419 = vst.msk [vmem:[%s382 + $0xb0] sm:$0xff] %vm2350, %v4351
        %4420 = vst.msk [vmem:[%s382 + $0xb8] sm:$0xff] %vm2350, %v4352
        %4421 = vst.msk [vmem:[%s382 + $0xd0] sm:$0xff] %vm2350, %v4353
        %4422 = vst.msk [vmem:[%s382 + $0xd8] sm:$0xff] %vm2350, %v4354
        %4423 = vst.msk [vmem:[%s382 + $0xf0] sm:$0xff] %vm2350, %v4355
        %4424 = vst.msk [vmem:[%s382 + $0xf8] sm:$0xff] %vm2350, %v4356
        %4425 = vst.msk [vmem:[%s382 + $0x110] sm:$0xff] %vm2350, %v4357
        %4426 = vst.msk [vmem:[%s382 + $0x118] sm:$0xff] %vm2350, %v4358
        %4427 = vst.msk [vmem:[%s382 + $0x130] sm:$0xff] %vm2350, %v4359
        %4428 = vst.msk [vmem:[%s382 + $0x138] sm:$0xff] %vm2350, %v4360
        %4429 = vst.msk [vmem:[%s382 + $0x150] sm:$0xff] %vm2350, %v4361
        %4430 = vst.msk [vmem:[%s382 + $0x158] sm:$0xff] %vm2350, %v4362
        %4431 = vst.msk [vmem:[%s382 + $0x170] sm:$0xff] %vm2350, %v4363
        %4432 = vst.msk [vmem:[%s382 + $0x178] sm:$0xff] %vm2350, %v4364
        %4433 = vst.msk [vmem:[%s382 + $0x190] sm:$0xff] %vm2350, %v4365
        %4434 = vst.msk [vmem:[%s382 + $0x198] sm:$0xff] %vm2350, %v4366
        %4435 = vst.msk [vmem:[%s382 + $0x1b0] sm:$0xff] %vm2350, %v4367
        %4436 = vst.msk [vmem:[%s382 + $0x1b8] sm:$0xff] %vm2350, %v4368
        %4437 = vst.msk [vmem:[%s382 + $0x1d0] sm:$0xff] %vm2350, %v4369
        %4438 = vst.msk [vmem:[%s382 + $0x1d8] sm:$0xff] %vm2350, %v4370
        %4439 = vst.msk [vmem:[%s382 + $0x1f0] sm:$0xff] %vm2350, %v4371
        %4440 = vst.msk [vmem:[%s382 + $0x1f8] sm:$0xff] %vm2350, %v4372
        %4441 = vst.msk [vmem:[#allocation2 + $0x10] sm:$0xff] %vm2350, %v4371
        %4442 = vst.msk [vmem:[#allocation2 + $0x18] sm:$0xff] %vm2350, %v4372
        %4443 = vst.msk [vmem:[%s418 + $0x10] sm:$0xff] %vm2350, %v4341
        %4444 = vst.msk [vmem:[%s418 + $0x18] sm:$0xff] %vm2350, %v4342
        %v4445 = vld [vmem:[#allocation2 + $0xf] sm:$0xff]
        %v4446 = vld [vmem:[#allocation2 + $0x17] sm:$0xff]
        %v4447 = vld [vmem:[#allocation2 + $0x2f] sm:$0xff]
        %v4448 = vld [vmem:[#allocation2 + $0x37] sm:$0xff]
        %v4449 = vld [vmem:[#allocation2 + $0x4f] sm:$0xff]
        %v4450 = vld [vmem:[#allocation2 + $0x57] sm:$0xff]
        %v4451 = vld [vmem:[#allocation2 + $0x6f] sm:$0xff]
        %v4452 = vld [vmem:[#allocation2 + $0x77] sm:$0xff]
        %v4453 = vld [vmem:[#allocation2 + $0x8f] sm:$0xff]
        %v4454 = vld [vmem:[#allocation2 + $0x97] sm:$0xff]
        %v4455 = vld [vmem:[#allocation2 + $0xaf] sm:$0xff]
        %v4456 = vld [vmem:[#allocation2 + $0xb7] sm:$0xff]
        %v4457 = vld [vmem:[#allocation2 + $0xcf] sm:$0xff]
        %v4458 = vld [vmem:[#allocation2 + $0xd7] sm:$0xff]
        %v4459 = vld [vmem:[#allocation2 + $0xef] sm:$0xff]
        %v4460 = vld [vmem:[#allocation2 + $0xf7] sm:$0xff]
        %v4461 = vld [vmem:[#allocation2 + $0x10f] sm:$0xff]
        %v4462 = vld [vmem:[#allocation2 + $0x117] sm:$0xff]
        %v4463 = vld [vmem:[#allocation2 + $0x12f] sm:$0xff]
        %v4464 = vld [vmem:[#allocation2 + $0x137] sm:$0xff]
        %v4465 = vld [vmem:[#allocation2 + $0x14f] sm:$0xff]
        %v4466 = vld [vmem:[#allocation2 + $0x157] sm:$0xff]
        %v4467 = vld [vmem:[#allocation2 + $0x16f] sm:$0xff]
        %v4468 = vld [vmem:[#allocation2 + $0x177] sm:$0xff]
        %v4469 = vld [vmem:[#allocation2 + $0x18f] sm:$0xff]
        %v4470 = vld [vmem:[#allocation2 + $0x197] sm:$0xff]
        %v4471 = vld [vmem:[#allocation2 + $0x1af] sm:$0xff]
        %v4472 = vld [vmem:[#allocation2 + $0x1b7] sm:$0xff]
        %v4473 = vld [vmem:[#allocation2 + $0x1cf] sm:$0xff]
        %v4474 = vld [vmem:[#allocation2 + $0x1d7] sm:$0xff]
        %v4475 = vld [vmem:[#allocation2 + $0x1ef] sm:$0xff]
        %v4476 = vld [vmem:[#allocation2 + $0x1f7] sm:$0xff]
        %4477 = vst.msk [vmem:[#allocation3] sm:$0xff] %vm2350, %v4445
        %4478 = vst.msk [vmem:[#allocation3 + $0x18] sm:$0xff] %vm2350, %v4446
        %4479 = vst.msk [vmem:[#allocation3 + $0x30] sm:$0xff] %vm2350, %v4447
        %4480 = vst.msk [vmem:[#allocation3 + $0x48] sm:$0xff] %vm2350, %v4448
        %4481 = vst.msk [vmem:[#allocation3 + $0x60] sm:$0xff] %vm2350, %v4449
        %4482 = vst.msk [vmem:[#allocation3 + $0x78] sm:$0xff] %vm2350, %v4450
        %4483 = vst.msk [vmem:[#allocation3 + $0x90] sm:$0xff] %vm2350, %v4451
        %4484 = vst.msk [vmem:[#allocation3 + $0xa8] sm:$0xff] %vm2350, %v4452
        %4485 = vst.msk [vmem:[#allocation3 + $0xc0] sm:$0xff] %vm2350, %v4453
        %4486 = vst.msk [vmem:[#allocation3 + $0xd8] sm:$0xff] %vm2350, %v4454
        %4487 = vst.msk [vmem:[#allocation3 + $0xf0] sm:$0xff] %vm2350, %v4455
        %4488 = vst.msk [vmem:[#allocation3 + $0x108] sm:$0xff] %vm2350, %v4456
        %4489 = vst.msk [vmem:[#allocation3 + $0x120] sm:$0xff] %vm2350, %v4457
        %4490 = vst.msk [vmem:[#allocation3 + $0x138] sm:$0xff] %vm2350, %v4458
        %4491 = vst.msk [vmem:[#allocation3 + $0x150] sm:$0xff] %vm2350, %v4459
        %4492 = vst.msk [vmem:[#allocation3 + $0x168] sm:$0xff] %vm2350, %v4460
        %4493 = vst.msk [vmem:[#allocation3 + $0x180] sm:$0xff] %vm2350, %v4461
        %4494 = vst.msk [vmem:[#allocation3 + $0x198] sm:$0xff] %vm2350, %v4462
        %4495 = vst.msk [vmem:[#allocation3 + $0x1b0] sm:$0xff] %vm2350, %v4463
        %4496 = vst.msk [vmem:[#allocation3 + $0x1c8] sm:$0xff] %vm2350, %v4464
        %4497 = vst.msk [vmem:[#allocation3 + $0x1e0] sm:$0xff] %vm2350, %v4465
        %4498 = vst.msk [vmem:[#allocation3 + $0x1f8] sm:$0xff] %vm2350, %v4466
        %4499 = vst.msk [vmem:[#allocation3 + $0x210] sm:$0xff] %vm2350, %v4467
        %4500 = vst.msk [vmem:[#allocation3 + $0x228] sm:$0xff] %vm2350, %v4468
        %4501 = vst.msk [vmem:[#allocation3 + $0x240] sm:$0xff] %vm2350, %v4469
        %4502 = vst.msk [vmem:[#allocation3 + $0x258] sm:$0xff] %vm2350, %v4470
        %4503 = vst.msk [vmem:[#allocation3 + $0x270] sm:$0xff] %vm2350, %v4471
        %4504 = vst.msk [vmem:[#allocation3 + $0x288] sm:$0xff] %vm2350, %v4472
        %4505 = vst.msk [vmem:[#allocation3 + $0x2a0] sm:$0xff] %vm2350, %v4473
        %4506 = vst.msk [vmem:[#allocation3 + $0x2b8] sm:$0xff] %vm2350, %v4474
        %4507 = vst.msk [vmem:[#allocation3 + $0x2d0] sm:$0xff] %vm2350, %v4475
        %4508 = vst.msk [vmem:[#allocation3 + $0x2e8] sm:$0xff] %vm2350, %v4476
        %v4509 = vld [vmem:[#allocation2] sm:$0xff]
        %v4510 = vld [vmem:[#allocation2 + $0x8] sm:$0xff]
        %v4511 = vld [vmem:[#allocation2 + $0x20] sm:$0xff]
        %v4512 = vld [vmem:[#allocation2 + $0x28] sm:$0xff]
        %v4513 = vld [vmem:[#allocation2 + $0x40] sm:$0xff]
        %v4514 = vld [vmem:[#allocation2 + $0x48] sm:$0xff]
        %v4515 = vld [vmem:[#allocation2 + $0x60] sm:$0xff]
        %v4516 = vld [vmem:[#allocation2 + $0x68] sm:$0xff]
        %v4517 = vld [vmem:[#allocation2 + $0x80] sm:$0xff]
        %v4518 = vld [vmem:[#allocation2 + $0x88] sm:$0xff]
        %v4519 = vld [vmem:[#allocation2 + $0xa0] sm:$0xff]
        %v4520 = vld [vmem:[#allocation2 + $0xa8] sm:$0xff]
        %v4521 = vld [vmem:[#allocation2 + $0xc0] sm:$0xff]
        %v4522 = vld [vmem:[#allocation2 + $0xc8] sm:$0xff]
        %v4523 = vld [vmem:[#allocation2 + $0xe0] sm:$0xff]
        %v4524 = vld [vmem:[#allocation2 + $0xe8] sm:$0xff]
        %v4525 = vld [vmem:[#allocation2 + $0x100] sm:$0xff]
        %v4526 = vld [vmem:[#allocation2 + $0x108] sm:$0xff]
        %v4527 = vld [vmem:[#allocation2 + $0x120] sm:$0xff]
        %v4528 = vld [vmem:[#allocation2 + $0x128] sm:$0xff]
        %v4529 = vld [vmem:[#allocation2 + $0x140] sm:$0xff]
        %v4530 = vld [vmem:[#allocation2 + $0x148] sm:$0xff]
        %v4531 = vld [vmem:[#allocation2 + $0x160] sm:$0xff]
        %v4532 = vld [vmem:[#allocation2 + $0x168] sm:$0xff]
        %v4533 = vld [vmem:[#allocation2 + $0x180] sm:$0xff]
        %v4534 = vld [vmem:[#allocation2 + $0x188] sm:$0xff]
        %v4535 = vld [vmem:[#allocation2 + $0x1a0] sm:$0xff]
        %v4536 = vld [vmem:[#allocation2 + $0x1a8] sm:$0xff]
        %v4537 = vld [vmem:[#allocation2 + $0x1c0] sm:$0xff]
        %v4538 = vld [vmem:[#allocation2 + $0x1c8] sm:$0xff]
        %v4539 = vld [vmem:[#allocation2 + $0x1e0] sm:$0xff]
        %v4540 = vld [vmem:[#allocation2 + $0x1e8] sm:$0xff]
        %4573 = vrot.lane.b32.xlu0 %v4509, 32
        %v4574 = vpop.permute.xlu0 %4573
        %4575 = vrot.lane.b32.xlu0 %v4510, 32
        %v4576 = vpop.permute.xlu0 %4575
        %4577 = vrot.lane.b32.xlu0 %v4511, 32
        %v4578 = vpop.permute.xlu0 %4577
        %4579 = vrot.lane.b32.xlu0 %v4512, 32
        %v4580 = vpop.permute.xlu0 %4579
        %4581 = vrot.lane.b32.xlu0 %v4513, 32
        %v4582 = vpop.permute.xlu0 %4581
        %4583 = vrot.lane.b32.xlu0 %v4514, 32
        %v4584 = vpop.permute.xlu0 %4583
        %4585 = vrot.lane.b32.xlu0 %v4515, 32
        %v4586 = vpop.permute.xlu0 %4585
        %4587 = vrot.lane.b32.xlu0 %v4516, 32
        %v4588 = vpop.permute.xlu0 %4587
        %4589 = vrot.lane.b32.xlu0 %v4517, 32
        %v4590 = vpop.permute.xlu0 %4589
        %4591 = vrot.lane.b32.xlu0 %v4518, 32
        %v4592 = vpop.permute.xlu0 %4591
        %4593 = vrot.lane.b32.xlu0 %v4519, 32
        %v4594 = vpop.permute.xlu0 %4593
        %4595 = vrot.lane.b32.xlu0 %v4520, 32
        %v4596 = vpop.permute.xlu0 %4595
        %4597 = vrot.lane.b32.xlu0 %v4521, 32
        %v4598 = vpop.permute.xlu0 %4597
        %4599 = vrot.lane.b32.xlu0 %v4522, 32
        %v4600 = vpop.permute.xlu0 %4599
        %4601 = vrot.lane.b32.xlu0 %v4523, 32
        %v4602 = vpop.permute.xlu0 %4601
        %4603 = vrot.lane.b32.xlu0 %v4524, 32
        %v4604 = vpop.permute.xlu0 %4603
        %4605 = vrot.lane.b32.xlu0 %v4525, 32
        %v4606 = vpop.permute.xlu0 %4605
        %4607 = vrot.lane.b32.xlu0 %v4526, 32
        %v4608 = vpop.permute.xlu0 %4607
        %4609 = vrot.lane.b32.xlu0 %v4527, 32
        %v4610 = vpop.permute.xlu0 %4609
        %4611 = vrot.lane.b32.xlu0 %v4528, 32
        %v4612 = vpop.permute.xlu0 %4611
        %4613 = vrot.lane.b32.xlu0 %v4529, 32
        %v4614 = vpop.permute.xlu0 %4613
        %4615 = vrot.lane.b32.xlu0 %v4530, 32
        %v4616 = vpop.permute.xlu0 %4615
        %4617 = vrot.lane.b32.xlu0 %v4531, 32
        %v4618 = vpop.permute.xlu0 %4617
        %4619 = vrot.lane.b32.xlu0 %v4532, 32
        %v4620 = vpop.permute.xlu0 %4619
        %4621 = vrot.lane.b32.xlu0 %v4533, 32
        %v4622 = vpop.permute.xlu0 %4621
        %4623 = vrot.lane.b32.xlu0 %v4534, 32
        %v4624 = vpop.permute.xlu0 %4623
        %4625 = vrot.lane.b32.xlu0 %v4535, 32
        %v4626 = vpop.permute.xlu0 %4625
        %4627 = vrot.lane.b32.xlu0 %v4536, 32
        %v4628 = vpop.permute.xlu0 %4627
        %4629 = vrot.lane.b32.xlu0 %v4537, 32
        %v4630 = vpop.permute.xlu0 %4629
        %4631 = vrot.lane.b32.xlu0 %v4538, 32
        %v4632 = vpop.permute.xlu0 %4631
        %4633 = vrot.lane.b32.xlu0 %v4539, 32
        %v4634 = vpop.permute.xlu0 %4633
        %4635 = vrot.lane.b32.xlu0 %v4540, 32
        %v4636 = vpop.permute.xlu0 %4635
        %4669 = vst.msk [vmem:[#allocation3] sm:$0xff] %vm2647, %v4574
        %4670 = vst.msk [vmem:[#allocation3 + $0x18] sm:$0xff] %vm2647, %v4576
        %4671 = vst.msk [vmem:[#allocation3 + $0x30] sm:$0xff] %vm2647, %v4578
        %4672 = vst.msk [vmem:[#allocation3 + $0x48] sm:$0xff] %vm2647, %v4580
        %4673 = vst.msk [vmem:[#allocation3 + $0x60] sm:$0xff] %vm2647, %v4582
        %4674 = vst.msk [vmem:[#allocation3 + $0x78] sm:$0xff] %vm2647, %v4584
        %4675 = vst.msk [vmem:[#allocation3 + $0x90] sm:$0xff] %vm2647, %v4586
        %4676 = vst.msk [vmem:[#allocation3 + $0xa8] sm:$0xff] %vm2647, %v4588
        %4677 = vst.msk [vmem:[#allocation3 + $0xc0] sm:$0xff] %vm2647, %v4590
        %4678 = vst.msk [vmem:[#allocation3 + $0xd8] sm:$0xff] %vm2647, %v4592
        %4679 = vst.msk [vmem:[#allocation3 + $0xf0] sm:$0xff] %vm2647, %v4594
        %4680 = vst.msk [vmem:[#allocation3 + $0x108] sm:$0xff] %vm2647, %v4596
        %4681 = vst.msk [vmem:[#allocation3 + $0x120] sm:$0xff] %vm2647, %v4598
        %4682 = vst.msk [vmem:[#allocation3 + $0x138] sm:$0xff] %vm2647, %v4600
        %4683 = vst.msk [vmem:[#allocation3 + $0x150] sm:$0xff] %vm2647, %v4602
        %4684 = vst.msk [vmem:[#allocation3 + $0x168] sm:$0xff] %vm2647, %v4604
        %4685 = vst.msk [vmem:[#allocation3 + $0x180] sm:$0xff] %vm2647, %v4606
        %4686 = vst.msk [vmem:[#allocation3 + $0x198] sm:$0xff] %vm2647, %v4608
        %4687 = vst.msk [vmem:[#allocation3 + $0x1b0] sm:$0xff] %vm2647, %v4610
        %4688 = vst.msk [vmem:[#allocation3 + $0x1c8] sm:$0xff] %vm2647, %v4612
        %4689 = vst.msk [vmem:[#allocation3 + $0x1e0] sm:$0xff] %vm2647, %v4614
        %4690 = vst.msk [vmem:[#allocation3 + $0x1f8] sm:$0xff] %vm2647, %v4616
        %4691 = vst.msk [vmem:[#allocation3 + $0x210] sm:$0xff] %vm2647, %v4618
        %4692 = vst.msk [vmem:[#allocation3 + $0x228] sm:$0xff] %vm2647, %v4620
        %4693 = vst.msk [vmem:[#allocation3 + $0x240] sm:$0xff] %vm2647, %v4622
        %4694 = vst.msk [vmem:[#allocation3 + $0x258] sm:$0xff] %vm2647, %v4624
        %4695 = vst.msk [vmem:[#allocation3 + $0x270] sm:$0xff] %vm2647, %v4626
        %4696 = vst.msk [vmem:[#allocation3 + $0x288] sm:$0xff] %vm2647, %v4628
        %4697 = vst.msk [vmem:[#allocation3 + $0x2a0] sm:$0xff] %vm2647, %v4630
        %4698 = vst.msk [vmem:[#allocation3 + $0x2b8] sm:$0xff] %vm2647, %v4632
        %4699 = vst.msk [vmem:[#allocation3 + $0x2d0] sm:$0xff] %vm2647, %v4634
        %4700 = vst.msk [vmem:[#allocation3 + $0x2e8] sm:$0xff] %vm2647, %v4636
        %v4701 = vld [vmem:[#allocation2 + $0x1] sm:$0xff]
        %v4702 = vld [vmem:[#allocation2 + $0x9] sm:$0xff]
        %v4703 = vld [vmem:[#allocation2 + $0x21] sm:$0xff]
        %v4704 = vld [vmem:[#allocation2 + $0x29] sm:$0xff]
        %v4705 = vld [vmem:[#allocation2 + $0x41] sm:$0xff]
        %v4706 = vld [vmem:[#allocation2 + $0x49] sm:$0xff]
        %v4707 = vld [vmem:[#allocation2 + $0x61] sm:$0xff]
        %v4708 = vld [vmem:[#allocation2 + $0x69] sm:$0xff]
        %v4709 = vld [vmem:[#allocation2 + $0x81] sm:$0xff]
        %v4710 = vld [vmem:[#allocation2 + $0x89] sm:$0xff]
        %v4711 = vld [vmem:[#allocation2 + $0xa1] sm:$0xff]
        %v4712 = vld [vmem:[#allocation2 + $0xa9] sm:$0xff]
        %v4713 = vld [vmem:[#allocation2 + $0xc1] sm:$0xff]
        %v4714 = vld [vmem:[#allocation2 + $0xc9] sm:$0xff]
        %v4715 = vld [vmem:[#allocation2 + $0xe1] sm:$0xff]
        %v4716 = vld [vmem:[#allocation2 + $0xe9] sm:$0xff]
        %v4717 = vld [vmem:[#allocation2 + $0x101] sm:$0xff]
        %v4718 = vld [vmem:[#allocation2 + $0x109] sm:$0xff]
        %v4719 = vld [vmem:[#allocation2 + $0x121] sm:$0xff]
        %v4720 = vld [vmem:[#allocation2 + $0x129] sm:$0xff]
        %v4721 = vld [vmem:[#allocation2 + $0x141] sm:$0xff]
        %v4722 = vld [vmem:[#allocation2 + $0x149] sm:$0xff]
        %v4723 = vld [vmem:[#allocation2 + $0x161] sm:$0xff]
        %v4724 = vld [vmem:[#allocation2 + $0x169] sm:$0xff]
        %v4725 = vld [vmem:[#allocation2 + $0x181] sm:$0xff]
        %v4726 = vld [vmem:[#allocation2 + $0x189] sm:$0xff]
        %v4727 = vld [vmem:[#allocation2 + $0x1a1] sm:$0xff]
        %v4728 = vld [vmem:[#allocation2 + $0x1a9] sm:$0xff]
        %v4729 = vld [vmem:[#allocation2 + $0x1c1] sm:$0xff]
        %v4730 = vld [vmem:[#allocation2 + $0x1c9] sm:$0xff]
        %v4731 = vld [vmem:[#allocation2 + $0x1e1] sm:$0xff]
        %v4732 = vld [vmem:[#allocation2 + $0x1e9] sm:$0xff]
        %4765 = vrot.lane.b32.xlu0 %v4701, 64
        %v4766 = vpop.permute.xlu0 %4765
        %4767 = vrot.lane.b32.xlu0 %v4702, 64
        %v4768 = vpop.permute.xlu0 %4767
        %4769 = vrot.lane.b32.xlu0 %v4703, 64
        %v4770 = vpop.permute.xlu0 %4769
        %4771 = vrot.lane.b32.xlu0 %v4704, 64
        %v4772 = vpop.permute.xlu0 %4771
        %4773 = vrot.lane.b32.xlu0 %v4705, 64
        %v4774 = vpop.permute.xlu0 %4773
        %4775 = vrot.lane.b32.xlu0 %v4706, 64
        %v4776 = vpop.permute.xlu0 %4775
        %4777 = vrot.lane.b32.xlu0 %v4707, 64
        %v4778 = vpop.permute.xlu0 %4777
        %4779 = vrot.lane.b32.xlu0 %v4708, 64
        %v4780 = vpop.permute.xlu0 %4779
        %4781 = vrot.lane.b32.xlu0 %v4709, 64
        %v4782 = vpop.permute.xlu0 %4781
        %4783 = vrot.lane.b32.xlu0 %v4710, 64
        %v4784 = vpop.permute.xlu0 %4783
        %4785 = vrot.lane.b32.xlu0 %v4711, 64
        %v4786 = vpop.permute.xlu0 %4785
        %4787 = vrot.lane.b32.xlu0 %v4712, 64
        %v4788 = vpop.permute.xlu0 %4787
        %4789 = vrot.lane.b32.xlu0 %v4713, 64
        %v4790 = vpop.permute.xlu0 %4789
        %4791 = vrot.lane.b32.xlu0 %v4714, 64
        %v4792 = vpop.permute.xlu0 %4791
        %4793 = vrot.lane.b32.xlu0 %v4715, 64
        %v4794 = vpop.permute.xlu0 %4793
        %4795 = vrot.lane.b32.xlu0 %v4716, 64
        %v4796 = vpop.permute.xlu0 %4795
        %4797 = vrot.lane.b32.xlu0 %v4717, 64
        %v4798 = vpop.permute.xlu0 %4797
        %4799 = vrot.lane.b32.xlu0 %v4718, 64
        %v4800 = vpop.permute.xlu0 %4799
        %4801 = vrot.lane.b32.xlu0 %v4719, 64
        %v4802 = vpop.permute.xlu0 %4801
        %4803 = vrot.lane.b32.xlu0 %v4720, 64
        %v4804 = vpop.permute.xlu0 %4803
        %4805 = vrot.lane.b32.xlu0 %v4721, 64
        %v4806 = vpop.permute.xlu0 %4805
        %4807 = vrot.lane.b32.xlu0 %v4722, 64
        %v4808 = vpop.permute.xlu0 %4807
        %4809 = vrot.lane.b32.xlu0 %v4723, 64
        %v4810 = vpop.permute.xlu0 %4809
        %4811 = vrot.lane.b32.xlu0 %v4724, 64
        %v4812 = vpop.permute.xlu0 %4811
        %4813 = vrot.lane.b32.xlu0 %v4725, 64
        %v4814 = vpop.permute.xlu0 %4813
        %4815 = vrot.lane.b32.xlu0 %v4726, 64
        %v4816 = vpop.permute.xlu0 %4815
        %4817 = vrot.lane.b32.xlu0 %v4727, 64
        %v4818 = vpop.permute.xlu0 %4817
        %4819 = vrot.lane.b32.xlu0 %v4728, 64
        %v4820 = vpop.permute.xlu0 %4819
        %4821 = vrot.lane.b32.xlu0 %v4729, 64
        %v4822 = vpop.permute.xlu0 %4821
        %4823 = vrot.lane.b32.xlu0 %v4730, 64
        %v4824 = vpop.permute.xlu0 %4823
        %4825 = vrot.lane.b32.xlu0 %v4731, 64
        %v4826 = vpop.permute.xlu0 %4825
        %4827 = vrot.lane.b32.xlu0 %v4732, 64
        %v4828 = vpop.permute.xlu0 %4827
        %4861 = vst.msk [vmem:[#allocation3] sm:$0xff] %vm2840, %v4766
        %4862 = vst.msk [vmem:[#allocation3 + $0x18] sm:$0xff] %vm2840, %v4768
        %4863 = vst.msk [vmem:[#allocation3 + $0x30] sm:$0xff] %vm2840, %v4770
        %4864 = vst.msk [vmem:[#allocation3 + $0x48] sm:$0xff] %vm2840, %v4772
        %4865 = vst.msk [vmem:[#allocation3 + $0x60] sm:$0xff] %vm2840, %v4774
        %4866 = vst.msk [vmem:[#allocation3 + $0x78] sm:$0xff] %vm2840, %v4776
        %4867 = vst.msk [vmem:[#allocation3 + $0x90] sm:$0xff] %vm2840, %v4778
        %4868 = vst.msk [vmem:[#allocation3 + $0xa8] sm:$0xff] %vm2840, %v4780
        %4869 = vst.msk [vmem:[#allocation3 + $0xc0] sm:$0xff] %vm2840, %v4782
        %4870 = vst.msk [vmem:[#allocation3 + $0xd8] sm:$0xff] %vm2840, %v4784
        %4871 = vst.msk [vmem:[#allocation3 + $0xf0] sm:$0xff] %vm2840, %v4786
        %4872 = vst.msk [vmem:[#allocation3 + $0x108] sm:$0xff] %vm2840, %v4788
        %4873 = vst.msk [vmem:[#allocation3 + $0x120] sm:$0xff] %vm2840, %v4790
        %4874 = vst.msk [vmem:[#allocation3 + $0x138] sm:$0xff] %vm2840, %v4792
        %4875 = vst.msk [vmem:[#allocation3 + $0x150] sm:$0xff] %vm2840, %v4794
        %4876 = vst.msk [vmem:[#allocation3 + $0x168] sm:$0xff] %vm2840, %v4796
        %4877 = vst.msk [vmem:[#allocation3 + $0x180] sm:$0xff] %vm2840, %v4798
        %4878 = vst.msk [vmem:[#allocation3 + $0x198] sm:$0xff] %vm2840, %v4800
        %4879 = vst.msk [vmem:[#allocation3 + $0x1b0] sm:$0xff] %vm2840, %v4802
        %4880 = vst.msk [vmem:[#allocation3 + $0x1c8] sm:$0xff] %vm2840, %v4804
        %4881 = vst.msk [vmem:[#allocation3 + $0x1e0] sm:$0xff] %vm2840, %v4806
        %4882 = vst.msk [vmem:[#allocation3 + $0x1f8] sm:$0xff] %vm2840, %v4808
        %4883 = vst.msk [vmem:[#allocation3 + $0x210] sm:$0xff] %vm2840, %v4810
        %4884 = vst.msk [vmem:[#allocation3 + $0x228] sm:$0xff] %vm2840, %v4812
        %4885 = vst.msk [vmem:[#allocation3 + $0x240] sm:$0xff] %vm2840, %v4814
        %4886 = vst.msk [vmem:[#allocation3 + $0x258] sm:$0xff] %vm2840, %v4816
        %4887 = vst.msk [vmem:[#allocation3 + $0x270] sm:$0xff] %vm2840, %v4818
        %4888 = vst.msk [vmem:[#allocation3 + $0x288] sm:$0xff] %vm2840, %v4820
        %4889 = vst.msk [vmem:[#allocation3 + $0x2a0] sm:$0xff] %vm2840, %v4822
        %4890 = vst.msk [vmem:[#allocation3 + $0x2b8] sm:$0xff] %vm2840, %v4824
        %4891 = vst.msk [vmem:[#allocation3 + $0x2d0] sm:$0xff] %vm2840, %v4826
        %4892 = vst.msk [vmem:[#allocation3 + $0x2e8] sm:$0xff] %vm2840, %v4828
        %v4893 = vld [vmem:[%s382 + $0xf] sm:$0xff]
        %v4894 = vld [vmem:[%s382 + $0x17] sm:$0xff]
        %v4895 = vld [vmem:[%s382 + $0x2f] sm:$0xff]
        %v4896 = vld [vmem:[%s382 + $0x37] sm:$0xff]
        %v4897 = vld [vmem:[%s382 + $0x4f] sm:$0xff]
        %v4898 = vld [vmem:[%s382 + $0x57] sm:$0xff]
        %v4899 = vld [vmem:[%s382 + $0x6f] sm:$0xff]
        %v4900 = vld [vmem:[%s382 + $0x77] sm:$0xff]
        %v4901 = vld [vmem:[%s382 + $0x8f] sm:$0xff]
        %v4902 = vld [vmem:[%s382 + $0x97] sm:$0xff]
        %v4903 = vld [vmem:[%s382 + $0xaf] sm:$0xff]
        %v4904 = vld [vmem:[%s382 + $0xb7] sm:$0xff]
        %v4905 = vld [vmem:[%s382 + $0xcf] sm:$0xff]
        %v4906 = vld [vmem:[%s382 + $0xd7] sm:$0xff]
        %v4907 = vld [vmem:[%s382 + $0xef] sm:$0xff]
        %v4908 = vld [vmem:[%s382 + $0xf7] sm:$0xff]
        %v4909 = vld [vmem:[%s382 + $0x10f] sm:$0xff]
        %v4910 = vld [vmem:[%s382 + $0x117] sm:$0xff]
        %v4911 = vld [vmem:[%s382 + $0x12f] sm:$0xff]
        %v4912 = vld [vmem:[%s382 + $0x137] sm:$0xff]
        %v4913 = vld [vmem:[%s382 + $0x14f] sm:$0xff]
        %v4914 = vld [vmem:[%s382 + $0x157] sm:$0xff]
        %v4915 = vld [vmem:[%s382 + $0x16f] sm:$0xff]
        %v4916 = vld [vmem:[%s382 + $0x177] sm:$0xff]
        %v4917 = vld [vmem:[%s382 + $0x18f] sm:$0xff]
        %v4918 = vld [vmem:[%s382 + $0x197] sm:$0xff]
        %v4919 = vld [vmem:[%s382 + $0x1af] sm:$0xff]
        %v4920 = vld [vmem:[%s382 + $0x1b7] sm:$0xff]
        %v4921 = vld [vmem:[%s382 + $0x1cf] sm:$0xff]
        %v4922 = vld [vmem:[%s382 + $0x1d7] sm:$0xff]
        %v4923 = vld [vmem:[%s382 + $0x1ef] sm:$0xff]
        %v4924 = vld [vmem:[%s382 + $0x1f7] sm:$0xff]
        %4957 = vrot.lane.b32.xlu0 %v4893, 96
        %v4958 = vpop.permute.xlu0 %4957
        %4959 = vrot.lane.b32.xlu0 %v4894, 96
        %v4960 = vpop.permute.xlu0 %4959
        %4961 = vrot.lane.b32.xlu0 %v4895, 96
        %v4962 = vpop.permute.xlu0 %4961
        %4963 = vrot.lane.b32.xlu0 %v4896, 96
        %v4964 = vpop.permute.xlu0 %4963
        %4965 = vrot.lane.b32.xlu0 %v4897, 96
        %v4966 = vpop.permute.xlu0 %4965
        %4967 = vrot.lane.b32.xlu0 %v4898, 96
        %v4968 = vpop.permute.xlu0 %4967
        %4969 = vrot.lane.b32.xlu0 %v4899, 96
        %v4970 = vpop.permute.xlu0 %4969
        %4971 = vrot.lane.b32.xlu0 %v4900, 96
        %v4972 = vpop.permute.xlu0 %4971
        %4973 = vrot.lane.b32.xlu0 %v4901, 96
        %v4974 = vpop.permute.xlu0 %4973
        %4975 = vrot.lane.b32.xlu0 %v4902, 96
        %v4976 = vpop.permute.xlu0 %4975
        %4977 = vrot.lane.b32.xlu0 %v4903, 96
        %v4978 = vpop.permute.xlu0 %4977
        %4979 = vrot.lane.b32.xlu0 %v4904, 96
        %v4980 = vpop.permute.xlu0 %4979
        %4981 = vrot.lane.b32.xlu0 %v4905, 96
        %v4982 = vpop.permute.xlu0 %4981
        %4983 = vrot.lane.b32.xlu0 %v4906, 96
        %v4984 = vpop.permute.xlu0 %4983
        %4985 = vrot.lane.b32.xlu0 %v4907, 96
        %v4986 = vpop.permute.xlu0 %4985
        %4987 = vrot.lane.b32.xlu0 %v4908, 96
        %v4988 = vpop.permute.xlu0 %4987
        %4989 = vrot.lane.b32.xlu0 %v4909, 96
        %v4990 = vpop.permute.xlu0 %4989
        %4991 = vrot.lane.b32.xlu0 %v4910, 96
        %v4992 = vpop.permute.xlu0 %4991
        %4993 = vrot.lane.b32.xlu0 %v4911, 96
        %v4994 = vpop.permute.xlu0 %4993
        %4995 = vrot.lane.b32.xlu0 %v4912, 96
        %v4996 = vpop.permute.xlu0 %4995
        %4997 = vrot.lane.b32.xlu0 %v4913, 96
        %v4998 = vpop.permute.xlu0 %4997
        %4999 = vrot.lane.b32.xlu0 %v4914, 96
        %v5000 = vpop.permute.xlu0 %4999
        %5001 = vrot.lane.b32.xlu0 %v4915, 96
        %v5002 = vpop.permute.xlu0 %5001
        %5003 = vrot.lane.b32.xlu0 %v4916, 96
        %v5004 = vpop.permute.xlu0 %5003
        %5005 = vrot.lane.b32.xlu0 %v4917, 96
        %v5006 = vpop.permute.xlu0 %5005
        %5007 = vrot.lane.b32.xlu0 %v4918, 96
        %v5008 = vpop.permute.xlu0 %5007
        %5009 = vrot.lane.b32.xlu0 %v4919, 96
        %v5010 = vpop.permute.xlu0 %5009
        %5011 = vrot.lane.b32.xlu0 %v4920, 96
        %v5012 = vpop.permute.xlu0 %5011
        %5013 = vrot.lane.b32.xlu0 %v4921, 96
        %v5014 = vpop.permute.xlu0 %5013
        %5015 = vrot.lane.b32.xlu0 %v4922, 96
        %v5016 = vpop.permute.xlu0 %5015
        %5017 = vrot.lane.b32.xlu0 %v4923, 96
        %v5018 = vpop.permute.xlu0 %5017
        %5019 = vrot.lane.b32.xlu0 %v4924, 96
        %v5020 = vpop.permute.xlu0 %5019
        %5053 = vst.msk [vmem:[#allocation3] sm:$0xff] %vm3033, %v4958
        %5054 = vst.msk [vmem:[#allocation3 + $0x18] sm:$0xff] %vm3033, %v4960
        %5055 = vst.msk [vmem:[#allocation3 + $0x30] sm:$0xff] %vm3033, %v4962
        %5056 = vst.msk [vmem:[#allocation3 + $0x48] sm:$0xff] %vm3033, %v4964
        %5057 = vst.msk [vmem:[#allocation3 + $0x60] sm:$0xff] %vm3033, %v4966
        %5058 = vst.msk [vmem:[#allocation3 + $0x78] sm:$0xff] %vm3033, %v4968
        %5059 = vst.msk [vmem:[#allocation3 + $0x90] sm:$0xff] %vm3033, %v4970
        %5060 = vst.msk [vmem:[#allocation3 + $0xa8] sm:$0xff] %vm3033, %v4972
        %5061 = vst.msk [vmem:[#allocation3 + $0xc0] sm:$0xff] %vm3033, %v4974
        %5062 = vst.msk [vmem:[#allocation3 + $0xd8] sm:$0xff] %vm3033, %v4976
        %5063 = vst.msk [vmem:[#allocation3 + $0xf0] sm:$0xff] %vm3033, %v4978
        %5064 = vst.msk [vmem:[#allocation3 + $0x108] sm:$0xff] %vm3033, %v4980
        %5065 = vst.msk [vmem:[#allocation3 + $0x120] sm:$0xff] %vm3033, %v4982
        %5066 = vst.msk [vmem:[#allocation3 + $0x138] sm:$0xff] %vm3033, %v4984
        %5067 = vst.msk [vmem:[#allocation3 + $0x150] sm:$0xff] %vm3033, %v4986
        %5068 = vst.msk [vmem:[#allocation3 + $0x168] sm:$0xff] %vm3033, %v4988
        %5069 = vst.msk [vmem:[#allocation3 + $0x180] sm:$0xff] %vm3033, %v4990
        %5070 = vst.msk [vmem:[#allocation3 + $0x198] sm:$0xff] %vm3033, %v4992
        %5071 = vst.msk [vmem:[#allocation3 + $0x1b0] sm:$0xff] %vm3033, %v4994
        %5072 = vst.msk [vmem:[#allocation3 + $0x1c8] sm:$0xff] %vm3033, %v4996
        %5073 = vst.msk [vmem:[#allocation3 + $0x1e0] sm:$0xff] %vm3033, %v4998
        %5074 = vst.msk [vmem:[#allocation3 + $0x1f8] sm:$0xff] %vm3033, %v5000
        %5075 = vst.msk [vmem:[#allocation3 + $0x210] sm:$0xff] %vm3033, %v5002
        %5076 = vst.msk [vmem:[#allocation3 + $0x228] sm:$0xff] %vm3033, %v5004
        %5077 = vst.msk [vmem:[#allocation3 + $0x240] sm:$0xff] %vm3033, %v5006
        %5078 = vst.msk [vmem:[#allocation3 + $0x258] sm:$0xff] %vm3033, %v5008
        %5079 = vst.msk [vmem:[#allocation3 + $0x270] sm:$0xff] %vm3033, %v5010
        %5080 = vst.msk [vmem:[#allocation3 + $0x288] sm:$0xff] %vm3033, %v5012
        %5081 = vst.msk [vmem:[#allocation3 + $0x2a0] sm:$0xff] %vm3033, %v5014
        %5082 = vst.msk [vmem:[#allocation3 + $0x2b8] sm:$0xff] %vm3033, %v5016
        %5083 = vst.msk [vmem:[#allocation3 + $0x2d0] sm:$0xff] %vm3033, %v5018
        %5084 = vst.msk [vmem:[#allocation3 + $0x2e8] sm:$0xff] %vm3033, %v5020
        %v5085 = vld [vmem:[%s382] sm:$0xff]
        %v5086 = vld [vmem:[%s382 + $0x8] sm:$0xff]
        %v5087 = vld [vmem:[%s382 + $0x20] sm:$0xff]
        %v5088 = vld [vmem:[%s382 + $0x28] sm:$0xff]
        %v5089 = vld [vmem:[%s382 + $0x40] sm:$0xff]
        %v5090 = vld [vmem:[%s382 + $0x48] sm:$0xff]
        %v5091 = vld [vmem:[%s382 + $0x60] sm:$0xff]
        %v5092 = vld [vmem:[%s382 + $0x68] sm:$0xff]
        %v5093 = vld [vmem:[%s382 + $0x80] sm:$0xff]
        %v5094 = vld [vmem:[%s382 + $0x88] sm:$0xff]
        %v5095 = vld [vmem:[%s382 + $0xa0] sm:$0xff]
        %v5096 = vld [vmem:[%s382 + $0xa8] sm:$0xff]
        %v5097 = vld [vmem:[%s382 + $0xc0] sm:$0xff]
        %v5098 = vld [vmem:[%s382 + $0xc8] sm:$0xff]
        %v5099 = vld [vmem:[%s382 + $0xe0] sm:$0xff]
        %v5100 = vld [vmem:[%s382 + $0xe8] sm:$0xff]
        %v5101 = vld [vmem:[%s382 + $0x100] sm:$0xff]
        %v5102 = vld [vmem:[%s382 + $0x108] sm:$0xff]
        %v5103 = vld [vmem:[%s382 + $0x120] sm:$0xff]
        %v5104 = vld [vmem:[%s382 + $0x128] sm:$0xff]
        %v5105 = vld [vmem:[%s382 + $0x140] sm:$0xff]
        %v5106 = vld [vmem:[%s382 + $0x148] sm:$0xff]
        %v5107 = vld [vmem:[%s382 + $0x160] sm:$0xff]
        %v5108 = vld [vmem:[%s382 + $0x168] sm:$0xff]
        %v5109 = vld [vmem:[%s382 + $0x180] sm:$0xff]
        %v5110 = vld [vmem:[%s382 + $0x188] sm:$0xff]
        %v5111 = vld [vmem:[%s382 + $0x1a0] sm:$0xff]
        %v5112 = vld [vmem:[%s382 + $0x1a8] sm:$0xff]
        %v5113 = vld [vmem:[%s382 + $0x1c0] sm:$0xff]
        %v5114 = vld [vmem:[%s382 + $0x1c8] sm:$0xff]
        %v5115 = vld [vmem:[%s382 + $0x1e0] sm:$0xff]
        %v5116 = vld [vmem:[%s382 + $0x1e8] sm:$0xff]
        %5117 = vst.msk [vmem:[#allocation3 + $0x8] sm:$0xff] %vm2350, %v5085
        %5118 = vst.msk [vmem:[#allocation3 + $0x20] sm:$0xff] %vm2350, %v5086
        %5119 = vst.msk [vmem:[#allocation3 + $0x38] sm:$0xff] %vm2350, %v5087
        %5120 = vst.msk [vmem:[#allocation3 + $0x50] sm:$0xff] %vm2350, %v5088
        %5121 = vst.msk [vmem:[#allocation3 + $0x68] sm:$0xff] %vm2350, %v5089
        %5122 = vst.msk [vmem:[#allocation3 + $0x80] sm:$0xff] %vm2350, %v5090
        %5123 = vst.msk [vmem:[#allocation3 + $0x98] sm:$0xff] %vm2350, %v5091
        %5124 = vst.msk [vmem:[#allocation3 + $0xb0] sm:$0xff] %vm2350, %v5092
        %5125 = vst.msk [vmem:[#allocation3 + $0xc8] sm:$0xff] %vm2350, %v5093
        %5126 = vst.msk [vmem:[#allocation3 + $0xe0] sm:$0xff] %vm2350, %v5094
        %5127 = vst.msk [vmem:[#allocation3 + $0xf8] sm:$0xff] %vm2350, %v5095
        %5128 = vst.msk [vmem:[#allocation3 + $0x110] sm:$0xff] %vm2350, %v5096
        %5129 = vst.msk [vmem:[#allocation3 + $0x128] sm:$0xff] %vm2350, %v5097
        %5130 = vst.msk [vmem:[#allocation3 + $0x140] sm:$0xff] %vm2350, %v5098
        %5131 = vst.msk [vmem:[#allocation3 + $0x158] sm:$0xff] %vm2350, %v5099
        %5132 = vst.msk [vmem:[#allocation3 + $0x170] sm:$0xff] %vm2350, %v5100
        %5133 = vst.msk [vmem:[#allocation3 + $0x188] sm:$0xff] %vm2350, %v5101
        %5134 = vst.msk [vmem:[#allocation3 + $0x1a0] sm:$0xff] %vm2350, %v5102
        %5135 = vst.msk [vmem:[#allocation3 + $0x1b8] sm:$0xff] %vm2350, %v5103
        %5136 = vst.msk [vmem:[#allocation3 + $0x1d0] sm:$0xff] %vm2350, %v5104
        %5137 = vst.msk [vmem:[#allocation3 + $0x1e8] sm:$0xff] %vm2350, %v5105
        %5138 = vst.msk [vmem:[#allocation3 + $0x200] sm:$0xff] %vm2350, %v5106
        %5139 = vst.msk [vmem:[#allocation3 + $0x218] sm:$0xff] %vm2350, %v5107
        %5140 = vst.msk [vmem:[#allocation3 + $0x230] sm:$0xff] %vm2350, %v5108
        %5141 = vst.msk [vmem:[#allocation3 + $0x248] sm:$0xff] %vm2350, %v5109
        %5142 = vst.msk [vmem:[#allocation3 + $0x260] sm:$0xff] %vm2350, %v5110
        %5143 = vst.msk [vmem:[#allocation3 + $0x278] sm:$0xff] %vm2350, %v5111
        %5144 = vst.msk [vmem:[#allocation3 + $0x290] sm:$0xff] %vm2350, %v5112
        %5145 = vst.msk [vmem:[#allocation3 + $0x2a8] sm:$0xff] %vm2350, %v5113
        %5146 = vst.msk [vmem:[#allocation3 + $0x2c0] sm:$0xff] %vm2350, %v5114
        %5147 = vst.msk [vmem:[#allocation3 + $0x2d8] sm:$0xff] %vm2350, %v5115
        %5148 = vst.msk [vmem:[#allocation3 + $0x2f0] sm:$0xff] %vm2350, %v5116
        %v5149 = vld [vmem:[%s382 + $0x1] sm:$0xff]
        %v5150 = vld [vmem:[%s382 + $0x9] sm:$0xff]
        %v5151 = vld [vmem:[%s382 + $0x21] sm:$0xff]
        %v5152 = vld [vmem:[%s382 + $0x29] sm:$0xff]
        %v5153 = vld [vmem:[%s382 + $0x41] sm:$0xff]
        %v5154 = vld [vmem:[%s382 + $0x49] sm:$0xff]
        %v5155 = vld [vmem:[%s382 + $0x61] sm:$0xff]
        %v5156 = vld [vmem:[%s382 + $0x69] sm:$0xff]
        %v5157 = vld [vmem:[%s382 + $0x81] sm:$0xff]
        %v5158 = vld [vmem:[%s382 + $0x89] sm:$0xff]
        %v5159 = vld [vmem:[%s382 + $0xa1] sm:$0xff]
        %v5160 = vld [vmem:[%s382 + $0xa9] sm:$0xff]
        %v5161 = vld [vmem:[%s382 + $0xc1] sm:$0xff]
        %v5162 = vld [vmem:[%s382 + $0xc9] sm:$0xff]
        %v5163 = vld [vmem:[%s382 + $0xe1] sm:$0xff]
        %v5164 = vld [vmem:[%s382 + $0xe9] sm:$0xff]
        %v5165 = vld [vmem:[%s382 + $0x101] sm:$0xff]
        %v5166 = vld [vmem:[%s382 + $0x109] sm:$0xff]
        %v5167 = vld [vmem:[%s382 + $0x121] sm:$0xff]
        %v5168 = vld [vmem:[%s382 + $0x129] sm:$0xff]
        %v5169 = vld [vmem:[%s382 + $0x141] sm:$0xff]
        %v5170 = vld [vmem:[%s382 + $0x149] sm:$0xff]
        %v5171 = vld [vmem:[%s382 + $0x161] sm:$0xff]
        %v5172 = vld [vmem:[%s382 + $0x169] sm:$0xff]
        %v5173 = vld [vmem:[%s382 + $0x181] sm:$0xff]
        %v5174 = vld [vmem:[%s382 + $0x189] sm:$0xff]
        %v5175 = vld [vmem:[%s382 + $0x1a1] sm:$0xff]
        %v5176 = vld [vmem:[%s382 + $0x1a9] sm:$0xff]
        %v5177 = vld [vmem:[%s382 + $0x1c1] sm:$0xff]
        %v5178 = vld [vmem:[%s382 + $0x1c9] sm:$0xff]
        %v5179 = vld [vmem:[%s382 + $0x1e1] sm:$0xff]
        %v5180 = vld [vmem:[%s382 + $0x1e9] sm:$0xff]
        %5213 = vrot.lane.b32.xlu0 %v5149, 32
        %v5214 = vpop.permute.xlu0 %5213
        %5215 = vrot.lane.b32.xlu0 %v5150, 32
        %v5216 = vpop.permute.xlu0 %5215
        %5217 = vrot.lane.b32.xlu0 %v5151, 32
        %v5218 = vpop.permute.xlu0 %5217
        %5219 = vrot.lane.b32.xlu0 %v5152, 32
        %v5220 = vpop.permute.xlu0 %5219
        %5221 = vrot.lane.b32.xlu0 %v5153, 32
        %v5222 = vpop.permute.xlu0 %5221
        %5223 = vrot.lane.b32.xlu0 %v5154, 32
        %v5224 = vpop.permute.xlu0 %5223
        %5225 = vrot.lane.b32.xlu0 %v5155, 32
        %v5226 = vpop.permute.xlu0 %5225
        %5227 = vrot.lane.b32.xlu0 %v5156, 32
        %v5228 = vpop.permute.xlu0 %5227
        %5229 = vrot.lane.b32.xlu0 %v5157, 32
        %v5230 = vpop.permute.xlu0 %5229
        %5231 = vrot.lane.b32.xlu0 %v5158, 32
        %v5232 = vpop.permute.xlu0 %5231
        %5233 = vrot.lane.b32.xlu0 %v5159, 32
        %v5234 = vpop.permute.xlu0 %5233
        %5235 = vrot.lane.b32.xlu0 %v5160, 32
        %v5236 = vpop.permute.xlu0 %5235
        %5237 = vrot.lane.b32.xlu0 %v5161, 32
        %v5238 = vpop.permute.xlu0 %5237
        %5239 = vrot.lane.b32.xlu0 %v5162, 32
        %v5240 = vpop.permute.xlu0 %5239
        %5241 = vrot.lane.b32.xlu0 %v5163, 32
        %v5242 = vpop.permute.xlu0 %5241
        %5243 = vrot.lane.b32.xlu0 %v5164, 32
        %v5244 = vpop.permute.xlu0 %5243
        %5245 = vrot.lane.b32.xlu0 %v5165, 32
        %v5246 = vpop.permute.xlu0 %5245
        %5247 = vrot.lane.b32.xlu0 %v5166, 32
        %v5248 = vpop.permute.xlu0 %5247
        %5249 = vrot.lane.b32.xlu0 %v5167, 32
        %v5250 = vpop.permute.xlu0 %5249
        %5251 = vrot.lane.b32.xlu0 %v5168, 32
        %v5252 = vpop.permute.xlu0 %5251
        %5253 = vrot.lane.b32.xlu0 %v5169, 32
        %v5254 = vpop.permute.xlu0 %5253
        %5255 = vrot.lane.b32.xlu0 %v5170, 32
        %v5256 = vpop.permute.xlu0 %5255
        %5257 = vrot.lane.b32.xlu0 %v5171, 32
        %v5258 = vpop.permute.xlu0 %5257
        %5259 = vrot.lane.b32.xlu0 %v5172, 32
        %v5260 = vpop.permute.xlu0 %5259
        %5261 = vrot.lane.b32.xlu0 %v5173, 32
        %v5262 = vpop.permute.xlu0 %5261
        %5263 = vrot.lane.b32.xlu0 %v5174, 32
        %v5264 = vpop.permute.xlu0 %5263
        %5265 = vrot.lane.b32.xlu0 %v5175, 32
        %v5266 = vpop.permute.xlu0 %5265
        %5267 = vrot.lane.b32.xlu0 %v5176, 32
        %v5268 = vpop.permute.xlu0 %5267
        %5269 = vrot.lane.b32.xlu0 %v5177, 32
        %v5270 = vpop.permute.xlu0 %5269
        %5271 = vrot.lane.b32.xlu0 %v5178, 32
        %v5272 = vpop.permute.xlu0 %5271
        %5273 = vrot.lane.b32.xlu0 %v5179, 32
        %v5274 = vpop.permute.xlu0 %5273
        %5275 = vrot.lane.b32.xlu0 %v5180, 32
        %v5276 = vpop.permute.xlu0 %5275
        %5309 = vst.msk [vmem:[#allocation3 + $0x8] sm:$0xff] %vm2647, %v5214
        %5310 = vst.msk [vmem:[#allocation3 + $0x20] sm:$0xff] %vm2647, %v5216
        %5311 = vst.msk [vmem:[#allocation3 + $0x38] sm:$0xff] %vm2647, %v5218
        %5312 = vst.msk [vmem:[#allocation3 + $0x50] sm:$0xff] %vm2647, %v5220
        %5313 = vst.msk [vmem:[#allocation3 + $0x68] sm:$0xff] %vm2647, %v5222
        %5314 = vst.msk [vmem:[#allocation3 + $0x80] sm:$0xff] %vm2647, %v5224
        %5315 = vst.msk [vmem:[#allocation3 + $0x98] sm:$0xff] %vm2647, %v5226
        %5316 = vst.msk [vmem:[#allocation3 + $0xb0] sm:$0xff] %vm2647, %v5228
        %5317 = vst.msk [vmem:[#allocation3 + $0xc8] sm:$0xff] %vm2647, %v5230
        %5318 = vst.msk [vmem:[#allocation3 + $0xe0] sm:$0xff] %vm2647, %v5232
        %5319 = vst.msk [vmem:[#allocation3 + $0xf8] sm:$0xff] %vm2647, %v5234
        %5320 = vst.msk [vmem:[#allocation3 + $0x110] sm:$0xff] %vm2647, %v5236
        %5321 = vst.msk [vmem:[#allocation3 + $0x128] sm:$0xff] %vm2647, %v5238
        %5322 = vst.msk [vmem:[#allocation3 + $0x140] sm:$0xff] %vm2647, %v5240
        %5323 = vst.msk [vmem:[#allocation3 + $0x158] sm:$0xff] %vm2647, %v5242
        %5324 = vst.msk [vmem:[#allocation3 + $0x170] sm:$0xff] %vm2647, %v5244
        %5325 = vst.msk [vmem:[#allocation3 + $0x188] sm:$0xff] %vm2647, %v5246
        %5326 = vst.msk [vmem:[#allocation3 + $0x1a0] sm:$0xff] %vm2647, %v5248
        %5327 = vst.msk [vmem:[#allocation3 + $0x1b8] sm:$0xff] %vm2647, %v5250
        %5328 = vst.msk [vmem:[#allocation3 + $0x1d0] sm:$0xff] %vm2647, %v5252
        %5329 = vst.msk [vmem:[#allocation3 + $0x1e8] sm:$0xff] %vm2647, %v5254
        %5330 = vst.msk [vmem:[#allocation3 + $0x200] sm:$0xff] %vm2647, %v5256
        %5331 = vst.msk [vmem:[#allocation3 + $0x218] sm:$0xff] %vm2647, %v5258
        %5332 = vst.msk [vmem:[#allocation3 + $0x230] sm:$0xff] %vm2647, %v5260
        %5333 = vst.msk [vmem:[#allocation3 + $0x248] sm:$0xff] %vm2647, %v5262
        %5334 = vst.msk [vmem:[#allocation3 + $0x260] sm:$0xff] %vm2647, %v5264
        %5335 = vst.msk [vmem:[#allocation3 + $0x278] sm:$0xff] %vm2647, %v5266
        %5336 = vst.msk [vmem:[#allocation3 + $0x290] sm:$0xff] %vm2647, %v5268
        %5337 = vst.msk [vmem:[#allocation3 + $0x2a8] sm:$0xff] %vm2647, %v5270
        %5338 = vst.msk [vmem:[#allocation3 + $0x2c0] sm:$0xff] %vm2647, %v5272
        %5339 = vst.msk [vmem:[#allocation3 + $0x2d8] sm:$0xff] %vm2647, %v5274
        %5340 = vst.msk [vmem:[#allocation3 + $0x2f0] sm:$0xff] %vm2647, %v5276
        %v5341 = vld [vmem:[%s1486 + $0xf] sm:$0xff]
        %v5342 = vld [vmem:[%s1486 + $0x17] sm:$0xff]
        %v5343 = vld [vmem:[%s1486 + $0x2f] sm:$0xff]
        %v5344 = vld [vmem:[%s1486 + $0x37] sm:$0xff]
        %v5345 = vld [vmem:[%s1486 + $0x4f] sm:$0xff]
        %v5346 = vld [vmem:[%s1486 + $0x57] sm:$0xff]
        %v5347 = vld [vmem:[%s1486 + $0x6f] sm:$0xff]
        %v5348 = vld [vmem:[%s1486 + $0x77] sm:$0xff]
        %v5349 = vld [vmem:[%s1486 + $0x8f] sm:$0xff]
        %v5350 = vld [vmem:[%s1486 + $0x97] sm:$0xff]
        %v5351 = vld [vmem:[%s1486 + $0xaf] sm:$0xff]
        %v5352 = vld [vmem:[%s1486 + $0xb7] sm:$0xff]
        %v5353 = vld [vmem:[%s1486 + $0xcf] sm:$0xff]
        %v5354 = vld [vmem:[%s1486 + $0xd7] sm:$0xff]
        %v5355 = vld [vmem:[%s1486 + $0xef] sm:$0xff]
        %v5356 = vld [vmem:[%s1486 + $0xf7] sm:$0xff]
        %v5357 = vld [vmem:[%s1486 + $0x10f] sm:$0xff]
        %v5358 = vld [vmem:[%s1486 + $0x117] sm:$0xff]
        %v5359 = vld [vmem:[%s1486 + $0x12f] sm:$0xff]
        %v5360 = vld [vmem:[%s1486 + $0x137] sm:$0xff]
        %v5361 = vld [vmem:[%s1486 + $0x14f] sm:$0xff]
        %v5362 = vld [vmem:[%s1486 + $0x157] sm:$0xff]
        %v5363 = vld [vmem:[%s1486 + $0x16f] sm:$0xff]
        %v5364 = vld [vmem:[%s1486 + $0x177] sm:$0xff]
        %v5365 = vld [vmem:[%s1486 + $0x18f] sm:$0xff]
        %v5366 = vld [vmem:[%s1486 + $0x197] sm:$0xff]
        %v5367 = vld [vmem:[%s1486 + $0x1af] sm:$0xff]
        %v5368 = vld [vmem:[%s1486 + $0x1b7] sm:$0xff]
        %v5369 = vld [vmem:[%s1486 + $0x1cf] sm:$0xff]
        %v5370 = vld [vmem:[%s1486 + $0x1d7] sm:$0xff]
        %v5371 = vld [vmem:[%s1486 + $0x1ef] sm:$0xff]
        %v5372 = vld [vmem:[%s1486 + $0x1f7] sm:$0xff]
        %5405 = vrot.lane.b32.xlu0 %v5341, 64
        %v5406 = vpop.permute.xlu0 %5405
        %5407 = vrot.lane.b32.xlu0 %v5342, 64
        %v5408 = vpop.permute.xlu0 %5407
        %5409 = vrot.lane.b32.xlu0 %v5343, 64
        %v5410 = vpop.permute.xlu0 %5409
        %5411 = vrot.lane.b32.xlu0 %v5344, 64
        %v5412 = vpop.permute.xlu0 %5411
        %5413 = vrot.lane.b32.xlu0 %v5345, 64
        %v5414 = vpop.permute.xlu0 %5413
        %5415 = vrot.lane.b32.xlu0 %v5346, 64
        %v5416 = vpop.permute.xlu0 %5415
        %5417 = vrot.lane.b32.xlu0 %v5347, 64
        %v5418 = vpop.permute.xlu0 %5417
        %5419 = vrot.lane.b32.xlu0 %v5348, 64
        %v5420 = vpop.permute.xlu0 %5419
        %5421 = vrot.lane.b32.xlu0 %v5349, 64
        %v5422 = vpop.permute.xlu0 %5421
        %5423 = vrot.lane.b32.xlu0 %v5350, 64
        %v5424 = vpop.permute.xlu0 %5423
        %5425 = vrot.lane.b32.xlu0 %v5351, 64
        %v5426 = vpop.permute.xlu0 %5425
        %5427 = vrot.lane.b32.xlu0 %v5352, 64
        %v5428 = vpop.permute.xlu0 %5427
        %5429 = vrot.lane.b32.xlu0 %v5353, 64
        %v5430 = vpop.permute.xlu0 %5429
        %5431 = vrot.lane.b32.xlu0 %v5354, 64
        %v5432 = vpop.permute.xlu0 %5431
        %5433 = vrot.lane.b32.xlu0 %v5355, 64
        %v5434 = vpop.permute.xlu0 %5433
        %5435 = vrot.lane.b32.xlu0 %v5356, 64
        %v5436 = vpop.permute.xlu0 %5435
        %5437 = vrot.lane.b32.xlu0 %v5357, 64
        %v5438 = vpop.permute.xlu0 %5437
        %5439 = vrot.lane.b32.xlu0 %v5358, 64
        %v5440 = vpop.permute.xlu0 %5439
        %5441 = vrot.lane.b32.xlu0 %v5359, 64
        %v5442 = vpop.permute.xlu0 %5441
        %5443 = vrot.lane.b32.xlu0 %v5360, 64
        %v5444 = vpop.permute.xlu0 %5443
        %5445 = vrot.lane.b32.xlu0 %v5361, 64
        %v5446 = vpop.permute.xlu0 %5445
        %5447 = vrot.lane.b32.xlu0 %v5362, 64
        %v5448 = vpop.permute.xlu0 %5447
        %5449 = vrot.lane.b32.xlu0 %v5363, 64
        %v5450 = vpop.permute.xlu0 %5449
        %5451 = vrot.lane.b32.xlu0 %v5364, 64
        %v5452 = vpop.permute.xlu0 %5451
        %5453 = vrot.lane.b32.xlu0 %v5365, 64
        %v5454 = vpop.permute.xlu0 %5453
        %5455 = vrot.lane.b32.xlu0 %v5366, 64
        %v5456 = vpop.permute.xlu0 %5455
        %5457 = vrot.lane.b32.xlu0 %v5367, 64
        %v5458 = vpop.permute.xlu0 %5457
        %5459 = vrot.lane.b32.xlu0 %v5368, 64
        %v5460 = vpop.permute.xlu0 %5459
        %5461 = vrot.lane.b32.xlu0 %v5369, 64
        %v5462 = vpop.permute.xlu0 %5461
        %5463 = vrot.lane.b32.xlu0 %v5370, 64
        %v5464 = vpop.permute.xlu0 %5463
        %5465 = vrot.lane.b32.xlu0 %v5371, 64
        %v5466 = vpop.permute.xlu0 %5465
        %5467 = vrot.lane.b32.xlu0 %v5372, 64
        %v5468 = vpop.permute.xlu0 %5467
        %5501 = vst.msk [vmem:[#allocation3 + $0x8] sm:$0xff] %vm2840, %v5406
        %5502 = vst.msk [vmem:[#allocation3 + $0x20] sm:$0xff] %vm2840, %v5408
        %5503 = vst.msk [vmem:[#allocation3 + $0x38] sm:$0xff] %vm2840, %v5410
        %5504 = vst.msk [vmem:[#allocation3 + $0x50] sm:$0xff] %vm2840, %v5412
        %5505 = vst.msk [vmem:[#allocation3 + $0x68] sm:$0xff] %vm2840, %v5414
        %5506 = vst.msk [vmem:[#allocation3 + $0x80] sm:$0xff] %vm2840, %v5416
        %5507 = vst.msk [vmem:[#allocation3 + $0x98] sm:$0xff] %vm2840, %v5418
        %5508 = vst.msk [vmem:[#allocation3 + $0xb0] sm:$0xff] %vm2840, %v5420
        %5509 = vst.msk [vmem:[#allocation3 + $0xc8] sm:$0xff] %vm2840, %v5422
        %5510 = vst.msk [vmem:[#allocation3 + $0xe0] sm:$0xff] %vm2840, %v5424
        %5511 = vst.msk [vmem:[#allocation3 + $0xf8] sm:$0xff] %vm2840, %v5426
        %5512 = vst.msk [vmem:[#allocation3 + $0x110] sm:$0xff] %vm2840, %v5428
        %5513 = vst.msk [vmem:[#allocation3 + $0x128] sm:$0xff] %vm2840, %v5430
        %5514 = vst.msk [vmem:[#allocation3 + $0x140] sm:$0xff] %vm2840, %v5432
        %5515 = vst.msk [vmem:[#allocation3 + $0x158] sm:$0xff] %vm2840, %v5434
        %5516 = vst.msk [vmem:[#allocation3 + $0x170] sm:$0xff] %vm2840, %v5436
        %5517 = vst.msk [vmem:[#allocation3 + $0x188] sm:$0xff] %vm2840, %v5438
        %5518 = vst.msk [vmem:[#allocation3 + $0x1a0] sm:$0xff] %vm2840, %v5440
        %5519 = vst.msk [vmem:[#allocation3 + $0x1b8] sm:$0xff] %vm2840, %v5442
        %5520 = vst.msk [vmem:[#allocation3 + $0x1d0] sm:$0xff] %vm2840, %v5444
        %5521 = vst.msk [vmem:[#allocation3 + $0x1e8] sm:$0xff] %vm2840, %v5446
        %5522 = vst.msk [vmem:[#allocation3 + $0x200] sm:$0xff] %vm2840, %v5448
        %5523 = vst.msk [vmem:[#allocation3 + $0x218] sm:$0xff] %vm2840, %v5450
        %5524 = vst.msk [vmem:[#allocation3 + $0x230] sm:$0xff] %vm2840, %v5452
        %5525 = vst.msk [vmem:[#allocation3 + $0x248] sm:$0xff] %vm2840, %v5454
        %5526 = vst.msk [vmem:[#allocation3 + $0x260] sm:$0xff] %vm2840, %v5456
        %5527 = vst.msk [vmem:[#allocation3 + $0x278] sm:$0xff] %vm2840, %v5458
        %5528 = vst.msk [vmem:[#allocation3 + $0x290] sm:$0xff] %vm2840, %v5460
        %5529 = vst.msk [vmem:[#allocation3 + $0x2a8] sm:$0xff] %vm2840, %v5462
        %5530 = vst.msk [vmem:[#allocation3 + $0x2c0] sm:$0xff] %vm2840, %v5464
        %5531 = vst.msk [vmem:[#allocation3 + $0x2d8] sm:$0xff] %vm2840, %v5466
        %5532 = vst.msk [vmem:[#allocation3 + $0x2f0] sm:$0xff] %vm2840, %v5468
        %v5533 = vld [vmem:[%s1486] sm:$0xff]
        %v5534 = vld [vmem:[%s1486 + $0x8] sm:$0xff]
        %v5535 = vld [vmem:[%s1486 + $0x20] sm:$0xff]
        %v5536 = vld [vmem:[%s1486 + $0x28] sm:$0xff]
        %v5537 = vld [vmem:[%s1486 + $0x40] sm:$0xff]
        %v5538 = vld [vmem:[%s1486 + $0x48] sm:$0xff]
        %v5539 = vld [vmem:[%s1486 + $0x60] sm:$0xff]
        %v5540 = vld [vmem:[%s1486 + $0x68] sm:$0xff]
        %v5541 = vld [vmem:[%s1486 + $0x80] sm:$0xff]
        %v5542 = vld [vmem:[%s1486 + $0x88] sm:$0xff]
        %v5543 = vld [vmem:[%s1486 + $0xa0] sm:$0xff]
        %v5544 = vld [vmem:[%s1486 + $0xa8] sm:$0xff]
        %v5545 = vld [vmem:[%s1486 + $0xc0] sm:$0xff]
        %v5546 = vld [vmem:[%s1486 + $0xc8] sm:$0xff]
        %v5547 = vld [vmem:[%s1486 + $0xe0] sm:$0xff]
        %v5548 = vld [vmem:[%s1486 + $0xe8] sm:$0xff]
        %v5549 = vld [vmem:[%s1486 + $0x100] sm:$0xff]
        %v5550 = vld [vmem:[%s1486 + $0x108] sm:$0xff]
        %v5551 = vld [vmem:[%s1486 + $0x120] sm:$0xff]
        %v5552 = vld [vmem:[%s1486 + $0x128] sm:$0xff]
        %v5553 = vld [vmem:[%s1486 + $0x140] sm:$0xff]
        %v5554 = vld [vmem:[%s1486 + $0x148] sm:$0xff]
        %v5555 = vld [vmem:[%s1486 + $0x160] sm:$0xff]
        %v5556 = vld [vmem:[%s1486 + $0x168] sm:$0xff]
        %v5557 = vld [vmem:[%s1486 + $0x180] sm:$0xff]
        %v5558 = vld [vmem:[%s1486 + $0x188] sm:$0xff]
        %v5559 = vld [vmem:[%s1486 + $0x1a0] sm:$0xff]
        %v5560 = vld [vmem:[%s1486 + $0x1a8] sm:$0xff]
        %v5561 = vld [vmem:[%s1486 + $0x1c0] sm:$0xff]
        %v5562 = vld [vmem:[%s1486 + $0x1c8] sm:$0xff]
        %v5563 = vld [vmem:[%s1486 + $0x1e0] sm:$0xff]
        %v5564 = vld [vmem:[%s1486 + $0x1e8] sm:$0xff]
        %5597 = vrot.lane.b32.xlu0 %v5533, 96
        %v5598 = vpop.permute.xlu0 %5597
        %5599 = vrot.lane.b32.xlu0 %v5534, 96
        %v5600 = vpop.permute.xlu0 %5599
        %5601 = vrot.lane.b32.xlu0 %v5535, 96
        %v5602 = vpop.permute.xlu0 %5601
        %5603 = vrot.lane.b32.xlu0 %v5536, 96
        %v5604 = vpop.permute.xlu0 %5603
        %5605 = vrot.lane.b32.xlu0 %v5537, 96
        %v5606 = vpop.permute.xlu0 %5605
        %5607 = vrot.lane.b32.xlu0 %v5538, 96
        %v5608 = vpop.permute.xlu0 %5607
        %5609 = vrot.lane.b32.xlu0 %v5539, 96
        %v5610 = vpop.permute.xlu0 %5609
        %5611 = vrot.lane.b32.xlu0 %v5540, 96
        %v5612 = vpop.permute.xlu0 %5611
        %5613 = vrot.lane.b32.xlu0 %v5541, 96
        %v5614 = vpop.permute.xlu0 %5613
        %5615 = vrot.lane.b32.xlu0 %v5542, 96
        %v5616 = vpop.permute.xlu0 %5615
        %5617 = vrot.lane.b32.xlu0 %v5543, 96
        %v5618 = vpop.permute.xlu0 %5617
        %5619 = vrot.lane.b32.xlu0 %v5544, 96
        %v5620 = vpop.permute.xlu0 %5619
        %5621 = vrot.lane.b32.xlu0 %v5545, 96
        %v5622 = vpop.permute.xlu0 %5621
        %5623 = vrot.lane.b32.xlu0 %v5546, 96
        %v5624 = vpop.permute.xlu0 %5623
        %5625 = vrot.lane.b32.xlu0 %v5547, 96
        %v5626 = vpop.permute.xlu0 %5625
        %5627 = vrot.lane.b32.xlu0 %v5548, 96
        %v5628 = vpop.permute.xlu0 %5627
        %5629 = vrot.lane.b32.xlu0 %v5549, 96
        %v5630 = vpop.permute.xlu0 %5629
        %5631 = vrot.lane.b32.xlu0 %v5550, 96
        %v5632 = vpop.permute.xlu0 %5631
        %5633 = vrot.lane.b32.xlu0 %v5551, 96
        %v5634 = vpop.permute.xlu0 %5633
        %5635 = vrot.lane.b32.xlu0 %v5552, 96
        %v5636 = vpop.permute.xlu0 %5635
        %5637 = vrot.lane.b32.xlu0 %v5553, 96
        %v5638 = vpop.permute.xlu0 %5637
        %5639 = vrot.lane.b32.xlu0 %v5554, 96
        %v5640 = vpop.permute.xlu0 %5639
        %5641 = vrot.lane.b32.xlu0 %v5555, 96
        %v5642 = vpop.permute.xlu0 %5641
        %5643 = vrot.lane.b32.xlu0 %v5556, 96
        %v5644 = vpop.permute.xlu0 %5643
        %5645 = vrot.lane.b32.xlu0 %v5557, 96
        %v5646 = vpop.permute.xlu0 %5645
        %5647 = vrot.lane.b32.xlu0 %v5558, 96
        %v5648 = vpop.permute.xlu0 %5647
        %5649 = vrot.lane.b32.xlu0 %v5559, 96
        %v5650 = vpop.permute.xlu0 %5649
        %5651 = vrot.lane.b32.xlu0 %v5560, 96
        %v5652 = vpop.permute.xlu0 %5651
        %5653 = vrot.lane.b32.xlu0 %v5561, 96
        %v5654 = vpop.permute.xlu0 %5653
        %5655 = vrot.lane.b32.xlu0 %v5562, 96
        %v5656 = vpop.permute.xlu0 %5655
        %5657 = vrot.lane.b32.xlu0 %v5563, 96
        %v5658 = vpop.permute.xlu0 %5657
        %5659 = vrot.lane.b32.xlu0 %v5564, 96
        %v5660 = vpop.permute.xlu0 %5659
        %5693 = vst.msk [vmem:[#allocation3 + $0x8] sm:$0xff] %vm3033, %v5598
        %5694 = vst.msk [vmem:[#allocation3 + $0x20] sm:$0xff] %vm3033, %v5600
        %5695 = vst.msk [vmem:[#allocation3 + $0x38] sm:$0xff] %vm3033, %v5602
        %5696 = vst.msk [vmem:[#allocation3 + $0x50] sm:$0xff] %vm3033, %v5604
        %5697 = vst.msk [vmem:[#allocation3 + $0x68] sm:$0xff] %vm3033, %v5606
        %5698 = vst.msk [vmem:[#allocation3 + $0x80] sm:$0xff] %vm3033, %v5608
        %5699 = vst.msk [vmem:[#allocation3 + $0x98] sm:$0xff] %vm3033, %v5610
        %5700 = vst.msk [vmem:[#allocation3 + $0xb0] sm:$0xff] %vm3033, %v5612
        %5701 = vst.msk [vmem:[#allocation3 + $0xc8] sm:$0xff] %vm3033, %v5614
        %5702 = vst.msk [vmem:[#allocation3 + $0xe0] sm:$0xff] %vm3033, %v5616
        %5703 = vst.msk [vmem:[#allocation3 + $0xf8] sm:$0xff] %vm3033, %v5618
        %5704 = vst.msk [vmem:[#allocation3 + $0x110] sm:$0xff] %vm3033, %v5620
        %5705 = vst.msk [vmem:[#allocation3 + $0x128] sm:$0xff] %vm3033, %v5622
        %5706 = vst.msk [vmem:[#allocation3 + $0x140] sm:$0xff] %vm3033, %v5624
        %5707 = vst.msk [vmem:[#allocation3 + $0x158] sm:$0xff] %vm3033, %v5626
        %5708 = vst.msk [vmem:[#allocation3 + $0x170] sm:$0xff] %vm3033, %v5628
        %5709 = vst.msk [vmem:[#allocation3 + $0x188] sm:$0xff] %vm3033, %v5630
        %5710 = vst.msk [vmem:[#allocation3 + $0x1a0] sm:$0xff] %vm3033, %v5632
        %5711 = vst.msk [vmem:[#allocation3 + $0x1b8] sm:$0xff] %vm3033, %v5634
        %5712 = vst.msk [vmem:[#allocation3 + $0x1d0] sm:$0xff] %vm3033, %v5636
        %5713 = vst.msk [vmem:[#allocation3 + $0x1e8] sm:$0xff] %vm3033, %v5638
        %5714 = vst.msk [vmem:[#allocation3 + $0x200] sm:$0xff] %vm3033, %v5640
        %5715 = vst.msk [vmem:[#allocation3 + $0x218] sm:$0xff] %vm3033, %v5642
        %5716 = vst.msk [vmem:[#allocation3 + $0x230] sm:$0xff] %vm3033, %v5644
        %5717 = vst.msk [vmem:[#allocation3 + $0x248] sm:$0xff] %vm3033, %v5646
        %5718 = vst.msk [vmem:[#allocation3 + $0x260] sm:$0xff] %vm3033, %v5648
        %5719 = vst.msk [vmem:[#allocation3 + $0x278] sm:$0xff] %vm3033, %v5650
        %5720 = vst.msk [vmem:[#allocation3 + $0x290] sm:$0xff] %vm3033, %v5652
        %5721 = vst.msk [vmem:[#allocation3 + $0x2a8] sm:$0xff] %vm3033, %v5654
        %5722 = vst.msk [vmem:[#allocation3 + $0x2c0] sm:$0xff] %vm3033, %v5656
        %5723 = vst.msk [vmem:[#allocation3 + $0x2d8] sm:$0xff] %vm3033, %v5658
        %5724 = vst.msk [vmem:[#allocation3 + $0x2f0] sm:$0xff] %vm3033, %v5660
        %v5725 = vld [vmem:[%s1486 + $0x1] sm:$0xff]
        %v5726 = vld [vmem:[%s1486 + $0x9] sm:$0xff]
        %v5727 = vld [vmem:[%s1486 + $0x21] sm:$0xff]
        %v5728 = vld [vmem:[%s1486 + $0x29] sm:$0xff]
        %v5729 = vld [vmem:[%s1486 + $0x41] sm:$0xff]
        %v5730 = vld [vmem:[%s1486 + $0x49] sm:$0xff]
        %v5731 = vld [vmem:[%s1486 + $0x61] sm:$0xff]
        %v5732 = vld [vmem:[%s1486 + $0x69] sm:$0xff]
        %v5733 = vld [vmem:[%s1486 + $0x81] sm:$0xff]
        %v5734 = vld [vmem:[%s1486 + $0x89] sm:$0xff]
        %v5735 = vld [vmem:[%s1486 + $0xa1] sm:$0xff]
        %v5736 = vld [vmem:[%s1486 + $0xa9] sm:$0xff]
        %v5737 = vld [vmem:[%s1486 + $0xc1] sm:$0xff]
        %v5738 = vld [vmem:[%s1486 + $0xc9] sm:$0xff]
        %v5739 = vld [vmem:[%s1486 + $0xe1] sm:$0xff]
        %v5740 = vld [vmem:[%s1486 + $0xe9] sm:$0xff]
        %v5741 = vld [vmem:[%s1486 + $0x101] sm:$0xff]
        %v5742 = vld [vmem:[%s1486 + $0x109] sm:$0xff]
        %v5743 = vld [vmem:[%s1486 + $0x121] sm:$0xff]
        %v5744 = vld [vmem:[%s1486 + $0x129] sm:$0xff]
        %v5745 = vld [vmem:[%s1486 + $0x141] sm:$0xff]
        %v5746 = vld [vmem:[%s1486 + $0x149] sm:$0xff]
        %v5747 = vld [vmem:[%s1486 + $0x161] sm:$0xff]
        %v5748 = vld [vmem:[%s1486 + $0x169] sm:$0xff]
        %v5749 = vld [vmem:[%s1486 + $0x181] sm:$0xff]
        %v5750 = vld [vmem:[%s1486 + $0x189] sm:$0xff]
        %v5751 = vld [vmem:[%s1486 + $0x1a1] sm:$0xff]
        %v5752 = vld [vmem:[%s1486 + $0x1a9] sm:$0xff]
        %v5753 = vld [vmem:[%s1486 + $0x1c1] sm:$0xff]
        %v5754 = vld [vmem:[%s1486 + $0x1c9] sm:$0xff]
        %v5755 = vld [vmem:[%s1486 + $0x1e1] sm:$0xff]
        %v5756 = vld [vmem:[%s1486 + $0x1e9] sm:$0xff]
        %5757 = vst.msk [vmem:[#allocation3 + $0x10] sm:$0xff] %vm2350, %v5725
        %5758 = vst.msk [vmem:[#allocation3 + $0x28] sm:$0xff] %vm2350, %v5726
        %5759 = vst.msk [vmem:[#allocation3 + $0x40] sm:$0xff] %vm2350, %v5727
        %5760 = vst.msk [vmem:[#allocation3 + $0x58] sm:$0xff] %vm2350, %v5728
        %5761 = vst.msk [vmem:[#allocation3 + $0x70] sm:$0xff] %vm2350, %v5729
        %5762 = vst.msk [vmem:[#allocation3 + $0x88] sm:$0xff] %vm2350, %v5730
        %5763 = vst.msk [vmem:[#allocation3 + $0xa0] sm:$0xff] %vm2350, %v5731
        %5764 = vst.msk [vmem:[#allocation3 + $0xb8] sm:$0xff] %vm2350, %v5732
        %5765 = vst.msk [vmem:[#allocation3 + $0xd0] sm:$0xff] %vm2350, %v5733
        %5766 = vst.msk [vmem:[#allocation3 + $0xe8] sm:$0xff] %vm2350, %v5734
        %5767 = vst.msk [vmem:[#allocation3 + $0x100] sm:$0xff] %vm2350, %v5735
        %5768 = vst.msk [vmem:[#allocation3 + $0x118] sm:$0xff] %vm2350, %v5736
        %5769 = vst.msk [vmem:[#allocation3 + $0x130] sm:$0xff] %vm2350, %v5737
        %5770 = vst.msk [vmem:[#allocation3 + $0x148] sm:$0xff] %vm2350, %v5738
        %5771 = vst.msk [vmem:[#allocation3 + $0x160] sm:$0xff] %vm2350, %v5739
        %5772 = vst.msk [vmem:[#allocation3 + $0x178] sm:$0xff] %vm2350, %v5740
        %5773 = vst.msk [vmem:[#allocation3 + $0x190] sm:$0xff] %vm2350, %v5741
        %5774 = vst.msk [vmem:[#allocation3 + $0x1a8] sm:$0xff] %vm2350, %v5742
        %5775 = vst.msk [vmem:[#allocation3 + $0x1c0] sm:$0xff] %vm2350, %v5743
        %5776 = vst.msk [vmem:[#allocation3 + $0x1d8] sm:$0xff] %vm2350, %v5744
        %5777 = vst.msk [vmem:[#allocation3 + $0x1f0] sm:$0xff] %vm2350, %v5745
        %5778 = vst.msk [vmem:[#allocation3 + $0x208] sm:$0xff] %vm2350, %v5746
        %5779 = vst.msk [vmem:[#allocation3 + $0x220] sm:$0xff] %vm2350, %v5747
        %5780 = vst.msk [vmem:[#allocation3 + $0x238] sm:$0xff] %vm2350, %v5748
        %5781 = vst.msk [vmem:[#allocation3 + $0x250] sm:$0xff] %vm2350, %v5749
        %5782 = vst.msk [vmem:[#allocation3 + $0x268] sm:$0xff] %vm2350, %v5750
        %5783 = vst.msk [vmem:[#allocation3 + $0x280] sm:$0xff] %vm2350, %v5751
        %5784 = vst.msk [vmem:[#allocation3 + $0x298] sm:$0xff] %vm2350, %v5752
        %5785 = vst.msk [vmem:[#allocation3 + $0x2b0] sm:$0xff] %vm2350, %v5753
        %5786 = vst.msk [vmem:[#allocation3 + $0x2c8] sm:$0xff] %vm2350, %v5754
        %5787 = vst.msk [vmem:[#allocation3 + $0x2e0] sm:$0xff] %vm2350, %v5755
        %5788 = vst.msk [vmem:[#allocation3 + $0x2f8] sm:$0xff] %vm2350, %v5756
        %v5789 = vld [vmem:[#allocation3] sm:$0xff]
        %v5790 = vld [vmem:[#allocation3 + $0x8] sm:$0xff]
        %v5791 = vld [vmem:[#allocation3 + $0x10] sm:$0xff]
        %v5792 = vld [vmem:[#allocation3 + $0x18] sm:$0xff]
        %v5793 = vld [vmem:[#allocation3 + $0x20] sm:$0xff]
        %v5794 = vld [vmem:[#allocation3 + $0x28] sm:$0xff]
        %v5795 = vld [vmem:[#allocation3 + $0x30] sm:$0xff]
        %v5796 = vld [vmem:[#allocation3 + $0x38] sm:$0xff]
        %v5797 = vld [vmem:[#allocation3 + $0x40] sm:$0xff]
        %v5798 = vld [vmem:[#allocation3 + $0x48] sm:$0xff]
        %v5799 = vld [vmem:[#allocation3 + $0x50] sm:$0xff]
        %v5800 = vld [vmem:[#allocation3 + $0x58] sm:$0xff]
        %v5801 = vld [vmem:[#allocation3 + $0x60] sm:$0xff]
        %v5802 = vld [vmem:[#allocation3 + $0x68] sm:$0xff]
        %v5803 = vld [vmem:[#allocation3 + $0x70] sm:$0xff]
        %v5804 = vld [vmem:[#allocation3 + $0x78] sm:$0xff]
        %v5805 = vld [vmem:[#allocation3 + $0x80] sm:$0xff]
        %v5806 = vld [vmem:[#allocation3 + $0x88] sm:$0xff]
        %v5807 = vld [vmem:[#allocation3 + $0x90] sm:$0xff]
        %v5808 = vld [vmem:[#allocation3 + $0x98] sm:$0xff]
        %v5809 = vld [vmem:[#allocation3 + $0xa0] sm:$0xff]
        %v5810 = vld [vmem:[#allocation3 + $0xa8] sm:$0xff]
        %v5811 = vld [vmem:[#allocation3 + $0xb0] sm:$0xff]
        %v5812 = vld [vmem:[#allocation3 + $0xb8] sm:$0xff]
        %v5813 = vld [vmem:[#allocation3 + $0xc0] sm:$0xff]
        %v5814 = vld [vmem:[#allocation3 + $0xc8] sm:$0xff]
        %v5815 = vld [vmem:[#allocation3 + $0xd0] sm:$0xff]
        %v5816 = vld [vmem:[#allocation3 + $0xd8] sm:$0xff]
        %v5817 = vld [vmem:[#allocation3 + $0xe0] sm:$0xff]
        %v5818 = vld [vmem:[#allocation3 + $0xe8] sm:$0xff]
        %v5819 = vld [vmem:[#allocation3 + $0xf0] sm:$0xff]
        %v5820 = vld [vmem:[#allocation3 + $0xf8] sm:$0xff]
        %v5821 = vld [vmem:[#allocation3 + $0x100] sm:$0xff]
        %v5822 = vld [vmem:[#allocation3 + $0x108] sm:$0xff]
        %v5823 = vld [vmem:[#allocation3 + $0x110] sm:$0xff]
        %v5824 = vld [vmem:[#allocation3 + $0x118] sm:$0xff]
        %v5825 = vld [vmem:[#allocation3 + $0x120] sm:$0xff]
        %v5826 = vld [vmem:[#allocation3 + $0x128] sm:$0xff]
        %v5827 = vld [vmem:[#allocation3 + $0x130] sm:$0xff]
        %v5828 = vld [vmem:[#allocation3 + $0x138] sm:$0xff]
        %v5829 = vld [vmem:[#allocation3 + $0x140] sm:$0xff]
        %v5830 = vld [vmem:[#allocation3 + $0x148] sm:$0xff]
        %v5831 = vld [vmem:[#allocation3 + $0x150] sm:$0xff]
        %v5832 = vld [vmem:[#allocation3 + $0x158] sm:$0xff]
        %v5833 = vld [vmem:[#allocation3 + $0x160] sm:$0xff]
        %v5834 = vld [vmem:[#allocation3 + $0x168] sm:$0xff]
        %v5835 = vld [vmem:[#allocation3 + $0x170] sm:$0xff]
        %v5836 = vld [vmem:[#allocation3 + $0x178] sm:$0xff]
        %v5837 = vld [vmem:[#allocation3 + $0x180] sm:$0xff]
        %v5838 = vld [vmem:[#allocation3 + $0x188] sm:$0xff]
        %v5839 = vld [vmem:[#allocation3 + $0x190] sm:$0xff]
        %v5840 = vld [vmem:[#allocation3 + $0x198] sm:$0xff]
        %v5841 = vld [vmem:[#allocation3 + $0x1a0] sm:$0xff]
        %v5842 = vld [vmem:[#allocation3 + $0x1a8] sm:$0xff]
        %v5843 = vld [vmem:[#allocation3 + $0x1b0] sm:$0xff]
        %v5844 = vld [vmem:[#allocation3 + $0x1b8] sm:$0xff]
        %v5845 = vld [vmem:[#allocation3 + $0x1c0] sm:$0xff]
        %v5846 = vld [vmem:[#allocation3 + $0x1c8] sm:$0xff]
        %v5847 = vld [vmem:[#allocation3 + $0x1d0] sm:$0xff]
        %v5848 = vld [vmem:[#allocation3 + $0x1d8] sm:$0xff]
        %v5849 = vld [vmem:[#allocation3 + $0x1e0] sm:$0xff]
        %v5850 = vld [vmem:[#allocation3 + $0x1e8] sm:$0xff]
        %v5851 = vld [vmem:[#allocation3 + $0x1f0] sm:$0xff]
        %v5852 = vld [vmem:[#allocation3 + $0x1f8] sm:$0xff]
        %v5853 = vld [vmem:[#allocation3 + $0x200] sm:$0xff]
        %v5854 = vld [vmem:[#allocation3 + $0x208] sm:$0xff]
        %v5855 = vld [vmem:[#allocation3 + $0x210] sm:$0xff]
        %v5856 = vld [vmem:[#allocation3 + $0x218] sm:$0xff]
        %v5857 = vld [vmem:[#allocation3 + $0x220] sm:$0xff]
        %v5858 = vld [vmem:[#allocation3 + $0x228] sm:$0xff]
        %v5859 = vld [vmem:[#allocation3 + $0x230] sm:$0xff]
        %v5860 = vld [vmem:[#allocation3 + $0x238] sm:$0xff]
        %v5861 = vld [vmem:[#allocation3 + $0x240] sm:$0xff]
        %v5862 = vld [vmem:[#allocation3 + $0x248] sm:$0xff]
        %v5863 = vld [vmem:[#allocation3 + $0x250] sm:$0xff]
        %v5864 = vld [vmem:[#allocation3 + $0x258] sm:$0xff]
        %v5865 = vld [vmem:[#allocation3 + $0x260] sm:$0xff]
        %v5866 = vld [vmem:[#allocation3 + $0x268] sm:$0xff]
        %v5867 = vld [vmem:[#allocation3 + $0x270] sm:$0xff]
        %v5868 = vld [vmem:[#allocation3 + $0x278] sm:$0xff]
        %v5869 = vld [vmem:[#allocation3 + $0x280] sm:$0xff]
        %v5870 = vld [vmem:[#allocation3 + $0x288] sm:$0xff]
        %v5871 = vld [vmem:[#allocation3 + $0x290] sm:$0xff]
        %v5872 = vld [vmem:[#allocation3 + $0x298] sm:$0xff]
        %v5873 = vld [vmem:[#allocation3 + $0x2a0] sm:$0xff]
        %v5874 = vld [vmem:[#allocation3 + $0x2a8] sm:$0xff]
        %v5875 = vld [vmem:[#allocation3 + $0x2b0] sm:$0xff]
        %v5876 = vld [vmem:[#allocation3 + $0x2b8] sm:$0xff]
        %v5877 = vld [vmem:[#allocation3 + $0x2c0] sm:$0xff]
        %v5878 = vld [vmem:[#allocation3 + $0x2c8] sm:$0xff]
        %v5879 = vld [vmem:[#allocation3 + $0x2d0] sm:$0xff]
        %v5880 = vld [vmem:[#allocation3 + $0x2d8] sm:$0xff]
        %v5881 = vld [vmem:[#allocation3 + $0x2e0] sm:$0xff]
        %v5882 = vld [vmem:[#allocation3 + $0x2e8] sm:$0xff]
        %v5883 = vld [vmem:[#allocation3 + $0x2f0] sm:$0xff]
        %v5884 = vld [vmem:[#allocation3 + $0x2f8] sm:$0xff]
        %v5885 = vld [vmem:[#allocation5] sm:$0xff]
        %v5886 = vld [vmem:[#allocation5 + $0x8] sm:$0xff]
        %v5887 = vld [vmem:[#allocation5 + $0x10] sm:$0xff]
        %v5888 = vld [vmem:[#allocation5 + $0x18] sm:$0xff]
        %v5889 = vld [vmem:[#allocation5 + $0x20] sm:$0xff]
        %v5890 = vld [vmem:[#allocation5 + $0x28] sm:$0xff]
        %v5891 = vld [vmem:[#allocation5 + $0x30] sm:$0xff]
        %v5892 = vld [vmem:[#allocation5 + $0x38] sm:$0xff]
        %v5893 = vld [vmem:[#allocation5 + $0x40] sm:$0xff]
        %v5894 = vld [vmem:[#allocation5 + $0x48] sm:$0xff]
        %v5895 = vld [vmem:[#allocation5 + $0x50] sm:$0xff]
        %v5896 = vld [vmem:[#allocation5 + $0x58] sm:$0xff]
        %v5897 = vld [vmem:[#allocation5 + $0x60] sm:$0xff]
        %v5898 = vld [vmem:[#allocation5 + $0x68] sm:$0xff]
        %v5899 = vld [vmem:[#allocation5 + $0x70] sm:$0xff]
        %v5900 = vld [vmem:[#allocation5 + $0x78] sm:$0xff]
        %v5901 = vld [vmem:[#allocation5 + $0x80] sm:$0xff]
        %v5902 = vld [vmem:[#allocation5 + $0x88] sm:$0xff]
        %v5903 = vld [vmem:[#allocation5 + $0x90] sm:$0xff]
        %v5904 = vld [vmem:[#allocation5 + $0x98] sm:$0xff]
        %v5905 = vld [vmem:[#allocation5 + $0xa0] sm:$0xff]
        %v5906 = vld [vmem:[#allocation5 + $0xa8] sm:$0xff]
        %v5907 = vld [vmem:[#allocation5 + $0xb0] sm:$0xff]
        %v5908 = vld [vmem:[#allocation5 + $0xb8] sm:$0xff]
        %v5909 = vld [vmem:[#allocation5 + $0xc0] sm:$0xff]
        %v5910 = vld [vmem:[#allocation5 + $0xc8] sm:$0xff]
        %v5911 = vld [vmem:[#allocation5 + $0xd0] sm:$0xff]
        %v5912 = vld [vmem:[#allocation5 + $0xd8] sm:$0xff]
        %v5913 = vld [vmem:[#allocation5 + $0xe0] sm:$0xff]
        %v5914 = vld [vmem:[#allocation5 + $0xe8] sm:$0xff]
        %v5915 = vld [vmem:[#allocation5 + $0xf0] sm:$0xff]
        %v5916 = vld [vmem:[#allocation5 + $0xf8] sm:$0xff]
        %v5917 = vld [vmem:[#allocation5 + $0x100] sm:$0xff]
        %v5918 = vld [vmem:[#allocation5 + $0x108] sm:$0xff]
        %v5919 = vld [vmem:[#allocation5 + $0x110] sm:$0xff]
        %v5920 = vld [vmem:[#allocation5 + $0x118] sm:$0xff]
        %v5921 = vld [vmem:[%s6] sm:$0x1]
        %v5923 = vperm.slane %v5921, 0
        %v5926 = vsel %vm2350, %v5791, 0
        %v5929 = vsel %vm2350, %v5794, 0
        %v5932 = vsel %vm2350, %v5797, 0
        %v5935 = vsel %vm2350, %v5800, 0
        %v5938 = vsel %vm2350, %v5803, 0
        %v5941 = vsel %vm2350, %v5806, 0
        %v5944 = vsel %vm2350, %v5809, 0
        %v5947 = vsel %vm2350, %v5812, 0
        %v5950 = vsel %vm2350, %v5815, 0
        %v5953 = vsel %vm2350, %v5818, 0
        %v5956 = vsel %vm2350, %v5821, 0
        %v5959 = vsel %vm2350, %v5824, 0
        %v5962 = vsel %vm2350, %v5827, 0
        %v5965 = vsel %vm2350, %v5830, 0
        %v5968 = vsel %vm2350, %v5833, 0
        %v5971 = vsel %vm2350, %v5836, 0
        %v5974 = vsel %vm2350, %v5839, 0
        %v5977 = vsel %vm2350, %v5842, 0
        %v5980 = vsel %vm2350, %v5845, 0
        %v5983 = vsel %vm2350, %v5848, 0
        %v5986 = vsel %vm2350, %v5851, 0
        %v5989 = vsel %vm2350, %v5854, 0
        %v5992 = vsel %vm2350, %v5857, 0
        %v5995 = vsel %vm2350, %v5860, 0
        %v5998 = vsel %vm2350, %v5863, 0
        %v6001 = vsel %vm2350, %v5866, 0
        %v6004 = vsel %vm2350, %v5869, 0
        %v6007 = vsel %vm2350, %v5872, 0
        %v6010 = vsel %vm2350, %v5875, 0
        %v6013 = vsel %vm2350, %v5878, 0
        %v6016 = vsel %vm2350, %v5881, 0
        %v6019 = vsel %vm2350, %v5884, 0
        %6021 = vmatpush.msra.mxu0 %v5900
        %6022 = vmatpush.msra.mxu0 %v5899
        %6023 = vmatpush.msra.mxu0 %v5898
        %6024 = vmatpush.msra.mxu0 %v5897
        %6025 = vmatpush.msra.mxu0 %v5896
        %6026 = vmatpush.msra.mxu0 %v5895
        %6027 = vmatpush.msra.mxu0 %v5894
        %6028 = vmatpush.msra.mxu0 %v5893
        %6029 = vmatpush.msra.mxu0 %v5892
        %6030 = vmatpush.msra.mxu0 %v5891
        %6031 = vmatpush.msra.mxu0 %v5890
        %6032 = vmatpush.msra.mxu0 %v5889
        %6033 = vmatpush.msra.mxu0 %v5888
        %6034 = vmatpush.msra.mxu0 %v5887
        %6035 = vmatpush.msra.mxu0 %v5886
        %6036 = vmatpush.msra.mxu0 %v5885
        %6037 = vmatmul.f32.gmra.mxu0 %v5789
        %v6038 = vpop.f32.mrf.mxu0
        %v6039 = vadd.f32 %v5923, %v6038
        %6040 = vmatmul.f32.gmra.mxu0 %v5792
        %v6041 = vpop.f32.mrf.mxu0
        %v6042 = vadd.f32 %v5923, %v6041
        %6043 = vmatmul.f32.gmra.mxu0 %v5795
        %v6044 = vpop.f32.mrf.mxu0
        %v6045 = vadd.f32 %v5923, %v6044
        %6046 = vmatmul.f32.gmra.mxu0 %v5798
        %v6047 = vpop.f32.mrf.mxu0
        %v6048 = vadd.f32 %v5923, %v6047
        %6049 = vmatmul.f32.gmra.mxu0 %v5801
        %v6050 = vpop.f32.mrf.mxu0
        %v6051 = vadd.f32 %v5923, %v6050
        %6052 = vmatmul.f32.gmra.mxu0 %v5804
        %v6053 = vpop.f32.mrf.mxu0
        %v6054 = vadd.f32 %v5923, %v6053
        %6055 = vmatmul.f32.gmra.mxu0 %v5807
        %v6056 = vpop.f32.mrf.mxu0
        %v6057 = vadd.f32 %v5923, %v6056
        %6058 = vmatmul.f32.gmra.mxu0 %v5810
        %v6059 = vpop.f32.mrf.mxu0
        %v6060 = vadd.f32 %v5923, %v6059
        %6061 = vmatmul.f32.gmra.mxu0 %v5813
        %v6062 = vpop.f32.mrf.mxu0
        %v6063 = vadd.f32 %v5923, %v6062
        %6064 = vmatmul.f32.gmra.mxu0 %v5816
        %v6065 = vpop.f32.mrf.mxu0
        %v6066 = vadd.f32 %v5923, %v6065
        %6067 = vmatmul.f32.gmra.mxu0 %v5819
        %v6068 = vpop.f32.mrf.mxu0
        %v6069 = vadd.f32 %v5923, %v6068
        %6070 = vmatmul.f32.gmra.mxu0 %v5822
        %v6071 = vpop.f32.mrf.mxu0
        %v6072 = vadd.f32 %v5923, %v6071
        %6073 = vmatmul.f32.gmra.mxu0 %v5825
        %v6074 = vpop.f32.mrf.mxu0
        %v6075 = vadd.f32 %v5923, %v6074
        %6076 = vmatmul.f32.gmra.mxu0 %v5828
        %v6077 = vpop.f32.mrf.mxu0
        %v6078 = vadd.f32 %v5923, %v6077
        %6079 = vmatmul.f32.gmra.mxu0 %v5831
        %v6080 = vpop.f32.mrf.mxu0
        %v6081 = vadd.f32 %v5923, %v6080
        %6082 = vmatmul.f32.gmra.mxu0 %v5834
        %v6083 = vpop.f32.mrf.mxu0
        %v6084 = vadd.f32 %v5923, %v6083
        %6085 = vmatmul.f32.gmra.mxu0 %v5837
        %v6086 = vpop.f32.mrf.mxu0
        %v6087 = vadd.f32 %v5923, %v6086
        %6088 = vmatmul.f32.gmra.mxu0 %v5840
        %v6089 = vpop.f32.mrf.mxu0
        %v6090 = vadd.f32 %v5923, %v6089
        %6091 = vmatmul.f32.gmra.mxu0 %v5843
        %v6092 = vpop.f32.mrf.mxu0
        %v6093 = vadd.f32 %v5923, %v6092
        %6094 = vmatmul.f32.gmra.mxu0 %v5846
        %v6095 = vpop.f32.mrf.mxu0
        %v6096 = vadd.f32 %v5923, %v6095
        %6097 = vmatmul.f32.gmra.mxu0 %v5849
        %v6098 = vpop.f32.mrf.mxu0
        %v6099 = vadd.f32 %v5923, %v6098
        %6100 = vmatmul.f32.gmra.mxu0 %v5852
        %v6101 = vpop.f32.mrf.mxu0
        %v6102 = vadd.f32 %v5923, %v6101
        %6103 = vmatmul.f32.gmra.mxu0 %v5855
        %v6104 = vpop.f32.mrf.mxu0
        %v6105 = vadd.f32 %v5923, %v6104
        %6106 = vmatmul.f32.gmra.mxu0 %v5858
        %v6107 = vpop.f32.mrf.mxu0
        %v6108 = vadd.f32 %v5923, %v6107
        %6109 = vmatmul.f32.gmra.mxu0 %v5861
        %v6110 = vpop.f32.mrf.mxu0
        %v6111 = vadd.f32 %v5923, %v6110
        %6112 = vmatmul.f32.gmra.mxu0 %v5864
        %v6113 = vpop.f32.mrf.mxu0
        %v6114 = vadd.f32 %v5923, %v6113
        %6115 = vmatmul.f32.gmra.mxu0 %v5867
        %v6116 = vpop.f32.mrf.mxu0
        %v6117 = vadd.f32 %v5923, %v6116
        %6118 = vmatmul.f32.gmra.mxu0 %v5870
        %v6119 = vpop.f32.mrf.mxu0
        %v6120 = vadd.f32 %v5923, %v6119
        %6121 = vmatmul.f32.gmra.mxu0 %v5873
        %v6122 = vpop.f32.mrf.mxu0
        %v6123 = vadd.f32 %v5923, %v6122
        %6124 = vmatmul.f32.gmra.mxu0 %v5876
        %v6125 = vpop.f32.mrf.mxu0
        %v6126 = vadd.f32 %v5923, %v6125
        %6127 = vmatmul.f32.gmra.mxu0 %v5879
        %v6128 = vpop.f32.mrf.mxu0
        %v6129 = vadd.f32 %v5923, %v6128
        %6130 = vmatmul.f32.gmra.mxu0 %v5882
        %v6131 = vpop.f32.mrf.mxu0
        %v6132 = vadd.f32 %v5923, %v6131
        %6133 = vdwg.mxu0
        %6134 = vmatpush.msra.mxu0 %v5916
        %6135 = vmatpush.msra.mxu0 %v5915
        %6136 = vmatpush.msra.mxu0 %v5914
        %6137 = vmatpush.msra.mxu0 %v5913
        %6138 = vmatpush.msra.mxu0 %v5912
        %6139 = vmatpush.msra.mxu0 %v5911
        %6140 = vmatpush.msra.mxu0 %v5910
        %6141 = vmatpush.msra.mxu0 %v5909
        %6142 = vmatpush.msra.mxu0 %v5908
        %6143 = vmatpush.msra.mxu0 %v5907
        %6144 = vmatpush.msra.mxu0 %v5906
        %6145 = vmatpush.msra.mxu0 %v5905
        %6146 = vmatpush.msra.mxu0 %v5904
        %6147 = vmatpush.msra.mxu0 %v5903
        %6148 = vmatpush.msra.mxu0 %v5902
        %6149 = vmatpush.msra.mxu0 %v5901
        %6150 = vmatmul.f32.gmra.mxu0 %v5790
        %v6151 = vpop.f32.mrf.mxu0
        %v6152 = vadd.f32 %v6039, %v6151
        %6153 = vmatmul.f32.gmra.mxu0 %v5793
        %v6154 = vpop.f32.mrf.mxu0
        %v6155 = vadd.f32 %v6042, %v6154
        %6156 = vmatmul.f32.gmra.mxu0 %v5796
        %v6157 = vpop.f32.mrf.mxu0
        %v6158 = vadd.f32 %v6045, %v6157
        %6159 = vmatmul.f32.gmra.mxu0 %v5799
        %v6160 = vpop.f32.mrf.mxu0
        %v6161 = vadd.f32 %v6048, %v6160
        %6162 = vmatmul.f32.gmra.mxu0 %v5802
        %v6163 = vpop.f32.mrf.mxu0
        %v6164 = vadd.f32 %v6051, %v6163
        %6165 = vmatmul.f32.gmra.mxu0 %v5805
        %v6166 = vpop.f32.mrf.mxu0
        %v6167 = vadd.f32 %v6054, %v6166
        %6168 = vmatmul.f32.gmra.mxu0 %v5808
        %v6169 = vpop.f32.mrf.mxu0
        %v6170 = vadd.f32 %v6057, %v6169
        %6171 = vmatmul.f32.gmra.mxu0 %v5811
        %v6172 = vpop.f32.mrf.mxu0
        %v6173 = vadd.f32 %v6060, %v6172
        %6174 = vmatmul.f32.gmra.mxu0 %v5814
        %v6175 = vpop.f32.mrf.mxu0
        %v6176 = vadd.f32 %v6063, %v6175
        %6177 = vmatmul.f32.gmra.mxu0 %v5817
        %v6178 = vpop.f32.mrf.mxu0
        %v6179 = vadd.f32 %v6066, %v6178
        %6180 = vmatmul.f32.gmra.mxu0 %v5820
        %v6181 = vpop.f32.mrf.mxu0
        %v6182 = vadd.f32 %v6069, %v6181
        %6183 = vmatmul.f32.gmra.mxu0 %v5823
        %v6184 = vpop.f32.mrf.mxu0
        %v6185 = vadd.f32 %v6072, %v6184
        %6186 = vmatmul.f32.gmra.mxu0 %v5826
        %v6187 = vpop.f32.mrf.mxu0
        %v6188 = vadd.f32 %v6075, %v6187
        %6189 = vmatmul.f32.gmra.mxu0 %v5829
        %v6190 = vpop.f32.mrf.mxu0
        %v6191 = vadd.f32 %v6078, %v6190
        %6192 = vmatmul.f32.gmra.mxu0 %v5832
        %v6193 = vpop.f32.mrf.mxu0
        %v6194 = vadd.f32 %v6081, %v6193
        %6195 = vmatmul.f32.gmra.mxu0 %v5835
        %v6196 = vpop.f32.mrf.mxu0
        %v6197 = vadd.f32 %v6084, %v6196
        %6198 = vmatmul.f32.gmra.mxu0 %v5838
        %v6199 = vpop.f32.mrf.mxu0
        %v6200 = vadd.f32 %v6087, %v6199
        %6201 = vmatmul.f32.gmra.mxu0 %v5841
        %v6202 = vpop.f32.mrf.mxu0
        %v6203 = vadd.f32 %v6090, %v6202
        %6204 = vmatmul.f32.gmra.mxu0 %v5844
        %v6205 = vpop.f32.mrf.mxu0
        %v6206 = vadd.f32 %v6093, %v6205
        %6207 = vmatmul.f32.gmra.mxu0 %v5847
        %v6208 = vpop.f32.mrf.mxu0
        %v6209 = vadd.f32 %v6096, %v6208
        %6210 = vmatmul.f32.gmra.mxu0 %v5850
        %v6211 = vpop.f32.mrf.mxu0
        %v6212 = vadd.f32 %v6099, %v6211
        %6213 = vmatmul.f32.gmra.mxu0 %v5853
        %v6214 = vpop.f32.mrf.mxu0
        %v6215 = vadd.f32 %v6102, %v6214
        %6216 = vmatmul.f32.gmra.mxu0 %v5856
        %v6217 = vpop.f32.mrf.mxu0
        %v6218 = vadd.f32 %v6105, %v6217
        %6219 = vmatmul.f32.gmra.mxu0 %v5859
        %v6220 = vpop.f32.mrf.mxu0
        %v6221 = vadd.f32 %v6108, %v6220
        %6222 = vmatmul.f32.gmra.mxu0 %v5862
        %v6223 = vpop.f32.mrf.mxu0
        %v6224 = vadd.f32 %v6111, %v6223
        %6225 = vmatmul.f32.gmra.mxu0 %v5865
        %v6226 = vpop.f32.mrf.mxu0
        %v6227 = vadd.f32 %v6114, %v6226
        %6228 = vmatmul.f32.gmra.mxu0 %v5868
        %v6229 = vpop.f32.mrf.mxu0
        %v6230 = vadd.f32 %v6117, %v6229
        %6231 = vmatmul.f32.gmra.mxu0 %v5871
        %v6232 = vpop.f32.mrf.mxu0
        %v6233 = vadd.f32 %v6120, %v6232
        %6234 = vmatmul.f32.gmra.mxu0 %v5874
        %v6235 = vpop.f32.mrf.mxu0
        %v6236 = vadd.f32 %v6123, %v6235
        %6237 = vmatmul.f32.gmra.mxu0 %v5877
        %v6238 = vpop.f32.mrf.mxu0
        %v6239 = vadd.f32 %v6126, %v6238
        %6240 = vmatmul.f32.gmra.mxu0 %v5880
        %v6241 = vpop.f32.mrf.mxu0
        %v6242 = vadd.f32 %v6129, %v6241
        %6243 = vmatmul.f32.gmra.mxu0 %v5883
        %v6244 = vpop.f32.mrf.mxu0
        %v6245 = vadd.f32 %v6132, %v6244
        %6246 = vdwg.mxu0
        %6247 = vmatpush.msra.mxu0 0.0
        %6248 = vmatpush.msra.mxu0 0.0
        %6249 = vmatpush.msra.mxu0 0.0
        %6250 = vmatpush.msra.mxu0 0.0
        %6251 = vmatpush.msra.mxu0 0.0
        %6252 = vmatpush.msra.mxu0 0.0
        %6253 = vmatpush.msra.mxu0 0.0
        %6254 = vmatpush.msra.mxu0 0.0
        %6255 = vmatpush.msra.mxu0 0.0
        %6256 = vmatpush.msra.mxu0 0.0
        %6257 = vmatpush.msra.mxu0 0.0
        %6258 = vmatpush.msra.mxu0 0.0
        %6259 = vmatpush.msra.mxu0 %v5920
        %6260 = vmatpush.msra.mxu0 %v5919
        %6261 = vmatpush.msra.mxu0 %v5918
        %6262 = vmatpush.msra.mxu0 %v5917
        %6263 = vmatmul.f32.gmra.mxu0 %v5926
        %v6264 = vpop.f32.mrf.mxu0
        %v6265 = vadd.f32 %v6152, %v6264
        %6266 = vmatmul.f32.gmra.mxu0 %v5929
        %v6267 = vpop.f32.mrf.mxu0
        %v6268 = vadd.f32 %v6155, %v6267
        %6269 = vmatmul.f32.gmra.mxu0 %v5932
        %v6270 = vpop.f32.mrf.mxu0
        %v6271 = vadd.f32 %v6158, %v6270
        %6272 = vmatmul.f32.gmra.mxu0 %v5935
        %v6273 = vpop.f32.mrf.mxu0
        %v6274 = vadd.f32 %v6161, %v6273
        %6275 = vmatmul.f32.gmra.mxu0 %v5938
        %v6276 = vpop.f32.mrf.mxu0
        %v6277 = vadd.f32 %v6164, %v6276
        %6278 = vmatmul.f32.gmra.mxu0 %v5941
        %v6279 = vpop.f32.mrf.mxu0
        %v6280 = vadd.f32 %v6167, %v6279
        %6281 = vmatmul.f32.gmra.mxu0 %v5944
        %v6282 = vpop.f32.mrf.mxu0
        %v6283 = vadd.f32 %v6170, %v6282
        %6284 = vmatmul.f32.gmra.mxu0 %v5947
        %v6285 = vpop.f32.mrf.mxu0
        %v6286 = vadd.f32 %v6173, %v6285
        %6287 = vmatmul.f32.gmra.mxu0 %v5950
        %v6288 = vpop.f32.mrf.mxu0
        %v6289 = vadd.f32 %v6176, %v6288
        %6290 = vmatmul.f32.gmra.mxu0 %v5953
        %v6291 = vpop.f32.mrf.mxu0
        %v6292 = vadd.f32 %v6179, %v6291
        %6293 = vmatmul.f32.gmra.mxu0 %v5956
        %v6294 = vpop.f32.mrf.mxu0
        %v6295 = vadd.f32 %v6182, %v6294
        %6296 = vmatmul.f32.gmra.mxu0 %v5959
        %v6297 = vpop.f32.mrf.mxu0
        %v6298 = vadd.f32 %v6185, %v6297
        %6299 = vmatmul.f32.gmra.mxu0 %v5962
        %v6300 = vpop.f32.mrf.mxu0
        %v6301 = vadd.f32 %v6188, %v6300
        %6302 = vmatmul.f32.gmra.mxu0 %v5965
        %v6303 = vpop.f32.mrf.mxu0
        %v6304 = vadd.f32 %v6191, %v6303
        %6305 = vmatmul.f32.gmra.mxu0 %v5968
        %v6306 = vpop.f32.mrf.mxu0
        %v6307 = vadd.f32 %v6194, %v6306
        %6308 = vmatmul.f32.gmra.mxu0 %v5971
        %v6309 = vpop.f32.mrf.mxu0
        %v6310 = vadd.f32 %v6197, %v6309
        %6311 = vmatmul.f32.gmra.mxu0 %v5974
        %v6312 = vpop.f32.mrf.mxu0
        %v6313 = vadd.f32 %v6200, %v6312
        %6314 = vmatmul.f32.gmra.mxu0 %v5977
        %v6315 = vpop.f32.mrf.mxu0
        %v6316 = vadd.f32 %v6203, %v6315
        %6317 = vmatmul.f32.gmra.mxu0 %v5980
        %v6318 = vpop.f32.mrf.mxu0
        %v6319 = vadd.f32 %v6206, %v6318
        %6320 = vmatmul.f32.gmra.mxu0 %v5983
        %v6321 = vpop.f32.mrf.mxu0
        %v6322 = vadd.f32 %v6209, %v6321
        %6323 = vmatmul.f32.gmra.mxu0 %v5986
        %v6324 = vpop.f32.mrf.mxu0
        %v6325 = vadd.f32 %v6212, %v6324
        %6326 = vmatmul.f32.gmra.mxu0 %v5989
        %v6327 = vpop.f32.mrf.mxu0
        %v6328 = vadd.f32 %v6215, %v6327
        %6329 = vmatmul.f32.gmra.mxu0 %v5992
        %v6330 = vpop.f32.mrf.mxu0
        %v6331 = vadd.f32 %v6218, %v6330
        %6332 = vmatmul.f32.gmra.mxu0 %v5995
        %v6333 = vpop.f32.mrf.mxu0
        %v6334 = vadd.f32 %v6221, %v6333
        %6335 = vmatmul.f32.gmra.mxu0 %v5998
        %v6336 = vpop.f32.mrf.mxu0
        %v6337 = vadd.f32 %v6224, %v6336
        %6338 = vmatmul.f32.gmra.mxu0 %v6001
        %v6339 = vpop.f32.mrf.mxu0
        %v6340 = vadd.f32 %v6227, %v6339
        %6341 = vmatmul.f32.gmra.mxu0 %v6004
        %v6342 = vpop.f32.mrf.mxu0
        %v6343 = vadd.f32 %v6230, %v6342
        %6344 = vmatmul.f32.gmra.mxu0 %v6007
        %v6345 = vpop.f32.mrf.mxu0
        %v6346 = vadd.f32 %v6233, %v6345
        %6347 = vmatmul.f32.gmra.mxu0 %v6010
        %v6348 = vpop.f32.mrf.mxu0
        %v6349 = vadd.f32 %v6236, %v6348
        %6350 = vmatmul.f32.gmra.mxu0 %v6013
        %v6351 = vpop.f32.mrf.mxu0
        %v6352 = vadd.f32 %v6239, %v6351
        %6353 = vmatmul.f32.gmra.mxu0 %v6016
        %v6354 = vpop.f32.mrf.mxu0
        %v6355 = vadd.f32 %v6242, %v6354
        %6356 = vmatmul.f32.gmra.mxu0 %v6019
        %v6357 = vpop.f32.mrf.mxu0
        %v6358 = vadd.f32 %v6245, %v6357
        %6359 = vdwg.mxu0
        %v6360 = vmax.f32 %v6265, 0.0
        %v6361 = vmax.f32 %v6268, 0.0
        %v6362 = vmax.f32 %v6271, 0.0
        %v6363 = vmax.f32 %v6274, 0.0
        %v6364 = vmax.f32 %v6277, 0.0
        %v6365 = vmax.f32 %v6280, 0.0
        %v6366 = vmax.f32 %v6283, 0.0
        %v6367 = vmax.f32 %v6286, 0.0
        %v6368 = vmax.f32 %v6289, 0.0
        %v6369 = vmax.f32 %v6292, 0.0
        %v6370 = vmax.f32 %v6295, 0.0
        %v6371 = vmax.f32 %v6298, 0.0
        %v6372 = vmax.f32 %v6301, 0.0
        %v6373 = vmax.f32 %v6304, 0.0
        %v6374 = vmax.f32 %v6307, 0.0
        %v6375 = vmax.f32 %v6310, 0.0
        %v6376 = vmax.f32 %v6313, 0.0
        %v6377 = vmax.f32 %v6316, 0.0
        %v6378 = vmax.f32 %v6319, 0.0
        %v6379 = vmax.f32 %v6322, 0.0
        %v6380 = vmax.f32 %v6325, 0.0
        %v6381 = vmax.f32 %v6328, 0.0
        %v6382 = vmax.f32 %v6331, 0.0
        %v6383 = vmax.f32 %v6334, 0.0
        %v6384 = vmax.f32 %v6337, 0.0
        %v6385 = vmax.f32 %v6340, 0.0
        %v6386 = vmax.f32 %v6343, 0.0
        %v6387 = vmax.f32 %v6346, 0.0
        %v6388 = vmax.f32 %v6349, 0.0
        %v6389 = vmax.f32 %v6352, 0.0
        %v6390 = vmax.f32 %v6355, 0.0
        %v6391 = vmax.f32 %v6358, 0.0
        %v6392 = vld [vmem:[%s7] sm:$0x1]
        %v6393 = vld [vmem:[#allocation4] sm:$0x1]
        %6395 = vset.pattern.permute.xlu0 0
        %6396 = vperm.xlu0 %6395, %v6393
        %v6397 = vpop.permute.xlu0 %6396
        %v6399 = vperm.slane %v6397, 0
        %v6401 = vsel %vm2350, %v6392, 0
        %v6404 = vsel %vm2350, %v6360, 0
        %v6407 = vsel %vm2350, %v6361, 0
        %v6410 = vsel %vm2350, %v6362, 0
        %v6413 = vsel %vm2350, %v6363, 0
        %v6416 = vsel %vm2350, %v6364, 0
        %v6419 = vsel %vm2350, %v6365, 0
        %v6422 = vsel %vm2350, %v6366, 0
        %v6425 = vsel %vm2350, %v6367, 0
        %v6428 = vsel %vm2350, %v6368, 0
        %v6431 = vsel %vm2350, %v6369, 0
        %v6434 = vsel %vm2350, %v6370, 0
        %v6437 = vsel %vm2350, %v6371, 0
        %v6440 = vsel %vm2350, %v6372, 0
        %v6443 = vsel %vm2350, %v6373, 0
        %v6446 = vsel %vm2350, %v6374, 0
        %v6449 = vsel %vm2350, %v6375, 0
        %v6452 = vsel %vm2350, %v6376, 0
        %v6455 = vsel %vm2350, %v6377, 0
        %v6458 = vsel %vm2350, %v6378, 0
        %v6461 = vsel %vm2350, %v6379, 0
        %v6464 = vsel %vm2350, %v6380, 0
        %v6467 = vsel %vm2350, %v6381, 0
        %v6470 = vsel %vm2350, %v6382, 0
        %v6473 = vsel %vm2350, %v6383, 0
        %v6476 = vsel %vm2350, %v6384, 0
        %v6479 = vsel %vm2350, %v6385, 0
        %v6482 = vsel %vm2350, %v6386, 0
        %v6485 = vsel %vm2350, %v6387, 0
        %v6488 = vsel %vm2350, %v6388, 0
        %v6491 = vsel %vm2350, %v6389, 0
        %v6494 = vsel %vm2350, %v6390, 0
        %v6497 = vsel %vm2350, %v6391, 0
        %6499 = vmatpush.xpose.msra.mxu0 %v6449
        %6500 = vmatpush.xpose.msra.mxu0 %v6446
        %6501 = vmatpush.xpose.msra.mxu0 %v6443
        %6502 = vmatpush.xpose.msra.mxu0 %v6440
        %6503 = vmatpush.xpose.msra.mxu0 %v6437
        %6504 = vmatpush.xpose.msra.mxu0 %v6434
        %6505 = vmatpush.xpose.msra.mxu0 %v6431
        %6506 = vmatpush.xpose.msra.mxu0 %v6428
        %6507 = vmatpush.xpose.msra.mxu0 %v6425
        %6508 = vmatpush.xpose.msra.mxu0 %v6422
        %6509 = vmatpush.xpose.msra.mxu0 %v6419
        %6510 = vmatpush.xpose.msra.mxu0 %v6416
        %6511 = vmatpush.xpose.msra.mxu0 %v6413
        %6512 = vmatpush.xpose.msra.mxu0 %v6410
        %6513 = vmatpush.xpose.msra.mxu0 %v6407
        %6514 = vmatpush.xpose.msra.mxu0 %v6404
        %6515 = vmatmul.f32.gmra.mxu0 %v6401
        %v6516 = vpop.f32.mrf.mxu0
        %v6517 = vadd.f32 %v6399, %v6516
        %6518 = vdwg.mxu0
        %6519 = vmatpush.xpose.msra.mxu0 %v6497
        %6520 = vmatpush.xpose.msra.mxu0 %v6494
        %6521 = vmatpush.xpose.msra.mxu0 %v6491
        %6522 = vmatpush.xpose.msra.mxu0 %v6488
        %6523 = vmatpush.xpose.msra.mxu0 %v6485
        %6524 = vmatpush.xpose.msra.mxu0 %v6482
        %6525 = vmatpush.xpose.msra.mxu0 %v6479
        %6526 = vmatpush.xpose.msra.mxu0 %v6476
        %6527 = vmatpush.xpose.msra.mxu0 %v6473
        %6528 = vmatpush.xpose.msra.mxu0 %v6470
        %6529 = vmatpush.xpose.msra.mxu0 %v6467
        %6530 = vmatpush.xpose.msra.mxu0 %v6464
        %6531 = vmatpush.xpose.msra.mxu0 %v6461
        %6532 = vmatpush.xpose.msra.mxu0 %v6458
        %6533 = vmatpush.xpose.msra.mxu0 %v6455
        %6534 = vmatpush.xpose.msra.mxu0 %v6452
        %6535 = vmatmul.f32.gmra.mxu0 %v6401
        %v6536 = vpop.f32.mrf.mxu0
        %v6537 = vadd.f32 %v6399, %v6536
        %6538 = vdwg.mxu0
        %v6541 = vrot.slane %v6537, 7
        %v6542 = vsel %vm2201, %v6517, %v6541
        %v6544 = vlaneseq
        %vm6545 = vcmp.ge.s32.totalorder %v6544, 0
        %vm6546 = vcmp.lt.s32.totalorder %v6544, 256
        %vm6547 = vmand %vm6545, %vm6546
        %6548 = vst.msk [vmem:[%s349] sm:$0x3] %vm6547, %v6542
        %p6549 = scmp.lt.s32.totalorder %s23, 1
        %s6550 = scalar_select %p6549, %s23, 1
        %s6551 = smul.addr %s6550, 2
        %s6552 = scalar_lea.vmem %s9, %s6551
        // Predicated region
        $region61: #{sparse_binary_generator_forward.1} parent=55 // pred_check
          %p6553 = pneg %p235
        $region62: #{sparse_binary_generator_forward.1} parent=55 // pred_check_branch
          %6555 = sbr.rel (%p6553) target = $region64
        $region63: #{sparse_binary_generator_forward.1} parent=55 // pred_region
          _
        $region64: #{sparse_binary_generator_forward.1} parent=55 // pred_fallthru
          _
      $region56: #{sparse_binary_generator_forward.1} parent=5 // pred_fallthru
        _
      %p6556 = scmp.le.s32.totalorder 2, %s18
      // Predicated region
      $region65: #{sparse_binary_generator_forward.1} parent=5 // pred_check
        %p6557 = pneg %p6556
      $region66: #{sparse_binary_generator_forward.1} parent=5 // pred_check_branch
        %6559 = sbr.rel (%p6557) target = $region68
      $region67: #{sparse_binary_generator_forward.1} parent=5 // pred_region
        %s6560 = ssub.s32 %s18, 2
        // Predicated region
        $region69: #{sparse_binary_generator_forward.1} parent=67 // pred_check
          %p6561 = pneg %p241
        $region70: #{sparse_binary_generator_forward.1} parent=67 // pred_check_branch
          %6563 = sbr.rel (%p6561) target = $region72
        $region71: #{sparse_binary_generator_forward.1} parent=67 // pred_region
          %p6564 = scmp.lt.s32.totalorder %s24, 1
          %s6565 = scalar_select %p6564, %s24, 1
          %s6566 = smul.addr %s6565, 2
          %s6567 = scalar_lea.vmem %s9, %s6566
        $region72: #{sparse_binary_generator_forward.1} parent=67 // pred_fallthru
          _
      $region68: #{sparse_binary_generator_forward.1} parent=5 // pred_fallthru
        _
    $region6: #{sparse_binary_generator_forward.1} parent=1 // loop_footer
      %s22 = sadd.s32 1, %s18
    $region7: #{sparse_binary_generator_forward.1} parent=1 // loop_footer_branch
      %17 = sbr.rel target = $region3
    $region8: #{sparse_binary_generator_forward.1} parent=1 // loop_exit
      _
    %6568 = vsyncpa [#allocation6], 1
    %s6569 = scalar_lea.sflag [#allocation6], 1
    %6570 = vsyncpa %s6569, 1

</llo_original>
